<compile_context>
chip_gen: v7x
topology: tpu7x:2x2x1
jax: 0.10.0
libtpu: 0.0.40
codegen_flags: <defaults>
</compile_context>

<pallas_src>
import numpy as np

import jax
import jax.numpy as jnp
from jax.experimental import pallas as pl
from jax.experimental.pallas import tpu as pltpu

BN_EPS = 1e-5


# ----------------------------------------------------------------------------
# Setup-time constant builders (run ONCE, not per forward call)
# ----------------------------------------------------------------------------
def fold_bn(conv_bias, gamma, beta, mean, var):
    scale = gamma / jnp.sqrt(var + BN_EPS)
    bias = (conv_bias - mean) * scale + beta
    return scale.astype(jnp.float32), bias.astype(jnp.float32)


def oihw_to_col(w):
    # (Cout, Cin, 3, 3) -> (Cout, 9*Cin); column index = (ky*3+kx)*Cin + cin.
    cout, cin = w.shape[0], w.shape[1]
    return jnp.transpose(w, (0, 2, 3, 1)).reshape(cout, 9 * cin)


def shift_matrices(H, W):
    # S[t] is (H*W, H*W) with S[t, q, p] = 1 iff input pixel q is the
    # (ky-1, kx-1)-shifted neighbour of output pixel p (t = ky*3 + kx) and it
    # is in bounds (zero padding otherwise).  For x of shape (C, H*W):
    #   (x @ S[t])[c, p] == x_zeropad[c, y + ky - 1, x + kx - 1]
    HW = H * W
    p = np.arange(HW)
    py, px = p // W, p % W
    mats = np.zeros((9, HW, HW), np.float32)
    for ky in range(3):
        for kx in range(3):
            qy, qx = py + ky - 1, px + kx - 1
            valid = (qy >= 0) & (qy < H) & (qx >= 0) & (qx < W)
            q = qy * W + qx
            mats[ky * 3 + kx, q[valid], p[valid]] = 1.0
    return jnp.asarray(mats)


def interp_matrix(out_size, in_size):
    # Bilinear (align_corners=True) row-interpolation matrix (out_size, in_size).
    i = jnp.arange(out_size, dtype=jnp.float32)
    src = i * (in_size - 1) / max(out_size - 1, 1)
    i0 = jnp.clip(jnp.floor(src).astype(jnp.int32), 0, max(in_size - 2, 0))
    frac = src - i0.astype(jnp.float32)
    m = jnp.zeros((out_size, in_size), jnp.float32)
    rows = jnp.arange(out_size)
    m = m.at[rows, i0].add(1.0 - frac)
    m = m.at[rows, jnp.minimum(i0 + 1, in_size - 1)].add(frac)
    return m


def make_kernel_consts(params, Hl, Wl, Hh, Wh):
    """All parameter preprocessing, hoisted out of the forward pass."""
    sc_low, bi_low = fold_bn(params["b_low"], *params["bn_low"])
    sc_high, bi_high = fold_bn(params["b_high"], *params["bn_high"])
    sc_dw, bi_dw = fold_bn(params["b_dw"], *params["bn_dw"])

    # up = high(64, Hh*Wh) @ Mt(Hh*Wh, Hl*Wl)
    Mt = jnp.kron(interp_matrix(Hl, Hh), interp_matrix(Wl, Wh)).T

    # Depthwise taps: (9, 64, 1), tap index = ky*3 + kx.
    dw = jnp.transpose(params["W_dw"][:, 0].reshape(64, 9), (1, 0))[..., None]

    consts = {
        "S_lo": shift_matrices(Hl, Wl),                       # (9, 256, 256)
        "S_hi": shift_matrices(Hh, Wh),                       # (9, 64, 64)
        "w_low": oihw_to_col(params["W_low"]),                # (64, 576)
        "sb_low": jnp.stack([sc_low, bi_low])[..., None],     # (2, 64, 1)
        "w_high": oihw_to_col(params["W_high"]),              # (64, 1152)
        "sb_high": jnp.stack([sc_high, bi_high])[..., None],  # (2, 64, 1)
        "Mt": Mt,                                             # (64, 256)
        "dw": dw,                                             # (9, 64, 1)
        "sb_dw": jnp.stack([sc_dw, bi_dw])[..., None],        # (2, 64, 1)
        "pw": params["W_pw"][:, :, 0, 0],                     # (K, 64)
        "pb": params["b_pw"][:, None],                        # (K, 1)
    }
    return jax.tree_util.tree_map(lambda a: jnp.asarray(a, jnp.float32), consts)


# ----------------------------------------------------------------------------
# The single fused kernel (per batch element)
# ----------------------------------------------------------------------------
def _rt_fused_kernel(low_ref, fea_ref, s_lo_ref, s_hi_ref,
                     w_low_ref, sb_low_ref, w_high_ref, sb_high_ref,
                     mt_ref, dw_ref, sb_dw_ref, pw_ref, pb_ref, o_ref):
    f32 = jnp.float32

    def conv3x3_bn(x, s_ref, w_ref, sb_ref):
        # x: (Cin, HW); s_ref: (9, HW, HW); w_ref: (Cout, 9*Cin); sb: (2, Cout, 1)
        taps = [jnp.dot(x, s_ref[t], preferred_element_type=f32)
                for t in range(9)]                         # 9 x (Cin, HW)
        col = jnp.concatenate(taps, axis=0)                # im2col: (9*Cin, HW)
        y = jnp.dot(w_ref[...], col, preferred_element_type=f32)   # (Cout, HW)
        return y * sb_ref[0] + sb_ref[1]                   # folded BN

    x_low = low_ref[0].astype(f32)                         # (64, Hl*Wl)
    x_high = fea_ref[0].astype(f32)                        # (128, Hh*Wh)

    low = jnp.maximum(conv3x3_bn(x_low, s_lo_ref, w_low_ref, sb_low_ref), 0.0)
    high = jnp.maximum(conv3x3_bn(x_high, s_hi_ref, w_high_ref, sb_high_ref), 0.0)

    # Bilinear (align_corners=True) upsample as one matmul, then residual add.
    s = low + jnp.dot(high, mt_ref[...], preferred_element_type=f32)  # (64, Hl*Wl)

    # Depthwise 3x3 (groups=C) + folded BN (no ReLU), reusing the shift matrices.
    acc = jnp.zeros_like(s)
    for t in range(9):
        acc = acc + dw_ref[t] * jnp.dot(s, s_lo_ref[t], preferred_element_type=f32)
    d = acc * sb_dw_ref[0] + sb_dw_ref[1]

    # 1x1 conv -> lane-dense (K, Hl*Wl) output tile.
    out = jnp.dot(pw_ref[...], d, preferred_element_type=f32) + pb_ref[...]
    o_ref[0] = out.astype(o_ref.dtype)


@jax.jit
def rt_classifier_forward(fea_nchw, low_nchw, consts):
    N, Ch, Hh, Wh = fea_nchw.shape
    _, Cl, Hl, Wl = low_nchw.shape
    HWh, HWl = Hh * Wh, Hl * Wl
    K = consts["pw"].shape[0]

    # NCHW -> (N, C, H*W): free reshapes, no transposes, no host-side padding.
    fea = fea_nchw.reshape(N, Ch, HWh)
    low = low_nchw.reshape(N, Cl, HWl)

    def rep(shape):  # constant operand: same block every grid step (loaded once)
        return pl.BlockSpec(shape, lambda n, _s=shape: (0,) * len(_s))

    out = pl.pallas_call(
        _rt_fused_kernel,
        out_shape=jax.ShapeDtypeStruct((N, K, HWl), jnp.float32),
        grid=(N,),
        in_specs=[
            pl.BlockSpec((1, Cl, HWl), lambda n: (n, 0, 0)),
            pl.BlockSpec((1, Ch, HWh), lambda n: (n, 0, 0)),
            rep(consts["S_lo"].shape),
            rep(consts["S_hi"].shape),
            rep(consts["w_low"].shape),
            rep(consts["sb_low"].shape),
            rep(consts["w_high"].shape),
            rep(consts["sb_high"].shape),
            rep(consts["Mt"].shape),
            rep(consts["dw"].shape),
            rep(consts["sb_dw"].shape),
            rep(consts["pw"].shape),
            rep(consts["pb"].shape),
        ],
        out_specs=pl.BlockSpec((1, K, HWl), lambda n: (n, 0, 0)),
        compiler_params=pltpu.CompilerParams(
            dimension_semantics=("parallel",),
            vmem_limit_bytes=32 * 1024 * 1024),
    )(low, fea, consts["S_lo"], consts["S_hi"], consts["w_low"],
      consts["sb_low"], consts["w_high"], consts["sb_high"], consts["Mt"],
      consts["dw"], consts["sb_dw"], consts["pw"], consts["pb"])

    return out.reshape(N, K, Hl, Wl)                       # already NCHW order


# ----------------------------------------------------------------------------
# Parameters (deterministic synthetic weights / BN running stats)
# ----------------------------------------------------------------------------
def make_params(num_classes, key):
    ks = jax.random.split(key, 24)
    n = lambda k, s, sc=0.1: (jax.random.normal(k, s) * sc).astype(jnp.float32)
    p = {}
    p["W_low"] = n(ks[0], (64, 64, 3, 3))
    p["b_low"] = n(ks[1], (64,))
    p["bn_low"] = (1.0 + n(ks[2], (64,)), n(ks[3], (64,)),
                   n(ks[4], (64,)), 0.5 + jnp.abs(n(ks[5], (64,), 0.5)))
    p["W_high"] = n(ks[6], (64, 128, 3, 3))
    p["b_high"] = n(ks[7], (64,))
    p["bn_high"] = (1.0 + n(ks[8], (64,)), n(ks[9], (64,)),
                    n(ks[10], (64,)), 0.5 + jnp.abs(n(ks[11], (64,), 0.5)))
    p["W_dw"] = n(ks[12], (64, 1, 3, 3))
    p["b_dw"] = n(ks[13], (64,))
    p["bn_dw"] = (1.0 + n(ks[14], (64,)), n(ks[15], (64,)),
                  n(ks[16], (64,)), 0.5 + jnp.abs(n(ks[17], (64,), 0.5)))
    p["W_pw"] = n(ks[18], (num_classes, 64, 1, 1))
    p["b_pw"] = n(ks[19], (num_classes,))
    return p


# ----------------------------------------------------------------------------
# Pure-JAX reference (for correctness check)
# ----------------------------------------------------------------------------
def reference_forward(fea, low_fea, params):
    hp = jax.lax.Precision.HIGHEST

    def conv(x, w, b, pad, groups=1):
        y = jax.lax.conv_general_dilated(
            x, w, (1, 1), [(pad, pad), (pad, pad)],
            dimension_numbers=("NCHW", "OIHW", "NCHW"),
            feature_group_count=groups, precision=hp)
        return y + b[None, :, None, None]

    def bn(x, g, be, m, v):
        return (g[None, :, None, None] * (x - m[None, :, None, None])
                / jnp.sqrt(v[None, :, None, None] + BN_EPS)
                + be[None, :, None, None])

    low = jax.nn.relu(bn(conv(low_fea, params["W_low"], params["b_low"], 1),
                         *params["bn_low"]))
    high = jax.nn.relu(bn(conv(fea, params["W_high"], params["b_high"], 1),
                          *params["bn_high"]))
    Ry = interp_matrix(low.shape[2], high.shape[2])
    Rx = interp_matrix(low.shape[3], high.shape[3])
    high_up = jnp.einsum("ph,nchw,qw->ncpq", Ry, high, Rx, precision=hp)
    s = low + high_up
    d = bn(conv(s, params["W_dw"], params["b_dw"], 1, groups=64), *params["bn_dw"])
    return conv(d, params["W_pw"], params["b_pw"], 0)


# ----------------------------------------------------------------------------
if __name__ == "__main__":
    NUM_CLASSES = 8
    key = jax.random.PRNGKey(0)
    k_fea, k_low, k_par = jax.random.split(key, 3)

    # fea (high-level): (N, 128, 8, 8); low_level_fea: (N, 64, 16, 16)
    fea = jax.random.normal(k_fea, (2, 128, 8, 8), jnp.float32)
    low_level_fea = jax.random.normal(k_low, (2, 64, 16, 16), jnp.float32)

    params = make_params(NUM_CLASSES, k_par)
    consts = make_kernel_consts(params, Hl=16, Wl=16, Hh=8, Wh=8)  # setup-time

    out = rt_classifier_forward(fea, low_level_fea, consts)
    out = jax.block_until_ready(out)
    assert out.shape == (2, NUM_CLASSES, 16, 16), out.shape

    ref = jax.block_until_ready(reference_forward(fea, low_level_fea, params))
    # Tightened from 5e-2; f32 MXU accumulation error here is ~1e-5, the 1e-2
    # band just leaves margin for MXU multi-pass f32 rounding differences.
    err = float(jnp.max(jnp.abs(out - ref)))
    assert jnp.allclose(out, ref, atol=1e-2, rtol=1e-2), err

    print("KERNEL_OK")
</pallas_src>

<mosaic_0001>
module attributes {stable_mosaic.version = 11 : i64} {
  func.func @_rt_fused_kernel(%arg0: i32, %arg1: memref<1x64x256xf32, #tpu.memory_space<vmem>>, %arg2: memref<1x128x64xf32, #tpu.memory_space<vmem>>, %arg3: memref<9x256x256xf32, #tpu.memory_space<vmem>>, %arg4: memref<9x64x64xf32, #tpu.memory_space<vmem>>, %arg5: memref<64x576xf32, #tpu.memory_space<vmem>>, %arg6: memref<2x64x1xf32, #tpu.memory_space<vmem>>, %arg7: memref<64x1152xf32, #tpu.memory_space<vmem>>, %arg8: memref<2x64x1xf32, #tpu.memory_space<vmem>>, %arg9: memref<64x256xf32, #tpu.memory_space<vmem>>, %arg10: memref<9x64x1xf32, #tpu.memory_space<vmem>>, %arg11: memref<2x64x1xf32, #tpu.memory_space<vmem>>, %arg12: memref<8x64xf32, #tpu.memory_space<vmem>>, %arg13: memref<8x1xf32, #tpu.memory_space<vmem>>, %arg14: memref<1x8x256xf32, #tpu.memory_space<vmem>>) attributes {dimension_semantics = [#tpu.dimension_semantics<parallel>], iteration_bounds = array<i64: 2>, scalar_prefetch = 0 : i64, scratch_operands = 0 : i64, tpu.core_type = #tpu.core_type<tc>, window_params = [{transform_indices = @transform_0, window_bounds = array<i64: 1, 64, 256>}, {transform_indices = @transform_1, window_bounds = array<i64: 1, 128, 64>}, {pipeline_mode = #tpu.pipeline_mode<synchronous>, transform_indices = @transform_2, window_bounds = array<i64: 9, 256, 256>}, {pipeline_mode = #tpu.pipeline_mode<synchronous>, transform_indices = @transform_3, window_bounds = array<i64: 9, 64, 64>}, {pipeline_mode = #tpu.pipeline_mode<synchronous>, transform_indices = @transform_4, window_bounds = array<i64: 64, 576>}, {pipeline_mode = #tpu.pipeline_mode<synchronous>, transform_indices = @transform_5, window_bounds = array<i64: 2, 64, 1>}, {pipeline_mode = #tpu.pipeline_mode<synchronous>, transform_indices = @transform_6, window_bounds = array<i64: 64, 1152>}, {pipeline_mode = #tpu.pipeline_mode<synchronous>, transform_indices = @transform_7, window_bounds = array<i64: 2, 64, 1>}, {pipeline_mode = #tpu.pipeline_mode<synchronous>, transform_indices = @transform_8, window_bounds = array<i64: 64, 256>}, {pipeline_mode = #tpu.pipeline_mode<synchronous>, transform_indices = @transform_9, window_bounds = array<i64: 9, 64, 1>}, {pipeline_mode = #tpu.pipeline_mode<synchronous>, transform_indices = @transform_10, window_bounds = array<i64: 2, 64, 1>}, {pipeline_mode = #tpu.pipeline_mode<synchronous>, transform_indices = @transform_11, window_bounds = array<i64: 8, 64>}, {pipeline_mode = #tpu.pipeline_mode<synchronous>, transform_indices = @transform_12, window_bounds = array<i64: 8, 1>}, {transform_indices = @transform_13, window_bounds = array<i64: 1, 8, 256>}]} {
    %c0 = arith.constant 0 : index
    %c0_0 = arith.constant 0 : index
    %c0_1 = arith.constant 0 : index
    %0 = vector.load %arg1[%c0, %c0_0, %c0_1] : memref<1x64x256xf32, #tpu.memory_space<vmem>>, vector<1x64x256xf32>
    %1 = vector.shape_cast %0 : vector<1x64x256xf32> to vector<64x256xf32>
    %c0_2 = arith.constant 0 : index
    %c0_3 = arith.constant 0 : index
    %c0_4 = arith.constant 0 : index
    %2 = vector.load %arg2[%c0_2, %c0_3, %c0_4] : memref<1x128x64xf32, #tpu.memory_space<vmem>>, vector<1x128x64xf32>
    %3 = vector.shape_cast %2 : vector<1x128x64xf32> to vector<128x64xf32>
    %c0_5 = arith.constant 0 : index
    %c0_6 = arith.constant 0 : index
    %c0_7 = arith.constant 0 : index
    %4 = vector.load %arg3[%c0_5, %c0_6, %c0_7] : memref<9x256x256xf32, #tpu.memory_space<vmem>>, vector<1x256x256xf32>
    %5 = vector.shape_cast %4 : vector<1x256x256xf32> to vector<256x256xf32>
    %cst = arith.constant dense<0.000000e+00> : vector<64x256xf32>
    %6 = tpu.matmul %1, %5, %cst {dimension_numbers = #tpu.dot_dimension_numbers<[1], [0], [0], [1], [0, 0, 1, 1], [], []>} : vector<64x256xf32>, vector<256x256xf32>, vector<64x256xf32> -> vector<64x256xf32>
    %c1 = arith.constant 1 : index
    %c0_8 = arith.constant 0 : index
    %c0_9 = arith.constant 0 : index
    %7 = vector.load %arg3[%c1, %c0_8, %c0_9] : memref<9x256x256xf32, #tpu.memory_space<vmem>>, vector<1x256x256xf32>
    %8 = vector.shape_cast %7 : vector<1x256x256xf32> to vector<256x256xf32>
    %cst_10 = arith.constant dense<0.000000e+00> : vector<64x256xf32>
    %9 = tpu.matmul %1, %8, %cst_10 {dimension_numbers = #tpu.dot_dimension_numbers<[1], [0], [0], [1], [0, 0, 1, 1], [], []>} : vector<64x256xf32>, vector<256x256xf32>, vector<64x256xf32> -> vector<64x256xf32>
    %c2 = arith.constant 2 : index
    %c0_11 = arith.constant 0 : index
    %c0_12 = arith.constant 0 : index
    %10 = vector.load %arg3[%c2, %c0_11, %c0_12] : memref<9x256x256xf32, #tpu.memory_space<vmem>>, vector<1x256x256xf32>
    %11 = vector.shape_cast %10 : vector<1x256x256xf32> to vector<256x256xf32>
    %cst_13 = arith.constant dense<0.000000e+00> : vector<64x256xf32>
    %12 = tpu.matmul %1, %11, %cst_13 {dimension_numbers = #tpu.dot_dimension_numbers<[1], [0], [0], [1], [0, 0, 1, 1], [], []>} : vector<64x256xf32>, vector<256x256xf32>, vector<64x256xf32> -> vector<64x256xf32>
    %c3 = arith.constant 3 : index
    %c0_14 = arith.constant 0 : index
    %c0_15 = arith.constant 0 : index
    %13 = vector.load %arg3[%c3, %c0_14, %c0_15] : memref<9x256x256xf32, #tpu.memory_space<vmem>>, vector<1x256x256xf32>
    %14 = vector.shape_cast %13 : vector<1x256x256xf32> to vector<256x256xf32>
    %cst_16 = arith.constant dense<0.000000e+00> : vector<64x256xf32>
    %15 = tpu.matmul %1, %14, %cst_16 {dimension_numbers = #tpu.dot_dimension_numbers<[1], [0], [0], [1], [0, 0, 1, 1], [], []>} : vector<64x256xf32>, vector<256x256xf32>, vector<64x256xf32> -> vector<64x256xf32>
    %c4 = arith.constant 4 : index
    %c0_17 = arith.constant 0 : index
    %c0_18 = arith.constant 0 : index
    %16 = vector.load %arg3[%c4, %c0_17, %c0_18] : memref<9x256x256xf32, #tpu.memory_space<vmem>>, vector<1x256x256xf32>
    %17 = vector.shape_cast %16 : vector<1x256x256xf32> to vector<256x256xf32>
    %cst_19 = arith.constant dense<0.000000e+00> : vector<64x256xf32>
    %18 = tpu.matmul %1, %17, %cst_19 {dimension_numbers = #tpu.dot_dimension_numbers<[1], [0], [0], [1], [0, 0, 1, 1], [], []>} : vector<64x256xf32>, vector<256x256xf32>, vector<64x256xf32> -> vector<64x256xf32>
    %c5 = arith.constant 5 : index
    %c0_20 = arith.constant 0 : index
    %c0_21 = arith.constant 0 : index
    %19 = vector.load %arg3[%c5, %c0_20, %c0_21] : memref<9x256x256xf32, #tpu.memory_space<vmem>>, vector<1x256x256xf32>
    %20 = vector.shape_cast %19 : vector<1x256x256xf32> to vector<256x256xf32>
    %cst_22 = arith.constant dense<0.000000e+00> : vector<64x256xf32>
    %21 = tpu.matmul %1, %20, %cst_22 {dimension_numbers = #tpu.dot_dimension_numbers<[1], [0], [0], [1], [0, 0, 1, 1], [], []>} : vector<64x256xf32>, vector<256x256xf32>, vector<64x256xf32> -> vector<64x256xf32>
    %c6 = arith.constant 6 : index
    %c0_23 = arith.constant 0 : index
    %c0_24 = arith.constant 0 : index
    %22 = vector.load %arg3[%c6, %c0_23, %c0_24] : memref<9x256x256xf32, #tpu.memory_space<vmem>>, vector<1x256x256xf32>
    %23 = vector.shape_cast %22 : vector<1x256x256xf32> to vector<256x256xf32>
    %cst_25 = arith.constant dense<0.000000e+00> : vector<64x256xf32>
    %24 = tpu.matmul %1, %23, %cst_25 {dimension_numbers = #tpu.dot_dimension_numbers<[1], [0], [0], [1], [0, 0, 1, 1], [], []>} : vector<64x256xf32>, vector<256x256xf32>, vector<64x256xf32> -> vector<64x256xf32>
    %c7 = arith.constant 7 : index
    %c0_26 = arith.constant 0 : index
    %c0_27 = arith.constant 0 : index
    %25 = vector.load %arg3[%c7, %c0_26, %c0_27] : memref<9x256x256xf32, #tpu.memory_space<vmem>>, vector<1x256x256xf32>
    %26 = vector.shape_cast %25 : vector<1x256x256xf32> to vector<256x256xf32>
    %cst_28 = arith.constant dense<0.000000e+00> : vector<64x256xf32>
    %27 = tpu.matmul %1, %26, %cst_28 {dimension_numbers = #tpu.dot_dimension_numbers<[1], [0], [0], [1], [0, 0, 1, 1], [], []>} : vector<64x256xf32>, vector<256x256xf32>, vector<64x256xf32> -> vector<64x256xf32>
    %c8 = arith.constant 8 : index
    %c0_29 = arith.constant 0 : index
    %c0_30 = arith.constant 0 : index
    %28 = vector.load %arg3[%c8, %c0_29, %c0_30] : memref<9x256x256xf32, #tpu.memory_space<vmem>>, vector<1x256x256xf32>
    %29 = vector.shape_cast %28 : vector<1x256x256xf32> to vector<256x256xf32>
    %cst_31 = arith.constant dense<0.000000e+00> : vector<64x256xf32>
    %30 = tpu.matmul %1, %29, %cst_31 {dimension_numbers = #tpu.dot_dimension_numbers<[1], [0], [0], [1], [0, 0, 1, 1], [], []>} : vector<64x256xf32>, vector<256x256xf32>, vector<64x256xf32> -> vector<64x256xf32>
    %31 = tpu.concatenate %6, %9, %12, %15, %18, %21, %24, %27, %30 in 0 : vector<64x256xf32>, vector<64x256xf32>, vector<64x256xf32>, vector<64x256xf32>, vector<64x256xf32>, vector<64x256xf32>, vector<64x256xf32>, vector<64x256xf32>, vector<64x256xf32> -> vector<576x256xf32>
    %c0_32 = arith.constant 0 : index
    %c0_33 = arith.constant 0 : index
    %32 = vector.load %arg5[%c0_32, %c0_33] : memref<64x576xf32, #tpu.memory_space<vmem>>, vector<64x576xf32>
    %cst_34 = arith.constant dense<0.000000e+00> : vector<64x256xf32>
    %33 = tpu.matmul %32, %31, %cst_34 {dimension_numbers = #tpu.dot_dimension_numbers<[1], [0], [0], [1], [0, 0, 1, 1], [], []>} : vector<64x576xf32>, vector<576x256xf32>, vector<64x256xf32> -> vector<64x256xf32>
    %c0_35 = arith.constant 0 : index
    %c0_36 = arith.constant 0 : index
    %c0_37 = arith.constant 0 : index
    %34 = vector.load %arg6[%c0_35, %c0_36, %c0_37] : memref<2x64x1xf32, #tpu.memory_space<vmem>>, vector<1x64x1xf32>
    %35 = vector.shape_cast %34 : vector<1x64x1xf32> to vector<64x1xf32>
    %36 = vector.broadcast %35 : vector<64x1xf32> to vector<64x256xf32>
    %37 = arith.mulf %33, %36 : vector<64x256xf32>
    %c1_38 = arith.constant 1 : index
    %c0_39 = arith.constant 0 : index
    %c0_40 = arith.constant 0 : index
    %38 = vector.load %arg6[%c1_38, %c0_39, %c0_40] : memref<2x64x1xf32, #tpu.memory_space<vmem>>, vector<1x64x1xf32>
    %39 = vector.shape_cast %38 : vector<1x64x1xf32> to vector<64x1xf32>
    %40 = vector.broadcast %39 : vector<64x1xf32> to vector<64x256xf32>
    %41 = arith.addf %37, %40 : vector<64x256xf32>
    %cst_41 = arith.constant 0.000000e+00 : f32
    %42 = vector.broadcast %cst_41 : f32 to vector<64x256xf32>
    %43 = arith.maximumf %41, %42 : vector<64x256xf32>
    %c0_42 = arith.constant 0 : index
    %c0_43 = arith.constant 0 : index
    %c0_44 = arith.constant 0 : index
    %44 = vector.load %arg4[%c0_42, %c0_43, %c0_44] : memref<9x64x64xf32, #tpu.memory_space<vmem>>, vector<1x64x64xf32>
    %45 = vector.shape_cast %44 : vector<1x64x64xf32> to vector<64x64xf32>
    %cst_45 = arith.constant dense<0.000000e+00> : vector<128x64xf32>
    %46 = tpu.matmul %3, %45, %cst_45 {dimension_numbers = #tpu.dot_dimension_numbers<[1], [0], [0], [1], [0, 0, 1, 1], [], []>} : vector<128x64xf32>, vector<64x64xf32>, vector<128x64xf32> -> vector<128x64xf32>
    %c1_46 = arith.constant 1 : index
    %c0_47 = arith.constant 0 : index
    %c0_48 = arith.constant 0 : index
    %47 = vector.load %arg4[%c1_46, %c0_47, %c0_48] : memref<9x64x64xf32, #tpu.memory_space<vmem>>, vector<1x64x64xf32>
    %48 = vector.shape_cast %47 : vector<1x64x64xf32> to vector<64x64xf32>
    %cst_49 = arith.constant dense<0.000000e+00> : vector<128x64xf32>
    %49 = tpu.matmul %3, %48, %cst_49 {dimension_numbers = #tpu.dot_dimension_numbers<[1], [0], [0], [1], [0, 0, 1, 1], [], []>} : vector<128x64xf32>, vector<64x64xf32>, vector<128x64xf32> -> vector<128x64xf32>
    %c2_50 = arith.constant 2 : index
    %c0_51 = arith.constant 0 : index
    %c0_52 = arith.constant 0 : index
    %50 = vector.load %arg4[%c2_50, %c0_51, %c0_52] : memref<9x64x64xf32, #tpu.memory_space<vmem>>, vector<1x64x64xf32>
    %51 = vector.shape_cast %50 : vector<1x64x64xf32> to vector<64x64xf32>
    %cst_53 = arith.constant dense<0.000000e+00> : vector<128x64xf32>
    %52 = tpu.matmul %3, %51, %cst_53 {dimension_numbers = #tpu.dot_dimension_numbers<[1], [0], [0], [1], [0, 0, 1, 1], [], []>} : vector<128x64xf32>, vector<64x64xf32>, vector<128x64xf32> -> vector<128x64xf32>
    %c3_54 = arith.constant 3 : index
    %c0_55 = arith.constant 0 : index
    %c0_56 = arith.constant 0 : index
    %53 = vector.load %arg4[%c3_54, %c0_55, %c0_56] : memref<9x64x64xf32, #tpu.memory_space<vmem>>, vector<1x64x64xf32>
    %54 = vector.shape_cast %53 : vector<1x64x64xf32> to vector<64x64xf32>
    %cst_57 = arith.constant dense<0.000000e+00> : vector<128x64xf32>
    %55 = tpu.matmul %3, %54, %cst_57 {dimension_numbers = #tpu.dot_dimension_numbers<[1], [0], [0], [1], [0, 0, 1, 1], [], []>} : vector<128x64xf32>, vector<64x64xf32>, vector<128x64xf32> -> vector<128x64xf32>
    %c4_58 = arith.constant 4 : index
    %c0_59 = arith.constant 0 : index
    %c0_60 = arith.constant 0 : index
    %56 = vector.load %arg4[%c4_58, %c0_59, %c0_60] : memref<9x64x64xf32, #tpu.memory_space<vmem>>, vector<1x64x64xf32>
    %57 = vector.shape_cast %56 : vector<1x64x64xf32> to vector<64x64xf32>
    %cst_61 = arith.constant dense<0.000000e+00> : vector<128x64xf32>
    %58 = tpu.matmul %3, %57, %cst_61 {dimension_numbers = #tpu.dot_dimension_numbers<[1], [0], [0], [1], [0, 0, 1, 1], [], []>} : vector<128x64xf32>, vector<64x64xf32>, vector<128x64xf32> -> vector<128x64xf32>
    %c5_62 = arith.constant 5 : index
    %c0_63 = arith.constant 0 : index
    %c0_64 = arith.constant 0 : index
    %59 = vector.load %arg4[%c5_62, %c0_63, %c0_64] : memref<9x64x64xf32, #tpu.memory_space<vmem>>, vector<1x64x64xf32>
    %60 = vector.shape_cast %59 : vector<1x64x64xf32> to vector<64x64xf32>
    %cst_65 = arith.constant dense<0.000000e+00> : vector<128x64xf32>
    %61 = tpu.matmul %3, %60, %cst_65 {dimension_numbers = #tpu.dot_dimension_numbers<[1], [0], [0], [1], [0, 0, 1, 1], [], []>} : vector<128x64xf32>, vector<64x64xf32>, vector<128x64xf32> -> vector<128x64xf32>
    %c6_66 = arith.constant 6 : index
    %c0_67 = arith.constant 0 : index
    %c0_68 = arith.constant 0 : index
    %62 = vector.load %arg4[%c6_66, %c0_67, %c0_68] : memref<9x64x64xf32, #tpu.memory_space<vmem>>, vector<1x64x64xf32>
    %63 = vector.shape_cast %62 : vector<1x64x64xf32> to vector<64x64xf32>
    %cst_69 = arith.constant dense<0.000000e+00> : vector<128x64xf32>
    %64 = tpu.matmul %3, %63, %cst_69 {dimension_numbers = #tpu.dot_dimension_numbers<[1], [0], [0], [1], [0, 0, 1, 1], [], []>} : vector<128x64xf32>, vector<64x64xf32>, vector<128x64xf32> -> vector<128x64xf32>
    %c7_70 = arith.constant 7 : index
    %c0_71 = arith.constant 0 : index
    %c0_72 = arith.constant 0 : index
    %65 = vector.load %arg4[%c7_70, %c0_71, %c0_72] : memref<9x64x64xf32, #tpu.memory_space<vmem>>, vector<1x64x64xf32>
    %66 = vector.shape_cast %65 : vector<1x64x64xf32> to vector<64x64xf32>
    %cst_73 = arith.constant dense<0.000000e+00> : vector<128x64xf32>
    %67 = tpu.matmul %3, %66, %cst_73 {dimension_numbers = #tpu.dot_dimension_numbers<[1], [0], [0], [1], [0, 0, 1, 1], [], []>} : vector<128x64xf32>, vector<64x64xf32>, vector<128x64xf32> -> vector<128x64xf32>
    %c8_74 = arith.constant 8 : index
    %c0_75 = arith.constant 0 : index
    %c0_76 = arith.constant 0 : index
    %68 = vector.load %arg4[%c8_74, %c0_75, %c0_76] : memref<9x64x64xf32, #tpu.memory_space<vmem>>, vector<1x64x64xf32>
    %69 = vector.shape_cast %68 : vector<1x64x64xf32> to vector<64x64xf32>
    %cst_77 = arith.constant dense<0.000000e+00> : vector<128x64xf32>
    %70 = tpu.matmul %3, %69, %cst_77 {dimension_numbers = #tpu.dot_dimension_numbers<[1], [0], [0], [1], [0, 0, 1, 1], [], []>} : vector<128x64xf32>, vector<64x64xf32>, vector<128x64xf32> -> vector<128x64xf32>
    %71 = tpu.concatenate %46, %49, %52, %55, %58, %61, %64, %67, %70 in 0 : vector<128x64xf32>, vector<128x64xf32>, vector<128x64xf32>, vector<128x64xf32>, vector<128x64xf32>, vector<128x64xf32>, vector<128x64xf32>, vector<128x64xf32>, vector<128x64xf32> -> vector<1152x64xf32>
    %c0_78 = arith.constant 0 : index
    %c0_79 = arith.constant 0 : index
    %72 = vector.load %arg7[%c0_78, %c0_79] : memref<64x1152xf32, #tpu.memory_space<vmem>>, vector<64x1152xf32>
    %cst_80 = arith.constant dense<0.000000e+00> : vector<64x64xf32>
    %73 = tpu.matmul %72, %71, %cst_80 {dimension_numbers = #tpu.dot_dimension_numbers<[1], [0], [0], [1], [0, 0, 1, 1], [], []>} : vector<64x1152xf32>, vector<1152x64xf32>, vector<64x64xf32> -> vector<64x64xf32>
    %c0_81 = arith.constant 0 : index
    %c0_82 = arith.constant 0 : index
    %c0_83 = arith.constant 0 : index
    %74 = vector.load %arg8[%c0_81, %c0_82, %c0_83] : memref<2x64x1xf32, #tpu.memory_space<vmem>>, vector<1x64x1xf32>
    %75 = vector.shape_cast %74 : vector<1x64x1xf32> to vector<64x1xf32>
    %76 = vector.broadcast %75 : vector<64x1xf32> to vector<64x64xf32>
    %77 = arith.mulf %73, %76 : vector<64x64xf32>
    %c1_84 = arith.constant 1 : index
    %c0_85 = arith.constant 0 : index
    %c0_86 = arith.constant 0 : index
    %78 = vector.load %arg8[%c1_84, %c0_85, %c0_86] : memref<2x64x1xf32, #tpu.memory_space<vmem>>, vector<1x64x1xf32>
    %79 = vector.shape_cast %78 : vector<1x64x1xf32> to vector<64x1xf32>
    %80 = vector.broadcast %79 : vector<64x1xf32> to vector<64x64xf32>
    %81 = arith.addf %77, %80 : vector<64x64xf32>
    %cst_87 = arith.constant 0.000000e+00 : f32
    %82 = vector.broadcast %cst_87 : f32 to vector<64x64xf32>
    %83 = arith.maximumf %81, %82 : vector<64x64xf32>
    %c0_88 = arith.constant 0 : index
    %c0_89 = arith.constant 0 : index
    %84 = vector.load %arg9[%c0_88, %c0_89] : memref<64x256xf32, #tpu.memory_space<vmem>>, vector<64x256xf32>
    %cst_90 = arith.constant dense<0.000000e+00> : vector<64x256xf32>
    %85 = tpu.matmul %83, %84, %cst_90 {dimension_numbers = #tpu.dot_dimension_numbers<[1], [0], [0], [1], [0, 0, 1, 1], [], []>} : vector<64x64xf32>, vector<64x256xf32>, vector<64x256xf32> -> vector<64x256xf32>
    %86 = arith.addf %43, %85 : vector<64x256xf32>
    %cst_91 = arith.constant 0.000000e+00 : f32
    %87 = vector.broadcast %cst_91 : f32 to vector<64x256xf32>
    %c0_92 = arith.constant 0 : index
    %c0_93 = arith.constant 0 : index
    %c0_94 = arith.constant 0 : index
    %88 = vector.load %arg10[%c0_92, %c0_93, %c0_94] : memref<9x64x1xf32, #tpu.memory_space<vmem>>, vector<1x64x1xf32>
    %89 = vector.shape_cast %88 : vector<1x64x1xf32> to vector<64x1xf32>
    %c0_95 = arith.constant 0 : index
    %c0_96 = arith.constant 0 : index
    %c0_97 = arith.constant 0 : index
    %90 = vector.load %arg3[%c0_95, %c0_96, %c0_97] : memref<9x256x256xf32, #tpu.memory_space<vmem>>, vector<1x256x256xf32>
    %91 = vector.shape_cast %90 : vector<1x256x256xf32> to vector<256x256xf32>
    %cst_98 = arith.constant dense<0.000000e+00> : vector<64x256xf32>
    %92 = tpu.matmul %86, %91, %cst_98 {dimension_numbers = #tpu.dot_dimension_numbers<[1], [0], [0], [1], [0, 0, 1, 1], [], []>} : vector<64x256xf32>, vector<256x256xf32>, vector<64x256xf32> -> vector<64x256xf32>
    %93 = vector.broadcast %89 : vector<64x1xf32> to vector<64x256xf32>
    %94 = arith.mulf %93, %92 : vector<64x256xf32>
    %95 = arith.addf %87, %94 : vector<64x256xf32>
    %c1_99 = arith.constant 1 : index
    %c0_100 = arith.constant 0 : index
    %c0_101 = arith.constant 0 : index
    %96 = vector.load %arg10[%c1_99, %c0_100, %c0_101] : memref<9x64x1xf32, #tpu.memory_space<vmem>>, vector<1x64x1xf32>
    %97 = vector.shape_cast %96 : vector<1x64x1xf32> to vector<64x1xf32>
    %c1_102 = arith.constant 1 : index
    %c0_103 = arith.constant 0 : index
    %c0_104 = arith.constant 0 : index
    %98 = vector.load %arg3[%c1_102, %c0_103, %c0_104] : memref<9x256x256xf32, #tpu.memory_space<vmem>>, vector<1x256x256xf32>
    %99 = vector.shape_cast %98 : vector<1x256x256xf32> to vector<256x256xf32>
    %cst_105 = arith.constant dense<0.000000e+00> : vector<64x256xf32>
    %100 = tpu.matmul %86, %99, %cst_105 {dimension_numbers = #tpu.dot_dimension_numbers<[1], [0], [0], [1], [0, 0, 1, 1], [], []>} : vector<64x256xf32>, vector<256x256xf32>, vector<64x256xf32> -> vector<64x256xf32>
    %101 = vector.broadcast %97 : vector<64x1xf32> to vector<64x256xf32>
    %102 = arith.mulf %101, %100 : vector<64x256xf32>
    %103 = arith.addf %95, %102 : vector<64x256xf32>
    %c2_106 = arith.constant 2 : index
    %c0_107 = arith.constant 0 : index
    %c0_108 = arith.constant 0 : index
    %104 = vector.load %arg10[%c2_106, %c0_107, %c0_108] : memref<9x64x1xf32, #tpu.memory_space<vmem>>, vector<1x64x1xf32>
    %105 = vector.shape_cast %104 : vector<1x64x1xf32> to vector<64x1xf32>
    %c2_109 = arith.constant 2 : index
    %c0_110 = arith.constant 0 : index
    %c0_111 = arith.constant 0 : index
    %106 = vector.load %arg3[%c2_109, %c0_110, %c0_111] : memref<9x256x256xf32, #tpu.memory_space<vmem>>, vector<1x256x256xf32>
    %107 = vector.shape_cast %106 : vector<1x256x256xf32> to vector<256x256xf32>
    %cst_112 = arith.constant dense<0.000000e+00> : vector<64x256xf32>
    %108 = tpu.matmul %86, %107, %cst_112 {dimension_numbers = #tpu.dot_dimension_numbers<[1], [0], [0], [1], [0, 0, 1, 1], [], []>} : vector<64x256xf32>, vector<256x256xf32>, vector<64x256xf32> -> vector<64x256xf32>
    %109 = vector.broadcast %105 : vector<64x1xf32> to vector<64x256xf32>
    %110 = arith.mulf %109, %108 : vector<64x256xf32>
    %111 = arith.addf %103, %110 : vector<64x256xf32>
    %c3_113 = arith.constant 3 : index
    %c0_114 = arith.constant 0 : index
    %c0_115 = arith.constant 0 : index
    %112 = vector.load %arg10[%c3_113, %c0_114, %c0_115] : memref<9x64x1xf32, #tpu.memory_space<vmem>>, vector<1x64x1xf32>
    %113 = vector.shape_cast %112 : vector<1x64x1xf32> to vector<64x1xf32>
    %c3_116 = arith.constant 3 : index
    %c0_117 = arith.constant 0 : index
    %c0_118 = arith.constant 0 : index
    %114 = vector.load %arg3[%c3_116, %c0_117, %c0_118] : memref<9x256x256xf32, #tpu.memory_space<vmem>>, vector<1x256x256xf32>
    %115 = vector.shape_cast %114 : vector<1x256x256xf32> to vector<256x256xf32>
    %cst_119 = arith.constant dense<0.000000e+00> : vector<64x256xf32>
    %116 = tpu.matmul %86, %115, %cst_119 {dimension_numbers = #tpu.dot_dimension_numbers<[1], [0], [0], [1], [0, 0, 1, 1], [], []>} : vector<64x256xf32>, vector<256x256xf32>, vector<64x256xf32> -> vector<64x256xf32>
    %117 = vector.broadcast %113 : vector<64x1xf32> to vector<64x256xf32>
    %118 = arith.mulf %117, %116 : vector<64x256xf32>
    %119 = arith.addf %111, %118 : vector<64x256xf32>
    %c4_120 = arith.constant 4 : index
    %c0_121 = arith.constant 0 : index
    %c0_122 = arith.constant 0 : index
    %120 = vector.load %arg10[%c4_120, %c0_121, %c0_122] : memref<9x64x1xf32, #tpu.memory_space<vmem>>, vector<1x64x1xf32>
    %121 = vector.shape_cast %120 : vector<1x64x1xf32> to vector<64x1xf32>
    %c4_123 = arith.constant 4 : index
    %c0_124 = arith.constant 0 : index
    %c0_125 = arith.constant 0 : index
    %122 = vector.load %arg3[%c4_123, %c0_124, %c0_125] : memref<9x256x256xf32, #tpu.memory_space<vmem>>, vector<1x256x256xf32>
    %123 = vector.shape_cast %122 : vector<1x256x256xf32> to vector<256x256xf32>
    %cst_126 = arith.constant dense<0.000000e+00> : vector<64x256xf32>
    %124 = tpu.matmul %86, %123, %cst_126 {dimension_numbers = #tpu.dot_dimension_numbers<[1], [0], [0], [1], [0, 0, 1, 1], [], []>} : vector<64x256xf32>, vector<256x256xf32>, vector<64x256xf32> -> vector<64x256xf32>
    %125 = vector.broadcast %121 : vector<64x1xf32> to vector<64x256xf32>
    %126 = arith.mulf %125, %124 : vector<64x256xf32>
    %127 = arith.addf %119, %126 : vector<64x256xf32>
    %c5_127 = arith.constant 5 : index
    %c0_128 = arith.constant 0 : index
    %c0_129 = arith.constant 0 : index
    %128 = vector.load %arg10[%c5_127, %c0_128, %c0_129] : memref<9x64x1xf32, #tpu.memory_space<vmem>>, vector<1x64x1xf32>
    %129 = vector.shape_cast %128 : vector<1x64x1xf32> to vector<64x1xf32>
    %c5_130 = arith.constant 5 : index
    %c0_131 = arith.constant 0 : index
    %c0_132 = arith.constant 0 : index
    %130 = vector.load %arg3[%c5_130, %c0_131, %c0_132] : memref<9x256x256xf32, #tpu.memory_space<vmem>>, vector<1x256x256xf32>
    %131 = vector.shape_cast %130 : vector<1x256x256xf32> to vector<256x256xf32>
    %cst_133 = arith.constant dense<0.000000e+00> : vector<64x256xf32>
    %132 = tpu.matmul %86, %131, %cst_133 {dimension_numbers = #tpu.dot_dimension_numbers<[1], [0], [0], [1], [0, 0, 1, 1], [], []>} : vector<64x256xf32>, vector<256x256xf32>, vector<64x256xf32> -> vector<64x256xf32>
    %133 = vector.broadcast %129 : vector<64x1xf32> to vector<64x256xf32>
    %134 = arith.mulf %133, %132 : vector<64x256xf32>
    %135 = arith.addf %127, %134 : vector<64x256xf32>
    %c6_134 = arith.constant 6 : index
    %c0_135 = arith.constant 0 : index
    %c0_136 = arith.constant 0 : index
    %136 = vector.load %arg10[%c6_134, %c0_135, %c0_136] : memref<9x64x1xf32, #tpu.memory_space<vmem>>, vector<1x64x1xf32>
    %137 = vector.shape_cast %136 : vector<1x64x1xf32> to vector<64x1xf32>
    %c6_137 = arith.constant 6 : index
    %c0_138 = arith.constant 0 : index
    %c0_139 = arith.constant 0 : index
    %138 = vector.load %arg3[%c6_137, %c0_138, %c0_139] : memref<9x256x256xf32, #tpu.memory_space<vmem>>, vector<1x256x256xf32>
    %139 = vector.shape_cast %138 : vector<1x256x256xf32> to vector<256x256xf32>
    %cst_140 = arith.constant dense<0.000000e+00> : vector<64x256xf32>
    %140 = tpu.matmul %86, %139, %cst_140 {dimension_numbers = #tpu.dot_dimension_numbers<[1], [0], [0], [1], [0, 0, 1, 1], [], []>} : vector<64x256xf32>, vector<256x256xf32>, vector<64x256xf32> -> vector<64x256xf32>
    %141 = vector.broadcast %137 : vector<64x1xf32> to vector<64x256xf32>
    %142 = arith.mulf %141, %140 : vector<64x256xf32>
    %143 = arith.addf %135, %142 : vector<64x256xf32>
    %c7_141 = arith.constant 7 : index
    %c0_142 = arith.constant 0 : index
    %c0_143 = arith.constant 0 : index
    %144 = vector.load %arg10[%c7_141, %c0_142, %c0_143] : memref<9x64x1xf32, #tpu.memory_space<vmem>>, vector<1x64x1xf32>
    %145 = vector.shape_cast %144 : vector<1x64x1xf32> to vector<64x1xf32>
    %c7_144 = arith.constant 7 : index
    %c0_145 = arith.constant 0 : index
    %c0_146 = arith.constant 0 : index
    %146 = vector.load %arg3[%c7_144, %c0_145, %c0_146] : memref<9x256x256xf32, #tpu.memory_space<vmem>>, vector<1x256x256xf32>
    %147 = vector.shape_cast %146 : vector<1x256x256xf32> to vector<256x256xf32>
    %cst_147 = arith.constant dense<0.000000e+00> : vector<64x256xf32>
    %148 = tpu.matmul %86, %147, %cst_147 {dimension_numbers = #tpu.dot_dimension_numbers<[1], [0], [0], [1], [0, 0, 1, 1], [], []>} : vector<64x256xf32>, vector<256x256xf32>, vector<64x256xf32> -> vector<64x256xf32>
    %149 = vector.broadcast %145 : vector<64x1xf32> to vector<64x256xf32>
    %150 = arith.mulf %149, %148 : vector<64x256xf32>
    %151 = arith.addf %143, %150 : vector<64x256xf32>
    %c8_148 = arith.constant 8 : index
    %c0_149 = arith.constant 0 : index
    %c0_150 = arith.constant 0 : index
    %152 = vector.load %arg10[%c8_148, %c0_149, %c0_150] : memref<9x64x1xf32, #tpu.memory_space<vmem>>, vector<1x64x1xf32>
    %153 = vector.shape_cast %152 : vector<1x64x1xf32> to vector<64x1xf32>
    %c8_151 = arith.constant 8 : index
    %c0_152 = arith.constant 0 : index
    %c0_153 = arith.constant 0 : index
    %154 = vector.load %arg3[%c8_151, %c0_152, %c0_153] : memref<9x256x256xf32, #tpu.memory_space<vmem>>, vector<1x256x256xf32>
    %155 = vector.shape_cast %154 : vector<1x256x256xf32> to vector<256x256xf32>
    %cst_154 = arith.constant dense<0.000000e+00> : vector<64x256xf32>
    %156 = tpu.matmul %86, %155, %cst_154 {dimension_numbers = #tpu.dot_dimension_numbers<[1], [0], [0], [1], [0, 0, 1, 1], [], []>} : vector<64x256xf32>, vector<256x256xf32>, vector<64x256xf32> -> vector<64x256xf32>
    %157 = vector.broadcast %153 : vector<64x1xf32> to vector<64x256xf32>
    %158 = arith.mulf %157, %156 : vector<64x256xf32>
    %159 = arith.addf %151, %158 : vector<64x256xf32>
    %c0_155 = arith.constant 0 : index
    %c0_156 = arith.constant 0 : index
    %c0_157 = arith.constant 0 : index
    %160 = vector.load %arg11[%c0_155, %c0_156, %c0_157] : memref<2x64x1xf32, #tpu.memory_space<vmem>>, vector<1x64x1xf32>
    %161 = vector.shape_cast %160 : vector<1x64x1xf32> to vector<64x1xf32>
    %162 = vector.broadcast %161 : vector<64x1xf32> to vector<64x256xf32>
    %163 = arith.mulf %159, %162 : vector<64x256xf32>
    %c1_158 = arith.constant 1 : index
    %c0_159 = arith.constant 0 : index
    %c0_160 = arith.constant 0 : index
    %164 = vector.load %arg11[%c1_158, %c0_159, %c0_160] : memref<2x64x1xf32, #tpu.memory_space<vmem>>, vector<1x64x1xf32>
    %165 = vector.shape_cast %164 : vector<1x64x1xf32> to vector<64x1xf32>
    %166 = vector.broadcast %165 : vector<64x1xf32> to vector<64x256xf32>
    %167 = arith.addf %163, %166 : vector<64x256xf32>
    %c0_161 = arith.constant 0 : index
    %c0_162 = arith.constant 0 : index
    %168 = vector.load %arg12[%c0_161, %c0_162] : memref<8x64xf32, #tpu.memory_space<vmem>>, vector<8x64xf32>
    %cst_163 = arith.constant dense<0.000000e+00> : vector<8x256xf32>
    %169 = tpu.matmul %168, %167, %cst_163 {dimension_numbers = #tpu.dot_dimension_numbers<[1], [0], [0], [1], [0, 0, 1, 1], [], []>} : vector<8x64xf32>, vector<64x256xf32>, vector<8x256xf32> -> vector<8x256xf32>
    %c0_164 = arith.constant 0 : index
    %c0_165 = arith.constant 0 : index
    %170 = vector.load %arg13[%c0_164, %c0_165] : memref<8x1xf32, #tpu.memory_space<vmem>>, vector<8x1xf32>
    %171 = vector.broadcast %170 : vector<8x1xf32> to vector<8x256xf32>
    %172 = arith.addf %169, %171 : vector<8x256xf32>
    %c0_166 = arith.constant 0 : index
    %c0_167 = arith.constant 0 : index
    %c0_168 = arith.constant 0 : index
    %173 = vector.load %arg14[%c0_166, %c0_167, %c0_168] : memref<1x8x256xf32, #tpu.memory_space<vmem>>, vector<1x8x256xf32>
    %174 = vector.shape_cast %173 : vector<1x8x256xf32> to vector<8x256xf32>
    %175 = vector.shape_cast %172 : vector<8x256xf32> to vector<1x8x256xf32>
    tpu.vector_store %arg14[%c0_166, %c0_167, %c0_168], %175 {strides = array<i32>} : memref<1x8x256xf32, #tpu.memory_space<vmem>>, vector<1x8x256xf32>,
    return
  }
  func.func @transform_0(%arg0: i32) -> (i32, i32, i32) {
    %c0_i32 = arith.constant 0 : i32
    %c0_i32_0 = arith.constant 0 : i32
    %c0_i32_1 = arith.constant 0 : i32
    return %arg0, %c0_i32, %c0_i32_0 : i32, i32, i32
  }
  func.func @transform_1(%arg0: i32) -> (i32, i32, i32) {
    %c0_i32 = arith.constant 0 : i32
    %c0_i32_0 = arith.constant 0 : i32
    %c0_i32_1 = arith.constant 0 : i32
    return %arg0, %c0_i32, %c0_i32_0 : i32, i32, i32
  }
  func.func @transform_2(%arg0: i32) -> (i32, i32, i32) {
    %c0_i32 = arith.constant 0 : i32
    %c0_i32_0 = arith.constant 0 : i32
    %c0_i32_1 = arith.constant 0 : i32
    %c0_i32_2 = arith.constant 0 : i32
    return %c0_i32, %c0_i32_0, %c0_i32_1 : i32, i32, i32
  }
  func.func @transform_3(%arg0: i32) -> (i32, i32, i32) {
    %c0_i32 = arith.constant 0 : i32
    %c0_i32_0 = arith.constant 0 : i32
    %c0_i32_1 = arith.constant 0 : i32
    %c0_i32_2 = arith.constant 0 : i32
    return %c0_i32, %c0_i32_0, %c0_i32_1 : i32, i32, i32
  }
  func.func @transform_4(%arg0: i32) -> (i32, i32) {
    %c0_i32 = arith.constant 0 : i32
    %c0_i32_0 = arith.constant 0 : i32
    %c0_i32_1 = arith.constant 0 : i32
    return %c0_i32, %c0_i32_0 : i32, i32
  }
  func.func @transform_5(%arg0: i32) -> (i32, i32, i32) {
    %c0_i32 = arith.constant 0 : i32
    %c0_i32_0 = arith.constant 0 : i32
    %c0_i32_1 = arith.constant 0 : i32
    %c0_i32_2 = arith.constant 0 : i32
    return %c0_i32, %c0_i32_0, %c0_i32_1 : i32, i32, i32
  }
  func.func @transform_6(%arg0: i32) -> (i32, i32) {
    %c0_i32 = arith.constant 0 : i32
    %c0_i32_0 = arith.constant 0 : i32
    %c0_i32_1 = arith.constant 0 : i32
    return %c0_i32, %c0_i32_0 : i32, i32
  }
  func.func @transform_7(%arg0: i32) -> (i32, i32, i32) {
    %c0_i32 = arith.constant 0 : i32
    %c0_i32_0 = arith.constant 0 : i32
    %c0_i32_1 = arith.constant 0 : i32
    %c0_i32_2 = arith.constant 0 : i32
    return %c0_i32, %c0_i32_0, %c0_i32_1 : i32, i32, i32
  }
  func.func @transform_8(%arg0: i32) -> (i32, i32) {
    %c0_i32 = arith.constant 0 : i32
    %c0_i32_0 = arith.constant 0 : i32
    %c0_i32_1 = arith.constant 0 : i32
    return %c0_i32, %c0_i32_0 : i32, i32
  }
  func.func @transform_9(%arg0: i32) -> (i32, i32, i32) {
    %c0_i32 = arith.constant 0 : i32
    %c0_i32_0 = arith.constant 0 : i32
    %c0_i32_1 = arith.constant 0 : i32
    %c0_i32_2 = arith.constant 0 : i32
    return %c0_i32, %c0_i32_0, %c0_i32_1 : i32, i32, i32
  }
  func.func @transform_10(%arg0: i32) -> (i32, i32, i32) {
    %c0_i32 = arith.constant 0 : i32
    %c0_i32_0 = arith.constant 0 : i32
    %c0_i32_1 = arith.constant 0 : i32
    %c0_i32_2 = arith.constant 0 : i32
    return %c0_i32, %c0_i32_0, %c0_i32_1 : i32, i32, i32
  }
  func.func @transform_11(%arg0: i32) -> (i32, i32) {
    %c0_i32 = arith.constant 0 : i32
    %c0_i32_0 = arith.constant 0 : i32
    %c0_i32_1 = arith.constant 0 : i32
    return %c0_i32, %c0_i32_0 : i32, i32
  }
  func.func @transform_12(%arg0: i32) -> (i32, i32) {
    %c0_i32 = arith.constant 0 : i32
    %c0_i32_0 = arith.constant 0 : i32
    %c0_i32_1 = arith.constant 0 : i32
    return %c0_i32, %c0_i32_0 : i32, i32
  }
  func.func @transform_13(%arg0: i32) -> (i32, i32, i32) {
    %c0_i32 = arith.constant 0 : i32
    %c0_i32_0 = arith.constant 0 : i32
    %c0_i32_1 = arith.constant 0 : i32
    return %arg0, %c0_i32, %c0_i32_0 : i32, i32, i32
  }
}

</mosaic_0001>

<llo_original>
// kernel: rt_classifier_forward.1
$region0: #{rt_classifier_forward.1}
  #allocation0 [shape = 'u32[]', space=smem, size = 0x4, offset = 0x4, fixed_abs, tag = 'smem constant byte address 0x4 - core index']
  #allocation1 [shape = 'u32[144,128]{1,0:T(1,128)}', space=vmem, size = 0x12000, scoped, tag = 'internal scratch']
  %s0 = inlined_call_operand.vmem [shape: f32[2,64,256], index: 0, kind: input, shape index: {}]
  %s1 = inlined_call_operand.vmem [shape: f32[2,128,64], index: 1, kind: input, shape index: {}]
  %s2 = inlined_call_operand.hbm [shape: f32[9,256,256], index: 2, kind: input, shape index: {}]
  %s3 = inlined_call_operand.hbm [shape: f32[9,64,64], index: 3, kind: input, shape index: {}]
  %s4 = inlined_call_operand.hbm [shape: f32[64,576], index: 4, kind: input, shape index: {}]
  %s5 = inlined_call_operand.vmem [shape: f32[2,64,1], index: 5, kind: input, shape index: {}]
  %s6 = inlined_call_operand.hbm [shape: f32[64,1152], index: 6, kind: input, shape index: {}]
  %s7 = inlined_call_operand.vmem [shape: f32[2,64,1], index: 7, kind: input, shape index: {}]
  %s8 = inlined_call_operand.hbm [shape: f32[64,256], index: 8, kind: input, shape index: {}]
  %s9 = inlined_call_operand.vmem [shape: f32[9,64,1], index: 9, kind: input, shape index: {}]
  %s10 = inlined_call_operand.vmem [shape: f32[2,64,1], index: 10, kind: input, shape index: {}]
  %s11 = inlined_call_operand.hbm [shape: f32[8,64], index: 11, kind: input, shape index: {}]
  %s12 = inlined_call_operand.vmem [shape: f32[8,1], index: 12, kind: input, shape index: {}]
  %s13 = inlined_call_operand.vmem [shape: f32[2,8,256], index: 13, kind: output, shape index: {}]
  %s14 = sld [smem:[#allocation0]]
  $region109: #{rt_classifier_forward.1} parent=0
    _
  %s16 = ssub.s32 1, %s14
  %s17 = scalar_select 0, %s16, %s14
  $region1: #{rt_classifier_forward.1} parent=0
    #allocation2 [shape = 'u8[2359296]{0}', space=vmem, size = 0x240000, scoped, tag = 'input window, operand 2, single buffered']
    #allocation3 [shape = 's32[2]{0}', space=sflag, size = 0x8, scoped, tag = 'scoped memory for rt_classifier_forward.1']
    #allocation4 [shape = 'u8[294912]{0}', space=vmem, size = 0x48000, scoped, tag = 'input window, operand 3, single buffered']
    #allocation5 [shape = 's32[1]{0}', space=sflag, size = 0x4, scoped, tag = 'scoped memory for rt_classifier_forward.1']
    #allocation6 [shape = 'u8[163840]{0}', space=vmem, size = 0x28000, scoped, tag = 'input window, operand 4, single buffered']
    #allocation7 [shape = 'u8[294912]{0}', space=vmem, size = 0x48000, scoped, tag = 'input window, operand 6, single buffered']
    #allocation8 [shape = 's32[1]{0}', space=sflag, size = 0x4, scoped, tag = 'scoped memory for rt_classifier_forward.1']
    #allocation9 [shape = 'u8[65536]{0}', space=vmem, size = 0x10000, scoped, tag = 'input window, operand 8, single buffered']
    #allocation10 [shape = 'u8[4096]{0}', space=vmem, size = 0x1000, scoped, tag = 'input window, operand 11, single buffered']
    #allocation11 [shape = 's32[1]{0}', space=sflag, size = 0x4, scoped, tag = 'scoped memory for rt_classifier_forward.1']
    %18 = vsyncpa [#allocation3], 0
    %19 = vsyncpa [#allocation5], 0
    %20 = vsyncpa [#allocation8], 0
    %21 = vsyncpa [#allocation11], 0
    loop: start=0, step=1, limit=4
    $region2: #{rt_classifier_forward.1} parent=1 // loop_pre_header
      _
    $region3: #{rt_classifier_forward.1} parent=1 // loop_header
      %s23 = sphi 0, %s27
      %p24 = scmp.ge.s32.totalorder %s23, 4
      %s33 = sphi 0, %s35
      %s36 = sphi 0, %s33
      %s37 = sphi 0, %s36
      %s53 = sphi 0, %s37
      %s59 = sphi 0, %s61
      %s62 = sphi 0, %s59
      %s63 = sphi 0, %s62
      %s79 = sphi 0, %s63
      %s83 = sphi 0, %s83
      %s85 = sphi 0, %s83
      %s86 = sphi 0, %s85
      %s100 = sphi 0, %s86
      %s104 = sphi 0, %s104
      %s106 = sphi 0, %s104
      %s107 = sphi 0, %s106
      %s121 = sphi 0, %s107
      %s125 = sphi 0, %s125
      %s127 = sphi 0, %s125
      %s128 = sphi 0, %s127
      %s142 = sphi 0, %s128
      %s146 = sphi 0, %s146
      %s148 = sphi 0, %s146
      %s149 = sphi 0, %s148
      %s163 = sphi 0, %s149
      %s167 = sphi 0, %s167
      %s169 = sphi 0, %s167
      %s170 = sphi 0, %s169
      %s184 = sphi 0, %s170
      %s188 = sphi 0, %s188
      %s190 = sphi 0, %s188
      %s191 = sphi 0, %s190
      %s205 = sphi 0, %s191
      %s209 = sphi 0, %s209
      %s211 = sphi 0, %s209
      %s212 = sphi 0, %s211
      %s226 = sphi 0, %s212
      %s230 = sphi 0, %s230
      %s232 = sphi 0, %s230
      %s233 = sphi 0, %s232
      %s247 = sphi 0, %s233
      %s251 = sphi 0, %s251
      %s253 = sphi 0, %s251
      %s254 = sphi 0, %s253
      %s268 = sphi 0, %s254
      %s272 = sphi 0, %s272
      %s274 = sphi 0, %s272
      %s275 = sphi 0, %s274
      %s289 = sphi 0, %s275
      %s293 = sphi 0, %s293
      %s295 = sphi 0, %s293
      %s296 = sphi 0, %s295
      %s310 = sphi 0, %s296
      %s316 = sphi 0, %s318
      %s319 = sphi 0, %s316
      %s320 = sphi 0, %s319
      %s336 = sphi 0, %s320
    $region4: #{rt_classifier_forward.1} parent=1 // loop_header_branch
      %26 = sbr.rel (%p24) target = $region8
    $region5: #{rt_classifier_forward.1} parent=1 // loop_body
      %s28 = ssub.s32 %s23, 1
      %s29 = ssub.s32 %s23, 2
      %s30 = sadd.s32 %s23, 1
      %s31 = ssub.s32 %s23, %s30
      %p32 = scmp.eq.s32.totalorder %s31, 0
      %s34 = sadd.s32 %s33, 1
      %s35 = scalar_select %p32, %s33, %s34
      %p38 = pneg %p32
      %p39 = scmp.eq.s32.totalorder %s23, 1
      %p40 = por %p38, %p39
      %p41 = scmp.ne.s32.totalorder %s33, %s36
      %p42 = scmp.eq.s32.totalorder %s23, 0
      %p43 = por %p41, %p42
      %p44 = scmp.ne.s32.totalorder %s33, %s36
      %p45 = scmp.eq.s32.totalorder %s28, 1
      %p46 = por %p44, %p45
      %p47 = scmp.ne.s32.totalorder %s36, %s37
      %p48 = scmp.eq.s32.totalorder %s28, 0
      %p49 = por %p47, %p48
      %p50 = scmp.ne.s32.totalorder %s36, %s37
      %p51 = scmp.eq.s32.totalorder %s29, 1
      %p52 = por %p50, %p51
      %p54 = scmp.ne.s32.totalorder %s37, %s53
      %p55 = scmp.eq.s32.totalorder %s29, 0
      %p56 = por %p54, %p55
      %s57 = ssub.s32 %s23, %s30
      %p58 = scmp.eq.s32.totalorder %s57, 0
      %s60 = sadd.s32 %s59, 1
      %s61 = scalar_select %p58, %s59, %s60
      %p64 = pneg %p58
      %p65 = scmp.eq.s32.totalorder %s23, 1
      %p66 = por %p64, %p65
      %p67 = scmp.ne.s32.totalorder %s59, %s62
      %p68 = scmp.eq.s32.totalorder %s23, 0
      %p69 = por %p67, %p68
      %p70 = scmp.ne.s32.totalorder %s59, %s62
      %p71 = scmp.eq.s32.totalorder %s28, 1
      %p72 = por %p70, %p71
      %p73 = scmp.ne.s32.totalorder %s62, %s63
      %p74 = scmp.eq.s32.totalorder %s28, 0
      %p75 = por %p73, %p74
      %p76 = scmp.ne.s32.totalorder %s62, %s63
      %p77 = scmp.eq.s32.totalorder %s29, 1
      %p78 = por %p76, %p77
      %p80 = scmp.ne.s32.totalorder %s63, %s79
      %p81 = scmp.eq.s32.totalorder %s29, 0
      %p82 = por %p80, %p81
      %s84 = sadd.s32 %s83, 1
      %p87 = scmp.eq.s32.totalorder %s23, 1
      %p88 = scmp.ne.s32.totalorder %s83, %s85
      %p89 = scmp.eq.s32.totalorder %s23, 0
      %p90 = por %p88, %p89
      %p91 = scmp.ne.s32.totalorder %s83, %s85
      %p92 = scmp.eq.s32.totalorder %s28, 1
      %p93 = por %p91, %p92
      %p94 = scmp.ne.s32.totalorder %s85, %s86
      %p95 = scmp.eq.s32.totalorder %s28, 0
      %p96 = por %p94, %p95
      %p97 = scmp.ne.s32.totalorder %s85, %s86
      %p98 = scmp.eq.s32.totalorder %s29, 1
      %p99 = por %p97, %p98
      %p101 = scmp.ne.s32.totalorder %s86, %s100
      %p102 = scmp.eq.s32.totalorder %s29, 0
      %p103 = por %p101, %p102
      %s105 = sadd.s32 %s104, 1
      %p108 = scmp.eq.s32.totalorder %s23, 1
      %p109 = scmp.ne.s32.totalorder %s104, %s106
      %p110 = scmp.eq.s32.totalorder %s23, 0
      %p111 = por %p109, %p110
      %p112 = scmp.ne.s32.totalorder %s104, %s106
      %p113 = scmp.eq.s32.totalorder %s28, 1
      %p114 = por %p112, %p113
      %p115 = scmp.ne.s32.totalorder %s106, %s107
      %p116 = scmp.eq.s32.totalorder %s28, 0
      %p117 = por %p115, %p116
      %p118 = scmp.ne.s32.totalorder %s106, %s107
      %p119 = scmp.eq.s32.totalorder %s29, 1
      %p120 = por %p118, %p119
      %p122 = scmp.ne.s32.totalorder %s107, %s121
      %p123 = scmp.eq.s32.totalorder %s29, 0
      %p124 = por %p122, %p123
      %s126 = sadd.s32 %s125, 1
      %p129 = scmp.eq.s32.totalorder %s23, 1
      %p130 = scmp.ne.s32.totalorder %s125, %s127
      %p131 = scmp.eq.s32.totalorder %s23, 0
      %p132 = por %p130, %p131
      %p133 = scmp.ne.s32.totalorder %s125, %s127
      %p134 = scmp.eq.s32.totalorder %s28, 1
      %p135 = por %p133, %p134
      %p136 = scmp.ne.s32.totalorder %s127, %s128
      %p137 = scmp.eq.s32.totalorder %s28, 0
      %p138 = por %p136, %p137
      %p139 = scmp.ne.s32.totalorder %s127, %s128
      %p140 = scmp.eq.s32.totalorder %s29, 1
      %p141 = por %p139, %p140
      %p143 = scmp.ne.s32.totalorder %s128, %s142
      %p144 = scmp.eq.s32.totalorder %s29, 0
      %p145 = por %p143, %p144
      %s147 = sadd.s32 %s146, 1
      %p150 = scmp.eq.s32.totalorder %s23, 1
      %p151 = scmp.ne.s32.totalorder %s146, %s148
      %p152 = scmp.eq.s32.totalorder %s23, 0
      %p153 = por %p151, %p152
      %p154 = scmp.ne.s32.totalorder %s146, %s148
      %p155 = scmp.eq.s32.totalorder %s28, 1
      %p156 = por %p154, %p155
      %p157 = scmp.ne.s32.totalorder %s148, %s149
      %p158 = scmp.eq.s32.totalorder %s28, 0
      %p159 = por %p157, %p158
      %p160 = scmp.ne.s32.totalorder %s148, %s149
      %p161 = scmp.eq.s32.totalorder %s29, 1
      %p162 = por %p160, %p161
      %p164 = scmp.ne.s32.totalorder %s149, %s163
      %p165 = scmp.eq.s32.totalorder %s29, 0
      %p166 = por %p164, %p165
      %s168 = sadd.s32 %s167, 1
      %p171 = scmp.eq.s32.totalorder %s23, 1
      %p172 = scmp.ne.s32.totalorder %s167, %s169
      %p173 = scmp.eq.s32.totalorder %s23, 0
      %p174 = por %p172, %p173
      %p175 = scmp.ne.s32.totalorder %s167, %s169
      %p176 = scmp.eq.s32.totalorder %s28, 1
      %p177 = por %p175, %p176
      %p178 = scmp.ne.s32.totalorder %s169, %s170
      %p179 = scmp.eq.s32.totalorder %s28, 0
      %p180 = por %p178, %p179
      %p181 = scmp.ne.s32.totalorder %s169, %s170
      %p182 = scmp.eq.s32.totalorder %s29, 1
      %p183 = por %p181, %p182
      %p185 = scmp.ne.s32.totalorder %s170, %s184
      %p186 = scmp.eq.s32.totalorder %s29, 0
      %p187 = por %p185, %p186
      %s189 = sadd.s32 %s188, 1
      %p192 = scmp.eq.s32.totalorder %s23, 1
      %p193 = scmp.ne.s32.totalorder %s188, %s190
      %p194 = scmp.eq.s32.totalorder %s23, 0
      %p195 = por %p193, %p194
      %p196 = scmp.ne.s32.totalorder %s188, %s190
      %p197 = scmp.eq.s32.totalorder %s28, 1
      %p198 = por %p196, %p197
      %p199 = scmp.ne.s32.totalorder %s190, %s191
      %p200 = scmp.eq.s32.totalorder %s28, 0
      %p201 = por %p199, %p200
      %p202 = scmp.ne.s32.totalorder %s190, %s191
      %p203 = scmp.eq.s32.totalorder %s29, 1
      %p204 = por %p202, %p203
      %p206 = scmp.ne.s32.totalorder %s191, %s205
      %p207 = scmp.eq.s32.totalorder %s29, 0
      %p208 = por %p206, %p207
      %s210 = sadd.s32 %s209, 1
      %p213 = scmp.eq.s32.totalorder %s23, 1
      %p214 = scmp.ne.s32.totalorder %s209, %s211
      %p215 = scmp.eq.s32.totalorder %s23, 0
      %p216 = por %p214, %p215
      %p217 = scmp.ne.s32.totalorder %s209, %s211
      %p218 = scmp.eq.s32.totalorder %s28, 1
      %p219 = por %p217, %p218
      %p220 = scmp.ne.s32.totalorder %s211, %s212
      %p221 = scmp.eq.s32.totalorder %s28, 0
      %p222 = por %p220, %p221
      %p223 = scmp.ne.s32.totalorder %s211, %s212
      %p224 = scmp.eq.s32.totalorder %s29, 1
      %p225 = por %p223, %p224
      %p227 = scmp.ne.s32.totalorder %s212, %s226
      %p228 = scmp.eq.s32.totalorder %s29, 0
      %p229 = por %p227, %p228
      %s231 = sadd.s32 %s230, 1
      %p234 = scmp.eq.s32.totalorder %s23, 1
      %p235 = scmp.ne.s32.totalorder %s230, %s232
      %p236 = scmp.eq.s32.totalorder %s23, 0
      %p237 = por %p235, %p236
      %p238 = scmp.ne.s32.totalorder %s230, %s232
      %p239 = scmp.eq.s32.totalorder %s28, 1
      %p240 = por %p238, %p239
      %p241 = scmp.ne.s32.totalorder %s232, %s233
      %p242 = scmp.eq.s32.totalorder %s28, 0
      %p243 = por %p241, %p242
      %p244 = scmp.ne.s32.totalorder %s232, %s233
      %p245 = scmp.eq.s32.totalorder %s29, 1
      %p246 = por %p244, %p245
      %p248 = scmp.ne.s32.totalorder %s233, %s247
      %p249 = scmp.eq.s32.totalorder %s29, 0
      %p250 = por %p248, %p249
      %s252 = sadd.s32 %s251, 1
      %p255 = scmp.eq.s32.totalorder %s23, 1
      %p256 = scmp.ne.s32.totalorder %s251, %s253
      %p257 = scmp.eq.s32.totalorder %s23, 0
      %p258 = por %p256, %p257
      %p259 = scmp.ne.s32.totalorder %s251, %s253
      %p260 = scmp.eq.s32.totalorder %s28, 1
      %p261 = por %p259, %p260
      %p262 = scmp.ne.s32.totalorder %s253, %s254
      %p263 = scmp.eq.s32.totalorder %s28, 0
      %p264 = por %p262, %p263
      %p265 = scmp.ne.s32.totalorder %s253, %s254
      %p266 = scmp.eq.s32.totalorder %s29, 1
      %p267 = por %p265, %p266
      %p269 = scmp.ne.s32.totalorder %s254, %s268
      %p270 = scmp.eq.s32.totalorder %s29, 0
      %p271 = por %p269, %p270
      %s273 = sadd.s32 %s272, 1
      %p276 = scmp.eq.s32.totalorder %s23, 1
      %p277 = scmp.ne.s32.totalorder %s272, %s274
      %p278 = scmp.eq.s32.totalorder %s23, 0
      %p279 = por %p277, %p278
      %p280 = scmp.ne.s32.totalorder %s272, %s274
      %p281 = scmp.eq.s32.totalorder %s28, 1
      %p282 = por %p280, %p281
      %p283 = scmp.ne.s32.totalorder %s274, %s275
      %p284 = scmp.eq.s32.totalorder %s28, 0
      %p285 = por %p283, %p284
      %p286 = scmp.ne.s32.totalorder %s274, %s275
      %p287 = scmp.eq.s32.totalorder %s29, 1
      %p288 = por %p286, %p287
      %p290 = scmp.ne.s32.totalorder %s275, %s289
      %p291 = scmp.eq.s32.totalorder %s29, 0
      %p292 = por %p290, %p291
      %s294 = sadd.s32 %s293, 1
      %p297 = scmp.eq.s32.totalorder %s23, 1
      %p298 = scmp.ne.s32.totalorder %s293, %s295
      %p299 = scmp.eq.s32.totalorder %s23, 0
      %p300 = por %p298, %p299
      %p301 = scmp.ne.s32.totalorder %s293, %s295
      %p302 = scmp.eq.s32.totalorder %s28, 1
      %p303 = por %p301, %p302
      %p304 = scmp.ne.s32.totalorder %s295, %s296
      %p305 = scmp.eq.s32.totalorder %s28, 0
      %p306 = por %p304, %p305
      %p307 = scmp.ne.s32.totalorder %s295, %s296
      %p308 = scmp.eq.s32.totalorder %s29, 1
      %p309 = por %p307, %p308
      %p311 = scmp.ne.s32.totalorder %s296, %s310
      %p312 = scmp.eq.s32.totalorder %s29, 0
      %p313 = por %p311, %p312
      %s314 = ssub.s32 %s23, %s30
      %p315 = scmp.eq.s32.totalorder %s314, 0
      %s317 = sadd.s32 %s316, 1
      %s318 = scalar_select %p315, %s316, %s317
      %p321 = pneg %p315
      %p322 = scmp.eq.s32.totalorder %s23, 1
      %p323 = por %p321, %p322
      %p324 = scmp.ne.s32.totalorder %s316, %s319
      %p325 = scmp.eq.s32.totalorder %s23, 0
      %p326 = por %p324, %p325
      %p327 = scmp.ne.s32.totalorder %s316, %s319
      %p328 = scmp.eq.s32.totalorder %s28, 1
      %p329 = por %p327, %p328
      %p330 = scmp.ne.s32.totalorder %s319, %s320
      %p331 = scmp.eq.s32.totalorder %s28, 0
      %p332 = por %p330, %p331
      %p333 = scmp.ne.s32.totalorder %s319, %s320
      %p334 = scmp.eq.s32.totalorder %s29, 1
      %p335 = por %p333, %p334
      %p337 = scmp.ne.s32.totalorder %s320, %s336
      %p338 = scmp.eq.s32.totalorder %s29, 0
      %p339 = por %p337, %p338
      %p340 = scmp.le.s32.totalorder 1, %s23
      %p341 = scmp.lt.s32.totalorder %s23, 3
      %p342 = pnand %p340, %p341
      %p343 = pneg %p342
      // Predicated region
      $region9: #{rt_classifier_forward.1} parent=5 // pred_check
        _
      $region10: #{rt_classifier_forward.1} parent=5 // pred_check_branch
        %345 = sbr.rel (%p342) target = $region12
      $region11: #{rt_classifier_forward.1} parent=5 // pred_region
        %s346 = ssub.s32 %s23, 1
        // Predicated region
        $region13: #{rt_classifier_forward.1} parent=11 // pred_check
          %p347 = pneg %p96
        $region14: #{rt_classifier_forward.1} parent=11 // pred_check_branch
          %349 = sbr.rel (%p347) target = $region16
        $region15: #{rt_classifier_forward.1} parent=11 // pred_region
          %s351 = ssub.s32 73728, 73728
          %352 = vsyncadd [#allocation3], %s351
          %s353 = sshll.u32 [#allocation2], 4
          %s354 = int_to_ptr.vmem [resolvable:$true] %s353
          %359 = dma.hbm_to_vmem [thread:$0]  %s2, 73728, %s354, [#allocation3], 256, 256, 16
        $region16: #{rt_classifier_forward.1} parent=11 // pred_fallthru
          _
        // Predicated region
        $region17: #{rt_classifier_forward.1} parent=11 // pred_check
          %p360 = pneg %p117
        $region18: #{rt_classifier_forward.1} parent=11 // pred_check_branch
          %362 = sbr.rel (%p360) target = $region20
        $region19: #{rt_classifier_forward.1} parent=11 // pred_region
          %s364 = ssub.s32 9216, 9216
          %365 = vsyncadd [#allocation5], %s364
          %s366 = sshll.u32 [#allocation4], 4
          %s367 = int_to_ptr.vmem [resolvable:$true] %s366
          %372 = dma.hbm_to_vmem [thread:$0]  %s3, 9216, %s367, [#allocation5], 128, 128, 8
        $region20: #{rt_classifier_forward.1} parent=11 // pred_fallthru
          _
        // Predicated region
        $region21: #{rt_classifier_forward.1} parent=11 // pred_check
          %p373 = pneg %p138
        $region22: #{rt_classifier_forward.1} parent=11 // pred_check_branch
          %375 = sbr.rel (%p373) target = $region24
        $region23: #{rt_classifier_forward.1} parent=11 // pred_region
          %s377 = ssub.s32 5120, 5120
          %378 = vsyncadd [#allocation5], %s377
          %s379 = sshll.u32 [#allocation6], 4
          %s380 = int_to_ptr.vmem [resolvable:$true] %s379
          %385 = dma.hbm_to_vmem [thread:$0]  %s4, 5120, %s380, [#allocation5], 640, 640, 40
        $region24: #{rt_classifier_forward.1} parent=11 // pred_fallthru
          _
        // Predicated region
        $region25: #{rt_classifier_forward.1} parent=11 // pred_check
          %p386 = pneg %p159
        $region26: #{rt_classifier_forward.1} parent=11 // pred_check_branch
          %388 = sbr.rel (%p386) target = $region28
        $region27: #{rt_classifier_forward.1} parent=11 // pred_region
          _
        $region28: #{rt_classifier_forward.1} parent=11 // pred_fallthru
          _
        // Predicated region
        $region29: #{rt_classifier_forward.1} parent=11 // pred_check
          %p389 = pneg %p180
        $region30: #{rt_classifier_forward.1} parent=11 // pred_check_branch
          %391 = sbr.rel (%p389) target = $region32
        $region31: #{rt_classifier_forward.1} parent=11 // pred_region
          %s393 = ssub.s32 9216, 9216
          %394 = vsyncadd [#allocation8], %s393
          %s395 = sshll.u32 [#allocation7], 4
          %s396 = int_to_ptr.vmem [resolvable:$true] %s395
          %401 = dma.hbm_to_vmem [thread:$0]  %s6, 9216, %s396, [#allocation8], 1152, 1152, 72
        $region32: #{rt_classifier_forward.1} parent=11 // pred_fallthru
          _
        // Predicated region
        $region33: #{rt_classifier_forward.1} parent=11 // pred_check
          %p402 = pneg %p201
        $region34: #{rt_classifier_forward.1} parent=11 // pred_check_branch
          %404 = sbr.rel (%p402) target = $region36
        $region35: #{rt_classifier_forward.1} parent=11 // pred_region
          _
        $region36: #{rt_classifier_forward.1} parent=11 // pred_fallthru
          _
        // Predicated region
        $region37: #{rt_classifier_forward.1} parent=11 // pred_check
          %p405 = pneg %p222
        $region38: #{rt_classifier_forward.1} parent=11 // pred_check_branch
          %407 = sbr.rel (%p405) target = $region40
        $region39: #{rt_classifier_forward.1} parent=11 // pred_region
          %s409 = ssub.s32 2048, 2048
          %410 = vsyncadd [#allocation8], %s409
          %s411 = sshll.u32 [#allocation9], 4
          %s412 = int_to_ptr.vmem [resolvable:$true] %s411
          %417 = dma.hbm_to_vmem [thread:$0]  %s8, 2048, %s412, [#allocation8], 256, 256, 16
        $region40: #{rt_classifier_forward.1} parent=11 // pred_fallthru
          _
        // Predicated region
        $region41: #{rt_classifier_forward.1} parent=11 // pred_check
          %p418 = pneg %p243
        $region42: #{rt_classifier_forward.1} parent=11 // pred_check_branch
          %420 = sbr.rel (%p418) target = $region44
        $region43: #{rt_classifier_forward.1} parent=11 // pred_region
          _
        $region44: #{rt_classifier_forward.1} parent=11 // pred_fallthru
          _
        // Predicated region
        $region45: #{rt_classifier_forward.1} parent=11 // pred_check
          %p421 = pneg %p264
        $region46: #{rt_classifier_forward.1} parent=11 // pred_check_branch
          %423 = sbr.rel (%p421) target = $region48
        $region47: #{rt_classifier_forward.1} parent=11 // pred_region
          _
        $region48: #{rt_classifier_forward.1} parent=11 // pred_fallthru
          _
        // Predicated region
        $region49: #{rt_classifier_forward.1} parent=11 // pred_check
          %p424 = pneg %p285
        $region50: #{rt_classifier_forward.1} parent=11 // pred_check_branch
          %426 = sbr.rel (%p424) target = $region52
        $region51: #{rt_classifier_forward.1} parent=11 // pred_region
          %s428 = ssub.s32 128, 128
          %429 = vsyncadd [#allocation11], %s428
          %s431 = sshll.u32 [#allocation10], 4
          %s432 = int_to_ptr.vmem [resolvable:$true] %s431
          %434 = dma.hbm_to_vmem [thread:$0]  %s11, 128, %s432, [#allocation11]
        $region52: #{rt_classifier_forward.1} parent=11 // pred_fallthru
          _
        // Predicated region
        $region53: #{rt_classifier_forward.1} parent=11 // pred_check
          %p435 = pneg %p306
        $region54: #{rt_classifier_forward.1} parent=11 // pred_check_branch
          %437 = sbr.rel (%p435) target = $region56
        $region55: #{rt_classifier_forward.1} parent=11 // pred_region
          _
        $region56: #{rt_classifier_forward.1} parent=11 // pred_fallthru
          _
      $region12: #{rt_classifier_forward.1} parent=5 // pred_fallthru
        _
      %p438 = scmp.lt.s32.totalorder %s23, 2
      // Predicated region
      $region57: #{rt_classifier_forward.1} parent=5 // pred_check
        %p439 = pneg %p438
      $region58: #{rt_classifier_forward.1} parent=5 // pred_check_branch
        %441 = sbr.rel (%p439) target = $region60
      $region59: #{rt_classifier_forward.1} parent=5 // pred_region
        // Predicated region
        $region61: #{rt_classifier_forward.1} parent=59 // pred_check
          %p442 = pneg %p43
        $region62: #{rt_classifier_forward.1} parent=59 // pred_check_branch
          %444 = sbr.rel (%p442) target = $region64
        $region63: #{rt_classifier_forward.1} parent=59 // pred_region
          %p445 = scmp.lt.s32.totalorder %s23, 1
          %s446 = scalar_select %p445, %s23, 1
          %s447 = smul.addr %s446, 16
          %s448 = smul.addr %s447, 8
          %s449 = scalar_lea.vmem %s0, %s448
        $region64: #{rt_classifier_forward.1} parent=59 // pred_fallthru
          _
        // Predicated region
        $region65: #{rt_classifier_forward.1} parent=59 // pred_check
          %p450 = pneg %p69
        $region66: #{rt_classifier_forward.1} parent=59 // pred_check_branch
          %452 = sbr.rel (%p450) target = $region68
        $region67: #{rt_classifier_forward.1} parent=59 // pred_region
          %p453 = scmp.lt.s32.totalorder %s23, 1
          %s454 = scalar_select %p453, %s23, 1
          %s455 = smul.addr %s454, 16
          %s456 = smul.addr %s455, 8
          %s457 = scalar_lea.vmem %s1, %s456
        $region68: #{rt_classifier_forward.1} parent=59 // pred_fallthru
          _
      $region60: #{rt_classifier_forward.1} parent=5 // pred_fallthru
        _
      %p458 = scmp.le.s32.totalorder 1, %s23
      %p459 = scmp.lt.s32.totalorder %s23, 3
      %p460 = pnand %p458, %p459
      %p461 = pneg %p460
      // Predicated region
      $region69: #{rt_classifier_forward.1} parent=5 // pred_check
        _
      $region70: #{rt_classifier_forward.1} parent=5 // pred_check_branch
        %463 = sbr.rel (%p460) target = $region72
      $region71: #{rt_classifier_forward.1} parent=5 // pred_region
        %s464 = ssub.s32 %s23, 1
        // Predicated region
        $region73: #{rt_classifier_forward.1} parent=71 // pred_check
          %p465 = pneg %p96
        $region74: #{rt_classifier_forward.1} parent=71 // pred_check_branch
          %467 = sbr.rel (%p465) target = $region76
        $region75: #{rt_classifier_forward.1} parent=71 // pred_region
          %468 = dma.done [#allocation3], 73728
        $region76: #{rt_classifier_forward.1} parent=71 // pred_fallthru
          _
        // Predicated region
        $region77: #{rt_classifier_forward.1} parent=71 // pred_check
          %p469 = pneg %p117
        $region78: #{rt_classifier_forward.1} parent=71 // pred_check_branch
          %471 = sbr.rel (%p469) target = $region80
        $region79: #{rt_classifier_forward.1} parent=71 // pred_region
          %472 = dma.done [#allocation5], 9216
        $region80: #{rt_classifier_forward.1} parent=71 // pred_fallthru
          _
        // Predicated region
        $region81: #{rt_classifier_forward.1} parent=71 // pred_check
          %p473 = pneg %p138
        $region82: #{rt_classifier_forward.1} parent=71 // pred_check_branch
          %475 = sbr.rel (%p473) target = $region84
        $region83: #{rt_classifier_forward.1} parent=71 // pred_region
          %476 = dma.done [#allocation5], 5120
        $region84: #{rt_classifier_forward.1} parent=71 // pred_fallthru
          _
        // Predicated region
        $region85: #{rt_classifier_forward.1} parent=71 // pred_check
          %p477 = pneg %p180
        $region86: #{rt_classifier_forward.1} parent=71 // pred_check_branch
          %479 = sbr.rel (%p477) target = $region88
        $region87: #{rt_classifier_forward.1} parent=71 // pred_region
          %480 = dma.done [#allocation8], 9216
        $region88: #{rt_classifier_forward.1} parent=71 // pred_fallthru
          _
        // Predicated region
        $region89: #{rt_classifier_forward.1} parent=71 // pred_check
          %p481 = pneg %p222
        $region90: #{rt_classifier_forward.1} parent=71 // pred_check_branch
          %483 = sbr.rel (%p481) target = $region92
        $region91: #{rt_classifier_forward.1} parent=71 // pred_region
          %484 = dma.done [#allocation8], 2048
        $region92: #{rt_classifier_forward.1} parent=71 // pred_fallthru
          _
        // Predicated region
        $region93: #{rt_classifier_forward.1} parent=71 // pred_check
          %p485 = pneg %p285
        $region94: #{rt_classifier_forward.1} parent=71 // pred_check_branch
          %487 = sbr.rel (%p485) target = $region96
        $region95: #{rt_classifier_forward.1} parent=71 // pred_region
          %488 = dma.done [#allocation11], 128
        $region96: #{rt_classifier_forward.1} parent=71 // pred_fallthru
          _
        %p489 = scmp.lt.s32.totalorder %s28, 1
        %s490 = scalar_select %p489, %s28, 1
        %s491 = smul.addr %s490, 16
        %s492 = smul.addr %s491, 8
        %s493 = scalar_lea.vmem %s0, %s492
        %p494 = pneg %p49
        %p495 = pneg %p46
        %p496 = scmp.lt.s32.totalorder %s28, 1
        %s497 = scalar_select %p496, %s28, 1
        %s498 = smul.addr %s497, 16
        %s499 = smul.addr %s498, 8
        %s500 = scalar_lea.vmem %s1, %s499
        %p501 = pneg %p75
        %p502 = pneg %p72
        %p503 = pneg %p96
        %p504 = pneg %p93
        %p505 = pneg %p117
        %p506 = pneg %p114
        %p507 = pneg %p138
        %p508 = pneg %p135
        %p509 = pneg %p159
        %p510 = pneg %p156
        %p511 = pneg %p180
        %p512 = pneg %p177
        %p513 = pneg %p201
        %p514 = pneg %p198
        %p515 = pneg %p222
        %p516 = pneg %p219
        %p517 = pneg %p243
        %p518 = pneg %p240
        %p519 = pneg %p264
        %p520 = pneg %p261
        %p521 = pneg %p285
        %p522 = pneg %p282
        %p523 = pneg %p306
        %p524 = pneg %p303
        %p525 = pneg %p332
        %p526 = pneg %p329
        %p527 = scmp.lt.s32.totalorder %s28, 1
        %s528 = scalar_select %p527, %s28, 1
        %s529 = smul.addr %s528, 2
        %s530 = smul.addr %s529, 8
        %s531 = scalar_lea.vmem %s13, %s530
        %p532 = scmp.lt.s32.totalorder %s28, 1
        %s533 = scalar_select %p532, %s28, 1
        %s534 = smul.addr %s533, 16
        %s535 = smul.addr %s534, 8
        %s536 = scalar_lea.vmem %s0, %s535
        %p537 = scmp.lt.s32.totalorder %s28, 1
        %s538 = scalar_select %p537, %s28, 1
        %s539 = smul.addr %s538, 16
        %s540 = smul.addr %s539, 8
        %s541 = scalar_lea.vmem %s1, %s540
        %p542 = scmp.lt.s32.totalorder %s28, 1
        %s543 = scalar_select %p542, %s28, 1
        %s544 = smul.addr %s543, 2
        %s545 = smul.addr %s544, 8
        %s546 = scalar_lea.vmem %s13, %s545
        %v547 = vld [vmem:[%s536] sm:$0xff]
        %v548 = vld [vmem:[%s536 + $0x8] sm:$0xff]
        %v549 = vld [vmem:[%s536 + $0x10] sm:$0xff]
        %v550 = vld [vmem:[%s536 + $0x18] sm:$0xff]
        %v551 = vld [vmem:[%s536 + $0x20] sm:$0xff]
        %v552 = vld [vmem:[%s536 + $0x28] sm:$0xff]
        %v553 = vld [vmem:[%s536 + $0x30] sm:$0xff]
        %v554 = vld [vmem:[%s536 + $0x38] sm:$0xff]
        %v555 = vld [vmem:[%s536 + $0x40] sm:$0xff]
        %v556 = vld [vmem:[%s536 + $0x48] sm:$0xff]
        %v557 = vld [vmem:[%s536 + $0x50] sm:$0xff]
        %v558 = vld [vmem:[%s536 + $0x58] sm:$0xff]
        %v559 = vld [vmem:[%s536 + $0x60] sm:$0xff]
        %v560 = vld [vmem:[%s536 + $0x68] sm:$0xff]
        %v561 = vld [vmem:[%s536 + $0x70] sm:$0xff]
        %v562 = vld [vmem:[%s536 + $0x78] sm:$0xff]
        %v563 = vld [vmem:[%s541] sm:$0xff]
        %v564 = vld [vmem:[%s541 + $0x8] sm:$0xff]
        %v565 = vld [vmem:[%s541 + $0x10] sm:$0xff]
        %v566 = vld [vmem:[%s541 + $0x18] sm:$0xff]
        %v567 = vld [vmem:[%s541 + $0x20] sm:$0xff]
        %v568 = vld [vmem:[%s541 + $0x28] sm:$0xff]
        %v569 = vld [vmem:[%s541 + $0x30] sm:$0xff]
        %v570 = vld [vmem:[%s541 + $0x38] sm:$0xff]
        %v571 = vld [vmem:[%s541 + $0x40] sm:$0xff]
        %v572 = vld [vmem:[%s541 + $0x48] sm:$0xff]
        %v573 = vld [vmem:[%s541 + $0x50] sm:$0xff]
        %v574 = vld [vmem:[%s541 + $0x58] sm:$0xff]
        %v575 = vld [vmem:[%s541 + $0x60] sm:$0xff]
        %v576 = vld [vmem:[%s541 + $0x68] sm:$0xff]
        %v577 = vld [vmem:[%s541 + $0x70] sm:$0xff]
        %v578 = vld [vmem:[%s541 + $0x78] sm:$0xff]
        %v579 = vld [vmem:[#allocation2] sm:$0xff]
        %v580 = vld [vmem:[#allocation2 + $0x8] sm:$0xff]
        %v581 = vld [vmem:[#allocation2 + $0x10] sm:$0xff]
        %v582 = vld [vmem:[#allocation2 + $0x18] sm:$0xff]
        %v583 = vld [vmem:[#allocation2 + $0x20] sm:$0xff]
        %v584 = vld [vmem:[#allocation2 + $0x28] sm:$0xff]
        %v585 = vld [vmem:[#allocation2 + $0x30] sm:$0xff]
        %v586 = vld [vmem:[#allocation2 + $0x38] sm:$0xff]
        %v587 = vld [vmem:[#allocation2 + $0x40] sm:$0xff]
        %v588 = vld [vmem:[#allocation2 + $0x48] sm:$0xff]
        %v589 = vld [vmem:[#allocation2 + $0x50] sm:$0xff]
        %v590 = vld [vmem:[#allocation2 + $0x58] sm:$0xff]
        %v591 = vld [vmem:[#allocation2 + $0x60] sm:$0xff]
        %v592 = vld [vmem:[#allocation2 + $0x68] sm:$0xff]
        %v593 = vld [vmem:[#allocation2 + $0x70] sm:$0xff]
        %v594 = vld [vmem:[#allocation2 + $0x78] sm:$0xff]
        %v595 = vld [vmem:[#allocation2 + $0x80] sm:$0xff]
        %v596 = vld [vmem:[#allocation2 + $0x88] sm:$0xff]
        %v597 = vld [vmem:[#allocation2 + $0x90] sm:$0xff]
        %v598 = vld [vmem:[#allocation2 + $0x98] sm:$0xff]
        %v599 = vld [vmem:[#allocation2 + $0xa0] sm:$0xff]
        %v600 = vld [vmem:[#allocation2 + $0xa8] sm:$0xff]
        %v601 = vld [vmem:[#allocation2 + $0xb0] sm:$0xff]
        %v602 = vld [vmem:[#allocation2 + $0xb8] sm:$0xff]
        %v603 = vld [vmem:[#allocation2 + $0xc0] sm:$0xff]
        %v604 = vld [vmem:[#allocation2 + $0xc8] sm:$0xff]
        %v605 = vld [vmem:[#allocation2 + $0xd0] sm:$0xff]
        %v606 = vld [vmem:[#allocation2 + $0xd8] sm:$0xff]
        %v607 = vld [vmem:[#allocation2 + $0xe0] sm:$0xff]
        %v608 = vld [vmem:[#allocation2 + $0xe8] sm:$0xff]
        %v609 = vld [vmem:[#allocation2 + $0xf0] sm:$0xff]
        %v610 = vld [vmem:[#allocation2 + $0xf8] sm:$0xff]
        %v611 = vld [vmem:[#allocation2 + $0x100] sm:$0xff]
        %v612 = vld [vmem:[#allocation2 + $0x108] sm:$0xff]
        %v613 = vld [vmem:[#allocation2 + $0x110] sm:$0xff]
        %v614 = vld [vmem:[#allocation2 + $0x118] sm:$0xff]
        %v615 = vld [vmem:[#allocation2 + $0x120] sm:$0xff]
        %v616 = vld [vmem:[#allocation2 + $0x128] sm:$0xff]
        %v617 = vld [vmem:[#allocation2 + $0x130] sm:$0xff]
        %v618 = vld [vmem:[#allocation2 + $0x138] sm:$0xff]
        %v619 = vld [vmem:[#allocation2 + $0x140] sm:$0xff]
        %v620 = vld [vmem:[#allocation2 + $0x148] sm:$0xff]
        %v621 = vld [vmem:[#allocation2 + $0x150] sm:$0xff]
        %v622 = vld [vmem:[#allocation2 + $0x158] sm:$0xff]
        %v623 = vld [vmem:[#allocation2 + $0x160] sm:$0xff]
        %v624 = vld [vmem:[#allocation2 + $0x168] sm:$0xff]
        %v625 = vld [vmem:[#allocation2 + $0x170] sm:$0xff]
        %v626 = vld [vmem:[#allocation2 + $0x178] sm:$0xff]
        %v627 = vld [vmem:[#allocation2 + $0x180] sm:$0xff]
        %v628 = vld [vmem:[#allocation2 + $0x188] sm:$0xff]
        %v629 = vld [vmem:[#allocation2 + $0x190] sm:$0xff]
        %v630 = vld [vmem:[#allocation2 + $0x198] sm:$0xff]
        %v631 = vld [vmem:[#allocation2 + $0x1a0] sm:$0xff]
        %v632 = vld [vmem:[#allocation2 + $0x1a8] sm:$0xff]
        %v633 = vld [vmem:[#allocation2 + $0x1b0] sm:$0xff]
        %v634 = vld [vmem:[#allocation2 + $0x1b8] sm:$0xff]
        %v635 = vld [vmem:[#allocation2 + $0x1c0] sm:$0xff]
        %v636 = vld [vmem:[#allocation2 + $0x1c8] sm:$0xff]
        %v637 = vld [vmem:[#allocation2 + $0x1d0] sm:$0xff]
        %v638 = vld [vmem:[#allocation2 + $0x1d8] sm:$0xff]
        %v639 = vld [vmem:[#allocation2 + $0x1e0] sm:$0xff]
        %v640 = vld [vmem:[#allocation2 + $0x1e8] sm:$0xff]
        %v641 = vld [vmem:[#allocation2 + $0x1f0] sm:$0xff]
        %v642 = vld [vmem:[#allocation2 + $0x1f8] sm:$0xff]
        %643 = vmatprep.subr.mxu0 %v580
        %644 = vmatpush1.msra.mxu0 %v579
        %645 = vmatprep.subr.mxu0 %v582
        %646 = vmatpush1.msra.mxu0 %v581
        %647 = vmatprep.subr.mxu0 %v584
        %648 = vmatpush1.msra.mxu0 %v583
        %649 = vmatprep.subr.mxu0 %v586
        %650 = vmatpush1.msra.mxu0 %v585
        %651 = vmatprep.subr.mxu0 %v588
        %652 = vmatpush1.msra.mxu0 %v587
        %653 = vmatprep.subr.mxu0 %v590
        %654 = vmatpush1.msra.mxu0 %v589
        %655 = vmatprep.subr.mxu0 %v592
        %656 = vmatpush1.msra.mxu0 %v591
        %657 = vmatprep.subr.mxu0 %v594
        %658 = vmatpush1.msra.mxu0 %v593
        %659 = vmatprep.subr.mxu0 %v596
        %660 = vmatpush1.msra.mxu0 %v595
        %661 = vmatprep.subr.mxu0 %v598
        %662 = vmatpush1.msra.mxu0 %v597
        %663 = vmatprep.subr.mxu0 %v600
        %664 = vmatpush1.msra.mxu0 %v599
        %665 = vmatprep.subr.mxu0 %v602
        %666 = vmatpush1.msra.mxu0 %v601
        %667 = vmatprep.subr.mxu0 %v604
        %668 = vmatpush1.msra.mxu0 %v603
        %669 = vmatprep.subr.mxu0 %v606
        %670 = vmatpush1.msra.mxu0 %v605
        %671 = vmatprep.subr.mxu0 %v608
        %672 = vmatpush1.msra.mxu0 %v607
        %673 = vmatprep.subr.mxu0 %v610
        %674 = vmatpush1.msra.mxu0 %v609
        %675 = vmatprep.subr.mxu0 %v612
        %676 = vmatpush1.msra.mxu0 %v611
        %677 = vmatprep.subr.mxu0 %v614
        %678 = vmatpush1.msra.mxu0 %v613
        %679 = vmatprep.subr.mxu0 %v616
        %680 = vmatpush1.msra.mxu0 %v615
        %681 = vmatprep.subr.mxu0 %v618
        %682 = vmatpush1.msra.mxu0 %v617
        %683 = vmatprep.subr.mxu0 %v620
        %684 = vmatpush1.msra.mxu0 %v619
        %685 = vmatprep.subr.mxu0 %v622
        %686 = vmatpush1.msra.mxu0 %v621
        %687 = vmatprep.subr.mxu0 %v624
        %688 = vmatpush1.msra.mxu0 %v623
        %689 = vmatprep.subr.mxu0 %v626
        %690 = vmatpush1.msra.mxu0 %v625
        %691 = vmatprep.subr.mxu0 %v628
        %692 = vmatpush1.msra.mxu0 %v627
        %693 = vmatprep.subr.mxu0 %v630
        %694 = vmatpush1.msra.mxu0 %v629
        %695 = vmatprep.subr.mxu0 %v632
        %696 = vmatpush1.msra.mxu0 %v631
        %697 = vmatprep.subr.mxu0 %v634
        %698 = vmatpush1.msra.mxu0 %v633
        %699 = vmatprep.subr.mxu0 %v636
        %700 = vmatpush1.msra.mxu0 %v635
        %701 = vmatprep.subr.mxu0 %v638
        %702 = vmatpush1.msra.mxu0 %v637
        %703 = vmatprep.subr.mxu0 %v640
        %704 = vmatpush1.msra.mxu0 %v639
        %705 = vmatprep.subr.mxu0 %v642
        %706 = vmatpush1.msra.mxu0 %v641
        %707 = vmatprep.mubr.f32.mxu0 %v548
        %708 = vmatmul.mubr.f32.gmra.mrb[0].mxu0 %v547
        %v709 = vpop.f32.mrb[0].mxu0
        %v710 = vadd.f32 0.0, %v709
        %v711 = vpop.f32.mrb[0].mxu0
        %v712 = vadd.f32 0.0, %v711
        %713 = vmatprep.mubr.f32.mxu0 %v550
        %714 = vmatmul.mubr.f32.gmra.mrb[0].mxu0 %v549
        %v715 = vpop.f32.mrb[0].mxu0
        %v716 = vadd.f32 0.0, %v715
        %v717 = vpop.f32.mrb[0].mxu0
        %v718 = vadd.f32 0.0, %v717
        %719 = vmatprep.mubr.f32.mxu0 %v552
        %720 = vmatmul.mubr.f32.gmra.mrb[0].mxu0 %v551
        %v721 = vpop.f32.mrb[0].mxu0
        %v722 = vadd.f32 0.0, %v721
        %v723 = vpop.f32.mrb[0].mxu0
        %v724 = vadd.f32 0.0, %v723
        %725 = vmatprep.mubr.f32.mxu0 %v554
        %726 = vmatmul.mubr.f32.gmra.mrb[0].mxu0 %v553
        %v727 = vpop.f32.mrb[0].mxu0
        %v728 = vadd.f32 0.0, %v727
        %v729 = vpop.f32.mrb[0].mxu0
        %v730 = vadd.f32 0.0, %v729
        %731 = vmatprep.mubr.f32.mxu0 %v556
        %732 = vmatmul.mubr.f32.gmra.mrb[0].mxu0 %v555
        %v733 = vpop.f32.mrb[0].mxu0
        %v734 = vadd.f32 0.0, %v733
        %v735 = vpop.f32.mrb[0].mxu0
        %v736 = vadd.f32 0.0, %v735
        %737 = vmatprep.mubr.f32.mxu0 %v558
        %738 = vmatmul.mubr.f32.gmra.mrb[0].mxu0 %v557
        %v739 = vpop.f32.mrb[0].mxu0
        %v740 = vadd.f32 0.0, %v739
        %v741 = vpop.f32.mrb[0].mxu0
        %v742 = vadd.f32 0.0, %v741
        %743 = vmatprep.mubr.f32.mxu0 %v560
        %744 = vmatmul.mubr.f32.gmra.mrb[0].mxu0 %v559
        %v745 = vpop.f32.mrb[0].mxu0
        %v746 = vadd.f32 0.0, %v745
        %v747 = vpop.f32.mrb[0].mxu0
        %v748 = vadd.f32 0.0, %v747
        %749 = vmatprep.mubr.f32.mxu0 %v562
        %750 = vmatmul.mubr.f32.gmra.mrb[0].mxu0 %v561
        %v751 = vpop.f32.mrb[0].mxu0
        %v752 = vadd.f32 0.0, %v751
        %v753 = vpop.f32.mrb[0].mxu0
        %v754 = vadd.f32 0.0, %v753
        %755 = vdwg.mxu0
        %s756 = scalar_lea.vmem [#allocation2], 512
        %v757 = vld [vmem:[%s756] sm:$0xff]
        %v758 = vld [vmem:[%s756 + $0x8] sm:$0xff]
        %v759 = vld [vmem:[%s756 + $0x10] sm:$0xff]
        %v760 = vld [vmem:[%s756 + $0x18] sm:$0xff]
        %v761 = vld [vmem:[%s756 + $0x20] sm:$0xff]
        %v762 = vld [vmem:[%s756 + $0x28] sm:$0xff]
        %v763 = vld [vmem:[%s756 + $0x30] sm:$0xff]
        %v764 = vld [vmem:[%s756 + $0x38] sm:$0xff]
        %v765 = vld [vmem:[%s756 + $0x40] sm:$0xff]
        %v766 = vld [vmem:[%s756 + $0x48] sm:$0xff]
        %v767 = vld [vmem:[%s756 + $0x50] sm:$0xff]
        %v768 = vld [vmem:[%s756 + $0x58] sm:$0xff]
        %v769 = vld [vmem:[%s756 + $0x60] sm:$0xff]
        %v770 = vld [vmem:[%s756 + $0x68] sm:$0xff]
        %v771 = vld [vmem:[%s756 + $0x70] sm:$0xff]
        %v772 = vld [vmem:[%s756 + $0x78] sm:$0xff]
        %v773 = vld [vmem:[%s756 + $0x80] sm:$0xff]
        %v774 = vld [vmem:[%s756 + $0x88] sm:$0xff]
        %v775 = vld [vmem:[%s756 + $0x90] sm:$0xff]
        %v776 = vld [vmem:[%s756 + $0x98] sm:$0xff]
        %v777 = vld [vmem:[%s756 + $0xa0] sm:$0xff]
        %v778 = vld [vmem:[%s756 + $0xa8] sm:$0xff]
        %v779 = vld [vmem:[%s756 + $0xb0] sm:$0xff]
        %v780 = vld [vmem:[%s756 + $0xb8] sm:$0xff]
        %v781 = vld [vmem:[%s756 + $0xc0] sm:$0xff]
        %v782 = vld [vmem:[%s756 + $0xc8] sm:$0xff]
        %v783 = vld [vmem:[%s756 + $0xd0] sm:$0xff]
        %v784 = vld [vmem:[%s756 + $0xd8] sm:$0xff]
        %v785 = vld [vmem:[%s756 + $0xe0] sm:$0xff]
        %v786 = vld [vmem:[%s756 + $0xe8] sm:$0xff]
        %v787 = vld [vmem:[%s756 + $0xf0] sm:$0xff]
        %v788 = vld [vmem:[%s756 + $0xf8] sm:$0xff]
        %v789 = vld [vmem:[%s756 + $0x100] sm:$0xff]
        %v790 = vld [vmem:[%s756 + $0x108] sm:$0xff]
        %v791 = vld [vmem:[%s756 + $0x110] sm:$0xff]
        %v792 = vld [vmem:[%s756 + $0x118] sm:$0xff]
        %v793 = vld [vmem:[%s756 + $0x120] sm:$0xff]
        %v794 = vld [vmem:[%s756 + $0x128] sm:$0xff]
        %v795 = vld [vmem:[%s756 + $0x130] sm:$0xff]
        %v796 = vld [vmem:[%s756 + $0x138] sm:$0xff]
        %v797 = vld [vmem:[%s756 + $0x140] sm:$0xff]
        %v798 = vld [vmem:[%s756 + $0x148] sm:$0xff]
        %v799 = vld [vmem:[%s756 + $0x150] sm:$0xff]
        %v800 = vld [vmem:[%s756 + $0x158] sm:$0xff]
        %v801 = vld [vmem:[%s756 + $0x160] sm:$0xff]
        %v802 = vld [vmem:[%s756 + $0x168] sm:$0xff]
        %v803 = vld [vmem:[%s756 + $0x170] sm:$0xff]
        %v804 = vld [vmem:[%s756 + $0x178] sm:$0xff]
        %v805 = vld [vmem:[%s756 + $0x180] sm:$0xff]
        %v806 = vld [vmem:[%s756 + $0x188] sm:$0xff]
        %v807 = vld [vmem:[%s756 + $0x190] sm:$0xff]
        %v808 = vld [vmem:[%s756 + $0x198] sm:$0xff]
        %v809 = vld [vmem:[%s756 + $0x1a0] sm:$0xff]
        %v810 = vld [vmem:[%s756 + $0x1a8] sm:$0xff]
        %v811 = vld [vmem:[%s756 + $0x1b0] sm:$0xff]
        %v812 = vld [vmem:[%s756 + $0x1b8] sm:$0xff]
        %v813 = vld [vmem:[%s756 + $0x1c0] sm:$0xff]
        %v814 = vld [vmem:[%s756 + $0x1c8] sm:$0xff]
        %v815 = vld [vmem:[%s756 + $0x1d0] sm:$0xff]
        %v816 = vld [vmem:[%s756 + $0x1d8] sm:$0xff]
        %v817 = vld [vmem:[%s756 + $0x1e0] sm:$0xff]
        %v818 = vld [vmem:[%s756 + $0x1e8] sm:$0xff]
        %v819 = vld [vmem:[%s756 + $0x1f0] sm:$0xff]
        %v820 = vld [vmem:[%s756 + $0x1f8] sm:$0xff]
        %821 = vmatprep.subr.mxu0 %v758
        %822 = vmatpush1.msra.mxu0 %v757
        %823 = vmatprep.subr.mxu0 %v760
        %824 = vmatpush1.msra.mxu0 %v759
        %825 = vmatprep.subr.mxu0 %v762
        %826 = vmatpush1.msra.mxu0 %v761
        %827 = vmatprep.subr.mxu0 %v764
        %828 = vmatpush1.msra.mxu0 %v763
        %829 = vmatprep.subr.mxu0 %v766
        %830 = vmatpush1.msra.mxu0 %v765
        %831 = vmatprep.subr.mxu0 %v768
        %832 = vmatpush1.msra.mxu0 %v767
        %833 = vmatprep.subr.mxu0 %v770
        %834 = vmatpush1.msra.mxu0 %v769
        %835 = vmatprep.subr.mxu0 %v772
        %836 = vmatpush1.msra.mxu0 %v771
        %837 = vmatprep.subr.mxu0 %v774
        %838 = vmatpush1.msra.mxu0 %v773
        %839 = vmatprep.subr.mxu0 %v776
        %840 = vmatpush1.msra.mxu0 %v775
        %841 = vmatprep.subr.mxu0 %v778
        %842 = vmatpush1.msra.mxu0 %v777
        %843 = vmatprep.subr.mxu0 %v780
        %844 = vmatpush1.msra.mxu0 %v779
        %845 = vmatprep.subr.mxu0 %v782
        %846 = vmatpush1.msra.mxu0 %v781
        %847 = vmatprep.subr.mxu0 %v784
        %848 = vmatpush1.msra.mxu0 %v783
        %849 = vmatprep.subr.mxu0 %v786
        %850 = vmatpush1.msra.mxu0 %v785
        %851 = vmatprep.subr.mxu0 %v788
        %852 = vmatpush1.msra.mxu0 %v787
        %853 = vmatprep.subr.mxu0 %v790
        %854 = vmatpush1.msra.mxu0 %v789
        %855 = vmatprep.subr.mxu0 %v792
        %856 = vmatpush1.msra.mxu0 %v791
        %857 = vmatprep.subr.mxu0 %v794
        %858 = vmatpush1.msra.mxu0 %v793
        %859 = vmatprep.subr.mxu0 %v796
        %860 = vmatpush1.msra.mxu0 %v795
        %861 = vmatprep.subr.mxu0 %v798
        %862 = vmatpush1.msra.mxu0 %v797
        %863 = vmatprep.subr.mxu0 %v800
        %864 = vmatpush1.msra.mxu0 %v799
        %865 = vmatprep.subr.mxu0 %v802
        %866 = vmatpush1.msra.mxu0 %v801
        %867 = vmatprep.subr.mxu0 %v804
        %868 = vmatpush1.msra.mxu0 %v803
        %869 = vmatprep.subr.mxu0 %v806
        %870 = vmatpush1.msra.mxu0 %v805
        %871 = vmatprep.subr.mxu0 %v808
        %872 = vmatpush1.msra.mxu0 %v807
        %873 = vmatprep.subr.mxu0 %v810
        %874 = vmatpush1.msra.mxu0 %v809
        %875 = vmatprep.subr.mxu0 %v812
        %876 = vmatpush1.msra.mxu0 %v811
        %877 = vmatprep.subr.mxu0 %v814
        %878 = vmatpush1.msra.mxu0 %v813
        %879 = vmatprep.subr.mxu0 %v816
        %880 = vmatpush1.msra.mxu0 %v815
        %881 = vmatprep.subr.mxu0 %v818
        %882 = vmatpush1.msra.mxu0 %v817
        %883 = vmatprep.subr.mxu0 %v820
        %884 = vmatpush1.msra.mxu0 %v819
        %885 = vmatprep.mubr.f32.mxu0 %v548
        %886 = vmatmul.mubr.f32.gmra.mrb[0].mxu0 %v547
        %v887 = vpop.f32.mrb[0].mxu0
        %v888 = vadd.f32 0.0, %v887
        %v889 = vpop.f32.mrb[0].mxu0
        %v890 = vadd.f32 0.0, %v889
        %891 = vmatprep.mubr.f32.mxu0 %v550
        %892 = vmatmul.mubr.f32.gmra.mrb[0].mxu0 %v549
        %v893 = vpop.f32.mrb[0].mxu0
        %v894 = vadd.f32 0.0, %v893
        %v895 = vpop.f32.mrb[0].mxu0
        %v896 = vadd.f32 0.0, %v895
        %897 = vmatprep.mubr.f32.mxu0 %v552
        %898 = vmatmul.mubr.f32.gmra.mrb[0].mxu0 %v551
        %v899 = vpop.f32.mrb[0].mxu0
        %v900 = vadd.f32 0.0, %v899
        %v901 = vpop.f32.mrb[0].mxu0
        %v902 = vadd.f32 0.0, %v901
        %903 = vmatprep.mubr.f32.mxu0 %v554
        %904 = vmatmul.mubr.f32.gmra.mrb[0].mxu0 %v553
        %v905 = vpop.f32.mrb[0].mxu0
        %v906 = vadd.f32 0.0, %v905
        %v907 = vpop.f32.mrb[0].mxu0
        %v908 = vadd.f32 0.0, %v907
        %909 = vmatprep.mubr.f32.mxu0 %v556
        %910 = vmatmul.mubr.f32.gmra.mrb[0].mxu0 %v555
        %v911 = vpop.f32.mrb[0].mxu0
        %v912 = vadd.f32 0.0, %v911
        %v913 = vpop.f32.mrb[0].mxu0
        %v914 = vadd.f32 0.0, %v913
        %915 = vmatprep.mubr.f32.mxu0 %v558
        %916 = vmatmul.mubr.f32.gmra.mrb[0].mxu0 %v557
        %v917 = vpop.f32.mrb[0].mxu0
        %v918 = vadd.f32 0.0, %v917
        %v919 = vpop.f32.mrb[0].mxu0
        %v920 = vadd.f32 0.0, %v919
        %921 = vmatprep.mubr.f32.mxu0 %v560
        %922 = vmatmul.mubr.f32.gmra.mrb[0].mxu0 %v559
        %v923 = vpop.f32.mrb[0].mxu0
        %v924 = vadd.f32 0.0, %v923
        %v925 = vpop.f32.mrb[0].mxu0
        %v926 = vadd.f32 0.0, %v925
        %927 = vmatprep.mubr.f32.mxu0 %v562
        %928 = vmatmul.mubr.f32.gmra.mrb[0].mxu0 %v561
        %v929 = vpop.f32.mrb[0].mxu0
        %v930 = vadd.f32 0.0, %v929
        %v931 = vpop.f32.mrb[0].mxu0
        %v932 = vadd.f32 0.0, %v931
        %933 = vdwg.mxu0
        %s934 = scalar_lea.vmem [#allocation2], 1024
        %v935 = vld [vmem:[%s934] sm:$0xff]
        %v936 = vld [vmem:[%s934 + $0x8] sm:$0xff]
        %v937 = vld [vmem:[%s934 + $0x10] sm:$0xff]
        %v938 = vld [vmem:[%s934 + $0x18] sm:$0xff]
        %v939 = vld [vmem:[%s934 + $0x20] sm:$0xff]
        %v940 = vld [vmem:[%s934 + $0x28] sm:$0xff]
        %v941 = vld [vmem:[%s934 + $0x30] sm:$0xff]
        %v942 = vld [vmem:[%s934 + $0x38] sm:$0xff]
        %v943 = vld [vmem:[%s934 + $0x40] sm:$0xff]
        %v944 = vld [vmem:[%s934 + $0x48] sm:$0xff]
        %v945 = vld [vmem:[%s934 + $0x50] sm:$0xff]
        %v946 = vld [vmem:[%s934 + $0x58] sm:$0xff]
        %v947 = vld [vmem:[%s934 + $0x60] sm:$0xff]
        %v948 = vld [vmem:[%s934 + $0x68] sm:$0xff]
        %v949 = vld [vmem:[%s934 + $0x70] sm:$0xff]
        %v950 = vld [vmem:[%s934 + $0x78] sm:$0xff]
        %v951 = vld [vmem:[%s934 + $0x80] sm:$0xff]
        %v952 = vld [vmem:[%s934 + $0x88] sm:$0xff]
        %v953 = vld [vmem:[%s934 + $0x90] sm:$0xff]
        %v954 = vld [vmem:[%s934 + $0x98] sm:$0xff]
        %v955 = vld [vmem:[%s934 + $0xa0] sm:$0xff]
        %v956 = vld [vmem:[%s934 + $0xa8] sm:$0xff]
        %v957 = vld [vmem:[%s934 + $0xb0] sm:$0xff]
        %v958 = vld [vmem:[%s934 + $0xb8] sm:$0xff]
        %v959 = vld [vmem:[%s934 + $0xc0] sm:$0xff]
        %v960 = vld [vmem:[%s934 + $0xc8] sm:$0xff]
        %v961 = vld [vmem:[%s934 + $0xd0] sm:$0xff]
        %v962 = vld [vmem:[%s934 + $0xd8] sm:$0xff]
        %v963 = vld [vmem:[%s934 + $0xe0] sm:$0xff]
        %v964 = vld [vmem:[%s934 + $0xe8] sm:$0xff]
        %v965 = vld [vmem:[%s934 + $0xf0] sm:$0xff]
        %v966 = vld [vmem:[%s934 + $0xf8] sm:$0xff]
        %v967 = vld [vmem:[%s934 + $0x100] sm:$0xff]
        %v968 = vld [vmem:[%s934 + $0x108] sm:$0xff]
        %v969 = vld [vmem:[%s934 + $0x110] sm:$0xff]
        %v970 = vld [vmem:[%s934 + $0x118] sm:$0xff]
        %v971 = vld [vmem:[%s934 + $0x120] sm:$0xff]
        %v972 = vld [vmem:[%s934 + $0x128] sm:$0xff]
        %v973 = vld [vmem:[%s934 + $0x130] sm:$0xff]
        %v974 = vld [vmem:[%s934 + $0x138] sm:$0xff]
        %v975 = vld [vmem:[%s934 + $0x140] sm:$0xff]
        %v976 = vld [vmem:[%s934 + $0x148] sm:$0xff]
        %v977 = vld [vmem:[%s934 + $0x150] sm:$0xff]
        %v978 = vld [vmem:[%s934 + $0x158] sm:$0xff]
        %v979 = vld [vmem:[%s934 + $0x160] sm:$0xff]
        %v980 = vld [vmem:[%s934 + $0x168] sm:$0xff]
        %v981 = vld [vmem:[%s934 + $0x170] sm:$0xff]
        %v982 = vld [vmem:[%s934 + $0x178] sm:$0xff]
        %v983 = vld [vmem:[%s934 + $0x180] sm:$0xff]
        %v984 = vld [vmem:[%s934 + $0x188] sm:$0xff]
        %v985 = vld [vmem:[%s934 + $0x190] sm:$0xff]
        %v986 = vld [vmem:[%s934 + $0x198] sm:$0xff]
        %v987 = vld [vmem:[%s934 + $0x1a0] sm:$0xff]
        %v988 = vld [vmem:[%s934 + $0x1a8] sm:$0xff]
        %v989 = vld [vmem:[%s934 + $0x1b0] sm:$0xff]
        %v990 = vld [vmem:[%s934 + $0x1b8] sm:$0xff]
        %v991 = vld [vmem:[%s934 + $0x1c0] sm:$0xff]
        %v992 = vld [vmem:[%s934 + $0x1c8] sm:$0xff]
        %v993 = vld [vmem:[%s934 + $0x1d0] sm:$0xff]
        %v994 = vld [vmem:[%s934 + $0x1d8] sm:$0xff]
        %v995 = vld [vmem:[%s934 + $0x1e0] sm:$0xff]
        %v996 = vld [vmem:[%s934 + $0x1e8] sm:$0xff]
        %v997 = vld [vmem:[%s934 + $0x1f0] sm:$0xff]
        %v998 = vld [vmem:[%s934 + $0x1f8] sm:$0xff]
        %999 = vmatprep.subr.mxu0 %v936
        %1000 = vmatpush1.msra.mxu0 %v935
        %1001 = vmatprep.subr.mxu0 %v938
        %1002 = vmatpush1.msra.mxu0 %v937
        %1003 = vmatprep.subr.mxu0 %v940
        %1004 = vmatpush1.msra.mxu0 %v939
        %1005 = vmatprep.subr.mxu0 %v942
        %1006 = vmatpush1.msra.mxu0 %v941
        %1007 = vmatprep.subr.mxu0 %v944
        %1008 = vmatpush1.msra.mxu0 %v943
        %1009 = vmatprep.subr.mxu0 %v946
        %1010 = vmatpush1.msra.mxu0 %v945
        %1011 = vmatprep.subr.mxu0 %v948
        %1012 = vmatpush1.msra.mxu0 %v947
        %1013 = vmatprep.subr.mxu0 %v950
        %1014 = vmatpush1.msra.mxu0 %v949
        %1015 = vmatprep.subr.mxu0 %v952
        %1016 = vmatpush1.msra.mxu0 %v951
        %1017 = vmatprep.subr.mxu0 %v954
        %1018 = vmatpush1.msra.mxu0 %v953
        %1019 = vmatprep.subr.mxu0 %v956
        %1020 = vmatpush1.msra.mxu0 %v955
        %1021 = vmatprep.subr.mxu0 %v958
        %1022 = vmatpush1.msra.mxu0 %v957
        %1023 = vmatprep.subr.mxu0 %v960
        %1024 = vmatpush1.msra.mxu0 %v959
        %1025 = vmatprep.subr.mxu0 %v962
        %1026 = vmatpush1.msra.mxu0 %v961
        %1027 = vmatprep.subr.mxu0 %v964
        %1028 = vmatpush1.msra.mxu0 %v963
        %1029 = vmatprep.subr.mxu0 %v966
        %1030 = vmatpush1.msra.mxu0 %v965
        %1031 = vmatprep.subr.mxu0 %v968
        %1032 = vmatpush1.msra.mxu0 %v967
        %1033 = vmatprep.subr.mxu0 %v970
        %1034 = vmatpush1.msra.mxu0 %v969
        %1035 = vmatprep.subr.mxu0 %v972
        %1036 = vmatpush1.msra.mxu0 %v971
        %1037 = vmatprep.subr.mxu0 %v974
        %1038 = vmatpush1.msra.mxu0 %v973
        %1039 = vmatprep.subr.mxu0 %v976
        %1040 = vmatpush1.msra.mxu0 %v975
        %1041 = vmatprep.subr.mxu0 %v978
        %1042 = vmatpush1.msra.mxu0 %v977
        %1043 = vmatprep.subr.mxu0 %v980
        %1044 = vmatpush1.msra.mxu0 %v979
        %1045 = vmatprep.subr.mxu0 %v982
        %1046 = vmatpush1.msra.mxu0 %v981
        %1047 = vmatprep.subr.mxu0 %v984
        %1048 = vmatpush1.msra.mxu0 %v983
        %1049 = vmatprep.subr.mxu0 %v986
        %1050 = vmatpush1.msra.mxu0 %v985
        %1051 = vmatprep.subr.mxu0 %v988
        %1052 = vmatpush1.msra.mxu0 %v987
        %1053 = vmatprep.subr.mxu0 %v990
        %1054 = vmatpush1.msra.mxu0 %v989
        %1055 = vmatprep.subr.mxu0 %v992
        %1056 = vmatpush1.msra.mxu0 %v991
        %1057 = vmatprep.subr.mxu0 %v994
        %1058 = vmatpush1.msra.mxu0 %v993
        %1059 = vmatprep.subr.mxu0 %v996
        %1060 = vmatpush1.msra.mxu0 %v995
        %1061 = vmatprep.subr.mxu0 %v998
        %1062 = vmatpush1.msra.mxu0 %v997
        %1063 = vmatprep.mubr.f32.mxu0 %v548
        %1064 = vmatmul.mubr.f32.gmra.mrb[0].mxu0 %v547
        %v1065 = vpop.f32.mrb[0].mxu0
        %v1066 = vadd.f32 0.0, %v1065
        %v1067 = vpop.f32.mrb[0].mxu0
        %v1068 = vadd.f32 0.0, %v1067
        %1069 = vmatprep.mubr.f32.mxu0 %v550
        %1070 = vmatmul.mubr.f32.gmra.mrb[0].mxu0 %v549
        %v1071 = vpop.f32.mrb[0].mxu0
        %v1072 = vadd.f32 0.0, %v1071
        %v1073 = vpop.f32.mrb[0].mxu0
        %v1074 = vadd.f32 0.0, %v1073
        %1075 = vmatprep.mubr.f32.mxu0 %v552
        %1076 = vmatmul.mubr.f32.gmra.mrb[0].mxu0 %v551
        %v1077 = vpop.f32.mrb[0].mxu0
        %v1078 = vadd.f32 0.0, %v1077
        %v1079 = vpop.f32.mrb[0].mxu0
        %v1080 = vadd.f32 0.0, %v1079
        %1081 = vmatprep.mubr.f32.mxu0 %v554
        %1082 = vmatmul.mubr.f32.gmra.mrb[0].mxu0 %v553
        %v1083 = vpop.f32.mrb[0].mxu0
        %v1084 = vadd.f32 0.0, %v1083
        %v1085 = vpop.f32.mrb[0].mxu0
        %v1086 = vadd.f32 0.0, %v1085
        %1087 = vmatprep.mubr.f32.mxu0 %v556
        %1088 = vmatmul.mubr.f32.gmra.mrb[0].mxu0 %v555
        %v1089 = vpop.f32.mrb[0].mxu0
        %v1090 = vadd.f32 0.0, %v1089
        %v1091 = vpop.f32.mrb[0].mxu0
        %v1092 = vadd.f32 0.0, %v1091
        %1093 = vmatprep.mubr.f32.mxu0 %v558
        %1094 = vmatmul.mubr.f32.gmra.mrb[0].mxu0 %v557
        %v1095 = vpop.f32.mrb[0].mxu0
        %v1096 = vadd.f32 0.0, %v1095
        %v1097 = vpop.f32.mrb[0].mxu0
        %v1098 = vadd.f32 0.0, %v1097
        %1099 = vmatprep.mubr.f32.mxu0 %v560
        %1100 = vmatmul.mubr.f32.gmra.mrb[0].mxu0 %v559
        %v1101 = vpop.f32.mrb[0].mxu0
        %v1102 = vadd.f32 0.0, %v1101
        %v1103 = vpop.f32.mrb[0].mxu0
        %v1104 = vadd.f32 0.0, %v1103
        %1105 = vmatprep.mubr.f32.mxu0 %v562
        %1106 = vmatmul.mubr.f32.gmra.mrb[0].mxu0 %v561
        %v1107 = vpop.f32.mrb[0].mxu0
        %v1108 = vadd.f32 0.0, %v1107
        %v1109 = vpop.f32.mrb[0].mxu0
        %v1110 = vadd.f32 0.0, %v1109
        %1111 = vdwg.mxu0
        %s1112 = scalar_lea.vmem [#allocation2], 1536
        %v1113 = vld [vmem:[%s1112] sm:$0xff]
        %v1114 = vld [vmem:[%s1112 + $0x8] sm:$0xff]
        %v1115 = vld [vmem:[%s1112 + $0x10] sm:$0xff]
        %v1116 = vld [vmem:[%s1112 + $0x18] sm:$0xff]
        %v1117 = vld [vmem:[%s1112 + $0x20] sm:$0xff]
        %v1118 = vld [vmem:[%s1112 + $0x28] sm:$0xff]
        %v1119 = vld [vmem:[%s1112 + $0x30] sm:$0xff]
        %v1120 = vld [vmem:[%s1112 + $0x38] sm:$0xff]
        %v1121 = vld [vmem:[%s1112 + $0x40] sm:$0xff]
        %v1122 = vld [vmem:[%s1112 + $0x48] sm:$0xff]
        %v1123 = vld [vmem:[%s1112 + $0x50] sm:$0xff]
        %v1124 = vld [vmem:[%s1112 + $0x58] sm:$0xff]
        %v1125 = vld [vmem:[%s1112 + $0x60] sm:$0xff]
        %v1126 = vld [vmem:[%s1112 + $0x68] sm:$0xff]
        %v1127 = vld [vmem:[%s1112 + $0x70] sm:$0xff]
        %v1128 = vld [vmem:[%s1112 + $0x78] sm:$0xff]
        %v1129 = vld [vmem:[%s1112 + $0x80] sm:$0xff]
        %v1130 = vld [vmem:[%s1112 + $0x88] sm:$0xff]
        %v1131 = vld [vmem:[%s1112 + $0x90] sm:$0xff]
        %v1132 = vld [vmem:[%s1112 + $0x98] sm:$0xff]
        %v1133 = vld [vmem:[%s1112 + $0xa0] sm:$0xff]
        %v1134 = vld [vmem:[%s1112 + $0xa8] sm:$0xff]
        %v1135 = vld [vmem:[%s1112 + $0xb0] sm:$0xff]
        %v1136 = vld [vmem:[%s1112 + $0xb8] sm:$0xff]
        %v1137 = vld [vmem:[%s1112 + $0xc0] sm:$0xff]
        %v1138 = vld [vmem:[%s1112 + $0xc8] sm:$0xff]
        %v1139 = vld [vmem:[%s1112 + $0xd0] sm:$0xff]
        %v1140 = vld [vmem:[%s1112 + $0xd8] sm:$0xff]
        %v1141 = vld [vmem:[%s1112 + $0xe0] sm:$0xff]
        %v1142 = vld [vmem:[%s1112 + $0xe8] sm:$0xff]
        %v1143 = vld [vmem:[%s1112 + $0xf0] sm:$0xff]
        %v1144 = vld [vmem:[%s1112 + $0xf8] sm:$0xff]
        %v1145 = vld [vmem:[%s1112 + $0x100] sm:$0xff]
        %v1146 = vld [vmem:[%s1112 + $0x108] sm:$0xff]
        %v1147 = vld [vmem:[%s1112 + $0x110] sm:$0xff]
        %v1148 = vld [vmem:[%s1112 + $0x118] sm:$0xff]
        %v1149 = vld [vmem:[%s1112 + $0x120] sm:$0xff]
        %v1150 = vld [vmem:[%s1112 + $0x128] sm:$0xff]
        %v1151 = vld [vmem:[%s1112 + $0x130] sm:$0xff]
        %v1152 = vld [vmem:[%s1112 + $0x138] sm:$0xff]
        %v1153 = vld [vmem:[%s1112 + $0x140] sm:$0xff]
        %v1154 = vld [vmem:[%s1112 + $0x148] sm:$0xff]
        %v1155 = vld [vmem:[%s1112 + $0x150] sm:$0xff]
        %v1156 = vld [vmem:[%s1112 + $0x158] sm:$0xff]
        %v1157 = vld [vmem:[%s1112 + $0x160] sm:$0xff]
        %v1158 = vld [vmem:[%s1112 + $0x168] sm:$0xff]
        %v1159 = vld [vmem:[%s1112 + $0x170] sm:$0xff]
        %v1160 = vld [vmem:[%s1112 + $0x178] sm:$0xff]
        %v1161 = vld [vmem:[%s1112 + $0x180] sm:$0xff]
        %v1162 = vld [vmem:[%s1112 + $0x188] sm:$0xff]
        %v1163 = vld [vmem:[%s1112 + $0x190] sm:$0xff]
        %v1164 = vld [vmem:[%s1112 + $0x198] sm:$0xff]
        %v1165 = vld [vmem:[%s1112 + $0x1a0] sm:$0xff]
        %v1166 = vld [vmem:[%s1112 + $0x1a8] sm:$0xff]
        %v1167 = vld [vmem:[%s1112 + $0x1b0] sm:$0xff]
        %v1168 = vld [vmem:[%s1112 + $0x1b8] sm:$0xff]
        %v1169 = vld [vmem:[%s1112 + $0x1c0] sm:$0xff]
        %v1170 = vld [vmem:[%s1112 + $0x1c8] sm:$0xff]
        %v1171 = vld [vmem:[%s1112 + $0x1d0] sm:$0xff]
        %v1172 = vld [vmem:[%s1112 + $0x1d8] sm:$0xff]
        %v1173 = vld [vmem:[%s1112 + $0x1e0] sm:$0xff]
        %v1174 = vld [vmem:[%s1112 + $0x1e8] sm:$0xff]
        %v1175 = vld [vmem:[%s1112 + $0x1f0] sm:$0xff]
        %v1176 = vld [vmem:[%s1112 + $0x1f8] sm:$0xff]
        %1177 = vmatprep.subr.mxu0 %v1114
        %1178 = vmatpush1.msra.mxu0 %v1113
        %1179 = vmatprep.subr.mxu0 %v1116
        %1180 = vmatpush1.msra.mxu0 %v1115
        %1181 = vmatprep.subr.mxu0 %v1118
        %1182 = vmatpush1.msra.mxu0 %v1117
        %1183 = vmatprep.subr.mxu0 %v1120
        %1184 = vmatpush1.msra.mxu0 %v1119
        %1185 = vmatprep.subr.mxu0 %v1122
        %1186 = vmatpush1.msra.mxu0 %v1121
        %1187 = vmatprep.subr.mxu0 %v1124
        %1188 = vmatpush1.msra.mxu0 %v1123
        %1189 = vmatprep.subr.mxu0 %v1126
        %1190 = vmatpush1.msra.mxu0 %v1125
        %1191 = vmatprep.subr.mxu0 %v1128
        %1192 = vmatpush1.msra.mxu0 %v1127
        %1193 = vmatprep.subr.mxu0 %v1130
        %1194 = vmatpush1.msra.mxu0 %v1129
        %1195 = vmatprep.subr.mxu0 %v1132
        %1196 = vmatpush1.msra.mxu0 %v1131
        %1197 = vmatprep.subr.mxu0 %v1134
        %1198 = vmatpush1.msra.mxu0 %v1133
        %1199 = vmatprep.subr.mxu0 %v1136
        %1200 = vmatpush1.msra.mxu0 %v1135
        %1201 = vmatprep.subr.mxu0 %v1138
        %1202 = vmatpush1.msra.mxu0 %v1137
        %1203 = vmatprep.subr.mxu0 %v1140
        %1204 = vmatpush1.msra.mxu0 %v1139
        %1205 = vmatprep.subr.mxu0 %v1142
        %1206 = vmatpush1.msra.mxu0 %v1141
        %1207 = vmatprep.subr.mxu0 %v1144
        %1208 = vmatpush1.msra.mxu0 %v1143
        %1209 = vmatprep.subr.mxu0 %v1146
        %1210 = vmatpush1.msra.mxu0 %v1145
        %1211 = vmatprep.subr.mxu0 %v1148
        %1212 = vmatpush1.msra.mxu0 %v1147
        %1213 = vmatprep.subr.mxu0 %v1150
        %1214 = vmatpush1.msra.mxu0 %v1149
        %1215 = vmatprep.subr.mxu0 %v1152
        %1216 = vmatpush1.msra.mxu0 %v1151
        %1217 = vmatprep.subr.mxu0 %v1154
        %1218 = vmatpush1.msra.mxu0 %v1153
        %1219 = vmatprep.subr.mxu0 %v1156
        %1220 = vmatpush1.msra.mxu0 %v1155
        %1221 = vmatprep.subr.mxu0 %v1158
        %1222 = vmatpush1.msra.mxu0 %v1157
        %1223 = vmatprep.subr.mxu0 %v1160
        %1224 = vmatpush1.msra.mxu0 %v1159
        %1225 = vmatprep.subr.mxu0 %v1162
        %1226 = vmatpush1.msra.mxu0 %v1161
        %1227 = vmatprep.subr.mxu0 %v1164
        %1228 = vmatpush1.msra.mxu0 %v1163
        %1229 = vmatprep.subr.mxu0 %v1166
        %1230 = vmatpush1.msra.mxu0 %v1165
        %1231 = vmatprep.subr.mxu0 %v1168
        %1232 = vmatpush1.msra.mxu0 %v1167
        %1233 = vmatprep.subr.mxu0 %v1170
        %1234 = vmatpush1.msra.mxu0 %v1169
        %1235 = vmatprep.subr.mxu0 %v1172
        %1236 = vmatpush1.msra.mxu0 %v1171
        %1237 = vmatprep.subr.mxu0 %v1174
        %1238 = vmatpush1.msra.mxu0 %v1173
        %1239 = vmatprep.subr.mxu0 %v1176
        %1240 = vmatpush1.msra.mxu0 %v1175
        %1241 = vmatprep.mubr.f32.mxu0 %v548
        %1242 = vmatmul.mubr.f32.gmra.mrb[0].mxu0 %v547
        %v1243 = vpop.f32.mrb[0].mxu0
        %v1244 = vadd.f32 0.0, %v1243
        %v1245 = vpop.f32.mrb[0].mxu0
        %v1246 = vadd.f32 0.0, %v1245
        %1247 = vmatprep.mubr.f32.mxu0 %v550
        %1248 = vmatmul.mubr.f32.gmra.mrb[0].mxu0 %v549
        %v1249 = vpop.f32.mrb[0].mxu0
        %v1250 = vadd.f32 0.0, %v1249
        %v1251 = vpop.f32.mrb[0].mxu0
        %v1252 = vadd.f32 0.0, %v1251
        %1253 = vmatprep.mubr.f32.mxu0 %v552
        %1254 = vmatmul.mubr.f32.gmra.mrb[0].mxu0 %v551
        %v1255 = vpop.f32.mrb[0].mxu0
        %v1256 = vadd.f32 0.0, %v1255
        %v1257 = vpop.f32.mrb[0].mxu0
        %v1258 = vadd.f32 0.0, %v1257
        %1259 = vmatprep.mubr.f32.mxu0 %v554
        %1260 = vmatmul.mubr.f32.gmra.mrb[0].mxu0 %v553
        %v1261 = vpop.f32.mrb[0].mxu0
        %v1262 = vadd.f32 0.0, %v1261
        %v1263 = vpop.f32.mrb[0].mxu0
        %v1264 = vadd.f32 0.0, %v1263
        %1265 = vmatprep.mubr.f32.mxu0 %v556
        %1266 = vmatmul.mubr.f32.gmra.mrb[0].mxu0 %v555
        %v1267 = vpop.f32.mrb[0].mxu0
        %v1268 = vadd.f32 0.0, %v1267
        %v1269 = vpop.f32.mrb[0].mxu0
        %v1270 = vadd.f32 0.0, %v1269
        %1271 = vmatprep.mubr.f32.mxu0 %v558
        %1272 = vmatmul.mubr.f32.gmra.mrb[0].mxu0 %v557
        %v1273 = vpop.f32.mrb[0].mxu0
        %v1274 = vadd.f32 0.0, %v1273
        %v1275 = vpop.f32.mrb[0].mxu0
        %v1276 = vadd.f32 0.0, %v1275
        %1277 = vmatprep.mubr.f32.mxu0 %v560
        %1278 = vmatmul.mubr.f32.gmra.mrb[0].mxu0 %v559
        %v1279 = vpop.f32.mrb[0].mxu0
        %v1280 = vadd.f32 0.0, %v1279
        %v1281 = vpop.f32.mrb[0].mxu0
        %v1282 = vadd.f32 0.0, %v1281
        %1283 = vmatprep.mubr.f32.mxu0 %v562
        %1284 = vmatmul.mubr.f32.gmra.mrb[0].mxu0 %v561
        %v1285 = vpop.f32.mrb[0].mxu0
        %v1286 = vadd.f32 0.0, %v1285
        %v1287 = vpop.f32.mrb[0].mxu0
        %v1288 = vadd.f32 0.0, %v1287
        %1289 = vdwg.mxu0
        %s1290 = scalar_lea.vmem [#allocation2], 2048
        %v1291 = vld [vmem:[%s1290] sm:$0xff]
        %v1292 = vld [vmem:[%s1290 + $0x8] sm:$0xff]
        %v1293 = vld [vmem:[%s1290 + $0x10] sm:$0xff]
        %v1294 = vld [vmem:[%s1290 + $0x18] sm:$0xff]
        %v1295 = vld [vmem:[%s1290 + $0x20] sm:$0xff]
        %v1296 = vld [vmem:[%s1290 + $0x28] sm:$0xff]
        %v1297 = vld [vmem:[%s1290 + $0x30] sm:$0xff]
        %v1298 = vld [vmem:[%s1290 + $0x38] sm:$0xff]
        %v1299 = vld [vmem:[%s1290 + $0x40] sm:$0xff]
        %v1300 = vld [vmem:[%s1290 + $0x48] sm:$0xff]
        %v1301 = vld [vmem:[%s1290 + $0x50] sm:$0xff]
        %v1302 = vld [vmem:[%s1290 + $0x58] sm:$0xff]
        %v1303 = vld [vmem:[%s1290 + $0x60] sm:$0xff]
        %v1304 = vld [vmem:[%s1290 + $0x68] sm:$0xff]
        %v1305 = vld [vmem:[%s1290 + $0x70] sm:$0xff]
        %v1306 = vld [vmem:[%s1290 + $0x78] sm:$0xff]
        %v1307 = vld [vmem:[%s1290 + $0x80] sm:$0xff]
        %v1308 = vld [vmem:[%s1290 + $0x88] sm:$0xff]
        %v1309 = vld [vmem:[%s1290 + $0x90] sm:$0xff]
        %v1310 = vld [vmem:[%s1290 + $0x98] sm:$0xff]
        %v1311 = vld [vmem:[%s1290 + $0xa0] sm:$0xff]
        %v1312 = vld [vmem:[%s1290 + $0xa8] sm:$0xff]
        %v1313 = vld [vmem:[%s1290 + $0xb0] sm:$0xff]
        %v1314 = vld [vmem:[%s1290 + $0xb8] sm:$0xff]
        %v1315 = vld [vmem:[%s1290 + $0xc0] sm:$0xff]
        %v1316 = vld [vmem:[%s1290 + $0xc8] sm:$0xff]
        %v1317 = vld [vmem:[%s1290 + $0xd0] sm:$0xff]
        %v1318 = vld [vmem:[%s1290 + $0xd8] sm:$0xff]
        %v1319 = vld [vmem:[%s1290 + $0xe0] sm:$0xff]
        %v1320 = vld [vmem:[%s1290 + $0xe8] sm:$0xff]
        %v1321 = vld [vmem:[%s1290 + $0xf0] sm:$0xff]
        %v1322 = vld [vmem:[%s1290 + $0xf8] sm:$0xff]
        %v1323 = vld [vmem:[%s1290 + $0x100] sm:$0xff]
        %v1324 = vld [vmem:[%s1290 + $0x108] sm:$0xff]
        %v1325 = vld [vmem:[%s1290 + $0x110] sm:$0xff]
        %v1326 = vld [vmem:[%s1290 + $0x118] sm:$0xff]
        %v1327 = vld [vmem:[%s1290 + $0x120] sm:$0xff]
        %v1328 = vld [vmem:[%s1290 + $0x128] sm:$0xff]
        %v1329 = vld [vmem:[%s1290 + $0x130] sm:$0xff]
        %v1330 = vld [vmem:[%s1290 + $0x138] sm:$0xff]
        %v1331 = vld [vmem:[%s1290 + $0x140] sm:$0xff]
        %v1332 = vld [vmem:[%s1290 + $0x148] sm:$0xff]
        %v1333 = vld [vmem:[%s1290 + $0x150] sm:$0xff]
        %v1334 = vld [vmem:[%s1290 + $0x158] sm:$0xff]
        %v1335 = vld [vmem:[%s1290 + $0x160] sm:$0xff]
        %v1336 = vld [vmem:[%s1290 + $0x168] sm:$0xff]
        %v1337 = vld [vmem:[%s1290 + $0x170] sm:$0xff]
        %v1338 = vld [vmem:[%s1290 + $0x178] sm:$0xff]
        %v1339 = vld [vmem:[%s1290 + $0x180] sm:$0xff]
        %v1340 = vld [vmem:[%s1290 + $0x188] sm:$0xff]
        %v1341 = vld [vmem:[%s1290 + $0x190] sm:$0xff]
        %v1342 = vld [vmem:[%s1290 + $0x198] sm:$0xff]
        %v1343 = vld [vmem:[%s1290 + $0x1a0] sm:$0xff]
        %v1344 = vld [vmem:[%s1290 + $0x1a8] sm:$0xff]
        %v1345 = vld [vmem:[%s1290 + $0x1b0] sm:$0xff]
        %v1346 = vld [vmem:[%s1290 + $0x1b8] sm:$0xff]
        %v1347 = vld [vmem:[%s1290 + $0x1c0] sm:$0xff]
        %v1348 = vld [vmem:[%s1290 + $0x1c8] sm:$0xff]
        %v1349 = vld [vmem:[%s1290 + $0x1d0] sm:$0xff]
        %v1350 = vld [vmem:[%s1290 + $0x1d8] sm:$0xff]
        %v1351 = vld [vmem:[%s1290 + $0x1e0] sm:$0xff]
        %v1352 = vld [vmem:[%s1290 + $0x1e8] sm:$0xff]
        %v1353 = vld [vmem:[%s1290 + $0x1f0] sm:$0xff]
        %v1354 = vld [vmem:[%s1290 + $0x1f8] sm:$0xff]
        %1355 = vmatprep.subr.mxu0 %v1292
        %1356 = vmatpush1.msra.mxu0 %v1291
        %1357 = vmatprep.subr.mxu0 %v1294
        %1358 = vmatpush1.msra.mxu0 %v1293
        %1359 = vmatprep.subr.mxu0 %v1296
        %1360 = vmatpush1.msra.mxu0 %v1295
        %1361 = vmatprep.subr.mxu0 %v1298
        %1362 = vmatpush1.msra.mxu0 %v1297
        %1363 = vmatprep.subr.mxu0 %v1300
        %1364 = vmatpush1.msra.mxu0 %v1299
        %1365 = vmatprep.subr.mxu0 %v1302
        %1366 = vmatpush1.msra.mxu0 %v1301
        %1367 = vmatprep.subr.mxu0 %v1304
        %1368 = vmatpush1.msra.mxu0 %v1303
        %1369 = vmatprep.subr.mxu0 %v1306
        %1370 = vmatpush1.msra.mxu0 %v1305
        %1371 = vmatprep.subr.mxu0 %v1308
        %1372 = vmatpush1.msra.mxu0 %v1307
        %1373 = vmatprep.subr.mxu0 %v1310
        %1374 = vmatpush1.msra.mxu0 %v1309
        %1375 = vmatprep.subr.mxu0 %v1312
        %1376 = vmatpush1.msra.mxu0 %v1311
        %1377 = vmatprep.subr.mxu0 %v1314
        %1378 = vmatpush1.msra.mxu0 %v1313
        %1379 = vmatprep.subr.mxu0 %v1316
        %1380 = vmatpush1.msra.mxu0 %v1315
        %1381 = vmatprep.subr.mxu0 %v1318
        %1382 = vmatpush1.msra.mxu0 %v1317
        %1383 = vmatprep.subr.mxu0 %v1320
        %1384 = vmatpush1.msra.mxu0 %v1319
        %1385 = vmatprep.subr.mxu0 %v1322
        %1386 = vmatpush1.msra.mxu0 %v1321
        %1387 = vmatprep.subr.mxu0 %v1324
        %1388 = vmatpush1.msra.mxu0 %v1323
        %1389 = vmatprep.subr.mxu0 %v1326
        %1390 = vmatpush1.msra.mxu0 %v1325
        %1391 = vmatprep.subr.mxu0 %v1328
        %1392 = vmatpush1.msra.mxu0 %v1327
        %1393 = vmatprep.subr.mxu0 %v1330
        %1394 = vmatpush1.msra.mxu0 %v1329
        %1395 = vmatprep.subr.mxu0 %v1332
        %1396 = vmatpush1.msra.mxu0 %v1331
        %1397 = vmatprep.subr.mxu0 %v1334
        %1398 = vmatpush1.msra.mxu0 %v1333
        %1399 = vmatprep.subr.mxu0 %v1336
        %1400 = vmatpush1.msra.mxu0 %v1335
        %1401 = vmatprep.subr.mxu0 %v1338
        %1402 = vmatpush1.msra.mxu0 %v1337
        %1403 = vmatprep.subr.mxu0 %v1340
        %1404 = vmatpush1.msra.mxu0 %v1339
        %1405 = vmatprep.subr.mxu0 %v1342
        %1406 = vmatpush1.msra.mxu0 %v1341
        %1407 = vmatprep.subr.mxu0 %v1344
        %1408 = vmatpush1.msra.mxu0 %v1343
        %1409 = vmatprep.subr.mxu0 %v1346
        %1410 = vmatpush1.msra.mxu0 %v1345
        %1411 = vmatprep.subr.mxu0 %v1348
        %1412 = vmatpush1.msra.mxu0 %v1347
        %1413 = vmatprep.subr.mxu0 %v1350
        %1414 = vmatpush1.msra.mxu0 %v1349
        %1415 = vmatprep.subr.mxu0 %v1352
        %1416 = vmatpush1.msra.mxu0 %v1351
        %1417 = vmatprep.subr.mxu0 %v1354
        %1418 = vmatpush1.msra.mxu0 %v1353
        %1419 = vmatprep.mubr.f32.mxu0 %v548
        %1420 = vmatmul.mubr.f32.gmra.mrb[0].mxu0 %v547
        %v1421 = vpop.f32.mrb[0].mxu0
        %v1422 = vadd.f32 0.0, %v1421
        %v1423 = vpop.f32.mrb[0].mxu0
        %v1424 = vadd.f32 0.0, %v1423
        %1425 = vmatprep.mubr.f32.mxu0 %v550
        %1426 = vmatmul.mubr.f32.gmra.mrb[0].mxu0 %v549
        %v1427 = vpop.f32.mrb[0].mxu0
        %v1428 = vadd.f32 0.0, %v1427
        %v1429 = vpop.f32.mrb[0].mxu0
        %v1430 = vadd.f32 0.0, %v1429
        %1431 = vmatprep.mubr.f32.mxu0 %v552
        %1432 = vmatmul.mubr.f32.gmra.mrb[0].mxu0 %v551
        %v1433 = vpop.f32.mrb[0].mxu0
        %v1434 = vadd.f32 0.0, %v1433
        %v1435 = vpop.f32.mrb[0].mxu0
        %v1436 = vadd.f32 0.0, %v1435
        %1437 = vmatprep.mubr.f32.mxu0 %v554
        %1438 = vmatmul.mubr.f32.gmra.mrb[0].mxu0 %v553
        %v1439 = vpop.f32.mrb[0].mxu0
        %v1440 = vadd.f32 0.0, %v1439
        %v1441 = vpop.f32.mrb[0].mxu0
        %v1442 = vadd.f32 0.0, %v1441
        %1443 = vmatprep.mubr.f32.mxu0 %v556
        %1444 = vmatmul.mubr.f32.gmra.mrb[0].mxu0 %v555
        %v1445 = vpop.f32.mrb[0].mxu0
        %v1446 = vadd.f32 0.0, %v1445
        %v1447 = vpop.f32.mrb[0].mxu0
        %v1448 = vadd.f32 0.0, %v1447
        %1449 = vmatprep.mubr.f32.mxu0 %v558
        %1450 = vmatmul.mubr.f32.gmra.mrb[0].mxu0 %v557
        %v1451 = vpop.f32.mrb[0].mxu0
        %v1452 = vadd.f32 0.0, %v1451
        %v1453 = vpop.f32.mrb[0].mxu0
        %v1454 = vadd.f32 0.0, %v1453
        %1455 = vmatprep.mubr.f32.mxu0 %v560
        %1456 = vmatmul.mubr.f32.gmra.mrb[0].mxu0 %v559
        %v1457 = vpop.f32.mrb[0].mxu0
        %v1458 = vadd.f32 0.0, %v1457
        %v1459 = vpop.f32.mrb[0].mxu0
        %v1460 = vadd.f32 0.0, %v1459
        %1461 = vmatprep.mubr.f32.mxu0 %v562
        %1462 = vmatmul.mubr.f32.gmra.mrb[0].mxu0 %v561
        %v1463 = vpop.f32.mrb[0].mxu0
        %v1464 = vadd.f32 0.0, %v1463
        %v1465 = vpop.f32.mrb[0].mxu0
        %v1466 = vadd.f32 0.0, %v1465
        %1467 = vdwg.mxu0
        %s1468 = scalar_lea.vmem [#allocation2], 2560
        %v1469 = vld [vmem:[%s1468] sm:$0xff]
        %v1470 = vld [vmem:[%s1468 + $0x8] sm:$0xff]
        %v1471 = vld [vmem:[%s1468 + $0x10] sm:$0xff]
        %v1472 = vld [vmem:[%s1468 + $0x18] sm:$0xff]
        %v1473 = vld [vmem:[%s1468 + $0x20] sm:$0xff]
        %v1474 = vld [vmem:[%s1468 + $0x28] sm:$0xff]
        %v1475 = vld [vmem:[%s1468 + $0x30] sm:$0xff]
        %v1476 = vld [vmem:[%s1468 + $0x38] sm:$0xff]
        %v1477 = vld [vmem:[%s1468 + $0x40] sm:$0xff]
        %v1478 = vld [vmem:[%s1468 + $0x48] sm:$0xff]
        %v1479 = vld [vmem:[%s1468 + $0x50] sm:$0xff]
        %v1480 = vld [vmem:[%s1468 + $0x58] sm:$0xff]
        %v1481 = vld [vmem:[%s1468 + $0x60] sm:$0xff]
        %v1482 = vld [vmem:[%s1468 + $0x68] sm:$0xff]
        %v1483 = vld [vmem:[%s1468 + $0x70] sm:$0xff]
        %v1484 = vld [vmem:[%s1468 + $0x78] sm:$0xff]
        %v1485 = vld [vmem:[%s1468 + $0x80] sm:$0xff]
        %v1486 = vld [vmem:[%s1468 + $0x88] sm:$0xff]
        %v1487 = vld [vmem:[%s1468 + $0x90] sm:$0xff]
        %v1488 = vld [vmem:[%s1468 + $0x98] sm:$0xff]
        %v1489 = vld [vmem:[%s1468 + $0xa0] sm:$0xff]
        %v1490 = vld [vmem:[%s1468 + $0xa8] sm:$0xff]
        %v1491 = vld [vmem:[%s1468 + $0xb0] sm:$0xff]
        %v1492 = vld [vmem:[%s1468 + $0xb8] sm:$0xff]
        %v1493 = vld [vmem:[%s1468 + $0xc0] sm:$0xff]
        %v1494 = vld [vmem:[%s1468 + $0xc8] sm:$0xff]
        %v1495 = vld [vmem:[%s1468 + $0xd0] sm:$0xff]
        %v1496 = vld [vmem:[%s1468 + $0xd8] sm:$0xff]
        %v1497 = vld [vmem:[%s1468 + $0xe0] sm:$0xff]
        %v1498 = vld [vmem:[%s1468 + $0xe8] sm:$0xff]
        %v1499 = vld [vmem:[%s1468 + $0xf0] sm:$0xff]
        %v1500 = vld [vmem:[%s1468 + $0xf8] sm:$0xff]
        %v1501 = vld [vmem:[%s1468 + $0x100] sm:$0xff]
        %v1502 = vld [vmem:[%s1468 + $0x108] sm:$0xff]
        %v1503 = vld [vmem:[%s1468 + $0x110] sm:$0xff]
        %v1504 = vld [vmem:[%s1468 + $0x118] sm:$0xff]
        %v1505 = vld [vmem:[%s1468 + $0x120] sm:$0xff]
        %v1506 = vld [vmem:[%s1468 + $0x128] sm:$0xff]
        %v1507 = vld [vmem:[%s1468 + $0x130] sm:$0xff]
        %v1508 = vld [vmem:[%s1468 + $0x138] sm:$0xff]
        %v1509 = vld [vmem:[%s1468 + $0x140] sm:$0xff]
        %v1510 = vld [vmem:[%s1468 + $0x148] sm:$0xff]
        %v1511 = vld [vmem:[%s1468 + $0x150] sm:$0xff]
        %v1512 = vld [vmem:[%s1468 + $0x158] sm:$0xff]
        %v1513 = vld [vmem:[%s1468 + $0x160] sm:$0xff]
        %v1514 = vld [vmem:[%s1468 + $0x168] sm:$0xff]
        %v1515 = vld [vmem:[%s1468 + $0x170] sm:$0xff]
        %v1516 = vld [vmem:[%s1468 + $0x178] sm:$0xff]
        %v1517 = vld [vmem:[%s1468 + $0x180] sm:$0xff]
        %v1518 = vld [vmem:[%s1468 + $0x188] sm:$0xff]
        %v1519 = vld [vmem:[%s1468 + $0x190] sm:$0xff]
        %v1520 = vld [vmem:[%s1468 + $0x198] sm:$0xff]
        %v1521 = vld [vmem:[%s1468 + $0x1a0] sm:$0xff]
        %v1522 = vld [vmem:[%s1468 + $0x1a8] sm:$0xff]
        %v1523 = vld [vmem:[%s1468 + $0x1b0] sm:$0xff]
        %v1524 = vld [vmem:[%s1468 + $0x1b8] sm:$0xff]
        %v1525 = vld [vmem:[%s1468 + $0x1c0] sm:$0xff]
        %v1526 = vld [vmem:[%s1468 + $0x1c8] sm:$0xff]
        %v1527 = vld [vmem:[%s1468 + $0x1d0] sm:$0xff]
        %v1528 = vld [vmem:[%s1468 + $0x1d8] sm:$0xff]
        %v1529 = vld [vmem:[%s1468 + $0x1e0] sm:$0xff]
        %v1530 = vld [vmem:[%s1468 + $0x1e8] sm:$0xff]
        %v1531 = vld [vmem:[%s1468 + $0x1f0] sm:$0xff]
        %v1532 = vld [vmem:[%s1468 + $0x1f8] sm:$0xff]
        %1533 = vmatprep.subr.mxu0 %v1470
        %1534 = vmatpush1.msra.mxu0 %v1469
        %1535 = vmatprep.subr.mxu0 %v1472
        %1536 = vmatpush1.msra.mxu0 %v1471
        %1537 = vmatprep.subr.mxu0 %v1474
        %1538 = vmatpush1.msra.mxu0 %v1473
        %1539 = vmatprep.subr.mxu0 %v1476
        %1540 = vmatpush1.msra.mxu0 %v1475
        %1541 = vmatprep.subr.mxu0 %v1478
        %1542 = vmatpush1.msra.mxu0 %v1477
        %1543 = vmatprep.subr.mxu0 %v1480
        %1544 = vmatpush1.msra.mxu0 %v1479
        %1545 = vmatprep.subr.mxu0 %v1482
        %1546 = vmatpush1.msra.mxu0 %v1481
        %1547 = vmatprep.subr.mxu0 %v1484
        %1548 = vmatpush1.msra.mxu0 %v1483
        %1549 = vmatprep.subr.mxu0 %v1486
        %1550 = vmatpush1.msra.mxu0 %v1485
        %1551 = vmatprep.subr.mxu0 %v1488
        %1552 = vmatpush1.msra.mxu0 %v1487
        %1553 = vmatprep.subr.mxu0 %v1490
        %1554 = vmatpush1.msra.mxu0 %v1489
        %1555 = vmatprep.subr.mxu0 %v1492
        %1556 = vmatpush1.msra.mxu0 %v1491
        %1557 = vmatprep.subr.mxu0 %v1494
        %1558 = vmatpush1.msra.mxu0 %v1493
        %1559 = vmatprep.subr.mxu0 %v1496
        %1560 = vmatpush1.msra.mxu0 %v1495
        %1561 = vmatprep.subr.mxu0 %v1498
        %1562 = vmatpush1.msra.mxu0 %v1497
        %1563 = vmatprep.subr.mxu0 %v1500
        %1564 = vmatpush1.msra.mxu0 %v1499
        %1565 = vmatprep.subr.mxu0 %v1502
        %1566 = vmatpush1.msra.mxu0 %v1501
        %1567 = vmatprep.subr.mxu0 %v1504
        %1568 = vmatpush1.msra.mxu0 %v1503
        %1569 = vmatprep.subr.mxu0 %v1506
        %1570 = vmatpush1.msra.mxu0 %v1505
        %1571 = vmatprep.subr.mxu0 %v1508
        %1572 = vmatpush1.msra.mxu0 %v1507
        %1573 = vmatprep.subr.mxu0 %v1510
        %1574 = vmatpush1.msra.mxu0 %v1509
        %1575 = vmatprep.subr.mxu0 %v1512
        %1576 = vmatpush1.msra.mxu0 %v1511
        %1577 = vmatprep.subr.mxu0 %v1514
        %1578 = vmatpush1.msra.mxu0 %v1513
        %1579 = vmatprep.subr.mxu0 %v1516
        %1580 = vmatpush1.msra.mxu0 %v1515
        %1581 = vmatprep.subr.mxu0 %v1518
        %1582 = vmatpush1.msra.mxu0 %v1517
        %1583 = vmatprep.subr.mxu0 %v1520
        %1584 = vmatpush1.msra.mxu0 %v1519
        %1585 = vmatprep.subr.mxu0 %v1522
        %1586 = vmatpush1.msra.mxu0 %v1521
        %1587 = vmatprep.subr.mxu0 %v1524
        %1588 = vmatpush1.msra.mxu0 %v1523
        %1589 = vmatprep.subr.mxu0 %v1526
        %1590 = vmatpush1.msra.mxu0 %v1525
        %1591 = vmatprep.subr.mxu0 %v1528
        %1592 = vmatpush1.msra.mxu0 %v1527
        %1593 = vmatprep.subr.mxu0 %v1530
        %1594 = vmatpush1.msra.mxu0 %v1529
        %1595 = vmatprep.subr.mxu0 %v1532
        %1596 = vmatpush1.msra.mxu0 %v1531
        %1597 = vmatprep.mubr.f32.mxu0 %v548
        %1598 = vmatmul.mubr.f32.gmra.mrb[0].mxu0 %v547
        %v1599 = vpop.f32.mrb[0].mxu0
        %v1600 = vadd.f32 0.0, %v1599
        %v1601 = vpop.f32.mrb[0].mxu0
        %v1602 = vadd.f32 0.0, %v1601
        %1603 = vmatprep.mubr.f32.mxu0 %v550
        %1604 = vmatmul.mubr.f32.gmra.mrb[0].mxu0 %v549
        %v1605 = vpop.f32.mrb[0].mxu0
        %v1606 = vadd.f32 0.0, %v1605
        %v1607 = vpop.f32.mrb[0].mxu0
        %v1608 = vadd.f32 0.0, %v1607
        %1609 = vmatprep.mubr.f32.mxu0 %v552
        %1610 = vmatmul.mubr.f32.gmra.mrb[0].mxu0 %v551
        %v1611 = vpop.f32.mrb[0].mxu0
        %v1612 = vadd.f32 0.0, %v1611
        %v1613 = vpop.f32.mrb[0].mxu0
        %v1614 = vadd.f32 0.0, %v1613
        %1615 = vmatprep.mubr.f32.mxu0 %v554
        %1616 = vmatmul.mubr.f32.gmra.mrb[0].mxu0 %v553
        %v1617 = vpop.f32.mrb[0].mxu0
        %v1618 = vadd.f32 0.0, %v1617
        %v1619 = vpop.f32.mrb[0].mxu0
        %v1620 = vadd.f32 0.0, %v1619
        %1621 = vmatprep.mubr.f32.mxu0 %v556
        %1622 = vmatmul.mubr.f32.gmra.mrb[0].mxu0 %v555
        %v1623 = vpop.f32.mrb[0].mxu0
        %v1624 = vadd.f32 0.0, %v1623
        %v1625 = vpop.f32.mrb[0].mxu0
        %v1626 = vadd.f32 0.0, %v1625
        %1627 = vmatprep.mubr.f32.mxu0 %v558
        %1628 = vmatmul.mubr.f32.gmra.mrb[0].mxu0 %v557
        %v1629 = vpop.f32.mrb[0].mxu0
        %v1630 = vadd.f32 0.0, %v1629
        %v1631 = vpop.f32.mrb[0].mxu0
        %v1632 = vadd.f32 0.0, %v1631
        %1633 = vmatprep.mubr.f32.mxu0 %v560
        %1634 = vmatmul.mubr.f32.gmra.mrb[0].mxu0 %v559
        %v1635 = vpop.f32.mrb[0].mxu0
        %v1636 = vadd.f32 0.0, %v1635
        %v1637 = vpop.f32.mrb[0].mxu0
        %v1638 = vadd.f32 0.0, %v1637
        %1639 = vmatprep.mubr.f32.mxu0 %v562
        %1640 = vmatmul.mubr.f32.gmra.mrb[0].mxu0 %v561
        %v1641 = vpop.f32.mrb[0].mxu0
        %v1642 = vadd.f32 0.0, %v1641
        %v1643 = vpop.f32.mrb[0].mxu0
        %v1644 = vadd.f32 0.0, %v1643
        %1645 = vdwg.mxu0
        %s1646 = scalar_lea.vmem [#allocation2], 3072
        %v1647 = vld [vmem:[%s1646] sm:$0xff]
        %v1648 = vld [vmem:[%s1646 + $0x8] sm:$0xff]
        %v1649 = vld [vmem:[%s1646 + $0x10] sm:$0xff]
        %v1650 = vld [vmem:[%s1646 + $0x18] sm:$0xff]
        %v1651 = vld [vmem:[%s1646 + $0x20] sm:$0xff]
        %v1652 = vld [vmem:[%s1646 + $0x28] sm:$0xff]
        %v1653 = vld [vmem:[%s1646 + $0x30] sm:$0xff]
        %v1654 = vld [vmem:[%s1646 + $0x38] sm:$0xff]
        %v1655 = vld [vmem:[%s1646 + $0x40] sm:$0xff]
        %v1656 = vld [vmem:[%s1646 + $0x48] sm:$0xff]
        %v1657 = vld [vmem:[%s1646 + $0x50] sm:$0xff]
        %v1658 = vld [vmem:[%s1646 + $0x58] sm:$0xff]
        %v1659 = vld [vmem:[%s1646 + $0x60] sm:$0xff]
        %v1660 = vld [vmem:[%s1646 + $0x68] sm:$0xff]
        %v1661 = vld [vmem:[%s1646 + $0x70] sm:$0xff]
        %v1662 = vld [vmem:[%s1646 + $0x78] sm:$0xff]
        %v1663 = vld [vmem:[%s1646 + $0x80] sm:$0xff]
        %v1664 = vld [vmem:[%s1646 + $0x88] sm:$0xff]
        %v1665 = vld [vmem:[%s1646 + $0x90] sm:$0xff]
        %v1666 = vld [vmem:[%s1646 + $0x98] sm:$0xff]
        %v1667 = vld [vmem:[%s1646 + $0xa0] sm:$0xff]
        %v1668 = vld [vmem:[%s1646 + $0xa8] sm:$0xff]
        %v1669 = vld [vmem:[%s1646 + $0xb0] sm:$0xff]
        %v1670 = vld [vmem:[%s1646 + $0xb8] sm:$0xff]
        %v1671 = vld [vmem:[%s1646 + $0xc0] sm:$0xff]
        %v1672 = vld [vmem:[%s1646 + $0xc8] sm:$0xff]
        %v1673 = vld [vmem:[%s1646 + $0xd0] sm:$0xff]
        %v1674 = vld [vmem:[%s1646 + $0xd8] sm:$0xff]
        %v1675 = vld [vmem:[%s1646 + $0xe0] sm:$0xff]
        %v1676 = vld [vmem:[%s1646 + $0xe8] sm:$0xff]
        %v1677 = vld [vmem:[%s1646 + $0xf0] sm:$0xff]
        %v1678 = vld [vmem:[%s1646 + $0xf8] sm:$0xff]
        %v1679 = vld [vmem:[%s1646 + $0x100] sm:$0xff]
        %v1680 = vld [vmem:[%s1646 + $0x108] sm:$0xff]
        %v1681 = vld [vmem:[%s1646 + $0x110] sm:$0xff]
        %v1682 = vld [vmem:[%s1646 + $0x118] sm:$0xff]
        %v1683 = vld [vmem:[%s1646 + $0x120] sm:$0xff]
        %v1684 = vld [vmem:[%s1646 + $0x128] sm:$0xff]
        %v1685 = vld [vmem:[%s1646 + $0x130] sm:$0xff]
        %v1686 = vld [vmem:[%s1646 + $0x138] sm:$0xff]
        %v1687 = vld [vmem:[%s1646 + $0x140] sm:$0xff]
        %v1688 = vld [vmem:[%s1646 + $0x148] sm:$0xff]
        %v1689 = vld [vmem:[%s1646 + $0x150] sm:$0xff]
        %v1690 = vld [vmem:[%s1646 + $0x158] sm:$0xff]
        %v1691 = vld [vmem:[%s1646 + $0x160] sm:$0xff]
        %v1692 = vld [vmem:[%s1646 + $0x168] sm:$0xff]
        %v1693 = vld [vmem:[%s1646 + $0x170] sm:$0xff]
        %v1694 = vld [vmem:[%s1646 + $0x178] sm:$0xff]
        %v1695 = vld [vmem:[%s1646 + $0x180] sm:$0xff]
        %v1696 = vld [vmem:[%s1646 + $0x188] sm:$0xff]
        %v1697 = vld [vmem:[%s1646 + $0x190] sm:$0xff]
        %v1698 = vld [vmem:[%s1646 + $0x198] sm:$0xff]
        %v1699 = vld [vmem:[%s1646 + $0x1a0] sm:$0xff]
        %v1700 = vld [vmem:[%s1646 + $0x1a8] sm:$0xff]
        %v1701 = vld [vmem:[%s1646 + $0x1b0] sm:$0xff]
        %v1702 = vld [vmem:[%s1646 + $0x1b8] sm:$0xff]
        %v1703 = vld [vmem:[%s1646 + $0x1c0] sm:$0xff]
        %v1704 = vld [vmem:[%s1646 + $0x1c8] sm:$0xff]
        %v1705 = vld [vmem:[%s1646 + $0x1d0] sm:$0xff]
        %v1706 = vld [vmem:[%s1646 + $0x1d8] sm:$0xff]
        %v1707 = vld [vmem:[%s1646 + $0x1e0] sm:$0xff]
        %v1708 = vld [vmem:[%s1646 + $0x1e8] sm:$0xff]
        %v1709 = vld [vmem:[%s1646 + $0x1f0] sm:$0xff]
        %v1710 = vld [vmem:[%s1646 + $0x1f8] sm:$0xff]
        %1711 = vmatprep.subr.mxu0 %v1648
        %1712 = vmatpush1.msra.mxu0 %v1647
        %1713 = vmatprep.subr.mxu0 %v1650
        %1714 = vmatpush1.msra.mxu0 %v1649
        %1715 = vmatprep.subr.mxu0 %v1652
        %1716 = vmatpush1.msra.mxu0 %v1651
        %1717 = vmatprep.subr.mxu0 %v1654
        %1718 = vmatpush1.msra.mxu0 %v1653
        %1719 = vmatprep.subr.mxu0 %v1656
        %1720 = vmatpush1.msra.mxu0 %v1655
        %1721 = vmatprep.subr.mxu0 %v1658
        %1722 = vmatpush1.msra.mxu0 %v1657
        %1723 = vmatprep.subr.mxu0 %v1660
        %1724 = vmatpush1.msra.mxu0 %v1659
        %1725 = vmatprep.subr.mxu0 %v1662
        %1726 = vmatpush1.msra.mxu0 %v1661
        %1727 = vmatprep.subr.mxu0 %v1664
        %1728 = vmatpush1.msra.mxu0 %v1663
        %1729 = vmatprep.subr.mxu0 %v1666
        %1730 = vmatpush1.msra.mxu0 %v1665
        %1731 = vmatprep.subr.mxu0 %v1668
        %1732 = vmatpush1.msra.mxu0 %v1667
        %1733 = vmatprep.subr.mxu0 %v1670
        %1734 = vmatpush1.msra.mxu0 %v1669
        %1735 = vmatprep.subr.mxu0 %v1672
        %1736 = vmatpush1.msra.mxu0 %v1671
        %1737 = vmatprep.subr.mxu0 %v1674
        %1738 = vmatpush1.msra.mxu0 %v1673
        %1739 = vmatprep.subr.mxu0 %v1676
        %1740 = vmatpush1.msra.mxu0 %v1675
        %1741 = vmatprep.subr.mxu0 %v1678
        %1742 = vmatpush1.msra.mxu0 %v1677
        %1743 = vmatprep.subr.mxu0 %v1680
        %1744 = vmatpush1.msra.mxu0 %v1679
        %1745 = vmatprep.subr.mxu0 %v1682
        %1746 = vmatpush1.msra.mxu0 %v1681
        %1747 = vmatprep.subr.mxu0 %v1684
        %1748 = vmatpush1.msra.mxu0 %v1683
        %1749 = vmatprep.subr.mxu0 %v1686
        %1750 = vmatpush1.msra.mxu0 %v1685
        %1751 = vmatprep.subr.mxu0 %v1688
        %1752 = vmatpush1.msra.mxu0 %v1687
        %1753 = vmatprep.subr.mxu0 %v1690
        %1754 = vmatpush1.msra.mxu0 %v1689
        %1755 = vmatprep.subr.mxu0 %v1692
        %1756 = vmatpush1.msra.mxu0 %v1691
        %1757 = vmatprep.subr.mxu0 %v1694
        %1758 = vmatpush1.msra.mxu0 %v1693
        %1759 = vmatprep.subr.mxu0 %v1696
        %1760 = vmatpush1.msra.mxu0 %v1695
        %1761 = vmatprep.subr.mxu0 %v1698
        %1762 = vmatpush1.msra.mxu0 %v1697
        %1763 = vmatprep.subr.mxu0 %v1700
        %1764 = vmatpush1.msra.mxu0 %v1699
        %1765 = vmatprep.subr.mxu0 %v1702
        %1766 = vmatpush1.msra.mxu0 %v1701
        %1767 = vmatprep.subr.mxu0 %v1704
        %1768 = vmatpush1.msra.mxu0 %v1703
        %1769 = vmatprep.subr.mxu0 %v1706
        %1770 = vmatpush1.msra.mxu0 %v1705
        %1771 = vmatprep.subr.mxu0 %v1708
        %1772 = vmatpush1.msra.mxu0 %v1707
        %1773 = vmatprep.subr.mxu0 %v1710
        %1774 = vmatpush1.msra.mxu0 %v1709
        %1775 = vmatprep.mubr.f32.mxu0 %v548
        %1776 = vmatmul.mubr.f32.gmra.mrb[0].mxu0 %v547
        %v1777 = vpop.f32.mrb[0].mxu0
        %v1778 = vadd.f32 0.0, %v1777
        %v1779 = vpop.f32.mrb[0].mxu0
        %v1780 = vadd.f32 0.0, %v1779
        %1781 = vmatprep.mubr.f32.mxu0 %v550
        %1782 = vmatmul.mubr.f32.gmra.mrb[0].mxu0 %v549
        %v1783 = vpop.f32.mrb[0].mxu0
        %v1784 = vadd.f32 0.0, %v1783
        %v1785 = vpop.f32.mrb[0].mxu0
        %v1786 = vadd.f32 0.0, %v1785
        %1787 = vmatprep.mubr.f32.mxu0 %v552
        %1788 = vmatmul.mubr.f32.gmra.mrb[0].mxu0 %v551
        %v1789 = vpop.f32.mrb[0].mxu0
        %v1790 = vadd.f32 0.0, %v1789
        %v1791 = vpop.f32.mrb[0].mxu0
        %v1792 = vadd.f32 0.0, %v1791
        %1793 = vmatprep.mubr.f32.mxu0 %v554
        %1794 = vmatmul.mubr.f32.gmra.mrb[0].mxu0 %v553
        %v1795 = vpop.f32.mrb[0].mxu0
        %v1796 = vadd.f32 0.0, %v1795
        %v1797 = vpop.f32.mrb[0].mxu0
        %v1798 = vadd.f32 0.0, %v1797
        %1799 = vmatprep.mubr.f32.mxu0 %v556
        %1800 = vmatmul.mubr.f32.gmra.mrb[0].mxu0 %v555
        %v1801 = vpop.f32.mrb[0].mxu0
        %v1802 = vadd.f32 0.0, %v1801
        %v1803 = vpop.f32.mrb[0].mxu0
        %v1804 = vadd.f32 0.0, %v1803
        %1805 = vmatprep.mubr.f32.mxu0 %v558
        %1806 = vmatmul.mubr.f32.gmra.mrb[0].mxu0 %v557
        %v1807 = vpop.f32.mrb[0].mxu0
        %v1808 = vadd.f32 0.0, %v1807
        %v1809 = vpop.f32.mrb[0].mxu0
        %v1810 = vadd.f32 0.0, %v1809
        %1811 = vmatprep.mubr.f32.mxu0 %v560
        %1812 = vmatmul.mubr.f32.gmra.mrb[0].mxu0 %v559
        %v1813 = vpop.f32.mrb[0].mxu0
        %v1814 = vadd.f32 0.0, %v1813
        %v1815 = vpop.f32.mrb[0].mxu0
        %v1816 = vadd.f32 0.0, %v1815
        %1817 = vmatprep.mubr.f32.mxu0 %v562
        %1818 = vmatmul.mubr.f32.gmra.mrb[0].mxu0 %v561
        %v1819 = vpop.f32.mrb[0].mxu0
        %v1820 = vadd.f32 0.0, %v1819
        %v1821 = vpop.f32.mrb[0].mxu0
        %v1822 = vadd.f32 0.0, %v1821
        %1823 = vdwg.mxu0
        %s1824 = scalar_lea.vmem [#allocation2], 3584
        %v1825 = vld [vmem:[%s1824] sm:$0xff]
        %v1826 = vld [vmem:[%s1824 + $0x8] sm:$0xff]
        %v1827 = vld [vmem:[%s1824 + $0x10] sm:$0xff]
        %v1828 = vld [vmem:[%s1824 + $0x18] sm:$0xff]
        %v1829 = vld [vmem:[%s1824 + $0x20] sm:$0xff]
        %v1830 = vld [vmem:[%s1824 + $0x28] sm:$0xff]
        %v1831 = vld [vmem:[%s1824 + $0x30] sm:$0xff]
        %v1832 = vld [vmem:[%s1824 + $0x38] sm:$0xff]
        %v1833 = vld [vmem:[%s1824 + $0x40] sm:$0xff]
        %v1834 = vld [vmem:[%s1824 + $0x48] sm:$0xff]
        %v1835 = vld [vmem:[%s1824 + $0x50] sm:$0xff]
        %v1836 = vld [vmem:[%s1824 + $0x58] sm:$0xff]
        %v1837 = vld [vmem:[%s1824 + $0x60] sm:$0xff]
        %v1838 = vld [vmem:[%s1824 + $0x68] sm:$0xff]
        %v1839 = vld [vmem:[%s1824 + $0x70] sm:$0xff]
        %v1840 = vld [vmem:[%s1824 + $0x78] sm:$0xff]
        %v1841 = vld [vmem:[%s1824 + $0x80] sm:$0xff]
        %v1842 = vld [vmem:[%s1824 + $0x88] sm:$0xff]
        %v1843 = vld [vmem:[%s1824 + $0x90] sm:$0xff]
        %v1844 = vld [vmem:[%s1824 + $0x98] sm:$0xff]
        %v1845 = vld [vmem:[%s1824 + $0xa0] sm:$0xff]
        %v1846 = vld [vmem:[%s1824 + $0xa8] sm:$0xff]
        %v1847 = vld [vmem:[%s1824 + $0xb0] sm:$0xff]
        %v1848 = vld [vmem:[%s1824 + $0xb8] sm:$0xff]
        %v1849 = vld [vmem:[%s1824 + $0xc0] sm:$0xff]
        %v1850 = vld [vmem:[%s1824 + $0xc8] sm:$0xff]
        %v1851 = vld [vmem:[%s1824 + $0xd0] sm:$0xff]
        %v1852 = vld [vmem:[%s1824 + $0xd8] sm:$0xff]
        %v1853 = vld [vmem:[%s1824 + $0xe0] sm:$0xff]
        %v1854 = vld [vmem:[%s1824 + $0xe8] sm:$0xff]
        %v1855 = vld [vmem:[%s1824 + $0xf0] sm:$0xff]
        %v1856 = vld [vmem:[%s1824 + $0xf8] sm:$0xff]
        %v1857 = vld [vmem:[%s1824 + $0x100] sm:$0xff]
        %v1858 = vld [vmem:[%s1824 + $0x108] sm:$0xff]
        %v1859 = vld [vmem:[%s1824 + $0x110] sm:$0xff]
        %v1860 = vld [vmem:[%s1824 + $0x118] sm:$0xff]
        %v1861 = vld [vmem:[%s1824 + $0x120] sm:$0xff]
        %v1862 = vld [vmem:[%s1824 + $0x128] sm:$0xff]
        %v1863 = vld [vmem:[%s1824 + $0x130] sm:$0xff]
        %v1864 = vld [vmem:[%s1824 + $0x138] sm:$0xff]
        %v1865 = vld [vmem:[%s1824 + $0x140] sm:$0xff]
        %v1866 = vld [vmem:[%s1824 + $0x148] sm:$0xff]
        %v1867 = vld [vmem:[%s1824 + $0x150] sm:$0xff]
        %v1868 = vld [vmem:[%s1824 + $0x158] sm:$0xff]
        %v1869 = vld [vmem:[%s1824 + $0x160] sm:$0xff]
        %v1870 = vld [vmem:[%s1824 + $0x168] sm:$0xff]
        %v1871 = vld [vmem:[%s1824 + $0x170] sm:$0xff]
        %v1872 = vld [vmem:[%s1824 + $0x178] sm:$0xff]
        %v1873 = vld [vmem:[%s1824 + $0x180] sm:$0xff]
        %v1874 = vld [vmem:[%s1824 + $0x188] sm:$0xff]
        %v1875 = vld [vmem:[%s1824 + $0x190] sm:$0xff]
        %v1876 = vld [vmem:[%s1824 + $0x198] sm:$0xff]
        %v1877 = vld [vmem:[%s1824 + $0x1a0] sm:$0xff]
        %v1878 = vld [vmem:[%s1824 + $0x1a8] sm:$0xff]
        %v1879 = vld [vmem:[%s1824 + $0x1b0] sm:$0xff]
        %v1880 = vld [vmem:[%s1824 + $0x1b8] sm:$0xff]
        %v1881 = vld [vmem:[%s1824 + $0x1c0] sm:$0xff]
        %v1882 = vld [vmem:[%s1824 + $0x1c8] sm:$0xff]
        %v1883 = vld [vmem:[%s1824 + $0x1d0] sm:$0xff]
        %v1884 = vld [vmem:[%s1824 + $0x1d8] sm:$0xff]
        %v1885 = vld [vmem:[%s1824 + $0x1e0] sm:$0xff]
        %v1886 = vld [vmem:[%s1824 + $0x1e8] sm:$0xff]
        %v1887 = vld [vmem:[%s1824 + $0x1f0] sm:$0xff]
        %v1888 = vld [vmem:[%s1824 + $0x1f8] sm:$0xff]
        %1889 = vmatprep.subr.mxu0 %v1826
        %1890 = vmatpush1.msra.mxu0 %v1825
        %1891 = vmatprep.subr.mxu0 %v1828
        %1892 = vmatpush1.msra.mxu0 %v1827
        %1893 = vmatprep.subr.mxu0 %v1830
        %1894 = vmatpush1.msra.mxu0 %v1829
        %1895 = vmatprep.subr.mxu0 %v1832
        %1896 = vmatpush1.msra.mxu0 %v1831
        %1897 = vmatprep.subr.mxu0 %v1834
        %1898 = vmatpush1.msra.mxu0 %v1833
        %1899 = vmatprep.subr.mxu0 %v1836
        %1900 = vmatpush1.msra.mxu0 %v1835
        %1901 = vmatprep.subr.mxu0 %v1838
        %1902 = vmatpush1.msra.mxu0 %v1837
        %1903 = vmatprep.subr.mxu0 %v1840
        %1904 = vmatpush1.msra.mxu0 %v1839
        %1905 = vmatprep.subr.mxu0 %v1842
        %1906 = vmatpush1.msra.mxu0 %v1841
        %1907 = vmatprep.subr.mxu0 %v1844
        %1908 = vmatpush1.msra.mxu0 %v1843
        %1909 = vmatprep.subr.mxu0 %v1846
        %1910 = vmatpush1.msra.mxu0 %v1845
        %1911 = vmatprep.subr.mxu0 %v1848
        %1912 = vmatpush1.msra.mxu0 %v1847
        %1913 = vmatprep.subr.mxu0 %v1850
        %1914 = vmatpush1.msra.mxu0 %v1849
        %1915 = vmatprep.subr.mxu0 %v1852
        %1916 = vmatpush1.msra.mxu0 %v1851
        %1917 = vmatprep.subr.mxu0 %v1854
        %1918 = vmatpush1.msra.mxu0 %v1853
        %1919 = vmatprep.subr.mxu0 %v1856
        %1920 = vmatpush1.msra.mxu0 %v1855
        %1921 = vmatprep.subr.mxu0 %v1858
        %1922 = vmatpush1.msra.mxu0 %v1857
        %1923 = vmatprep.subr.mxu0 %v1860
        %1924 = vmatpush1.msra.mxu0 %v1859
        %1925 = vmatprep.subr.mxu0 %v1862
        %1926 = vmatpush1.msra.mxu0 %v1861
        %1927 = vmatprep.subr.mxu0 %v1864
        %1928 = vmatpush1.msra.mxu0 %v1863
        %1929 = vmatprep.subr.mxu0 %v1866
        %1930 = vmatpush1.msra.mxu0 %v1865
        %1931 = vmatprep.subr.mxu0 %v1868
        %1932 = vmatpush1.msra.mxu0 %v1867
        %1933 = vmatprep.subr.mxu0 %v1870
        %1934 = vmatpush1.msra.mxu0 %v1869
        %1935 = vmatprep.subr.mxu0 %v1872
        %1936 = vmatpush1.msra.mxu0 %v1871
        %1937 = vmatprep.subr.mxu0 %v1874
        %1938 = vmatpush1.msra.mxu0 %v1873
        %1939 = vmatprep.subr.mxu0 %v1876
        %1940 = vmatpush1.msra.mxu0 %v1875
        %1941 = vmatprep.subr.mxu0 %v1878
        %1942 = vmatpush1.msra.mxu0 %v1877
        %1943 = vmatprep.subr.mxu0 %v1880
        %1944 = vmatpush1.msra.mxu0 %v1879
        %1945 = vmatprep.subr.mxu0 %v1882
        %1946 = vmatpush1.msra.mxu0 %v1881
        %1947 = vmatprep.subr.mxu0 %v1884
        %1948 = vmatpush1.msra.mxu0 %v1883
        %1949 = vmatprep.subr.mxu0 %v1886
        %1950 = vmatpush1.msra.mxu0 %v1885
        %1951 = vmatprep.subr.mxu0 %v1888
        %1952 = vmatpush1.msra.mxu0 %v1887
        %1953 = vmatprep.mubr.f32.mxu0 %v548
        %1954 = vmatmul.mubr.f32.gmra.mrb[0].mxu0 %v547
        %v1955 = vpop.f32.mrb[0].mxu0
        %v1956 = vadd.f32 0.0, %v1955
        %v1957 = vpop.f32.mrb[0].mxu0
        %v1958 = vadd.f32 0.0, %v1957
        %1959 = vmatprep.mubr.f32.mxu0 %v550
        %1960 = vmatmul.mubr.f32.gmra.mrb[0].mxu0 %v549
        %v1961 = vpop.f32.mrb[0].mxu0
        %v1962 = vadd.f32 0.0, %v1961
        %v1963 = vpop.f32.mrb[0].mxu0
        %v1964 = vadd.f32 0.0, %v1963
        %1965 = vmatprep.mubr.f32.mxu0 %v552
        %1966 = vmatmul.mubr.f32.gmra.mrb[0].mxu0 %v551
        %v1967 = vpop.f32.mrb[0].mxu0
        %v1968 = vadd.f32 0.0, %v1967
        %v1969 = vpop.f32.mrb[0].mxu0
        %v1970 = vadd.f32 0.0, %v1969
        %1971 = vmatprep.mubr.f32.mxu0 %v554
        %1972 = vmatmul.mubr.f32.gmra.mrb[0].mxu0 %v553
        %v1973 = vpop.f32.mrb[0].mxu0
        %v1974 = vadd.f32 0.0, %v1973
        %v1975 = vpop.f32.mrb[0].mxu0
        %v1976 = vadd.f32 0.0, %v1975
        %1977 = vmatprep.mubr.f32.mxu0 %v556
        %1978 = vmatmul.mubr.f32.gmra.mrb[0].mxu0 %v555
        %v1979 = vpop.f32.mrb[0].mxu0
        %v1980 = vadd.f32 0.0, %v1979
        %v1981 = vpop.f32.mrb[0].mxu0
        %v1982 = vadd.f32 0.0, %v1981
        %1983 = vmatprep.mubr.f32.mxu0 %v558
        %1984 = vmatmul.mubr.f32.gmra.mrb[0].mxu0 %v557
        %v1985 = vpop.f32.mrb[0].mxu0
        %v1986 = vadd.f32 0.0, %v1985
        %v1987 = vpop.f32.mrb[0].mxu0
        %v1988 = vadd.f32 0.0, %v1987
        %1989 = vmatprep.mubr.f32.mxu0 %v560
        %1990 = vmatmul.mubr.f32.gmra.mrb[0].mxu0 %v559
        %v1991 = vpop.f32.mrb[0].mxu0
        %v1992 = vadd.f32 0.0, %v1991
        %v1993 = vpop.f32.mrb[0].mxu0
        %v1994 = vadd.f32 0.0, %v1993
        %1995 = vmatprep.mubr.f32.mxu0 %v562
        %1996 = vmatmul.mubr.f32.gmra.mrb[0].mxu0 %v561
        %v1997 = vpop.f32.mrb[0].mxu0
        %v1998 = vadd.f32 0.0, %v1997
        %v1999 = vpop.f32.mrb[0].mxu0
        %v2000 = vadd.f32 0.0, %v1999
        %2001 = vdwg.mxu0
        %s2002 = scalar_lea.vmem [#allocation2], 4096
        %v2003 = vld [vmem:[%s2002] sm:$0xff]
        %v2004 = vld [vmem:[%s2002 + $0x8] sm:$0xff]
        %v2005 = vld [vmem:[%s2002 + $0x10] sm:$0xff]
        %v2006 = vld [vmem:[%s2002 + $0x18] sm:$0xff]
        %v2007 = vld [vmem:[%s2002 + $0x20] sm:$0xff]
        %v2008 = vld [vmem:[%s2002 + $0x28] sm:$0xff]
        %v2009 = vld [vmem:[%s2002 + $0x30] sm:$0xff]
        %v2010 = vld [vmem:[%s2002 + $0x38] sm:$0xff]
        %v2011 = vld [vmem:[%s2002 + $0x40] sm:$0xff]
        %v2012 = vld [vmem:[%s2002 + $0x48] sm:$0xff]
        %v2013 = vld [vmem:[%s2002 + $0x50] sm:$0xff]
        %v2014 = vld [vmem:[%s2002 + $0x58] sm:$0xff]
        %v2015 = vld [vmem:[%s2002 + $0x60] sm:$0xff]
        %v2016 = vld [vmem:[%s2002 + $0x68] sm:$0xff]
        %v2017 = vld [vmem:[%s2002 + $0x70] sm:$0xff]
        %v2018 = vld [vmem:[%s2002 + $0x78] sm:$0xff]
        %v2019 = vld [vmem:[%s2002 + $0x80] sm:$0xff]
        %v2020 = vld [vmem:[%s2002 + $0x88] sm:$0xff]
        %v2021 = vld [vmem:[%s2002 + $0x90] sm:$0xff]
        %v2022 = vld [vmem:[%s2002 + $0x98] sm:$0xff]
        %v2023 = vld [vmem:[%s2002 + $0xa0] sm:$0xff]
        %v2024 = vld [vmem:[%s2002 + $0xa8] sm:$0xff]
        %v2025 = vld [vmem:[%s2002 + $0xb0] sm:$0xff]
        %v2026 = vld [vmem:[%s2002 + $0xb8] sm:$0xff]
        %v2027 = vld [vmem:[%s2002 + $0xc0] sm:$0xff]
        %v2028 = vld [vmem:[%s2002 + $0xc8] sm:$0xff]
        %v2029 = vld [vmem:[%s2002 + $0xd0] sm:$0xff]
        %v2030 = vld [vmem:[%s2002 + $0xd8] sm:$0xff]
        %v2031 = vld [vmem:[%s2002 + $0xe0] sm:$0xff]
        %v2032 = vld [vmem:[%s2002 + $0xe8] sm:$0xff]
        %v2033 = vld [vmem:[%s2002 + $0xf0] sm:$0xff]
        %v2034 = vld [vmem:[%s2002 + $0xf8] sm:$0xff]
        %v2035 = vld [vmem:[%s2002 + $0x100] sm:$0xff]
        %v2036 = vld [vmem:[%s2002 + $0x108] sm:$0xff]
        %v2037 = vld [vmem:[%s2002 + $0x110] sm:$0xff]
        %v2038 = vld [vmem:[%s2002 + $0x118] sm:$0xff]
        %v2039 = vld [vmem:[%s2002 + $0x120] sm:$0xff]
        %v2040 = vld [vmem:[%s2002 + $0x128] sm:$0xff]
        %v2041 = vld [vmem:[%s2002 + $0x130] sm:$0xff]
        %v2042 = vld [vmem:[%s2002 + $0x138] sm:$0xff]
        %v2043 = vld [vmem:[%s2002 + $0x140] sm:$0xff]
        %v2044 = vld [vmem:[%s2002 + $0x148] sm:$0xff]
        %v2045 = vld [vmem:[%s2002 + $0x150] sm:$0xff]
        %v2046 = vld [vmem:[%s2002 + $0x158] sm:$0xff]
        %v2047 = vld [vmem:[%s2002 + $0x160] sm:$0xff]
        %v2048 = vld [vmem:[%s2002 + $0x168] sm:$0xff]
        %v2049 = vld [vmem:[%s2002 + $0x170] sm:$0xff]
        %v2050 = vld [vmem:[%s2002 + $0x178] sm:$0xff]
        %v2051 = vld [vmem:[%s2002 + $0x180] sm:$0xff]
        %v2052 = vld [vmem:[%s2002 + $0x188] sm:$0xff]
        %v2053 = vld [vmem:[%s2002 + $0x190] sm:$0xff]
        %v2054 = vld [vmem:[%s2002 + $0x198] sm:$0xff]
        %v2055 = vld [vmem:[%s2002 + $0x1a0] sm:$0xff]
        %v2056 = vld [vmem:[%s2002 + $0x1a8] sm:$0xff]
        %v2057 = vld [vmem:[%s2002 + $0x1b0] sm:$0xff]
        %v2058 = vld [vmem:[%s2002 + $0x1b8] sm:$0xff]
        %v2059 = vld [vmem:[%s2002 + $0x1c0] sm:$0xff]
        %v2060 = vld [vmem:[%s2002 + $0x1c8] sm:$0xff]
        %v2061 = vld [vmem:[%s2002 + $0x1d0] sm:$0xff]
        %v2062 = vld [vmem:[%s2002 + $0x1d8] sm:$0xff]
        %v2063 = vld [vmem:[%s2002 + $0x1e0] sm:$0xff]
        %v2064 = vld [vmem:[%s2002 + $0x1e8] sm:$0xff]
        %v2065 = vld [vmem:[%s2002 + $0x1f0] sm:$0xff]
        %v2066 = vld [vmem:[%s2002 + $0x1f8] sm:$0xff]
        %2067 = vmatprep.subr.mxu0 %v2004
        %2068 = vmatpush1.msra.mxu0 %v2003
        %2069 = vmatprep.subr.mxu0 %v2006
        %2070 = vmatpush1.msra.mxu0 %v2005
        %2071 = vmatprep.subr.mxu0 %v2008
        %2072 = vmatpush1.msra.mxu0 %v2007
        %2073 = vmatprep.subr.mxu0 %v2010
        %2074 = vmatpush1.msra.mxu0 %v2009
        %2075 = vmatprep.subr.mxu0 %v2012
        %2076 = vmatpush1.msra.mxu0 %v2011
        %2077 = vmatprep.subr.mxu0 %v2014
        %2078 = vmatpush1.msra.mxu0 %v2013
        %2079 = vmatprep.subr.mxu0 %v2016
        %2080 = vmatpush1.msra.mxu0 %v2015
        %2081 = vmatprep.subr.mxu0 %v2018
        %2082 = vmatpush1.msra.mxu0 %v2017
        %2083 = vmatprep.subr.mxu0 %v2020
        %2084 = vmatpush1.msra.mxu0 %v2019
        %2085 = vmatprep.subr.mxu0 %v2022
        %2086 = vmatpush1.msra.mxu0 %v2021
        %2087 = vmatprep.subr.mxu0 %v2024
        %2088 = vmatpush1.msra.mxu0 %v2023
        %2089 = vmatprep.subr.mxu0 %v2026
        %2090 = vmatpush1.msra.mxu0 %v2025
        %2091 = vmatprep.subr.mxu0 %v2028
        %2092 = vmatpush1.msra.mxu0 %v2027
        %2093 = vmatprep.subr.mxu0 %v2030
        %2094 = vmatpush1.msra.mxu0 %v2029
        %2095 = vmatprep.subr.mxu0 %v2032
        %2096 = vmatpush1.msra.mxu0 %v2031
        %2097 = vmatprep.subr.mxu0 %v2034
        %2098 = vmatpush1.msra.mxu0 %v2033
        %2099 = vmatprep.subr.mxu0 %v2036
        %2100 = vmatpush1.msra.mxu0 %v2035
        %2101 = vmatprep.subr.mxu0 %v2038
        %2102 = vmatpush1.msra.mxu0 %v2037
        %2103 = vmatprep.subr.mxu0 %v2040
        %2104 = vmatpush1.msra.mxu0 %v2039
        %2105 = vmatprep.subr.mxu0 %v2042
        %2106 = vmatpush1.msra.mxu0 %v2041
        %2107 = vmatprep.subr.mxu0 %v2044
        %2108 = vmatpush1.msra.mxu0 %v2043
        %2109 = vmatprep.subr.mxu0 %v2046
        %2110 = vmatpush1.msra.mxu0 %v2045
        %2111 = vmatprep.subr.mxu0 %v2048
        %2112 = vmatpush1.msra.mxu0 %v2047
        %2113 = vmatprep.subr.mxu0 %v2050
        %2114 = vmatpush1.msra.mxu0 %v2049
        %2115 = vmatprep.subr.mxu0 %v2052
        %2116 = vmatpush1.msra.mxu0 %v2051
        %2117 = vmatprep.subr.mxu0 %v2054
        %2118 = vmatpush1.msra.mxu0 %v2053
        %2119 = vmatprep.subr.mxu0 %v2056
        %2120 = vmatpush1.msra.mxu0 %v2055
        %2121 = vmatprep.subr.mxu0 %v2058
        %2122 = vmatpush1.msra.mxu0 %v2057
        %2123 = vmatprep.subr.mxu0 %v2060
        %2124 = vmatpush1.msra.mxu0 %v2059
        %2125 = vmatprep.subr.mxu0 %v2062
        %2126 = vmatpush1.msra.mxu0 %v2061
        %2127 = vmatprep.subr.mxu0 %v2064
        %2128 = vmatpush1.msra.mxu0 %v2063
        %2129 = vmatprep.subr.mxu0 %v2066
        %2130 = vmatpush1.msra.mxu0 %v2065
        %2131 = vmatprep.mubr.f32.mxu0 %v548
        %2132 = vmatmul.mubr.f32.gmra.mrb[0].mxu0 %v547
        %v2133 = vpop.f32.mrb[0].mxu0
        %v2134 = vadd.f32 0.0, %v2133
        %v2135 = vpop.f32.mrb[0].mxu0
        %v2136 = vadd.f32 0.0, %v2135
        %2137 = vmatprep.mubr.f32.mxu0 %v550
        %2138 = vmatmul.mubr.f32.gmra.mrb[0].mxu0 %v549
        %v2139 = vpop.f32.mrb[0].mxu0
        %v2140 = vadd.f32 0.0, %v2139
        %v2141 = vpop.f32.mrb[0].mxu0
        %v2142 = vadd.f32 0.0, %v2141
        %2143 = vmatprep.mubr.f32.mxu0 %v552
        %2144 = vmatmul.mubr.f32.gmra.mrb[0].mxu0 %v551
        %v2145 = vpop.f32.mrb[0].mxu0
        %v2146 = vadd.f32 0.0, %v2145
        %v2147 = vpop.f32.mrb[0].mxu0
        %v2148 = vadd.f32 0.0, %v2147
        %2149 = vmatprep.mubr.f32.mxu0 %v554
        %2150 = vmatmul.mubr.f32.gmra.mrb[0].mxu0 %v553
        %v2151 = vpop.f32.mrb[0].mxu0
        %v2152 = vadd.f32 0.0, %v2151
        %v2153 = vpop.f32.mrb[0].mxu0
        %v2154 = vadd.f32 0.0, %v2153
        %2155 = vmatprep.mubr.f32.mxu0 %v556
        %2156 = vmatmul.mubr.f32.gmra.mrb[0].mxu0 %v555
        %v2157 = vpop.f32.mrb[0].mxu0
        %v2158 = vadd.f32 0.0, %v2157
        %v2159 = vpop.f32.mrb[0].mxu0
        %v2160 = vadd.f32 0.0, %v2159
        %2161 = vmatprep.mubr.f32.mxu0 %v558
        %2162 = vmatmul.mubr.f32.gmra.mrb[0].mxu0 %v557
        %v2163 = vpop.f32.mrb[0].mxu0
        %v2164 = vadd.f32 0.0, %v2163
        %v2165 = vpop.f32.mrb[0].mxu0
        %v2166 = vadd.f32 0.0, %v2165
        %2167 = vmatprep.mubr.f32.mxu0 %v560
        %2168 = vmatmul.mubr.f32.gmra.mrb[0].mxu0 %v559
        %v2169 = vpop.f32.mrb[0].mxu0
        %v2170 = vadd.f32 0.0, %v2169
        %v2171 = vpop.f32.mrb[0].mxu0
        %v2172 = vadd.f32 0.0, %v2171
        %2173 = vmatprep.mubr.f32.mxu0 %v562
        %2174 = vmatmul.mubr.f32.gmra.mrb[0].mxu0 %v561
        %v2175 = vpop.f32.mrb[0].mxu0
        %v2176 = vadd.f32 0.0, %v2175
        %v2177 = vpop.f32.mrb[0].mxu0
        %v2178 = vadd.f32 0.0, %v2177
        %2179 = vdwg.mxu0
        %v2180 = vld [vmem:[#allocation6] sm:$0xff]
        %v2181 = vld [vmem:[#allocation6 + $0x8] sm:$0xff]
        %v2182 = vld [vmem:[#allocation6 + $0x10] sm:$0xff]
        %v2183 = vld [vmem:[#allocation6 + $0x18] sm:$0xff]
        %v2184 = vld [vmem:[#allocation6 + $0x20] sm:$0xff]
        %v2185 = vld [vmem:[#allocation6 + $0x28] sm:$0xff]
        %v2186 = vld [vmem:[#allocation6 + $0x30] sm:$0xff]
        %v2187 = vld [vmem:[#allocation6 + $0x38] sm:$0xff]
        %v2188 = vld [vmem:[#allocation6 + $0x40] sm:$0xff]
        %v2189 = vld [vmem:[#allocation6 + $0x48] sm:$0xff]
        %v2190 = vld [vmem:[#allocation6 + $0x50] sm:$0xff]
        %v2191 = vld [vmem:[#allocation6 + $0x58] sm:$0xff]
        %v2192 = vld [vmem:[#allocation6 + $0x60] sm:$0xff]
        %v2193 = vld [vmem:[#allocation6 + $0x68] sm:$0xff]
        %v2194 = vld [vmem:[#allocation6 + $0x70] sm:$0xff]
        %v2195 = vld [vmem:[#allocation6 + $0x78] sm:$0xff]
        %v2196 = vld [vmem:[#allocation6 + $0x80] sm:$0xff]
        %v2197 = vld [vmem:[#allocation6 + $0x88] sm:$0xff]
        %v2198 = vld [vmem:[#allocation6 + $0x90] sm:$0xff]
        %v2199 = vld [vmem:[#allocation6 + $0x98] sm:$0xff]
        %v2200 = vld [vmem:[#allocation6 + $0xa0] sm:$0xff]
        %v2201 = vld [vmem:[#allocation6 + $0xa8] sm:$0xff]
        %v2202 = vld [vmem:[#allocation6 + $0xb0] sm:$0xff]
        %v2203 = vld [vmem:[#allocation6 + $0xb8] sm:$0xff]
        %v2204 = vld [vmem:[#allocation6 + $0xc0] sm:$0xff]
        %v2205 = vld [vmem:[#allocation6 + $0xc8] sm:$0xff]
        %v2206 = vld [vmem:[#allocation6 + $0xd0] sm:$0xff]
        %v2207 = vld [vmem:[#allocation6 + $0xd8] sm:$0xff]
        %v2208 = vld [vmem:[#allocation6 + $0xe0] sm:$0xff]
        %v2209 = vld [vmem:[#allocation6 + $0xe8] sm:$0xff]
        %v2210 = vld [vmem:[#allocation6 + $0xf0] sm:$0xff]
        %v2211 = vld [vmem:[#allocation6 + $0xf8] sm:$0xff]
        %v2212 = vld [vmem:[#allocation6 + $0x100] sm:$0xff]
        %v2213 = vld [vmem:[#allocation6 + $0x108] sm:$0xff]
        %v2214 = vld [vmem:[#allocation6 + $0x110] sm:$0xff]
        %v2215 = vld [vmem:[#allocation6 + $0x118] sm:$0xff]
        %v2216 = vld [vmem:[#allocation6 + $0x120] sm:$0xff]
        %v2217 = vld [vmem:[#allocation6 + $0x128] sm:$0xff]
        %v2218 = vld [vmem:[#allocation6 + $0x130] sm:$0xff]
        %v2219 = vld [vmem:[#allocation6 + $0x138] sm:$0xff]
        %vm2220 = vcmask 523264
        %v2222 = vsel %vm2220, %v2184, 0
        %v2225 = vsel %vm2220, %v2189, 0
        %v2228 = vsel %vm2220, %v2194, 0
        %v2231 = vsel %vm2220, %v2199, 0
        %v2234 = vsel %vm2220, %v2204, 0
        %v2237 = vsel %vm2220, %v2209, 0
        %v2240 = vsel %vm2220, %v2214, 0
        %v2243 = vsel %vm2220, %v2219, 0
        %2245 = vmatprep.subr.mxu0 %v712
        %2246 = vmatpush1.msra.mxu0 %v710
        %2247 = vmatprep.subr.mxu0 %v718
        %2248 = vmatpush1.msra.mxu0 %v716
        %2249 = vmatprep.subr.mxu0 %v724
        %2250 = vmatpush1.msra.mxu0 %v722
        %2251 = vmatprep.subr.mxu0 %v730
        %2252 = vmatpush1.msra.mxu0 %v728
        %2253 = vmatprep.subr.mxu0 %v736
        %2254 = vmatpush1.msra.mxu0 %v734
        %2255 = vmatprep.subr.mxu0 %v742
        %2256 = vmatpush1.msra.mxu0 %v740
        %2257 = vmatprep.subr.mxu0 %v748
        %2258 = vmatpush1.msra.mxu0 %v746
        %2259 = vmatprep.subr.mxu0 %v754
        %2260 = vmatpush1.msra.mxu0 %v752
        %2261 = vmatprep.subr.mxu0 %v890
        %2262 = vmatpush1.msra.mxu0 %v888
        %2263 = vmatprep.subr.mxu0 %v896
        %2264 = vmatpush1.msra.mxu0 %v894
        %2265 = vmatprep.subr.mxu0 %v902
        %2266 = vmatpush1.msra.mxu0 %v900
        %2267 = vmatprep.subr.mxu0 %v908
        %2268 = vmatpush1.msra.mxu0 %v906
        %2269 = vmatprep.subr.mxu0 %v914
        %2270 = vmatpush1.msra.mxu0 %v912
        %2271 = vmatprep.subr.mxu0 %v920
        %2272 = vmatpush1.msra.mxu0 %v918
        %2273 = vmatprep.subr.mxu0 %v926
        %2274 = vmatpush1.msra.mxu0 %v924
        %2275 = vmatprep.subr.mxu0 %v932
        %2276 = vmatpush1.msra.mxu0 %v930
        %2277 = vmatprep.subr.mxu0 %v1068
        %2278 = vmatpush1.msra.mxu0 %v1066
        %2279 = vmatprep.subr.mxu0 %v1074
        %2280 = vmatpush1.msra.mxu0 %v1072
        %2281 = vmatprep.subr.mxu0 %v1080
        %2282 = vmatpush1.msra.mxu0 %v1078
        %2283 = vmatprep.subr.mxu0 %v1086
        %2284 = vmatpush1.msra.mxu0 %v1084
        %2285 = vmatprep.subr.mxu0 %v1092
        %2286 = vmatpush1.msra.mxu0 %v1090
        %2287 = vmatprep.subr.mxu0 %v1098
        %2288 = vmatpush1.msra.mxu0 %v1096
        %2289 = vmatprep.subr.mxu0 %v1104
        %2290 = vmatpush1.msra.mxu0 %v1102
        %2291 = vmatprep.subr.mxu0 %v1110
        %2292 = vmatpush1.msra.mxu0 %v1108
        %2293 = vmatprep.subr.mxu0 %v1246
        %2294 = vmatpush1.msra.mxu0 %v1244
        %2295 = vmatprep.subr.mxu0 %v1252
        %2296 = vmatpush1.msra.mxu0 %v1250
        %2297 = vmatprep.subr.mxu0 %v1258
        %2298 = vmatpush1.msra.mxu0 %v1256
        %2299 = vmatprep.subr.mxu0 %v1264
        %2300 = vmatpush1.msra.mxu0 %v1262
        %2301 = vmatprep.subr.mxu0 %v1270
        %2302 = vmatpush1.msra.mxu0 %v1268
        %2303 = vmatprep.subr.mxu0 %v1276
        %2304 = vmatpush1.msra.mxu0 %v1274
        %2305 = vmatprep.subr.mxu0 %v1282
        %2306 = vmatpush1.msra.mxu0 %v1280
        %2307 = vmatprep.subr.mxu0 %v1288
        %2308 = vmatpush1.msra.mxu0 %v1286
        %2309 = vmatprep.mubr.f32.mxu0 %v2181
        %2310 = vmatmul.mubr.f32.gmra.mrb[0].mxu0 %v2180
        %v2311 = vpop.f32.mrb[0].mxu0
        %v2312 = vadd.f32 0.0, %v2311
        %v2313 = vpop.f32.mrb[0].mxu0
        %v2314 = vadd.f32 0.0, %v2313
        %2315 = vmatprep.mubr.f32.mxu0 %v2186
        %2316 = vmatmul.mubr.f32.gmra.mrb[0].mxu0 %v2185
        %v2317 = vpop.f32.mrb[0].mxu0
        %v2318 = vadd.f32 0.0, %v2317
        %v2319 = vpop.f32.mrb[0].mxu0
        %v2320 = vadd.f32 0.0, %v2319
        %2321 = vmatprep.mubr.f32.mxu0 %v2191
        %2322 = vmatmul.mubr.f32.gmra.mrb[0].mxu0 %v2190
        %v2323 = vpop.f32.mrb[0].mxu0
        %v2324 = vadd.f32 0.0, %v2323
        %v2325 = vpop.f32.mrb[0].mxu0
        %v2326 = vadd.f32 0.0, %v2325
        %2327 = vmatprep.mubr.f32.mxu0 %v2196
        %2328 = vmatmul.mubr.f32.gmra.mrb[0].mxu0 %v2195
        %v2329 = vpop.f32.mrb[0].mxu0
        %v2330 = vadd.f32 0.0, %v2329
        %v2331 = vpop.f32.mrb[0].mxu0
        %v2332 = vadd.f32 0.0, %v2331
        %2333 = vmatprep.mubr.f32.mxu0 %v2201
        %2334 = vmatmul.mubr.f32.gmra.mrb[0].mxu0 %v2200
        %v2335 = vpop.f32.mrb[0].mxu0
        %v2336 = vadd.f32 0.0, %v2335
        %v2337 = vpop.f32.mrb[0].mxu0
        %v2338 = vadd.f32 0.0, %v2337
        %2339 = vmatprep.mubr.f32.mxu0 %v2206
        %2340 = vmatmul.mubr.f32.gmra.mrb[0].mxu0 %v2205
        %v2341 = vpop.f32.mrb[0].mxu0
        %v2342 = vadd.f32 0.0, %v2341
        %v2343 = vpop.f32.mrb[0].mxu0
        %v2344 = vadd.f32 0.0, %v2343
        %2345 = vmatprep.mubr.f32.mxu0 %v2211
        %2346 = vmatmul.mubr.f32.gmra.mrb[0].mxu0 %v2210
        %v2347 = vpop.f32.mrb[0].mxu0
        %v2348 = vadd.f32 0.0, %v2347
        %v2349 = vpop.f32.mrb[0].mxu0
        %v2350 = vadd.f32 0.0, %v2349
        %2351 = vmatprep.mubr.f32.mxu0 %v2216
        %2352 = vmatmul.mubr.f32.gmra.mrb[0].mxu0 %v2215
        %v2353 = vpop.f32.mrb[0].mxu0
        %v2354 = vadd.f32 0.0, %v2353
        %v2355 = vpop.f32.mrb[0].mxu0
        %v2356 = vadd.f32 0.0, %v2355
        %2357 = vdwg.mxu0
        %2358 = vmatprep.subr.mxu0 %v1424
        %2359 = vmatpush1.msra.mxu0 %v1422
        %2360 = vmatprep.subr.mxu0 %v1430
        %2361 = vmatpush1.msra.mxu0 %v1428
        %2362 = vmatprep.subr.mxu0 %v1436
        %2363 = vmatpush1.msra.mxu0 %v1434
        %2364 = vmatprep.subr.mxu0 %v1442
        %2365 = vmatpush1.msra.mxu0 %v1440
        %2366 = vmatprep.subr.mxu0 %v1448
        %2367 = vmatpush1.msra.mxu0 %v1446
        %2368 = vmatprep.subr.mxu0 %v1454
        %2369 = vmatpush1.msra.mxu0 %v1452
        %2370 = vmatprep.subr.mxu0 %v1460
        %2371 = vmatpush1.msra.mxu0 %v1458
        %2372 = vmatprep.subr.mxu0 %v1466
        %2373 = vmatpush1.msra.mxu0 %v1464
        %2374 = vmatprep.subr.mxu0 %v1602
        %2375 = vmatpush1.msra.mxu0 %v1600
        %2376 = vmatprep.subr.mxu0 %v1608
        %2377 = vmatpush1.msra.mxu0 %v1606
        %2378 = vmatprep.subr.mxu0 %v1614
        %2379 = vmatpush1.msra.mxu0 %v1612
        %2380 = vmatprep.subr.mxu0 %v1620
        %2381 = vmatpush1.msra.mxu0 %v1618
        %2382 = vmatprep.subr.mxu0 %v1626
        %2383 = vmatpush1.msra.mxu0 %v1624
        %2384 = vmatprep.subr.mxu0 %v1632
        %2385 = vmatpush1.msra.mxu0 %v1630
        %2386 = vmatprep.subr.mxu0 %v1638
        %2387 = vmatpush1.msra.mxu0 %v1636
        %2388 = vmatprep.subr.mxu0 %v1644
        %2389 = vmatpush1.msra.mxu0 %v1642
        %2390 = vmatprep.subr.mxu0 %v1780
        %2391 = vmatpush1.msra.mxu0 %v1778
        %2392 = vmatprep.subr.mxu0 %v1786
        %2393 = vmatpush1.msra.mxu0 %v1784
        %2394 = vmatprep.subr.mxu0 %v1792
        %2395 = vmatpush1.msra.mxu0 %v1790
        %2396 = vmatprep.subr.mxu0 %v1798
        %2397 = vmatpush1.msra.mxu0 %v1796
        %2398 = vmatprep.subr.mxu0 %v1804
        %2399 = vmatpush1.msra.mxu0 %v1802
        %2400 = vmatprep.subr.mxu0 %v1810
        %2401 = vmatpush1.msra.mxu0 %v1808
        %2402 = vmatprep.subr.mxu0 %v1816
        %2403 = vmatpush1.msra.mxu0 %v1814
        %2404 = vmatprep.subr.mxu0 %v1822
        %2405 = vmatpush1.msra.mxu0 %v1820
        %2406 = vmatprep.subr.mxu0 %v1958
        %2407 = vmatpush1.msra.mxu0 %v1956
        %2408 = vmatprep.subr.mxu0 %v1964
        %2409 = vmatpush1.msra.mxu0 %v1962
        %2410 = vmatprep.subr.mxu0 %v1970
        %2411 = vmatpush1.msra.mxu0 %v1968
        %2412 = vmatprep.subr.mxu0 %v1976
        %2413 = vmatpush1.msra.mxu0 %v1974
        %2414 = vmatprep.subr.mxu0 %v1982
        %2415 = vmatpush1.msra.mxu0 %v1980
        %2416 = vmatprep.subr.mxu0 %v1988
        %2417 = vmatpush1.msra.mxu0 %v1986
        %2418 = vmatprep.subr.mxu0 %v1994
        %2419 = vmatpush1.msra.mxu0 %v1992
        %2420 = vmatprep.subr.mxu0 %v2000
        %2421 = vmatpush1.msra.mxu0 %v1998
        %2422 = vmatprep.mubr.f32.mxu0 %v2183
        %2423 = vmatmul.mubr.f32.gmra.mrb[0].mxu0 %v2182
        %v2424 = vpop.f32.mrb[0].mxu0
        %v2425 = vadd.f32 %v2312, %v2424
        %v2426 = vpop.f32.mrb[0].mxu0
        %v2427 = vadd.f32 %v2314, %v2426
        %2428 = vmatprep.mubr.f32.mxu0 %v2188
        %2429 = vmatmul.mubr.f32.gmra.mrb[0].mxu0 %v2187
        %v2430 = vpop.f32.mrb[0].mxu0
        %v2431 = vadd.f32 %v2318, %v2430
        %v2432 = vpop.f32.mrb[0].mxu0
        %v2433 = vadd.f32 %v2320, %v2432
        %2434 = vmatprep.mubr.f32.mxu0 %v2193
        %2435 = vmatmul.mubr.f32.gmra.mrb[0].mxu0 %v2192
        %v2436 = vpop.f32.mrb[0].mxu0
        %v2437 = vadd.f32 %v2324, %v2436
        %v2438 = vpop.f32.mrb[0].mxu0
        %v2439 = vadd.f32 %v2326, %v2438
        %2440 = vmatprep.mubr.f32.mxu0 %v2198
        %2441 = vmatmul.mubr.f32.gmra.mrb[0].mxu0 %v2197
        %v2442 = vpop.f32.mrb[0].mxu0
        %v2443 = vadd.f32 %v2330, %v2442
        %v2444 = vpop.f32.mrb[0].mxu0
        %v2445 = vadd.f32 %v2332, %v2444
        %2446 = vmatprep.mubr.f32.mxu0 %v2203
        %2447 = vmatmul.mubr.f32.gmra.mrb[0].mxu0 %v2202
        %v2448 = vpop.f32.mrb[0].mxu0
        %v2449 = vadd.f32 %v2336, %v2448
        %v2450 = vpop.f32.mrb[0].mxu0
        %v2451 = vadd.f32 %v2338, %v2450
        %2452 = vmatprep.mubr.f32.mxu0 %v2208
        %2453 = vmatmul.mubr.f32.gmra.mrb[0].mxu0 %v2207
        %v2454 = vpop.f32.mrb[0].mxu0
        %v2455 = vadd.f32 %v2342, %v2454
        %v2456 = vpop.f32.mrb[0].mxu0
        %v2457 = vadd.f32 %v2344, %v2456
        %2458 = vmatprep.mubr.f32.mxu0 %v2213
        %2459 = vmatmul.mubr.f32.gmra.mrb[0].mxu0 %v2212
        %v2460 = vpop.f32.mrb[0].mxu0
        %v2461 = vadd.f32 %v2348, %v2460
        %v2462 = vpop.f32.mrb[0].mxu0
        %v2463 = vadd.f32 %v2350, %v2462
        %2464 = vmatprep.mubr.f32.mxu0 %v2218
        %2465 = vmatmul.mubr.f32.gmra.mrb[0].mxu0 %v2217
        %v2466 = vpop.f32.mrb[0].mxu0
        %v2467 = vadd.f32 %v2354, %v2466
        %v2468 = vpop.f32.mrb[0].mxu0
        %v2469 = vadd.f32 %v2356, %v2468
        %2470 = vdwg.mxu0
        %2471 = vmatprep.subr.mxu0 %v2136
        %2472 = vmatpush1.msra.mxu0 %v2134
        %2473 = vmatprep.subr.mxu0 %v2142
        %2474 = vmatpush1.msra.mxu0 %v2140
        %2475 = vmatprep.subr.mxu0 %v2148
        %2476 = vmatpush1.msra.mxu0 %v2146
        %2477 = vmatprep.subr.mxu0 %v2154
        %2478 = vmatpush1.msra.mxu0 %v2152
        %2479 = vmatprep.subr.mxu0 %v2160
        %2480 = vmatpush1.msra.mxu0 %v2158
        %2481 = vmatprep.subr.mxu0 %v2166
        %2482 = vmatpush1.msra.mxu0 %v2164
        %2483 = vmatprep.subr.mxu0 %v2172
        %2484 = vmatpush1.msra.mxu0 %v2170
        %2485 = vmatprep.subr.mxu0 %v2178
        %2486 = vmatpush1.msra.mxu0 %v2176
        %2487 = vmatprep.subr.mxu0 0.0
        %2488 = vmatpush1.msra.mxu0 0.0
        %2489 = vmatprep.subr.mxu0 0.0
        %2490 = vmatpush1.msra.mxu0 0.0
        %2491 = vmatprep.subr.mxu0 0.0
        %2492 = vmatpush1.msra.mxu0 0.0
        %2493 = vmatprep.subr.mxu0 0.0
        %2494 = vmatpush1.msra.mxu0 0.0
        %2495 = vmatprep.subr.mxu0 0.0
        %2496 = vmatpush1.msra.mxu0 0.0
        %2497 = vmatprep.subr.mxu0 0.0
        %2498 = vmatpush1.msra.mxu0 0.0
        %2499 = vmatprep.subr.mxu0 0.0
        %2500 = vmatpush1.msra.mxu0 0.0
        %2501 = vmatprep.subr.mxu0 0.0
        %2502 = vmatpush1.msra.mxu0 0.0
        %2503 = vmatprep.subr.mxu0 0.0
        %2504 = vmatpush1.msra.mxu0 0.0
        %2505 = vmatprep.subr.mxu0 0.0
        %2506 = vmatpush1.msra.mxu0 0.0
        %2507 = vmatprep.subr.mxu0 0.0
        %2508 = vmatpush1.msra.mxu0 0.0
        %2509 = vmatprep.subr.mxu0 0.0
        %2510 = vmatpush1.msra.mxu0 0.0
        %2511 = vmatprep.subr.mxu0 0.0
        %2512 = vmatpush1.msra.mxu0 0.0
        %2513 = vmatprep.subr.mxu0 0.0
        %2514 = vmatpush1.msra.mxu0 0.0
        %2515 = vmatprep.subr.mxu0 0.0
        %2516 = vmatpush1.msra.mxu0 0.0
        %2517 = vmatprep.subr.mxu0 0.0
        %2518 = vmatpush1.msra.mxu0 0.0
        %2519 = vmatprep.subr.mxu0 0.0
        %2520 = vmatpush1.msra.mxu0 0.0
        %2521 = vmatprep.subr.mxu0 0.0
        %2522 = vmatpush1.msra.mxu0 0.0
        %2523 = vmatprep.subr.mxu0 0.0
        %2524 = vmatpush1.msra.mxu0 0.0
        %2525 = vmatprep.subr.mxu0 0.0
        %2526 = vmatpush1.msra.mxu0 0.0
        %2527 = vmatprep.subr.mxu0 0.0
        %2528 = vmatpush1.msra.mxu0 0.0
        %2529 = vmatprep.subr.mxu0 0.0
        %2530 = vmatpush1.msra.mxu0 0.0
        %2531 = vmatprep.subr.mxu0 0.0
        %2532 = vmatpush1.msra.mxu0 0.0
        %2533 = vmatprep.subr.mxu0 0.0
        %2534 = vmatpush1.msra.mxu0 0.0
        %2535 = vmatprep.mubr.f32.mxu0 0.0
        %2536 = vmatmul.mubr.f32.gmra.mrb[0].mxu0 %v2222
        %v2537 = vpop.f32.mrb[0].mxu0
        %v2538 = vadd.f32 %v2425, %v2537
        %v2539 = vpop.f32.mrb[0].mxu0
        %v2540 = vadd.f32 %v2427, %v2539
        %2541 = vmatprep.mubr.f32.mxu0 0.0
        %2542 = vmatmul.mubr.f32.gmra.mrb[0].mxu0 %v2225
        %v2543 = vpop.f32.mrb[0].mxu0
        %v2544 = vadd.f32 %v2431, %v2543
        %v2545 = vpop.f32.mrb[0].mxu0
        %v2546 = vadd.f32 %v2433, %v2545
        %2547 = vmatprep.mubr.f32.mxu0 0.0
        %2548 = vmatmul.mubr.f32.gmra.mrb[0].mxu0 %v2228
        %v2549 = vpop.f32.mrb[0].mxu0
        %v2550 = vadd.f32 %v2437, %v2549
        %v2551 = vpop.f32.mrb[0].mxu0
        %v2552 = vadd.f32 %v2439, %v2551
        %2553 = vmatprep.mubr.f32.mxu0 0.0
        %2554 = vmatmul.mubr.f32.gmra.mrb[0].mxu0 %v2231
        %v2555 = vpop.f32.mrb[0].mxu0
        %v2556 = vadd.f32 %v2443, %v2555
        %v2557 = vpop.f32.mrb[0].mxu0
        %v2558 = vadd.f32 %v2445, %v2557
        %2559 = vmatprep.mubr.f32.mxu0 0.0
        %2560 = vmatmul.mubr.f32.gmra.mrb[0].mxu0 %v2234
        %v2561 = vpop.f32.mrb[0].mxu0
        %v2562 = vadd.f32 %v2449, %v2561
        %v2563 = vpop.f32.mrb[0].mxu0
        %v2564 = vadd.f32 %v2451, %v2563
        %2565 = vmatprep.mubr.f32.mxu0 0.0
        %2566 = vmatmul.mubr.f32.gmra.mrb[0].mxu0 %v2237
        %v2567 = vpop.f32.mrb[0].mxu0
        %v2568 = vadd.f32 %v2455, %v2567
        %v2569 = vpop.f32.mrb[0].mxu0
        %v2570 = vadd.f32 %v2457, %v2569
        %2571 = vmatprep.mubr.f32.mxu0 0.0
        %2572 = vmatmul.mubr.f32.gmra.mrb[0].mxu0 %v2240
        %v2573 = vpop.f32.mrb[0].mxu0
        %v2574 = vadd.f32 %v2461, %v2573
        %v2575 = vpop.f32.mrb[0].mxu0
        %v2576 = vadd.f32 %v2463, %v2575
        %2577 = vmatprep.mubr.f32.mxu0 0.0
        %2578 = vmatmul.mubr.f32.gmra.mrb[0].mxu0 %v2243
        %v2579 = vpop.f32.mrb[0].mxu0
        %v2580 = vadd.f32 %v2467, %v2579
        %v2581 = vpop.f32.mrb[0].mxu0
        %v2582 = vadd.f32 %v2469, %v2581
        %2583 = vdwg.mxu0
        %v2584 = vld [vmem:[%s5] sm:$0xff]
        %v2585 = vld [vmem:[%s5 + $0x8] sm:$0xff]
        %v2586 = vld [vmem:[%s5 + $0x10] sm:$0xff]
        %v2587 = vld [vmem:[%s5 + $0x18] sm:$0xff]
        %v2588 = vld [vmem:[%s5 + $0x20] sm:$0xff]
        %v2589 = vld [vmem:[%s5 + $0x28] sm:$0xff]
        %v2590 = vld [vmem:[%s5 + $0x30] sm:$0xff]
        %v2591 = vld [vmem:[%s5 + $0x38] sm:$0xff]
        %2593 = vset.pattern.permute.xlu0 0
        %2594 = vperm.xlu0 %2593, %v2584
        %v2595 = vpop.permute.xlu0 %2594
        %2598 = vset.pattern.permute.xlu0 0
        %2599 = vperm.xlu0 %2598, %v2585
        %v2600 = vpop.permute.xlu0 %2599
        %2603 = vset.pattern.permute.xlu0 0
        %2604 = vperm.xlu0 %2603, %v2586
        %v2605 = vpop.permute.xlu0 %2604
        %2608 = vset.pattern.permute.xlu0 0
        %2609 = vperm.xlu0 %2608, %v2587
        %v2610 = vpop.permute.xlu0 %2609
        %2613 = vset.pattern.permute.xlu0 0
        %2614 = vperm.xlu0 %2613, %v2588
        %v2615 = vpop.permute.xlu0 %2614
        %2618 = vset.pattern.permute.xlu0 0
        %2619 = vperm.xlu0 %2618, %v2589
        %v2620 = vpop.permute.xlu0 %2619
        %2623 = vset.pattern.permute.xlu0 0
        %2624 = vperm.xlu0 %2623, %v2590
        %v2625 = vpop.permute.xlu0 %2624
        %2628 = vset.pattern.permute.xlu0 0
        %2629 = vperm.xlu0 %2628, %v2591
        %v2630 = vpop.permute.xlu0 %2629
        %v2632 = vmul.f32 %v2538, %v2595
        %v2633 = vmul.f32 %v2540, %v2595
        %v2634 = vmul.f32 %v2544, %v2600
        %v2635 = vmul.f32 %v2546, %v2600
        %v2636 = vmul.f32 %v2550, %v2605
        %v2637 = vmul.f32 %v2552, %v2605
        %v2638 = vmul.f32 %v2556, %v2610
        %v2639 = vmul.f32 %v2558, %v2610
        %v2640 = vmul.f32 %v2562, %v2615
        %v2641 = vmul.f32 %v2564, %v2615
        %v2642 = vmul.f32 %v2568, %v2620
        %v2643 = vmul.f32 %v2570, %v2620
        %v2644 = vmul.f32 %v2574, %v2625
        %v2645 = vmul.f32 %v2576, %v2625
        %v2646 = vmul.f32 %v2580, %v2630
        %v2647 = vmul.f32 %v2582, %v2630
        %s2648 = scalar_lea.vmem %s5, 64
        %v2649 = vld [vmem:[%s2648] sm:$0xff]
        %v2650 = vld [vmem:[%s2648 + $0x8] sm:$0xff]
        %v2651 = vld [vmem:[%s2648 + $0x10] sm:$0xff]
        %v2652 = vld [vmem:[%s2648 + $0x18] sm:$0xff]
        %v2653 = vld [vmem:[%s2648 + $0x20] sm:$0xff]
        %v2654 = vld [vmem:[%s2648 + $0x28] sm:$0xff]
        %v2655 = vld [vmem:[%s2648 + $0x30] sm:$0xff]
        %v2656 = vld [vmem:[%s2648 + $0x38] sm:$0xff]
        %2658 = vset.pattern.permute.xlu0 0
        %2659 = vperm.xlu0 %2658, %v2649
        %v2660 = vpop.permute.xlu0 %2659
        %2663 = vset.pattern.permute.xlu0 0
        %2664 = vperm.xlu0 %2663, %v2650
        %v2665 = vpop.permute.xlu0 %2664
        %2668 = vset.pattern.permute.xlu0 0
        %2669 = vperm.xlu0 %2668, %v2651
        %v2670 = vpop.permute.xlu0 %2669
        %2673 = vset.pattern.permute.xlu0 0
        %2674 = vperm.xlu0 %2673, %v2652
        %v2675 = vpop.permute.xlu0 %2674
        %2678 = vset.pattern.permute.xlu0 0
        %2679 = vperm.xlu0 %2678, %v2653
        %v2680 = vpop.permute.xlu0 %2679
        %2683 = vset.pattern.permute.xlu0 0
        %2684 = vperm.xlu0 %2683, %v2654
        %v2685 = vpop.permute.xlu0 %2684
        %2688 = vset.pattern.permute.xlu0 0
        %2689 = vperm.xlu0 %2688, %v2655
        %v2690 = vpop.permute.xlu0 %2689
        %2693 = vset.pattern.permute.xlu0 0
        %2694 = vperm.xlu0 %2693, %v2656
        %v2695 = vpop.permute.xlu0 %2694
        %v2697 = vadd.f32 %v2632, %v2660
        %v2698 = vadd.f32 %v2633, %v2660
        %v2699 = vadd.f32 %v2634, %v2665
        %v2700 = vadd.f32 %v2635, %v2665
        %v2701 = vadd.f32 %v2636, %v2670
        %v2702 = vadd.f32 %v2637, %v2670
        %v2703 = vadd.f32 %v2638, %v2675
        %v2704 = vadd.f32 %v2639, %v2675
        %v2705 = vadd.f32 %v2640, %v2680
        %v2706 = vadd.f32 %v2641, %v2680
        %v2707 = vadd.f32 %v2642, %v2685
        %v2708 = vadd.f32 %v2643, %v2685
        %v2709 = vadd.f32 %v2644, %v2690
        %v2710 = vadd.f32 %v2645, %v2690
        %v2711 = vadd.f32 %v2646, %v2695
        %v2712 = vadd.f32 %v2647, %v2695
        %v2713 = vmax.f32 %v2697, 0.0
        %v2714 = vmax.f32 %v2698, 0.0
        %v2715 = vmax.f32 %v2699, 0.0
        %v2716 = vmax.f32 %v2700, 0.0
        %v2717 = vmax.f32 %v2701, 0.0
        %v2718 = vmax.f32 %v2702, 0.0
        %v2719 = vmax.f32 %v2703, 0.0
        %v2720 = vmax.f32 %v2704, 0.0
        %v2721 = vmax.f32 %v2705, 0.0
        %v2722 = vmax.f32 %v2706, 0.0
        %v2723 = vmax.f32 %v2707, 0.0
        %v2724 = vmax.f32 %v2708, 0.0
        %v2725 = vmax.f32 %v2709, 0.0
        %v2726 = vmax.f32 %v2710, 0.0
        %v2727 = vmax.f32 %v2711, 0.0
        %v2728 = vmax.f32 %v2712, 0.0
        %v2729 = vld [vmem:[#allocation4] sm:$0xff]
        %v2730 = vld [vmem:[#allocation4 + $0x8] sm:$0xff]
        %v2731 = vld [vmem:[#allocation4 + $0x10] sm:$0xff]
        %v2732 = vld [vmem:[#allocation4 + $0x18] sm:$0xff]
        %v2733 = vld [vmem:[#allocation4 + $0x20] sm:$0xff]
        %v2734 = vld [vmem:[#allocation4 + $0x28] sm:$0xff]
        %v2735 = vld [vmem:[#allocation4 + $0x30] sm:$0xff]
        %v2736 = vld [vmem:[#allocation4 + $0x38] sm:$0xff]
        %v2738 = vsel %vm2220, %v563, 0
        %v2741 = vsel %vm2220, %v564, 0
        %v2744 = vsel %vm2220, %v565, 0
        %v2747 = vsel %vm2220, %v566, 0
        %v2750 = vsel %vm2220, %v567, 0
        %v2753 = vsel %vm2220, %v568, 0
        %v2756 = vsel %vm2220, %v569, 0
        %v2759 = vsel %vm2220, %v570, 0
        %v2762 = vsel %vm2220, %v571, 0
        %v2765 = vsel %vm2220, %v572, 0
        %v2768 = vsel %vm2220, %v573, 0
        %v2771 = vsel %vm2220, %v574, 0
        %v2774 = vsel %vm2220, %v575, 0
        %v2777 = vsel %vm2220, %v576, 0
        %v2780 = vsel %vm2220, %v577, 0
        %v2783 = vsel %vm2220, %v578, 0
        %2785 = vmatprep.subr.mxu0 0.0
        %2786 = vmatpush1.msra.mxu0 %v2729
        %2787 = vmatprep.subr.mxu0 0.0
        %2788 = vmatpush1.msra.mxu0 %v2730
        %2789 = vmatprep.subr.mxu0 0.0
        %2790 = vmatpush1.msra.mxu0 %v2731
        %2791 = vmatprep.subr.mxu0 0.0
        %2792 = vmatpush1.msra.mxu0 %v2732
        %2793 = vmatprep.subr.mxu0 0.0
        %2794 = vmatpush1.msra.mxu0 %v2733
        %2795 = vmatprep.subr.mxu0 0.0
        %2796 = vmatpush1.msra.mxu0 %v2734
        %2797 = vmatprep.subr.mxu0 0.0
        %2798 = vmatpush1.msra.mxu0 %v2735
        %2799 = vmatprep.subr.mxu0 0.0
        %2800 = vmatpush1.msra.mxu0 %v2736
        %2801 = vmatprep.subr.mxu0 0.0
        %2802 = vmatpush1.msra.mxu0 0.0
        %2803 = vmatprep.subr.mxu0 0.0
        %2804 = vmatpush1.msra.mxu0 0.0
        %2805 = vmatprep.subr.mxu0 0.0
        %2806 = vmatpush1.msra.mxu0 0.0
        %2807 = vmatprep.subr.mxu0 0.0
        %2808 = vmatpush1.msra.mxu0 0.0
        %2809 = vmatprep.subr.mxu0 0.0
        %2810 = vmatpush1.msra.mxu0 0.0
        %2811 = vmatprep.subr.mxu0 0.0
        %2812 = vmatpush1.msra.mxu0 0.0
        %2813 = vmatprep.subr.mxu0 0.0
        %2814 = vmatpush1.msra.mxu0 0.0
        %2815 = vmatprep.subr.mxu0 0.0
        %2816 = vmatpush1.msra.mxu0 0.0
        %2817 = vmatprep.subr.mxu0 0.0
        %2818 = vmatpush1.msra.mxu0 0.0
        %2819 = vmatprep.subr.mxu0 0.0
        %2820 = vmatpush1.msra.mxu0 0.0
        %2821 = vmatprep.subr.mxu0 0.0
        %2822 = vmatpush1.msra.mxu0 0.0
        %2823 = vmatprep.subr.mxu0 0.0
        %2824 = vmatpush1.msra.mxu0 0.0
        %2825 = vmatprep.subr.mxu0 0.0
        %2826 = vmatpush1.msra.mxu0 0.0
        %2827 = vmatprep.subr.mxu0 0.0
        %2828 = vmatpush1.msra.mxu0 0.0
        %2829 = vmatprep.subr.mxu0 0.0
        %2830 = vmatpush1.msra.mxu0 0.0
        %2831 = vmatprep.subr.mxu0 0.0
        %2832 = vmatpush1.msra.mxu0 0.0
        %2833 = vmatprep.subr.mxu0 0.0
        %2834 = vmatpush1.msra.mxu0 0.0
        %2835 = vmatprep.subr.mxu0 0.0
        %2836 = vmatpush1.msra.mxu0 0.0
        %2837 = vmatprep.subr.mxu0 0.0
        %2838 = vmatpush1.msra.mxu0 0.0
        %2839 = vmatprep.subr.mxu0 0.0
        %2840 = vmatpush1.msra.mxu0 0.0
        %2841 = vmatprep.subr.mxu0 0.0
        %2842 = vmatpush1.msra.mxu0 0.0
        %2843 = vmatprep.subr.mxu0 0.0
        %2844 = vmatpush1.msra.mxu0 0.0
        %2845 = vmatprep.subr.mxu0 0.0
        %2846 = vmatpush1.msra.mxu0 0.0
        %2847 = vmatprep.subr.mxu0 0.0
        %2848 = vmatpush1.msra.mxu0 0.0
        %2849 = vmatprep.mubr.f32.mxu0 0.0
        %2850 = vmatmul.mubr.f32.gmra.mrb[0].mxu0 %v2738
        %v2851 = vpop.f32.mrb[0].mxu0
        %v2852 = vadd.f32 0.0, %v2851
        %v2853 = vpop.f32.mrb[0].mxu0
        %2854 = vmatprep.mubr.f32.mxu0 0.0
        %2855 = vmatmul.mubr.f32.gmra.mrb[0].mxu0 %v2741
        %v2856 = vpop.f32.mrb[0].mxu0
        %v2857 = vadd.f32 0.0, %v2856
        %v2858 = vpop.f32.mrb[0].mxu0
        %2859 = vmatprep.mubr.f32.mxu0 0.0
        %2860 = vmatmul.mubr.f32.gmra.mrb[0].mxu0 %v2744
        %v2861 = vpop.f32.mrb[0].mxu0
        %v2862 = vadd.f32 0.0, %v2861
        %v2863 = vpop.f32.mrb[0].mxu0
        %2864 = vmatprep.mubr.f32.mxu0 0.0
        %2865 = vmatmul.mubr.f32.gmra.mrb[0].mxu0 %v2747
        %v2866 = vpop.f32.mrb[0].mxu0
        %v2867 = vadd.f32 0.0, %v2866
        %v2868 = vpop.f32.mrb[0].mxu0
        %2869 = vmatprep.mubr.f32.mxu0 0.0
        %2870 = vmatmul.mubr.f32.gmra.mrb[0].mxu0 %v2750
        %v2871 = vpop.f32.mrb[0].mxu0
        %v2872 = vadd.f32 0.0, %v2871
        %v2873 = vpop.f32.mrb[0].mxu0
        %2874 = vmatprep.mubr.f32.mxu0 0.0
        %2875 = vmatmul.mubr.f32.gmra.mrb[0].mxu0 %v2753
        %v2876 = vpop.f32.mrb[0].mxu0
        %v2877 = vadd.f32 0.0, %v2876
        %v2878 = vpop.f32.mrb[0].mxu0
        %2879 = vmatprep.mubr.f32.mxu0 0.0
        %2880 = vmatmul.mubr.f32.gmra.mrb[0].mxu0 %v2756
        %v2881 = vpop.f32.mrb[0].mxu0
        %v2882 = vadd.f32 0.0, %v2881
        %v2883 = vpop.f32.mrb[0].mxu0
        %2884 = vmatprep.mubr.f32.mxu0 0.0
        %2885 = vmatmul.mubr.f32.gmra.mrb[0].mxu0 %v2759
        %v2886 = vpop.f32.mrb[0].mxu0
        %v2887 = vadd.f32 0.0, %v2886
        %v2888 = vpop.f32.mrb[0].mxu0
        %2889 = vmatprep.mubr.f32.mxu0 0.0
        %2890 = vmatmul.mubr.f32.gmra.mrb[0].mxu0 %v2762
        %v2891 = vpop.f32.mrb[0].mxu0
        %v2892 = vadd.f32 0.0, %v2891
        %v2893 = vpop.f32.mrb[0].mxu0
        %2894 = vmatprep.mubr.f32.mxu0 0.0
        %2895 = vmatmul.mubr.f32.gmra.mrb[0].mxu0 %v2765
        %v2896 = vpop.f32.mrb[0].mxu0
        %v2897 = vadd.f32 0.0, %v2896
        %v2898 = vpop.f32.mrb[0].mxu0
        %2899 = vmatprep.mubr.f32.mxu0 0.0
        %2900 = vmatmul.mubr.f32.gmra.mrb[0].mxu0 %v2768
        %v2901 = vpop.f32.mrb[0].mxu0
        %v2902 = vadd.f32 0.0, %v2901
        %v2903 = vpop.f32.mrb[0].mxu0
        %2904 = vmatprep.mubr.f32.mxu0 0.0
        %2905 = vmatmul.mubr.f32.gmra.mrb[0].mxu0 %v2771
        %v2906 = vpop.f32.mrb[0].mxu0
        %v2907 = vadd.f32 0.0, %v2906
        %v2908 = vpop.f32.mrb[0].mxu0
        %2909 = vmatprep.mubr.f32.mxu0 0.0
        %2910 = vmatmul.mubr.f32.gmra.mrb[0].mxu0 %v2774
        %v2911 = vpop.f32.mrb[0].mxu0
        %v2912 = vadd.f32 0.0, %v2911
        %v2913 = vpop.f32.mrb[0].mxu0
        %2914 = vmatprep.mubr.f32.mxu0 0.0
        %2915 = vmatmul.mubr.f32.gmra.mrb[0].mxu0 %v2777
        %v2916 = vpop.f32.mrb[0].mxu0
        %v2917 = vadd.f32 0.0, %v2916
        %v2918 = vpop.f32.mrb[0].mxu0
        %2919 = vmatprep.mubr.f32.mxu0 0.0
        %2920 = vmatmul.mubr.f32.gmra.mrb[0].mxu0 %v2780
        %v2921 = vpop.f32.mrb[0].mxu0
        %v2922 = vadd.f32 0.0, %v2921
        %v2923 = vpop.f32.mrb[0].mxu0
        %2924 = vmatprep.mubr.f32.mxu0 0.0
        %2925 = vmatmul.mubr.f32.gmra.mrb[0].mxu0 %v2783
        %v2926 = vpop.f32.mrb[0].mxu0
        %v2927 = vadd.f32 0.0, %v2926
        %v2928 = vpop.f32.mrb[0].mxu0
        %2929 = vdwg.mxu0
        %s2930 = scalar_lea.vmem [#allocation4], 64
        %v2931 = vld [vmem:[%s2930] sm:$0xff]
        %v2932 = vld [vmem:[%s2930 + $0x8] sm:$0xff]
        %v2933 = vld [vmem:[%s2930 + $0x10] sm:$0xff]
        %v2934 = vld [vmem:[%s2930 + $0x18] sm:$0xff]
        %v2935 = vld [vmem:[%s2930 + $0x20] sm:$0xff]
        %v2936 = vld [vmem:[%s2930 + $0x28] sm:$0xff]
        %v2937 = vld [vmem:[%s2930 + $0x30] sm:$0xff]
        %v2938 = vld [vmem:[%s2930 + $0x38] sm:$0xff]
        %2939 = vmatprep.subr.mxu0 0.0
        %2940 = vmatpush1.msra.mxu0 %v2931
        %2941 = vmatprep.subr.mxu0 0.0
        %2942 = vmatpush1.msra.mxu0 %v2932
        %2943 = vmatprep.subr.mxu0 0.0
        %2944 = vmatpush1.msra.mxu0 %v2933
        %2945 = vmatprep.subr.mxu0 0.0
        %2946 = vmatpush1.msra.mxu0 %v2934
        %2947 = vmatprep.subr.mxu0 0.0
        %2948 = vmatpush1.msra.mxu0 %v2935
        %2949 = vmatprep.subr.mxu0 0.0
        %2950 = vmatpush1.msra.mxu0 %v2936
        %2951 = vmatprep.subr.mxu0 0.0
        %2952 = vmatpush1.msra.mxu0 %v2937
        %2953 = vmatprep.subr.mxu0 0.0
        %2954 = vmatpush1.msra.mxu0 %v2938
        %2955 = vmatprep.subr.mxu0 0.0
        %2956 = vmatpush1.msra.mxu0 0.0
        %2957 = vmatprep.subr.mxu0 0.0
        %2958 = vmatpush1.msra.mxu0 0.0
        %2959 = vmatprep.subr.mxu0 0.0
        %2960 = vmatpush1.msra.mxu0 0.0
        %2961 = vmatprep.subr.mxu0 0.0
        %2962 = vmatpush1.msra.mxu0 0.0
        %2963 = vmatprep.subr.mxu0 0.0
        %2964 = vmatpush1.msra.mxu0 0.0
        %2965 = vmatprep.subr.mxu0 0.0
        %2966 = vmatpush1.msra.mxu0 0.0
        %2967 = vmatprep.subr.mxu0 0.0
        %2968 = vmatpush1.msra.mxu0 0.0
        %2969 = vmatprep.subr.mxu0 0.0
        %2970 = vmatpush1.msra.mxu0 0.0
        %2971 = vmatprep.subr.mxu0 0.0
        %2972 = vmatpush1.msra.mxu0 0.0
        %2973 = vmatprep.subr.mxu0 0.0
        %2974 = vmatpush1.msra.mxu0 0.0
        %2975 = vmatprep.subr.mxu0 0.0
        %2976 = vmatpush1.msra.mxu0 0.0
        %2977 = vmatprep.subr.mxu0 0.0
        %2978 = vmatpush1.msra.mxu0 0.0
        %2979 = vmatprep.subr.mxu0 0.0
        %2980 = vmatpush1.msra.mxu0 0.0
        %2981 = vmatprep.subr.mxu0 0.0
        %2982 = vmatpush1.msra.mxu0 0.0
        %2983 = vmatprep.subr.mxu0 0.0
        %2984 = vmatpush1.msra.mxu0 0.0
        %2985 = vmatprep.subr.mxu0 0.0
        %2986 = vmatpush1.msra.mxu0 0.0
        %2987 = vmatprep.subr.mxu0 0.0
        %2988 = vmatpush1.msra.mxu0 0.0
        %2989 = vmatprep.subr.mxu0 0.0
        %2990 = vmatpush1.msra.mxu0 0.0
        %2991 = vmatprep.subr.mxu0 0.0
        %2992 = vmatpush1.msra.mxu0 0.0
        %2993 = vmatprep.subr.mxu0 0.0
        %2994 = vmatpush1.msra.mxu0 0.0
        %2995 = vmatprep.subr.mxu0 0.0
        %2996 = vmatpush1.msra.mxu0 0.0
        %2997 = vmatprep.subr.mxu0 0.0
        %2998 = vmatpush1.msra.mxu0 0.0
        %2999 = vmatprep.subr.mxu0 0.0
        %3000 = vmatpush1.msra.mxu0 0.0
        %3001 = vmatprep.subr.mxu0 0.0
        %3002 = vmatpush1.msra.mxu0 0.0
        %3003 = vmatprep.mubr.f32.mxu0 0.0
        %3004 = vmatmul.mubr.f32.gmra.mrb[0].mxu0 %v2738
        %v3005 = vpop.f32.mrb[0].mxu0
        %v3006 = vadd.f32 0.0, %v3005
        %v3007 = vpop.f32.mrb[0].mxu0
        %3008 = vmatprep.mubr.f32.mxu0 0.0
        %3009 = vmatmul.mubr.f32.gmra.mrb[0].mxu0 %v2741
        %v3010 = vpop.f32.mrb[0].mxu0
        %v3011 = vadd.f32 0.0, %v3010
        %v3012 = vpop.f32.mrb[0].mxu0
        %3013 = vmatprep.mubr.f32.mxu0 0.0
        %3014 = vmatmul.mubr.f32.gmra.mrb[0].mxu0 %v2744
        %v3015 = vpop.f32.mrb[0].mxu0
        %v3016 = vadd.f32 0.0, %v3015
        %v3017 = vpop.f32.mrb[0].mxu0
        %3018 = vmatprep.mubr.f32.mxu0 0.0
        %3019 = vmatmul.mubr.f32.gmra.mrb[0].mxu0 %v2747
        %v3020 = vpop.f32.mrb[0].mxu0
        %v3021 = vadd.f32 0.0, %v3020
        %v3022 = vpop.f32.mrb[0].mxu0
        %3023 = vmatprep.mubr.f32.mxu0 0.0
        %3024 = vmatmul.mubr.f32.gmra.mrb[0].mxu0 %v2750
        %v3025 = vpop.f32.mrb[0].mxu0
        %v3026 = vadd.f32 0.0, %v3025
        %v3027 = vpop.f32.mrb[0].mxu0
        %3028 = vmatprep.mubr.f32.mxu0 0.0
        %3029 = vmatmul.mubr.f32.gmra.mrb[0].mxu0 %v2753
        %v3030 = vpop.f32.mrb[0].mxu0
        %v3031 = vadd.f32 0.0, %v3030
        %v3032 = vpop.f32.mrb[0].mxu0
        %3033 = vmatprep.mubr.f32.mxu0 0.0
        %3034 = vmatmul.mubr.f32.gmra.mrb[0].mxu0 %v2756
        %v3035 = vpop.f32.mrb[0].mxu0
        %v3036 = vadd.f32 0.0, %v3035
        %v3037 = vpop.f32.mrb[0].mxu0
        %3038 = vmatprep.mubr.f32.mxu0 0.0
        %3039 = vmatmul.mubr.f32.gmra.mrb[0].mxu0 %v2759
        %v3040 = vpop.f32.mrb[0].mxu0
        %v3041 = vadd.f32 0.0, %v3040
        %v3042 = vpop.f32.mrb[0].mxu0
        %3043 = vmatprep.mubr.f32.mxu0 0.0
        %3044 = vmatmul.mubr.f32.gmra.mrb[0].mxu0 %v2762
        %v3045 = vpop.f32.mrb[0].mxu0
        %v3046 = vadd.f32 0.0, %v3045
        %v3047 = vpop.f32.mrb[0].mxu0
        %3048 = vmatprep.mubr.f32.mxu0 0.0
        %3049 = vmatmul.mubr.f32.gmra.mrb[0].mxu0 %v2765
        %v3050 = vpop.f32.mrb[0].mxu0
        %v3051 = vadd.f32 0.0, %v3050
        %v3052 = vpop.f32.mrb[0].mxu0
        %3053 = vmatprep.mubr.f32.mxu0 0.0
        %3054 = vmatmul.mubr.f32.gmra.mrb[0].mxu0 %v2768
        %v3055 = vpop.f32.mrb[0].mxu0
        %v3056 = vadd.f32 0.0, %v3055
        %v3057 = vpop.f32.mrb[0].mxu0
        %3058 = vmatprep.mubr.f32.mxu0 0.0
        %3059 = vmatmul.mubr.f32.gmra.mrb[0].mxu0 %v2771
        %v3060 = vpop.f32.mrb[0].mxu0
        %v3061 = vadd.f32 0.0, %v3060
        %v3062 = vpop.f32.mrb[0].mxu0
        %3063 = vmatprep.mubr.f32.mxu0 0.0
        %3064 = vmatmul.mubr.f32.gmra.mrb[0].mxu0 %v2774
        %v3065 = vpop.f32.mrb[0].mxu0
        %v3066 = vadd.f32 0.0, %v3065
        %v3067 = vpop.f32.mrb[0].mxu0
        %3068 = vmatprep.mubr.f32.mxu0 0.0
        %3069 = vmatmul.mubr.f32.gmra.mrb[0].mxu0 %v2777
        %v3070 = vpop.f32.mrb[0].mxu0
        %v3071 = vadd.f32 0.0, %v3070
        %v3072 = vpop.f32.mrb[0].mxu0
        %3073 = vmatprep.mubr.f32.mxu0 0.0
        %3074 = vmatmul.mubr.f32.gmra.mrb[0].mxu0 %v2780
        %v3075 = vpop.f32.mrb[0].mxu0
        %v3076 = vadd.f32 0.0, %v3075
        %v3077 = vpop.f32.mrb[0].mxu0
        %3078 = vmatprep.mubr.f32.mxu0 0.0
        %3079 = vmatmul.mubr.f32.gmra.mrb[0].mxu0 %v2783
        %v3080 = vpop.f32.mrb[0].mxu0
        %v3081 = vadd.f32 0.0, %v3080
        %v3082 = vpop.f32.mrb[0].mxu0
        %3083 = vdwg.mxu0
        %s3084 = scalar_lea.vmem [#allocation4], 128
        %v3085 = vld [vmem:[%s3084] sm:$0xff]
        %v3086 = vld [vmem:[%s3084 + $0x8] sm:$0xff]
        %v3087 = vld [vmem:[%s3084 + $0x10] sm:$0xff]
        %v3088 = vld [vmem:[%s3084 + $0x18] sm:$0xff]
        %v3089 = vld [vmem:[%s3084 + $0x20] sm:$0xff]
        %v3090 = vld [vmem:[%s3084 + $0x28] sm:$0xff]
        %v3091 = vld [vmem:[%s3084 + $0x30] sm:$0xff]
        %v3092 = vld [vmem:[%s3084 + $0x38] sm:$0xff]
        %3093 = vmatprep.subr.mxu0 0.0
        %3094 = vmatpush1.msra.mxu0 %v3085
        %3095 = vmatprep.subr.mxu0 0.0
        %3096 = vmatpush1.msra.mxu0 %v3086
        %3097 = vmatprep.subr.mxu0 0.0
        %3098 = vmatpush1.msra.mxu0 %v3087
        %3099 = vmatprep.subr.mxu0 0.0
        %3100 = vmatpush1.msra.mxu0 %v3088
        %3101 = vmatprep.subr.mxu0 0.0
        %3102 = vmatpush1.msra.mxu0 %v3089
        %3103 = vmatprep.subr.mxu0 0.0
        %3104 = vmatpush1.msra.mxu0 %v3090
        %3105 = vmatprep.subr.mxu0 0.0
        %3106 = vmatpush1.msra.mxu0 %v3091
        %3107 = vmatprep.subr.mxu0 0.0
        %3108 = vmatpush1.msra.mxu0 %v3092
        %3109 = vmatprep.subr.mxu0 0.0
        %3110 = vmatpush1.msra.mxu0 0.0
        %3111 = vmatprep.subr.mxu0 0.0
        %3112 = vmatpush1.msra.mxu0 0.0
        %3113 = vmatprep.subr.mxu0 0.0
        %3114 = vmatpush1.msra.mxu0 0.0
        %3115 = vmatprep.subr.mxu0 0.0
        %3116 = vmatpush1.msra.mxu0 0.0
        %3117 = vmatprep.subr.mxu0 0.0
        %3118 = vmatpush1.msra.mxu0 0.0
        %3119 = vmatprep.subr.mxu0 0.0
        %3120 = vmatpush1.msra.mxu0 0.0
        %3121 = vmatprep.subr.mxu0 0.0
        %3122 = vmatpush1.msra.mxu0 0.0
        %3123 = vmatprep.subr.mxu0 0.0
        %3124 = vmatpush1.msra.mxu0 0.0
        %3125 = vmatprep.subr.mxu0 0.0
        %3126 = vmatpush1.msra.mxu0 0.0
        %3127 = vmatprep.subr.mxu0 0.0
        %3128 = vmatpush1.msra.mxu0 0.0
        %3129 = vmatprep.subr.mxu0 0.0
        %3130 = vmatpush1.msra.mxu0 0.0
        %3131 = vmatprep.subr.mxu0 0.0
        %3132 = vmatpush1.msra.mxu0 0.0
        %3133 = vmatprep.subr.mxu0 0.0
        %3134 = vmatpush1.msra.mxu0 0.0
        %3135 = vmatprep.subr.mxu0 0.0
        %3136 = vmatpush1.msra.mxu0 0.0
        %3137 = vmatprep.subr.mxu0 0.0
        %3138 = vmatpush1.msra.mxu0 0.0
        %3139 = vmatprep.subr.mxu0 0.0
        %3140 = vmatpush1.msra.mxu0 0.0
        %3141 = vmatprep.subr.mxu0 0.0
        %3142 = vmatpush1.msra.mxu0 0.0
        %3143 = vmatprep.subr.mxu0 0.0
        %3144 = vmatpush1.msra.mxu0 0.0
        %3145 = vmatprep.subr.mxu0 0.0
        %3146 = vmatpush1.msra.mxu0 0.0
        %3147 = vmatprep.subr.mxu0 0.0
        %3148 = vmatpush1.msra.mxu0 0.0
        %3149 = vmatprep.subr.mxu0 0.0
        %3150 = vmatpush1.msra.mxu0 0.0
        %3151 = vmatprep.subr.mxu0 0.0
        %3152 = vmatpush1.msra.mxu0 0.0
        %3153 = vmatprep.subr.mxu0 0.0
        %3154 = vmatpush1.msra.mxu0 0.0
        %3155 = vmatprep.subr.mxu0 0.0
        %3156 = vmatpush1.msra.mxu0 0.0
        %3157 = vmatprep.mubr.f32.mxu0 0.0
        %3158 = vmatmul.mubr.f32.gmra.mrb[0].mxu0 %v2738
        %v3159 = vpop.f32.mrb[0].mxu0
        %v3160 = vadd.f32 0.0, %v3159
        %v3161 = vpop.f32.mrb[0].mxu0
        %3162 = vmatprep.mubr.f32.mxu0 0.0
        %3163 = vmatmul.mubr.f32.gmra.mrb[0].mxu0 %v2741
        %v3164 = vpop.f32.mrb[0].mxu0
        %v3165 = vadd.f32 0.0, %v3164
        %v3166 = vpop.f32.mrb[0].mxu0
        %3167 = vmatprep.mubr.f32.mxu0 0.0
        %3168 = vmatmul.mubr.f32.gmra.mrb[0].mxu0 %v2744
        %v3169 = vpop.f32.mrb[0].mxu0
        %v3170 = vadd.f32 0.0, %v3169
        %v3171 = vpop.f32.mrb[0].mxu0
        %3172 = vmatprep.mubr.f32.mxu0 0.0
        %3173 = vmatmul.mubr.f32.gmra.mrb[0].mxu0 %v2747
        %v3174 = vpop.f32.mrb[0].mxu0
        %v3175 = vadd.f32 0.0, %v3174
        %v3176 = vpop.f32.mrb[0].mxu0
        %3177 = vmatprep.mubr.f32.mxu0 0.0
        %3178 = vmatmul.mubr.f32.gmra.mrb[0].mxu0 %v2750
        %v3179 = vpop.f32.mrb[0].mxu0
        %v3180 = vadd.f32 0.0, %v3179
        %v3181 = vpop.f32.mrb[0].mxu0
        %3182 = vmatprep.mubr.f32.mxu0 0.0
        %3183 = vmatmul.mubr.f32.gmra.mrb[0].mxu0 %v2753
        %v3184 = vpop.f32.mrb[0].mxu0
        %v3185 = vadd.f32 0.0, %v3184
        %v3186 = vpop.f32.mrb[0].mxu0
        %3187 = vmatprep.mubr.f32.mxu0 0.0
        %3188 = vmatmul.mubr.f32.gmra.mrb[0].mxu0 %v2756
        %v3189 = vpop.f32.mrb[0].mxu0
        %v3190 = vadd.f32 0.0, %v3189
        %v3191 = vpop.f32.mrb[0].mxu0
        %3192 = vmatprep.mubr.f32.mxu0 0.0
        %3193 = vmatmul.mubr.f32.gmra.mrb[0].mxu0 %v2759
        %v3194 = vpop.f32.mrb[0].mxu0
        %v3195 = vadd.f32 0.0, %v3194
        %v3196 = vpop.f32.mrb[0].mxu0
        %3197 = vmatprep.mubr.f32.mxu0 0.0
        %3198 = vmatmul.mubr.f32.gmra.mrb[0].mxu0 %v2762
        %v3199 = vpop.f32.mrb[0].mxu0
        %v3200 = vadd.f32 0.0, %v3199
        %v3201 = vpop.f32.mrb[0].mxu0
        %3202 = vmatprep.mubr.f32.mxu0 0.0
        %3203 = vmatmul.mubr.f32.gmra.mrb[0].mxu0 %v2765
        %v3204 = vpop.f32.mrb[0].mxu0
        %v3205 = vadd.f32 0.0, %v3204
        %v3206 = vpop.f32.mrb[0].mxu0
        %3207 = vmatprep.mubr.f32.mxu0 0.0
        %3208 = vmatmul.mubr.f32.gmra.mrb[0].mxu0 %v2768
        %v3209 = vpop.f32.mrb[0].mxu0
        %v3210 = vadd.f32 0.0, %v3209
        %v3211 = vpop.f32.mrb[0].mxu0
        %3212 = vmatprep.mubr.f32.mxu0 0.0
        %3213 = vmatmul.mubr.f32.gmra.mrb[0].mxu0 %v2771
        %v3214 = vpop.f32.mrb[0].mxu0
        %v3215 = vadd.f32 0.0, %v3214
        %v3216 = vpop.f32.mrb[0].mxu0
        %3217 = vmatprep.mubr.f32.mxu0 0.0
        %3218 = vmatmul.mubr.f32.gmra.mrb[0].mxu0 %v2774
        %v3219 = vpop.f32.mrb[0].mxu0
        %v3220 = vadd.f32 0.0, %v3219
        %v3221 = vpop.f32.mrb[0].mxu0
        %3222 = vmatprep.mubr.f32.mxu0 0.0
        %3223 = vmatmul.mubr.f32.gmra.mrb[0].mxu0 %v2777
        %v3224 = vpop.f32.mrb[0].mxu0
        %v3225 = vadd.f32 0.0, %v3224
        %v3226 = vpop.f32.mrb[0].mxu0
        %3227 = vmatprep.mubr.f32.mxu0 0.0
        %3228 = vmatmul.mubr.f32.gmra.mrb[0].mxu0 %v2780
        %v3229 = vpop.f32.mrb[0].mxu0
        %v3230 = vadd.f32 0.0, %v3229
        %v3231 = vpop.f32.mrb[0].mxu0
        %3232 = vmatprep.mubr.f32.mxu0 0.0
        %3233 = vmatmul.mubr.f32.gmra.mrb[0].mxu0 %v2783
        %v3234 = vpop.f32.mrb[0].mxu0
        %v3235 = vadd.f32 0.0, %v3234
        %v3236 = vpop.f32.mrb[0].mxu0
        %3237 = vdwg.mxu0
        %s3238 = scalar_lea.vmem [#allocation4], 192
        %v3239 = vld [vmem:[%s3238] sm:$0xff]
        %v3240 = vld [vmem:[%s3238 + $0x8] sm:$0xff]
        %v3241 = vld [vmem:[%s3238 + $0x10] sm:$0xff]
        %v3242 = vld [vmem:[%s3238 + $0x18] sm:$0xff]
        %v3243 = vld [vmem:[%s3238 + $0x20] sm:$0xff]
        %v3244 = vld [vmem:[%s3238 + $0x28] sm:$0xff]
        %v3245 = vld [vmem:[%s3238 + $0x30] sm:$0xff]
        %v3246 = vld [vmem:[%s3238 + $0x38] sm:$0xff]
        %3247 = vmatprep.subr.mxu0 0.0
        %3248 = vmatpush1.msra.mxu0 %v3239
        %3249 = vmatprep.subr.mxu0 0.0
        %3250 = vmatpush1.msra.mxu0 %v3240
        %3251 = vmatprep.subr.mxu0 0.0
        %3252 = vmatpush1.msra.mxu0 %v3241
        %3253 = vmatprep.subr.mxu0 0.0
        %3254 = vmatpush1.msra.mxu0 %v3242
        %3255 = vmatprep.subr.mxu0 0.0
        %3256 = vmatpush1.msra.mxu0 %v3243
        %3257 = vmatprep.subr.mxu0 0.0
        %3258 = vmatpush1.msra.mxu0 %v3244
        %3259 = vmatprep.subr.mxu0 0.0
        %3260 = vmatpush1.msra.mxu0 %v3245
        %3261 = vmatprep.subr.mxu0 0.0
        %3262 = vmatpush1.msra.mxu0 %v3246
        %3263 = vmatprep.subr.mxu0 0.0
        %3264 = vmatpush1.msra.mxu0 0.0
        %3265 = vmatprep.subr.mxu0 0.0
        %3266 = vmatpush1.msra.mxu0 0.0
        %3267 = vmatprep.subr.mxu0 0.0
        %3268 = vmatpush1.msra.mxu0 0.0
        %3269 = vmatprep.subr.mxu0 0.0
        %3270 = vmatpush1.msra.mxu0 0.0
        %3271 = vmatprep.subr.mxu0 0.0
        %3272 = vmatpush1.msra.mxu0 0.0
        %3273 = vmatprep.subr.mxu0 0.0
        %3274 = vmatpush1.msra.mxu0 0.0
        %3275 = vmatprep.subr.mxu0 0.0
        %3276 = vmatpush1.msra.mxu0 0.0
        %3277 = vmatprep.subr.mxu0 0.0
        %3278 = vmatpush1.msra.mxu0 0.0
        %3279 = vmatprep.subr.mxu0 0.0
        %3280 = vmatpush1.msra.mxu0 0.0
        %3281 = vmatprep.subr.mxu0 0.0
        %3282 = vmatpush1.msra.mxu0 0.0
        %3283 = vmatprep.subr.mxu0 0.0
        %3284 = vmatpush1.msra.mxu0 0.0
        %3285 = vmatprep.subr.mxu0 0.0
        %3286 = vmatpush1.msra.mxu0 0.0
        %3287 = vmatprep.subr.mxu0 0.0
        %3288 = vmatpush1.msra.mxu0 0.0
        %3289 = vmatprep.subr.mxu0 0.0
        %3290 = vmatpush1.msra.mxu0 0.0
        %3291 = vmatprep.subr.mxu0 0.0
        %3292 = vmatpush1.msra.mxu0 0.0
        %3293 = vmatprep.subr.mxu0 0.0
        %3294 = vmatpush1.msra.mxu0 0.0
        %3295 = vmatprep.subr.mxu0 0.0
        %3296 = vmatpush1.msra.mxu0 0.0
        %3297 = vmatprep.subr.mxu0 0.0
        %3298 = vmatpush1.msra.mxu0 0.0
        %3299 = vmatprep.subr.mxu0 0.0
        %3300 = vmatpush1.msra.mxu0 0.0
        %3301 = vmatprep.subr.mxu0 0.0
        %3302 = vmatpush1.msra.mxu0 0.0
        %3303 = vmatprep.subr.mxu0 0.0
        %3304 = vmatpush1.msra.mxu0 0.0
        %3305 = vmatprep.subr.mxu0 0.0
        %3306 = vmatpush1.msra.mxu0 0.0
        %3307 = vmatprep.subr.mxu0 0.0
        %3308 = vmatpush1.msra.mxu0 0.0
        %3309 = vmatprep.subr.mxu0 0.0
        %3310 = vmatpush1.msra.mxu0 0.0
        %3311 = vmatprep.mubr.f32.mxu0 0.0
        %3312 = vmatmul.mubr.f32.gmra.mrb[0].mxu0 %v2738
        %v3313 = vpop.f32.mrb[0].mxu0
        %v3314 = vadd.f32 0.0, %v3313
        %v3315 = vpop.f32.mrb[0].mxu0
        %3316 = vmatprep.mubr.f32.mxu0 0.0
        %3317 = vmatmul.mubr.f32.gmra.mrb[0].mxu0 %v2741
        %v3318 = vpop.f32.mrb[0].mxu0
        %v3319 = vadd.f32 0.0, %v3318
        %v3320 = vpop.f32.mrb[0].mxu0
        %3321 = vmatprep.mubr.f32.mxu0 0.0
        %3322 = vmatmul.mubr.f32.gmra.mrb[0].mxu0 %v2744
        %v3323 = vpop.f32.mrb[0].mxu0
        %v3324 = vadd.f32 0.0, %v3323
        %v3325 = vpop.f32.mrb[0].mxu0
        %3326 = vmatprep.mubr.f32.mxu0 0.0
        %3327 = vmatmul.mubr.f32.gmra.mrb[0].mxu0 %v2747
        %v3328 = vpop.f32.mrb[0].mxu0
        %v3329 = vadd.f32 0.0, %v3328
        %v3330 = vpop.f32.mrb[0].mxu0
        %3331 = vmatprep.mubr.f32.mxu0 0.0
        %3332 = vmatmul.mubr.f32.gmra.mrb[0].mxu0 %v2750
        %v3333 = vpop.f32.mrb[0].mxu0
        %v3334 = vadd.f32 0.0, %v3333
        %v3335 = vpop.f32.mrb[0].mxu0
        %3336 = vmatprep.mubr.f32.mxu0 0.0
        %3337 = vmatmul.mubr.f32.gmra.mrb[0].mxu0 %v2753
        %v3338 = vpop.f32.mrb[0].mxu0
        %v3339 = vadd.f32 0.0, %v3338
        %v3340 = vpop.f32.mrb[0].mxu0
        %3341 = vmatprep.mubr.f32.mxu0 0.0
        %3342 = vmatmul.mubr.f32.gmra.mrb[0].mxu0 %v2756
        %v3343 = vpop.f32.mrb[0].mxu0
        %v3344 = vadd.f32 0.0, %v3343
        %v3345 = vpop.f32.mrb[0].mxu0
        %3346 = vmatprep.mubr.f32.mxu0 0.0
        %3347 = vmatmul.mubr.f32.gmra.mrb[0].mxu0 %v2759
        %v3348 = vpop.f32.mrb[0].mxu0
        %v3349 = vadd.f32 0.0, %v3348
        %v3350 = vpop.f32.mrb[0].mxu0
        %3351 = vmatprep.mubr.f32.mxu0 0.0
        %3352 = vmatmul.mubr.f32.gmra.mrb[0].mxu0 %v2762
        %v3353 = vpop.f32.mrb[0].mxu0
        %v3354 = vadd.f32 0.0, %v3353
        %v3355 = vpop.f32.mrb[0].mxu0
        %3356 = vmatprep.mubr.f32.mxu0 0.0
        %3357 = vmatmul.mubr.f32.gmra.mrb[0].mxu0 %v2765
        %v3358 = vpop.f32.mrb[0].mxu0
        %v3359 = vadd.f32 0.0, %v3358
        %v3360 = vpop.f32.mrb[0].mxu0
        %3361 = vmatprep.mubr.f32.mxu0 0.0
        %3362 = vmatmul.mubr.f32.gmra.mrb[0].mxu0 %v2768
        %v3363 = vpop.f32.mrb[0].mxu0
        %v3364 = vadd.f32 0.0, %v3363
        %v3365 = vpop.f32.mrb[0].mxu0
        %3366 = vmatprep.mubr.f32.mxu0 0.0
        %3367 = vmatmul.mubr.f32.gmra.mrb[0].mxu0 %v2771
        %v3368 = vpop.f32.mrb[0].mxu0
        %v3369 = vadd.f32 0.0, %v3368
        %v3370 = vpop.f32.mrb[0].mxu0
        %3371 = vmatprep.mubr.f32.mxu0 0.0
        %3372 = vmatmul.mubr.f32.gmra.mrb[0].mxu0 %v2774
        %v3373 = vpop.f32.mrb[0].mxu0
        %v3374 = vadd.f32 0.0, %v3373
        %v3375 = vpop.f32.mrb[0].mxu0
        %3376 = vmatprep.mubr.f32.mxu0 0.0
        %3377 = vmatmul.mubr.f32.gmra.mrb[0].mxu0 %v2777
        %v3378 = vpop.f32.mrb[0].mxu0
        %v3379 = vadd.f32 0.0, %v3378
        %v3380 = vpop.f32.mrb[0].mxu0
        %3381 = vmatprep.mubr.f32.mxu0 0.0
        %3382 = vmatmul.mubr.f32.gmra.mrb[0].mxu0 %v2780
        %v3383 = vpop.f32.mrb[0].mxu0
        %v3384 = vadd.f32 0.0, %v3383
        %v3385 = vpop.f32.mrb[0].mxu0
        %3386 = vmatprep.mubr.f32.mxu0 0.0
        %3387 = vmatmul.mubr.f32.gmra.mrb[0].mxu0 %v2783
        %v3388 = vpop.f32.mrb[0].mxu0
        %v3389 = vadd.f32 0.0, %v3388
        %v3390 = vpop.f32.mrb[0].mxu0
        %3391 = vdwg.mxu0
        %s3392 = scalar_lea.vmem [#allocation4], 256
        %v3393 = vld [vmem:[%s3392] sm:$0xff]
        %v3394 = vld [vmem:[%s3392 + $0x8] sm:$0xff]
        %v3395 = vld [vmem:[%s3392 + $0x10] sm:$0xff]
        %v3396 = vld [vmem:[%s3392 + $0x18] sm:$0xff]
        %v3397 = vld [vmem:[%s3392 + $0x20] sm:$0xff]
        %v3398 = vld [vmem:[%s3392 + $0x28] sm:$0xff]
        %v3399 = vld [vmem:[%s3392 + $0x30] sm:$0xff]
        %v3400 = vld [vmem:[%s3392 + $0x38] sm:$0xff]
        %3401 = vmatprep.subr.mxu0 0.0
        %3402 = vmatpush1.msra.mxu0 %v3393
        %3403 = vmatprep.subr.mxu0 0.0
        %3404 = vmatpush1.msra.mxu0 %v3394
        %3405 = vmatprep.subr.mxu0 0.0
        %3406 = vmatpush1.msra.mxu0 %v3395
        %3407 = vmatprep.subr.mxu0 0.0
        %3408 = vmatpush1.msra.mxu0 %v3396
        %3409 = vmatprep.subr.mxu0 0.0
        %3410 = vmatpush1.msra.mxu0 %v3397
        %3411 = vmatprep.subr.mxu0 0.0
        %3412 = vmatpush1.msra.mxu0 %v3398
        %3413 = vmatprep.subr.mxu0 0.0
        %3414 = vmatpush1.msra.mxu0 %v3399
        %3415 = vmatprep.subr.mxu0 0.0
        %3416 = vmatpush1.msra.mxu0 %v3400
        %3417 = vmatprep.subr.mxu0 0.0
        %3418 = vmatpush1.msra.mxu0 0.0
        %3419 = vmatprep.subr.mxu0 0.0
        %3420 = vmatpush1.msra.mxu0 0.0
        %3421 = vmatprep.subr.mxu0 0.0
        %3422 = vmatpush1.msra.mxu0 0.0
        %3423 = vmatprep.subr.mxu0 0.0
        %3424 = vmatpush1.msra.mxu0 0.0
        %3425 = vmatprep.subr.mxu0 0.0
        %3426 = vmatpush1.msra.mxu0 0.0
        %3427 = vmatprep.subr.mxu0 0.0
        %3428 = vmatpush1.msra.mxu0 0.0
        %3429 = vmatprep.subr.mxu0 0.0
        %3430 = vmatpush1.msra.mxu0 0.0
        %3431 = vmatprep.subr.mxu0 0.0
        %3432 = vmatpush1.msra.mxu0 0.0
        %3433 = vmatprep.subr.mxu0 0.0
        %3434 = vmatpush1.msra.mxu0 0.0
        %3435 = vmatprep.subr.mxu0 0.0
        %3436 = vmatpush1.msra.mxu0 0.0
        %3437 = vmatprep.subr.mxu0 0.0
        %3438 = vmatpush1.msra.mxu0 0.0
        %3439 = vmatprep.subr.mxu0 0.0
        %3440 = vmatpush1.msra.mxu0 0.0
        %3441 = vmatprep.subr.mxu0 0.0
        %3442 = vmatpush1.msra.mxu0 0.0
        %3443 = vmatprep.subr.mxu0 0.0
        %3444 = vmatpush1.msra.mxu0 0.0
        %3445 = vmatprep.subr.mxu0 0.0
        %3446 = vmatpush1.msra.mxu0 0.0
        %3447 = vmatprep.subr.mxu0 0.0
        %3448 = vmatpush1.msra.mxu0 0.0
        %3449 = vmatprep.subr.mxu0 0.0
        %3450 = vmatpush1.msra.mxu0 0.0
        %3451 = vmatprep.subr.mxu0 0.0
        %3452 = vmatpush1.msra.mxu0 0.0
        %3453 = vmatprep.subr.mxu0 0.0
        %3454 = vmatpush1.msra.mxu0 0.0
        %3455 = vmatprep.subr.mxu0 0.0
        %3456 = vmatpush1.msra.mxu0 0.0
        %3457 = vmatprep.subr.mxu0 0.0
        %3458 = vmatpush1.msra.mxu0 0.0
        %3459 = vmatprep.subr.mxu0 0.0
        %3460 = vmatpush1.msra.mxu0 0.0
        %3461 = vmatprep.subr.mxu0 0.0
        %3462 = vmatpush1.msra.mxu0 0.0
        %3463 = vmatprep.subr.mxu0 0.0
        %3464 = vmatpush1.msra.mxu0 0.0
        %3465 = vmatprep.mubr.f32.mxu0 0.0
        %3466 = vmatmul.mubr.f32.gmra.mrb[0].mxu0 %v2738
        %v3467 = vpop.f32.mrb[0].mxu0
        %v3468 = vadd.f32 0.0, %v3467
        %v3469 = vpop.f32.mrb[0].mxu0
        %3470 = vmatprep.mubr.f32.mxu0 0.0
        %3471 = vmatmul.mubr.f32.gmra.mrb[0].mxu0 %v2741
        %v3472 = vpop.f32.mrb[0].mxu0
        %v3473 = vadd.f32 0.0, %v3472
        %v3474 = vpop.f32.mrb[0].mxu0
        %3475 = vmatprep.mubr.f32.mxu0 0.0
        %3476 = vmatmul.mubr.f32.gmra.mrb[0].mxu0 %v2744
        %v3477 = vpop.f32.mrb[0].mxu0
        %v3478 = vadd.f32 0.0, %v3477
        %v3479 = vpop.f32.mrb[0].mxu0
        %3480 = vmatprep.mubr.f32.mxu0 0.0
        %3481 = vmatmul.mubr.f32.gmra.mrb[0].mxu0 %v2747
        %v3482 = vpop.f32.mrb[0].mxu0
        %v3483 = vadd.f32 0.0, %v3482
        %v3484 = vpop.f32.mrb[0].mxu0
        %3485 = vmatprep.mubr.f32.mxu0 0.0
        %3486 = vmatmul.mubr.f32.gmra.mrb[0].mxu0 %v2750
        %v3487 = vpop.f32.mrb[0].mxu0
        %v3488 = vadd.f32 0.0, %v3487
        %v3489 = vpop.f32.mrb[0].mxu0
        %3490 = vmatprep.mubr.f32.mxu0 0.0
        %3491 = vmatmul.mubr.f32.gmra.mrb[0].mxu0 %v2753
        %v3492 = vpop.f32.mrb[0].mxu0
        %v3493 = vadd.f32 0.0, %v3492
        %v3494 = vpop.f32.mrb[0].mxu0
        %3495 = vmatprep.mubr.f32.mxu0 0.0
        %3496 = vmatmul.mubr.f32.gmra.mrb[0].mxu0 %v2756
        %v3497 = vpop.f32.mrb[0].mxu0
        %v3498 = vadd.f32 0.0, %v3497
        %v3499 = vpop.f32.mrb[0].mxu0
        %3500 = vmatprep.mubr.f32.mxu0 0.0
        %3501 = vmatmul.mubr.f32.gmra.mrb[0].mxu0 %v2759
        %v3502 = vpop.f32.mrb[0].mxu0
        %v3503 = vadd.f32 0.0, %v3502
        %v3504 = vpop.f32.mrb[0].mxu0
        %3505 = vmatprep.mubr.f32.mxu0 0.0
        %3506 = vmatmul.mubr.f32.gmra.mrb[0].mxu0 %v2762
        %v3507 = vpop.f32.mrb[0].mxu0
        %v3508 = vadd.f32 0.0, %v3507
        %v3509 = vpop.f32.mrb[0].mxu0
        %3510 = vmatprep.mubr.f32.mxu0 0.0
        %3511 = vmatmul.mubr.f32.gmra.mrb[0].mxu0 %v2765
        %v3512 = vpop.f32.mrb[0].mxu0
        %v3513 = vadd.f32 0.0, %v3512
        %v3514 = vpop.f32.mrb[0].mxu0
        %3515 = vmatprep.mubr.f32.mxu0 0.0
        %3516 = vmatmul.mubr.f32.gmra.mrb[0].mxu0 %v2768
        %v3517 = vpop.f32.mrb[0].mxu0
        %v3518 = vadd.f32 0.0, %v3517
        %v3519 = vpop.f32.mrb[0].mxu0
        %3520 = vmatprep.mubr.f32.mxu0 0.0
        %3521 = vmatmul.mubr.f32.gmra.mrb[0].mxu0 %v2771
        %v3522 = vpop.f32.mrb[0].mxu0
        %v3523 = vadd.f32 0.0, %v3522
        %v3524 = vpop.f32.mrb[0].mxu0
        %3525 = vmatprep.mubr.f32.mxu0 0.0
        %3526 = vmatmul.mubr.f32.gmra.mrb[0].mxu0 %v2774
        %v3527 = vpop.f32.mrb[0].mxu0
        %v3528 = vadd.f32 0.0, %v3527
        %v3529 = vpop.f32.mrb[0].mxu0
        %3530 = vmatprep.mubr.f32.mxu0 0.0
        %3531 = vmatmul.mubr.f32.gmra.mrb[0].mxu0 %v2777
        %v3532 = vpop.f32.mrb[0].mxu0
        %v3533 = vadd.f32 0.0, %v3532
        %v3534 = vpop.f32.mrb[0].mxu0
        %3535 = vmatprep.mubr.f32.mxu0 0.0
        %3536 = vmatmul.mubr.f32.gmra.mrb[0].mxu0 %v2780
        %v3537 = vpop.f32.mrb[0].mxu0
        %v3538 = vadd.f32 0.0, %v3537
        %v3539 = vpop.f32.mrb[0].mxu0
        %3540 = vmatprep.mubr.f32.mxu0 0.0
        %3541 = vmatmul.mubr.f32.gmra.mrb[0].mxu0 %v2783
        %v3542 = vpop.f32.mrb[0].mxu0
        %v3543 = vadd.f32 0.0, %v3542
        %v3544 = vpop.f32.mrb[0].mxu0
        %3545 = vdwg.mxu0
        %s3546 = scalar_lea.vmem [#allocation4], 320
        %v3547 = vld [vmem:[%s3546] sm:$0xff]
        %v3548 = vld [vmem:[%s3546 + $0x8] sm:$0xff]
        %v3549 = vld [vmem:[%s3546 + $0x10] sm:$0xff]
        %v3550 = vld [vmem:[%s3546 + $0x18] sm:$0xff]
        %v3551 = vld [vmem:[%s3546 + $0x20] sm:$0xff]
        %v3552 = vld [vmem:[%s3546 + $0x28] sm:$0xff]
        %v3553 = vld [vmem:[%s3546 + $0x30] sm:$0xff]
        %v3554 = vld [vmem:[%s3546 + $0x38] sm:$0xff]
        %3555 = vmatprep.subr.mxu0 0.0
        %3556 = vmatpush1.msra.mxu0 %v3547
        %3557 = vmatprep.subr.mxu0 0.0
        %3558 = vmatpush1.msra.mxu0 %v3548
        %3559 = vmatprep.subr.mxu0 0.0
        %3560 = vmatpush1.msra.mxu0 %v3549
        %3561 = vmatprep.subr.mxu0 0.0
        %3562 = vmatpush1.msra.mxu0 %v3550
        %3563 = vmatprep.subr.mxu0 0.0
        %3564 = vmatpush1.msra.mxu0 %v3551
        %3565 = vmatprep.subr.mxu0 0.0
        %3566 = vmatpush1.msra.mxu0 %v3552
        %3567 = vmatprep.subr.mxu0 0.0
        %3568 = vmatpush1.msra.mxu0 %v3553
        %3569 = vmatprep.subr.mxu0 0.0
        %3570 = vmatpush1.msra.mxu0 %v3554
        %3571 = vmatprep.subr.mxu0 0.0
        %3572 = vmatpush1.msra.mxu0 0.0
        %3573 = vmatprep.subr.mxu0 0.0
        %3574 = vmatpush1.msra.mxu0 0.0
        %3575 = vmatprep.subr.mxu0 0.0
        %3576 = vmatpush1.msra.mxu0 0.0
        %3577 = vmatprep.subr.mxu0 0.0
        %3578 = vmatpush1.msra.mxu0 0.0
        %3579 = vmatprep.subr.mxu0 0.0
        %3580 = vmatpush1.msra.mxu0 0.0
        %3581 = vmatprep.subr.mxu0 0.0
        %3582 = vmatpush1.msra.mxu0 0.0
        %3583 = vmatprep.subr.mxu0 0.0
        %3584 = vmatpush1.msra.mxu0 0.0
        %3585 = vmatprep.subr.mxu0 0.0
        %3586 = vmatpush1.msra.mxu0 0.0
        %3587 = vmatprep.subr.mxu0 0.0
        %3588 = vmatpush1.msra.mxu0 0.0
        %3589 = vmatprep.subr.mxu0 0.0
        %3590 = vmatpush1.msra.mxu0 0.0
        %3591 = vmatprep.subr.mxu0 0.0
        %3592 = vmatpush1.msra.mxu0 0.0
        %3593 = vmatprep.subr.mxu0 0.0
        %3594 = vmatpush1.msra.mxu0 0.0
        %3595 = vmatprep.subr.mxu0 0.0
        %3596 = vmatpush1.msra.mxu0 0.0
        %3597 = vmatprep.subr.mxu0 0.0
        %3598 = vmatpush1.msra.mxu0 0.0
        %3599 = vmatprep.subr.mxu0 0.0
        %3600 = vmatpush1.msra.mxu0 0.0
        %3601 = vmatprep.subr.mxu0 0.0
        %3602 = vmatpush1.msra.mxu0 0.0
        %3603 = vmatprep.subr.mxu0 0.0
        %3604 = vmatpush1.msra.mxu0 0.0
        %3605 = vmatprep.subr.mxu0 0.0
        %3606 = vmatpush1.msra.mxu0 0.0
        %3607 = vmatprep.subr.mxu0 0.0
        %3608 = vmatpush1.msra.mxu0 0.0
        %3609 = vmatprep.subr.mxu0 0.0
        %3610 = vmatpush1.msra.mxu0 0.0
        %3611 = vmatprep.subr.mxu0 0.0
        %3612 = vmatpush1.msra.mxu0 0.0
        %3613 = vmatprep.subr.mxu0 0.0
        %3614 = vmatpush1.msra.mxu0 0.0
        %3615 = vmatprep.subr.mxu0 0.0
        %3616 = vmatpush1.msra.mxu0 0.0
        %3617 = vmatprep.subr.mxu0 0.0
        %3618 = vmatpush1.msra.mxu0 0.0
        %3619 = vmatprep.mubr.f32.mxu0 0.0
        %3620 = vmatmul.mubr.f32.gmra.mrb[0].mxu0 %v2738
        %v3621 = vpop.f32.mrb[0].mxu0
        %v3622 = vadd.f32 0.0, %v3621
        %v3623 = vpop.f32.mrb[0].mxu0
        %3624 = vmatprep.mubr.f32.mxu0 0.0
        %3625 = vmatmul.mubr.f32.gmra.mrb[0].mxu0 %v2741
        %v3626 = vpop.f32.mrb[0].mxu0
        %v3627 = vadd.f32 0.0, %v3626
        %v3628 = vpop.f32.mrb[0].mxu0
        %3629 = vmatprep.mubr.f32.mxu0 0.0
        %3630 = vmatmul.mubr.f32.gmra.mrb[0].mxu0 %v2744
        %v3631 = vpop.f32.mrb[0].mxu0
        %v3632 = vadd.f32 0.0, %v3631
        %v3633 = vpop.f32.mrb[0].mxu0
        %3634 = vmatprep.mubr.f32.mxu0 0.0
        %3635 = vmatmul.mubr.f32.gmra.mrb[0].mxu0 %v2747
        %v3636 = vpop.f32.mrb[0].mxu0
        %v3637 = vadd.f32 0.0, %v3636
        %v3638 = vpop.f32.mrb[0].mxu0
        %3639 = vmatprep.mubr.f32.mxu0 0.0
        %3640 = vmatmul.mubr.f32.gmra.mrb[0].mxu0 %v2750
        %v3641 = vpop.f32.mrb[0].mxu0
        %v3642 = vadd.f32 0.0, %v3641
        %v3643 = vpop.f32.mrb[0].mxu0
        %3644 = vmatprep.mubr.f32.mxu0 0.0
        %3645 = vmatmul.mubr.f32.gmra.mrb[0].mxu0 %v2753
        %v3646 = vpop.f32.mrb[0].mxu0
        %v3647 = vadd.f32 0.0, %v3646
        %v3648 = vpop.f32.mrb[0].mxu0
        %3649 = vmatprep.mubr.f32.mxu0 0.0
        %3650 = vmatmul.mubr.f32.gmra.mrb[0].mxu0 %v2756
        %v3651 = vpop.f32.mrb[0].mxu0
        %v3652 = vadd.f32 0.0, %v3651
        %v3653 = vpop.f32.mrb[0].mxu0
        %3654 = vmatprep.mubr.f32.mxu0 0.0
        %3655 = vmatmul.mubr.f32.gmra.mrb[0].mxu0 %v2759
        %v3656 = vpop.f32.mrb[0].mxu0
        %v3657 = vadd.f32 0.0, %v3656
        %v3658 = vpop.f32.mrb[0].mxu0
        %3659 = vmatprep.mubr.f32.mxu0 0.0
        %3660 = vmatmul.mubr.f32.gmra.mrb[0].mxu0 %v2762
        %v3661 = vpop.f32.mrb[0].mxu0
        %v3662 = vadd.f32 0.0, %v3661
        %v3663 = vpop.f32.mrb[0].mxu0
        %3664 = vmatprep.mubr.f32.mxu0 0.0
        %3665 = vmatmul.mubr.f32.gmra.mrb[0].mxu0 %v2765
        %v3666 = vpop.f32.mrb[0].mxu0
        %v3667 = vadd.f32 0.0, %v3666
        %v3668 = vpop.f32.mrb[0].mxu0
        %3669 = vmatprep.mubr.f32.mxu0 0.0
        %3670 = vmatmul.mubr.f32.gmra.mrb[0].mxu0 %v2768
        %v3671 = vpop.f32.mrb[0].mxu0
        %v3672 = vadd.f32 0.0, %v3671
        %v3673 = vpop.f32.mrb[0].mxu0
        %3674 = vmatprep.mubr.f32.mxu0 0.0
        %3675 = vmatmul.mubr.f32.gmra.mrb[0].mxu0 %v2771
        %v3676 = vpop.f32.mrb[0].mxu0
        %v3677 = vadd.f32 0.0, %v3676
        %v3678 = vpop.f32.mrb[0].mxu0
        %3679 = vmatprep.mubr.f32.mxu0 0.0
        %3680 = vmatmul.mubr.f32.gmra.mrb[0].mxu0 %v2774
        %v3681 = vpop.f32.mrb[0].mxu0
        %v3682 = vadd.f32 0.0, %v3681
        %v3683 = vpop.f32.mrb[0].mxu0
        %3684 = vmatprep.mubr.f32.mxu0 0.0
        %3685 = vmatmul.mubr.f32.gmra.mrb[0].mxu0 %v2777
        %v3686 = vpop.f32.mrb[0].mxu0
        %v3687 = vadd.f32 0.0, %v3686
        %v3688 = vpop.f32.mrb[0].mxu0
        %3689 = vmatprep.mubr.f32.mxu0 0.0
        %3690 = vmatmul.mubr.f32.gmra.mrb[0].mxu0 %v2780
        %v3691 = vpop.f32.mrb[0].mxu0
        %v3692 = vadd.f32 0.0, %v3691
        %v3693 = vpop.f32.mrb[0].mxu0
        %3694 = vmatprep.mubr.f32.mxu0 0.0
        %3695 = vmatmul.mubr.f32.gmra.mrb[0].mxu0 %v2783
        %v3696 = vpop.f32.mrb[0].mxu0
        %v3697 = vadd.f32 0.0, %v3696
        %v3698 = vpop.f32.mrb[0].mxu0
        %3699 = vdwg.mxu0
        %s3700 = scalar_lea.vmem [#allocation4], 384
        %v3701 = vld [vmem:[%s3700] sm:$0xff]
        %v3702 = vld [vmem:[%s3700 + $0x8] sm:$0xff]
        %v3703 = vld [vmem:[%s3700 + $0x10] sm:$0xff]
        %v3704 = vld [vmem:[%s3700 + $0x18] sm:$0xff]
        %v3705 = vld [vmem:[%s3700 + $0x20] sm:$0xff]
        %v3706 = vld [vmem:[%s3700 + $0x28] sm:$0xff]
        %v3707 = vld [vmem:[%s3700 + $0x30] sm:$0xff]
        %v3708 = vld [vmem:[%s3700 + $0x38] sm:$0xff]
        %3709 = vmatprep.subr.mxu0 0.0
        %3710 = vmatpush1.msra.mxu0 %v3701
        %3711 = vmatprep.subr.mxu0 0.0
        %3712 = vmatpush1.msra.mxu0 %v3702
        %3713 = vmatprep.subr.mxu0 0.0
        %3714 = vmatpush1.msra.mxu0 %v3703
        %3715 = vmatprep.subr.mxu0 0.0
        %3716 = vmatpush1.msra.mxu0 %v3704
        %3717 = vmatprep.subr.mxu0 0.0
        %3718 = vmatpush1.msra.mxu0 %v3705
        %3719 = vmatprep.subr.mxu0 0.0
        %3720 = vmatpush1.msra.mxu0 %v3706
        %3721 = vmatprep.subr.mxu0 0.0
        %3722 = vmatpush1.msra.mxu0 %v3707
        %3723 = vmatprep.subr.mxu0 0.0
        %3724 = vmatpush1.msra.mxu0 %v3708
        %3725 = vmatprep.subr.mxu0 0.0
        %3726 = vmatpush1.msra.mxu0 0.0
        %3727 = vmatprep.subr.mxu0 0.0
        %3728 = vmatpush1.msra.mxu0 0.0
        %3729 = vmatprep.subr.mxu0 0.0
        %3730 = vmatpush1.msra.mxu0 0.0
        %3731 = vmatprep.subr.mxu0 0.0
        %3732 = vmatpush1.msra.mxu0 0.0
        %3733 = vmatprep.subr.mxu0 0.0
        %3734 = vmatpush1.msra.mxu0 0.0
        %3735 = vmatprep.subr.mxu0 0.0
        %3736 = vmatpush1.msra.mxu0 0.0
        %3737 = vmatprep.subr.mxu0 0.0
        %3738 = vmatpush1.msra.mxu0 0.0
        %3739 = vmatprep.subr.mxu0 0.0
        %3740 = vmatpush1.msra.mxu0 0.0
        %3741 = vmatprep.subr.mxu0 0.0
        %3742 = vmatpush1.msra.mxu0 0.0
        %3743 = vmatprep.subr.mxu0 0.0
        %3744 = vmatpush1.msra.mxu0 0.0
        %3745 = vmatprep.subr.mxu0 0.0
        %3746 = vmatpush1.msra.mxu0 0.0
        %3747 = vmatprep.subr.mxu0 0.0
        %3748 = vmatpush1.msra.mxu0 0.0
        %3749 = vmatprep.subr.mxu0 0.0
        %3750 = vmatpush1.msra.mxu0 0.0
        %3751 = vmatprep.subr.mxu0 0.0
        %3752 = vmatpush1.msra.mxu0 0.0
        %3753 = vmatprep.subr.mxu0 0.0
        %3754 = vmatpush1.msra.mxu0 0.0
        %3755 = vmatprep.subr.mxu0 0.0
        %3756 = vmatpush1.msra.mxu0 0.0
        %3757 = vmatprep.subr.mxu0 0.0
        %3758 = vmatpush1.msra.mxu0 0.0
        %3759 = vmatprep.subr.mxu0 0.0
        %3760 = vmatpush1.msra.mxu0 0.0
        %3761 = vmatprep.subr.mxu0 0.0
        %3762 = vmatpush1.msra.mxu0 0.0
        %3763 = vmatprep.subr.mxu0 0.0
        %3764 = vmatpush1.msra.mxu0 0.0
        %3765 = vmatprep.subr.mxu0 0.0
        %3766 = vmatpush1.msra.mxu0 0.0
        %3767 = vmatprep.subr.mxu0 0.0
        %3768 = vmatpush1.msra.mxu0 0.0
        %3769 = vmatprep.subr.mxu0 0.0
        %3770 = vmatpush1.msra.mxu0 0.0
        %3771 = vmatprep.subr.mxu0 0.0
        %3772 = vmatpush1.msra.mxu0 0.0
        %3773 = vmatprep.mubr.f32.mxu0 0.0
        %3774 = vmatmul.mubr.f32.gmra.mrb[0].mxu0 %v2738
        %v3775 = vpop.f32.mrb[0].mxu0
        %v3776 = vadd.f32 0.0, %v3775
        %v3777 = vpop.f32.mrb[0].mxu0
        %3778 = vmatprep.mubr.f32.mxu0 0.0
        %3779 = vmatmul.mubr.f32.gmra.mrb[0].mxu0 %v2741
        %v3780 = vpop.f32.mrb[0].mxu0
        %v3781 = vadd.f32 0.0, %v3780
        %v3782 = vpop.f32.mrb[0].mxu0
        %3783 = vmatprep.mubr.f32.mxu0 0.0
        %3784 = vmatmul.mubr.f32.gmra.mrb[0].mxu0 %v2744
        %v3785 = vpop.f32.mrb[0].mxu0
        %v3786 = vadd.f32 0.0, %v3785
        %v3787 = vpop.f32.mrb[0].mxu0
        %3788 = vmatprep.mubr.f32.mxu0 0.0
        %3789 = vmatmul.mubr.f32.gmra.mrb[0].mxu0 %v2747
        %v3790 = vpop.f32.mrb[0].mxu0
        %v3791 = vadd.f32 0.0, %v3790
        %v3792 = vpop.f32.mrb[0].mxu0
        %3793 = vmatprep.mubr.f32.mxu0 0.0
        %3794 = vmatmul.mubr.f32.gmra.mrb[0].mxu0 %v2750
        %v3795 = vpop.f32.mrb[0].mxu0
        %v3796 = vadd.f32 0.0, %v3795
        %v3797 = vpop.f32.mrb[0].mxu0
        %3798 = vmatprep.mubr.f32.mxu0 0.0
        %3799 = vmatmul.mubr.f32.gmra.mrb[0].mxu0 %v2753
        %v3800 = vpop.f32.mrb[0].mxu0
        %v3801 = vadd.f32 0.0, %v3800
        %v3802 = vpop.f32.mrb[0].mxu0
        %3803 = vmatprep.mubr.f32.mxu0 0.0
        %3804 = vmatmul.mubr.f32.gmra.mrb[0].mxu0 %v2756
        %v3805 = vpop.f32.mrb[0].mxu0
        %v3806 = vadd.f32 0.0, %v3805
        %v3807 = vpop.f32.mrb[0].mxu0
        %3808 = vmatprep.mubr.f32.mxu0 0.0
        %3809 = vmatmul.mubr.f32.gmra.mrb[0].mxu0 %v2759
        %v3810 = vpop.f32.mrb[0].mxu0
        %v3811 = vadd.f32 0.0, %v3810
        %v3812 = vpop.f32.mrb[0].mxu0
        %3813 = vmatprep.mubr.f32.mxu0 0.0
        %3814 = vmatmul.mubr.f32.gmra.mrb[0].mxu0 %v2762
        %v3815 = vpop.f32.mrb[0].mxu0
        %v3816 = vadd.f32 0.0, %v3815
        %v3817 = vpop.f32.mrb[0].mxu0
        %3818 = vmatprep.mubr.f32.mxu0 0.0
        %3819 = vmatmul.mubr.f32.gmra.mrb[0].mxu0 %v2765
        %v3820 = vpop.f32.mrb[0].mxu0
        %v3821 = vadd.f32 0.0, %v3820
        %v3822 = vpop.f32.mrb[0].mxu0
        %3823 = vmatprep.mubr.f32.mxu0 0.0
        %3824 = vmatmul.mubr.f32.gmra.mrb[0].mxu0 %v2768
        %v3825 = vpop.f32.mrb[0].mxu0
        %v3826 = vadd.f32 0.0, %v3825
        %v3827 = vpop.f32.mrb[0].mxu0
        %3828 = vmatprep.mubr.f32.mxu0 0.0
        %3829 = vmatmul.mubr.f32.gmra.mrb[0].mxu0 %v2771
        %v3830 = vpop.f32.mrb[0].mxu0
        %v3831 = vadd.f32 0.0, %v3830
        %v3832 = vpop.f32.mrb[0].mxu0
        %3833 = vmatprep.mubr.f32.mxu0 0.0
        %3834 = vmatmul.mubr.f32.gmra.mrb[0].mxu0 %v2774
        %v3835 = vpop.f32.mrb[0].mxu0
        %v3836 = vadd.f32 0.0, %v3835
        %v3837 = vpop.f32.mrb[0].mxu0
        %3838 = vmatprep.mubr.f32.mxu0 0.0
        %3839 = vmatmul.mubr.f32.gmra.mrb[0].mxu0 %v2777
        %v3840 = vpop.f32.mrb[0].mxu0
        %v3841 = vadd.f32 0.0, %v3840
        %v3842 = vpop.f32.mrb[0].mxu0
        %3843 = vmatprep.mubr.f32.mxu0 0.0
        %3844 = vmatmul.mubr.f32.gmra.mrb[0].mxu0 %v2780
        %v3845 = vpop.f32.mrb[0].mxu0
        %v3846 = vadd.f32 0.0, %v3845
        %v3847 = vpop.f32.mrb[0].mxu0
        %3848 = vmatprep.mubr.f32.mxu0 0.0
        %3849 = vmatmul.mubr.f32.gmra.mrb[0].mxu0 %v2783
        %v3850 = vpop.f32.mrb[0].mxu0
        %v3851 = vadd.f32 0.0, %v3850
        %v3852 = vpop.f32.mrb[0].mxu0
        %3853 = vdwg.mxu0
        %s3854 = scalar_lea.vmem [#allocation4], 448
        %v3855 = vld [vmem:[%s3854] sm:$0xff]
        %v3856 = vld [vmem:[%s3854 + $0x8] sm:$0xff]
        %v3857 = vld [vmem:[%s3854 + $0x10] sm:$0xff]
        %v3858 = vld [vmem:[%s3854 + $0x18] sm:$0xff]
        %v3859 = vld [vmem:[%s3854 + $0x20] sm:$0xff]
        %v3860 = vld [vmem:[%s3854 + $0x28] sm:$0xff]
        %v3861 = vld [vmem:[%s3854 + $0x30] sm:$0xff]
        %v3862 = vld [vmem:[%s3854 + $0x38] sm:$0xff]
        %3863 = vmatprep.subr.mxu0 0.0
        %3864 = vmatpush1.msra.mxu0 %v3855
        %3865 = vmatprep.subr.mxu0 0.0
        %3866 = vmatpush1.msra.mxu0 %v3856
        %3867 = vmatprep.subr.mxu0 0.0
        %3868 = vmatpush1.msra.mxu0 %v3857
        %3869 = vmatprep.subr.mxu0 0.0
        %3870 = vmatpush1.msra.mxu0 %v3858
        %3871 = vmatprep.subr.mxu0 0.0
        %3872 = vmatpush1.msra.mxu0 %v3859
        %3873 = vmatprep.subr.mxu0 0.0
        %3874 = vmatpush1.msra.mxu0 %v3860
        %3875 = vmatprep.subr.mxu0 0.0
        %3876 = vmatpush1.msra.mxu0 %v3861
        %3877 = vmatprep.subr.mxu0 0.0
        %3878 = vmatpush1.msra.mxu0 %v3862
        %3879 = vmatprep.subr.mxu0 0.0
        %3880 = vmatpush1.msra.mxu0 0.0
        %3881 = vmatprep.subr.mxu0 0.0
        %3882 = vmatpush1.msra.mxu0 0.0
        %3883 = vmatprep.subr.mxu0 0.0
        %3884 = vmatpush1.msra.mxu0 0.0
        %3885 = vmatprep.subr.mxu0 0.0
        %3886 = vmatpush1.msra.mxu0 0.0
        %3887 = vmatprep.subr.mxu0 0.0
        %3888 = vmatpush1.msra.mxu0 0.0
        %3889 = vmatprep.subr.mxu0 0.0
        %3890 = vmatpush1.msra.mxu0 0.0
        %3891 = vmatprep.subr.mxu0 0.0
        %3892 = vmatpush1.msra.mxu0 0.0
        %3893 = vmatprep.subr.mxu0 0.0
        %3894 = vmatpush1.msra.mxu0 0.0
        %3895 = vmatprep.subr.mxu0 0.0
        %3896 = vmatpush1.msra.mxu0 0.0
        %3897 = vmatprep.subr.mxu0 0.0
        %3898 = vmatpush1.msra.mxu0 0.0
        %3899 = vmatprep.subr.mxu0 0.0
        %3900 = vmatpush1.msra.mxu0 0.0
        %3901 = vmatprep.subr.mxu0 0.0
        %3902 = vmatpush1.msra.mxu0 0.0
        %3903 = vmatprep.subr.mxu0 0.0
        %3904 = vmatpush1.msra.mxu0 0.0
        %3905 = vmatprep.subr.mxu0 0.0
        %3906 = vmatpush1.msra.mxu0 0.0
        %3907 = vmatprep.subr.mxu0 0.0
        %3908 = vmatpush1.msra.mxu0 0.0
        %3909 = vmatprep.subr.mxu0 0.0
        %3910 = vmatpush1.msra.mxu0 0.0
        %3911 = vmatprep.subr.mxu0 0.0
        %3912 = vmatpush1.msra.mxu0 0.0
        %3913 = vmatprep.subr.mxu0 0.0
        %3914 = vmatpush1.msra.mxu0 0.0
        %3915 = vmatprep.subr.mxu0 0.0
        %3916 = vmatpush1.msra.mxu0 0.0
        %3917 = vmatprep.subr.mxu0 0.0
        %3918 = vmatpush1.msra.mxu0 0.0
        %3919 = vmatprep.subr.mxu0 0.0
        %3920 = vmatpush1.msra.mxu0 0.0
        %3921 = vmatprep.subr.mxu0 0.0
        %3922 = vmatpush1.msra.mxu0 0.0
        %3923 = vmatprep.subr.mxu0 0.0
        %3924 = vmatpush1.msra.mxu0 0.0
        %3925 = vmatprep.subr.mxu0 0.0
        %3926 = vmatpush1.msra.mxu0 0.0
        %3927 = vmatprep.mubr.f32.mxu0 0.0
        %3928 = vmatmul.mubr.f32.gmra.mrb[0].mxu0 %v2738
        %v3929 = vpop.f32.mrb[0].mxu0
        %v3930 = vadd.f32 0.0, %v3929
        %v3931 = vpop.f32.mrb[0].mxu0
        %3932 = vmatprep.mubr.f32.mxu0 0.0
        %3933 = vmatmul.mubr.f32.gmra.mrb[0].mxu0 %v2741
        %v3934 = vpop.f32.mrb[0].mxu0
        %v3935 = vadd.f32 0.0, %v3934
        %v3936 = vpop.f32.mrb[0].mxu0
        %3937 = vmatprep.mubr.f32.mxu0 0.0
        %3938 = vmatmul.mubr.f32.gmra.mrb[0].mxu0 %v2744
        %v3939 = vpop.f32.mrb[0].mxu0
        %v3940 = vadd.f32 0.0, %v3939
        %v3941 = vpop.f32.mrb[0].mxu0
        %3942 = vmatprep.mubr.f32.mxu0 0.0
        %3943 = vmatmul.mubr.f32.gmra.mrb[0].mxu0 %v2747
        %v3944 = vpop.f32.mrb[0].mxu0
        %v3945 = vadd.f32 0.0, %v3944
        %v3946 = vpop.f32.mrb[0].mxu0
        %3947 = vmatprep.mubr.f32.mxu0 0.0
        %3948 = vmatmul.mubr.f32.gmra.mrb[0].mxu0 %v2750
        %v3949 = vpop.f32.mrb[0].mxu0
        %v3950 = vadd.f32 0.0, %v3949
        %v3951 = vpop.f32.mrb[0].mxu0
        %3952 = vmatprep.mubr.f32.mxu0 0.0
        %3953 = vmatmul.mubr.f32.gmra.mrb[0].mxu0 %v2753
        %v3954 = vpop.f32.mrb[0].mxu0
        %v3955 = vadd.f32 0.0, %v3954
        %v3956 = vpop.f32.mrb[0].mxu0
        %3957 = vmatprep.mubr.f32.mxu0 0.0
        %3958 = vmatmul.mubr.f32.gmra.mrb[0].mxu0 %v2756
        %v3959 = vpop.f32.mrb[0].mxu0
        %v3960 = vadd.f32 0.0, %v3959
        %v3961 = vpop.f32.mrb[0].mxu0
        %3962 = vmatprep.mubr.f32.mxu0 0.0
        %3963 = vmatmul.mubr.f32.gmra.mrb[0].mxu0 %v2759
        %v3964 = vpop.f32.mrb[0].mxu0
        %v3965 = vadd.f32 0.0, %v3964
        %v3966 = vpop.f32.mrb[0].mxu0
        %3967 = vmatprep.mubr.f32.mxu0 0.0
        %3968 = vmatmul.mubr.f32.gmra.mrb[0].mxu0 %v2762
        %v3969 = vpop.f32.mrb[0].mxu0
        %v3970 = vadd.f32 0.0, %v3969
        %v3971 = vpop.f32.mrb[0].mxu0
        %3972 = vmatprep.mubr.f32.mxu0 0.0
        %3973 = vmatmul.mubr.f32.gmra.mrb[0].mxu0 %v2765
        %v3974 = vpop.f32.mrb[0].mxu0
        %v3975 = vadd.f32 0.0, %v3974
        %v3976 = vpop.f32.mrb[0].mxu0
        %3977 = vmatprep.mubr.f32.mxu0 0.0
        %3978 = vmatmul.mubr.f32.gmra.mrb[0].mxu0 %v2768
        %v3979 = vpop.f32.mrb[0].mxu0
        %v3980 = vadd.f32 0.0, %v3979
        %v3981 = vpop.f32.mrb[0].mxu0
        %3982 = vmatprep.mubr.f32.mxu0 0.0
        %3983 = vmatmul.mubr.f32.gmra.mrb[0].mxu0 %v2771
        %v3984 = vpop.f32.mrb[0].mxu0
        %v3985 = vadd.f32 0.0, %v3984
        %v3986 = vpop.f32.mrb[0].mxu0
        %3987 = vmatprep.mubr.f32.mxu0 0.0
        %3988 = vmatmul.mubr.f32.gmra.mrb[0].mxu0 %v2774
        %v3989 = vpop.f32.mrb[0].mxu0
        %v3990 = vadd.f32 0.0, %v3989
        %v3991 = vpop.f32.mrb[0].mxu0
        %3992 = vmatprep.mubr.f32.mxu0 0.0
        %3993 = vmatmul.mubr.f32.gmra.mrb[0].mxu0 %v2777
        %v3994 = vpop.f32.mrb[0].mxu0
        %v3995 = vadd.f32 0.0, %v3994
        %v3996 = vpop.f32.mrb[0].mxu0
        %3997 = vmatprep.mubr.f32.mxu0 0.0
        %3998 = vmatmul.mubr.f32.gmra.mrb[0].mxu0 %v2780
        %v3999 = vpop.f32.mrb[0].mxu0
        %v4000 = vadd.f32 0.0, %v3999
        %v4001 = vpop.f32.mrb[0].mxu0
        %4002 = vmatprep.mubr.f32.mxu0 0.0
        %4003 = vmatmul.mubr.f32.gmra.mrb[0].mxu0 %v2783
        %v4004 = vpop.f32.mrb[0].mxu0
        %v4005 = vadd.f32 0.0, %v4004
        %v4006 = vpop.f32.mrb[0].mxu0
        %4007 = vdwg.mxu0
        %s4008 = scalar_lea.vmem [#allocation4], 512
        %v4009 = vld [vmem:[%s4008] sm:$0xff]
        %v4010 = vld [vmem:[%s4008 + $0x8] sm:$0xff]
        %v4011 = vld [vmem:[%s4008 + $0x10] sm:$0xff]
        %v4012 = vld [vmem:[%s4008 + $0x18] sm:$0xff]
        %v4013 = vld [vmem:[%s4008 + $0x20] sm:$0xff]
        %v4014 = vld [vmem:[%s4008 + $0x28] sm:$0xff]
        %v4015 = vld [vmem:[%s4008 + $0x30] sm:$0xff]
        %v4016 = vld [vmem:[%s4008 + $0x38] sm:$0xff]
        %4017 = vmatprep.subr.mxu0 0.0
        %4018 = vmatpush1.msra.mxu0 %v4009
        %4019 = vmatprep.subr.mxu0 0.0
        %4020 = vmatpush1.msra.mxu0 %v4010
        %4021 = vmatprep.subr.mxu0 0.0
        %4022 = vmatpush1.msra.mxu0 %v4011
        %4023 = vmatprep.subr.mxu0 0.0
        %4024 = vmatpush1.msra.mxu0 %v4012
        %4025 = vmatprep.subr.mxu0 0.0
        %4026 = vmatpush1.msra.mxu0 %v4013
        %4027 = vmatprep.subr.mxu0 0.0
        %4028 = vmatpush1.msra.mxu0 %v4014
        %4029 = vmatprep.subr.mxu0 0.0
        %4030 = vmatpush1.msra.mxu0 %v4015
        %4031 = vmatprep.subr.mxu0 0.0
        %4032 = vmatpush1.msra.mxu0 %v4016
        %4033 = vmatprep.subr.mxu0 0.0
        %4034 = vmatpush1.msra.mxu0 0.0
        %4035 = vmatprep.subr.mxu0 0.0
        %4036 = vmatpush1.msra.mxu0 0.0
        %4037 = vmatprep.subr.mxu0 0.0
        %4038 = vmatpush1.msra.mxu0 0.0
        %4039 = vmatprep.subr.mxu0 0.0
        %4040 = vmatpush1.msra.mxu0 0.0
        %4041 = vmatprep.subr.mxu0 0.0
        %4042 = vmatpush1.msra.mxu0 0.0
        %4043 = vmatprep.subr.mxu0 0.0
        %4044 = vmatpush1.msra.mxu0 0.0
        %4045 = vmatprep.subr.mxu0 0.0
        %4046 = vmatpush1.msra.mxu0 0.0
        %4047 = vmatprep.subr.mxu0 0.0
        %4048 = vmatpush1.msra.mxu0 0.0
        %4049 = vmatprep.subr.mxu0 0.0
        %4050 = vmatpush1.msra.mxu0 0.0
        %4051 = vmatprep.subr.mxu0 0.0
        %4052 = vmatpush1.msra.mxu0 0.0
        %4053 = vmatprep.subr.mxu0 0.0
        %4054 = vmatpush1.msra.mxu0 0.0
        %4055 = vmatprep.subr.mxu0 0.0
        %4056 = vmatpush1.msra.mxu0 0.0
        %4057 = vmatprep.subr.mxu0 0.0
        %4058 = vmatpush1.msra.mxu0 0.0
        %4059 = vmatprep.subr.mxu0 0.0
        %4060 = vmatpush1.msra.mxu0 0.0
        %4061 = vmatprep.subr.mxu0 0.0
        %4062 = vmatpush1.msra.mxu0 0.0
        %4063 = vmatprep.subr.mxu0 0.0
        %4064 = vmatpush1.msra.mxu0 0.0
        %4065 = vmatprep.subr.mxu0 0.0
        %4066 = vmatpush1.msra.mxu0 0.0
        %4067 = vmatprep.subr.mxu0 0.0
        %4068 = vmatpush1.msra.mxu0 0.0
        %4069 = vmatprep.subr.mxu0 0.0
        %4070 = vmatpush1.msra.mxu0 0.0
        %4071 = vmatprep.subr.mxu0 0.0
        %4072 = vmatpush1.msra.mxu0 0.0
        %4073 = vmatprep.subr.mxu0 0.0
        %4074 = vmatpush1.msra.mxu0 0.0
        %4075 = vmatprep.subr.mxu0 0.0
        %4076 = vmatpush1.msra.mxu0 0.0
        %4077 = vmatprep.subr.mxu0 0.0
        %4078 = vmatpush1.msra.mxu0 0.0
        %4079 = vmatprep.subr.mxu0 0.0
        %4080 = vmatpush1.msra.mxu0 0.0
        %4081 = vmatprep.mubr.f32.mxu0 0.0
        %4082 = vmatmul.mubr.f32.gmra.mrb[0].mxu0 %v2738
        %v4083 = vpop.f32.mrb[0].mxu0
        %v4084 = vadd.f32 0.0, %v4083
        %v4085 = vpop.f32.mrb[0].mxu0
        %4086 = vmatprep.mubr.f32.mxu0 0.0
        %4087 = vmatmul.mubr.f32.gmra.mrb[0].mxu0 %v2741
        %v4088 = vpop.f32.mrb[0].mxu0
        %v4089 = vadd.f32 0.0, %v4088
        %v4090 = vpop.f32.mrb[0].mxu0
        %4091 = vmatprep.mubr.f32.mxu0 0.0
        %4092 = vmatmul.mubr.f32.gmra.mrb[0].mxu0 %v2744
        %v4093 = vpop.f32.mrb[0].mxu0
        %v4094 = vadd.f32 0.0, %v4093
        %v4095 = vpop.f32.mrb[0].mxu0
        %4096 = vmatprep.mubr.f32.mxu0 0.0
        %4097 = vmatmul.mubr.f32.gmra.mrb[0].mxu0 %v2747
        %v4098 = vpop.f32.mrb[0].mxu0
        %v4099 = vadd.f32 0.0, %v4098
        %v4100 = vpop.f32.mrb[0].mxu0
        %4101 = vmatprep.mubr.f32.mxu0 0.0
        %4102 = vmatmul.mubr.f32.gmra.mrb[0].mxu0 %v2750
        %v4103 = vpop.f32.mrb[0].mxu0
        %v4104 = vadd.f32 0.0, %v4103
        %v4105 = vpop.f32.mrb[0].mxu0
        %4106 = vmatprep.mubr.f32.mxu0 0.0
        %4107 = vmatmul.mubr.f32.gmra.mrb[0].mxu0 %v2753
        %v4108 = vpop.f32.mrb[0].mxu0
        %v4109 = vadd.f32 0.0, %v4108
        %v4110 = vpop.f32.mrb[0].mxu0
        %4111 = vmatprep.mubr.f32.mxu0 0.0
        %4112 = vmatmul.mubr.f32.gmra.mrb[0].mxu0 %v2756
        %v4113 = vpop.f32.mrb[0].mxu0
        %v4114 = vadd.f32 0.0, %v4113
        %v4115 = vpop.f32.mrb[0].mxu0
        %4116 = vmatprep.mubr.f32.mxu0 0.0
        %4117 = vmatmul.mubr.f32.gmra.mrb[0].mxu0 %v2759
        %v4118 = vpop.f32.mrb[0].mxu0
        %v4119 = vadd.f32 0.0, %v4118
        %v4120 = vpop.f32.mrb[0].mxu0
        %4121 = vmatprep.mubr.f32.mxu0 0.0
        %4122 = vmatmul.mubr.f32.gmra.mrb[0].mxu0 %v2762
        %v4123 = vpop.f32.mrb[0].mxu0
        %v4124 = vadd.f32 0.0, %v4123
        %v4125 = vpop.f32.mrb[0].mxu0
        %4126 = vmatprep.mubr.f32.mxu0 0.0
        %4127 = vmatmul.mubr.f32.gmra.mrb[0].mxu0 %v2765
        %v4128 = vpop.f32.mrb[0].mxu0
        %v4129 = vadd.f32 0.0, %v4128
        %v4130 = vpop.f32.mrb[0].mxu0
        %4131 = vmatprep.mubr.f32.mxu0 0.0
        %4132 = vmatmul.mubr.f32.gmra.mrb[0].mxu0 %v2768
        %v4133 = vpop.f32.mrb[0].mxu0
        %v4134 = vadd.f32 0.0, %v4133
        %v4135 = vpop.f32.mrb[0].mxu0
        %4136 = vmatprep.mubr.f32.mxu0 0.0
        %4137 = vmatmul.mubr.f32.gmra.mrb[0].mxu0 %v2771
        %v4138 = vpop.f32.mrb[0].mxu0
        %v4139 = vadd.f32 0.0, %v4138
        %v4140 = vpop.f32.mrb[0].mxu0
        %4141 = vmatprep.mubr.f32.mxu0 0.0
        %4142 = vmatmul.mubr.f32.gmra.mrb[0].mxu0 %v2774
        %v4143 = vpop.f32.mrb[0].mxu0
        %v4144 = vadd.f32 0.0, %v4143
        %v4145 = vpop.f32.mrb[0].mxu0
        %4146 = vmatprep.mubr.f32.mxu0 0.0
        %4147 = vmatmul.mubr.f32.gmra.mrb[0].mxu0 %v2777
        %v4148 = vpop.f32.mrb[0].mxu0
        %v4149 = vadd.f32 0.0, %v4148
        %v4150 = vpop.f32.mrb[0].mxu0
        %4151 = vmatprep.mubr.f32.mxu0 0.0
        %4152 = vmatmul.mubr.f32.gmra.mrb[0].mxu0 %v2780
        %v4153 = vpop.f32.mrb[0].mxu0
        %v4154 = vadd.f32 0.0, %v4153
        %v4155 = vpop.f32.mrb[0].mxu0
        %4156 = vmatprep.mubr.f32.mxu0 0.0
        %4157 = vmatmul.mubr.f32.gmra.mrb[0].mxu0 %v2783
        %v4158 = vpop.f32.mrb[0].mxu0
        %v4159 = vadd.f32 0.0, %v4158
        %v4160 = vpop.f32.mrb[0].mxu0
        %4161 = vdwg.mxu0
        %v4162 = vld [vmem:[#allocation7] sm:$0xff]
        %v4163 = vld [vmem:[#allocation7 + $0x8] sm:$0xff]
        %v4164 = vld [vmem:[#allocation7 + $0x10] sm:$0xff]
        %v4165 = vld [vmem:[#allocation7 + $0x18] sm:$0xff]
        %v4166 = vld [vmem:[#allocation7 + $0x20] sm:$0xff]
        %v4167 = vld [vmem:[#allocation7 + $0x28] sm:$0xff]
        %v4168 = vld [vmem:[#allocation7 + $0x30] sm:$0xff]
        %v4169 = vld [vmem:[#allocation7 + $0x38] sm:$0xff]
        %v4170 = vld [vmem:[#allocation7 + $0x40] sm:$0xff]
        %v4171 = vld [vmem:[#allocation7 + $0x48] sm:$0xff]
        %v4172 = vld [vmem:[#allocation7 + $0x50] sm:$0xff]
        %v4173 = vld [vmem:[#allocation7 + $0x58] sm:$0xff]
        %v4174 = vld [vmem:[#allocation7 + $0x60] sm:$0xff]
        %v4175 = vld [vmem:[#allocation7 + $0x68] sm:$0xff]
        %v4176 = vld [vmem:[#allocation7 + $0x70] sm:$0xff]
        %v4177 = vld [vmem:[#allocation7 + $0x78] sm:$0xff]
        %v4178 = vld [vmem:[#allocation7 + $0x80] sm:$0xff]
        %v4179 = vld [vmem:[#allocation7 + $0x88] sm:$0xff]
        %v4180 = vld [vmem:[#allocation7 + $0x90] sm:$0xff]
        %v4181 = vld [vmem:[#allocation7 + $0x98] sm:$0xff]
        %v4182 = vld [vmem:[#allocation7 + $0xa0] sm:$0xff]
        %v4183 = vld [vmem:[#allocation7 + $0xa8] sm:$0xff]
        %v4184 = vld [vmem:[#allocation7 + $0xb0] sm:$0xff]
        %v4185 = vld [vmem:[#allocation7 + $0xb8] sm:$0xff]
        %v4186 = vld [vmem:[#allocation7 + $0xc0] sm:$0xff]
        %v4187 = vld [vmem:[#allocation7 + $0xc8] sm:$0xff]
        %v4188 = vld [vmem:[#allocation7 + $0xd0] sm:$0xff]
        %v4189 = vld [vmem:[#allocation7 + $0xd8] sm:$0xff]
        %v4190 = vld [vmem:[#allocation7 + $0xe0] sm:$0xff]
        %v4191 = vld [vmem:[#allocation7 + $0xe8] sm:$0xff]
        %v4192 = vld [vmem:[#allocation7 + $0xf0] sm:$0xff]
        %v4193 = vld [vmem:[#allocation7 + $0xf8] sm:$0xff]
        %v4194 = vld [vmem:[#allocation7 + $0x100] sm:$0xff]
        %v4195 = vld [vmem:[#allocation7 + $0x108] sm:$0xff]
        %v4196 = vld [vmem:[#allocation7 + $0x110] sm:$0xff]
        %v4197 = vld [vmem:[#allocation7 + $0x118] sm:$0xff]
        %v4198 = vld [vmem:[#allocation7 + $0x120] sm:$0xff]
        %v4199 = vld [vmem:[#allocation7 + $0x128] sm:$0xff]
        %v4200 = vld [vmem:[#allocation7 + $0x130] sm:$0xff]
        %v4201 = vld [vmem:[#allocation7 + $0x138] sm:$0xff]
        %v4202 = vld [vmem:[#allocation7 + $0x140] sm:$0xff]
        %v4203 = vld [vmem:[#allocation7 + $0x148] sm:$0xff]
        %v4204 = vld [vmem:[#allocation7 + $0x150] sm:$0xff]
        %v4205 = vld [vmem:[#allocation7 + $0x158] sm:$0xff]
        %v4206 = vld [vmem:[#allocation7 + $0x160] sm:$0xff]
        %v4207 = vld [vmem:[#allocation7 + $0x168] sm:$0xff]
        %v4208 = vld [vmem:[#allocation7 + $0x170] sm:$0xff]
        %v4209 = vld [vmem:[#allocation7 + $0x178] sm:$0xff]
        %v4210 = vld [vmem:[#allocation7 + $0x180] sm:$0xff]
        %v4211 = vld [vmem:[#allocation7 + $0x188] sm:$0xff]
        %v4212 = vld [vmem:[#allocation7 + $0x190] sm:$0xff]
        %v4213 = vld [vmem:[#allocation7 + $0x198] sm:$0xff]
        %v4214 = vld [vmem:[#allocation7 + $0x1a0] sm:$0xff]
        %v4215 = vld [vmem:[#allocation7 + $0x1a8] sm:$0xff]
        %v4216 = vld [vmem:[#allocation7 + $0x1b0] sm:$0xff]
        %v4217 = vld [vmem:[#allocation7 + $0x1b8] sm:$0xff]
        %v4218 = vld [vmem:[#allocation7 + $0x1c0] sm:$0xff]
        %v4219 = vld [vmem:[#allocation7 + $0x1c8] sm:$0xff]
        %v4220 = vld [vmem:[#allocation7 + $0x1d0] sm:$0xff]
        %v4221 = vld [vmem:[#allocation7 + $0x1d8] sm:$0xff]
        %v4222 = vld [vmem:[#allocation7 + $0x1e0] sm:$0xff]
        %v4223 = vld [vmem:[#allocation7 + $0x1e8] sm:$0xff]
        %v4224 = vld [vmem:[#allocation7 + $0x1f0] sm:$0xff]
        %v4225 = vld [vmem:[#allocation7 + $0x1f8] sm:$0xff]
        %v4226 = vld [vmem:[#allocation7 + $0x200] sm:$0xff]
        %v4227 = vld [vmem:[#allocation7 + $0x208] sm:$0xff]
        %v4228 = vld [vmem:[#allocation7 + $0x210] sm:$0xff]
        %v4229 = vld [vmem:[#allocation7 + $0x218] sm:$0xff]
        %v4230 = vld [vmem:[#allocation7 + $0x220] sm:$0xff]
        %v4231 = vld [vmem:[#allocation7 + $0x228] sm:$0xff]
        %v4232 = vld [vmem:[#allocation7 + $0x230] sm:$0xff]
        %v4233 = vld [vmem:[#allocation7 + $0x238] sm:$0xff]
        %4234 = vmatprep.subr.mxu0 0.0
        %4235 = vmatpush1.msra.mxu0 %v2852
        %4236 = vmatprep.subr.mxu0 0.0
        %4237 = vmatpush1.msra.mxu0 %v2857
        %4238 = vmatprep.subr.mxu0 0.0
        %4239 = vmatpush1.msra.mxu0 %v2862
        %4240 = vmatprep.subr.mxu0 0.0
        %4241 = vmatpush1.msra.mxu0 %v2867
        %4242 = vmatprep.subr.mxu0 0.0
        %4243 = vmatpush1.msra.mxu0 %v2872
        %4244 = vmatprep.subr.mxu0 0.0
        %4245 = vmatpush1.msra.mxu0 %v2877
        %4246 = vmatprep.subr.mxu0 0.0
        %4247 = vmatpush1.msra.mxu0 %v2882
        %4248 = vmatprep.subr.mxu0 0.0
        %4249 = vmatpush1.msra.mxu0 %v2887
        %4250 = vmatprep.subr.mxu0 0.0
        %4251 = vmatpush1.msra.mxu0 %v2892
        %4252 = vmatprep.subr.mxu0 0.0
        %4253 = vmatpush1.msra.mxu0 %v2897
        %4254 = vmatprep.subr.mxu0 0.0
        %4255 = vmatpush1.msra.mxu0 %v2902
        %4256 = vmatprep.subr.mxu0 0.0
        %4257 = vmatpush1.msra.mxu0 %v2907
        %4258 = vmatprep.subr.mxu0 0.0
        %4259 = vmatpush1.msra.mxu0 %v2912
        %4260 = vmatprep.subr.mxu0 0.0
        %4261 = vmatpush1.msra.mxu0 %v2917
        %4262 = vmatprep.subr.mxu0 0.0
        %4263 = vmatpush1.msra.mxu0 %v2922
        %4264 = vmatprep.subr.mxu0 0.0
        %4265 = vmatpush1.msra.mxu0 %v2927
        %4266 = vmatprep.subr.mxu0 0.0
        %4267 = vmatpush1.msra.mxu0 %v3006
        %4268 = vmatprep.subr.mxu0 0.0
        %4269 = vmatpush1.msra.mxu0 %v3011
        %4270 = vmatprep.subr.mxu0 0.0
        %4271 = vmatpush1.msra.mxu0 %v3016
        %4272 = vmatprep.subr.mxu0 0.0
        %4273 = vmatpush1.msra.mxu0 %v3021
        %4274 = vmatprep.subr.mxu0 0.0
        %4275 = vmatpush1.msra.mxu0 %v3026
        %4276 = vmatprep.subr.mxu0 0.0
        %4277 = vmatpush1.msra.mxu0 %v3031
        %4278 = vmatprep.subr.mxu0 0.0
        %4279 = vmatpush1.msra.mxu0 %v3036
        %4280 = vmatprep.subr.mxu0 0.0
        %4281 = vmatpush1.msra.mxu0 %v3041
        %4282 = vmatprep.subr.mxu0 0.0
        %4283 = vmatpush1.msra.mxu0 %v3046
        %4284 = vmatprep.subr.mxu0 0.0
        %4285 = vmatpush1.msra.mxu0 %v3051
        %4286 = vmatprep.subr.mxu0 0.0
        %4287 = vmatpush1.msra.mxu0 %v3056
        %4288 = vmatprep.subr.mxu0 0.0
        %4289 = vmatpush1.msra.mxu0 %v3061
        %4290 = vmatprep.subr.mxu0 0.0
        %4291 = vmatpush1.msra.mxu0 %v3066
        %4292 = vmatprep.subr.mxu0 0.0
        %4293 = vmatpush1.msra.mxu0 %v3071
        %4294 = vmatprep.subr.mxu0 0.0
        %4295 = vmatpush1.msra.mxu0 %v3076
        %4296 = vmatprep.subr.mxu0 0.0
        %4297 = vmatpush1.msra.mxu0 %v3081
        %4298 = vmatprep.mubr.f32.mxu0 %v4163
        %4299 = vmatmul.mubr.f32.gmra.mrb[0].mxu0 %v4162
        %v4300 = vpop.f32.mrb[0].mxu0
        %v4301 = vadd.f32 0.0, %v4300
        %v4302 = vpop.f32.mrb[0].mxu0
        %4303 = vmatprep.mubr.f32.mxu0 %v4172
        %4304 = vmatmul.mubr.f32.gmra.mrb[0].mxu0 %v4171
        %v4305 = vpop.f32.mrb[0].mxu0
        %v4306 = vadd.f32 0.0, %v4305
        %v4307 = vpop.f32.mrb[0].mxu0
        %4308 = vmatprep.mubr.f32.mxu0 %v4181
        %4309 = vmatmul.mubr.f32.gmra.mrb[0].mxu0 %v4180
        %v4310 = vpop.f32.mrb[0].mxu0
        %v4311 = vadd.f32 0.0, %v4310
        %v4312 = vpop.f32.mrb[0].mxu0
        %4313 = vmatprep.mubr.f32.mxu0 %v4190
        %4314 = vmatmul.mubr.f32.gmra.mrb[0].mxu0 %v4189
        %v4315 = vpop.f32.mrb[0].mxu0
        %v4316 = vadd.f32 0.0, %v4315
        %v4317 = vpop.f32.mrb[0].mxu0
        %4318 = vmatprep.mubr.f32.mxu0 %v4199
        %4319 = vmatmul.mubr.f32.gmra.mrb[0].mxu0 %v4198
        %v4320 = vpop.f32.mrb[0].mxu0
        %v4321 = vadd.f32 0.0, %v4320
        %v4322 = vpop.f32.mrb[0].mxu0
        %4323 = vmatprep.mubr.f32.mxu0 %v4208
        %4324 = vmatmul.mubr.f32.gmra.mrb[0].mxu0 %v4207
        %v4325 = vpop.f32.mrb[0].mxu0
        %v4326 = vadd.f32 0.0, %v4325
        %v4327 = vpop.f32.mrb[0].mxu0
        %4328 = vmatprep.mubr.f32.mxu0 %v4217
        %4329 = vmatmul.mubr.f32.gmra.mrb[0].mxu0 %v4216
        %v4330 = vpop.f32.mrb[0].mxu0
        %v4331 = vadd.f32 0.0, %v4330
        %v4332 = vpop.f32.mrb[0].mxu0
        %4333 = vmatprep.mubr.f32.mxu0 %v4226
        %4334 = vmatmul.mubr.f32.gmra.mrb[0].mxu0 %v4225
        %v4335 = vpop.f32.mrb[0].mxu0
        %v4336 = vadd.f32 0.0, %v4335
        %v4337 = vpop.f32.mrb[0].mxu0
        %4338 = vdwg.mxu0
        %4339 = vmatprep.subr.mxu0 0.0
        %4340 = vmatpush1.msra.mxu0 %v3160
        %4341 = vmatprep.subr.mxu0 0.0
        %4342 = vmatpush1.msra.mxu0 %v3165
        %4343 = vmatprep.subr.mxu0 0.0
        %4344 = vmatpush1.msra.mxu0 %v3170
        %4345 = vmatprep.subr.mxu0 0.0
        %4346 = vmatpush1.msra.mxu0 %v3175
        %4347 = vmatprep.subr.mxu0 0.0
        %4348 = vmatpush1.msra.mxu0 %v3180
        %4349 = vmatprep.subr.mxu0 0.0
        %4350 = vmatpush1.msra.mxu0 %v3185
        %4351 = vmatprep.subr.mxu0 0.0
        %4352 = vmatpush1.msra.mxu0 %v3190
        %4353 = vmatprep.subr.mxu0 0.0
        %4354 = vmatpush1.msra.mxu0 %v3195
        %4355 = vmatprep.subr.mxu0 0.0
        %4356 = vmatpush1.msra.mxu0 %v3200
        %4357 = vmatprep.subr.mxu0 0.0
        %4358 = vmatpush1.msra.mxu0 %v3205
        %4359 = vmatprep.subr.mxu0 0.0
        %4360 = vmatpush1.msra.mxu0 %v3210
        %4361 = vmatprep.subr.mxu0 0.0
        %4362 = vmatpush1.msra.mxu0 %v3215
        %4363 = vmatprep.subr.mxu0 0.0
        %4364 = vmatpush1.msra.mxu0 %v3220
        %4365 = vmatprep.subr.mxu0 0.0
        %4366 = vmatpush1.msra.mxu0 %v3225
        %4367 = vmatprep.subr.mxu0 0.0
        %4368 = vmatpush1.msra.mxu0 %v3230
        %4369 = vmatprep.subr.mxu0 0.0
        %4370 = vmatpush1.msra.mxu0 %v3235
        %4371 = vmatprep.subr.mxu0 0.0
        %4372 = vmatpush1.msra.mxu0 %v3314
        %4373 = vmatprep.subr.mxu0 0.0
        %4374 = vmatpush1.msra.mxu0 %v3319
        %4375 = vmatprep.subr.mxu0 0.0
        %4376 = vmatpush1.msra.mxu0 %v3324
        %4377 = vmatprep.subr.mxu0 0.0
        %4378 = vmatpush1.msra.mxu0 %v3329
        %4379 = vmatprep.subr.mxu0 0.0
        %4380 = vmatpush1.msra.mxu0 %v3334
        %4381 = vmatprep.subr.mxu0 0.0
        %4382 = vmatpush1.msra.mxu0 %v3339
        %4383 = vmatprep.subr.mxu0 0.0
        %4384 = vmatpush1.msra.mxu0 %v3344
        %4385 = vmatprep.subr.mxu0 0.0
        %4386 = vmatpush1.msra.mxu0 %v3349
        %4387 = vmatprep.subr.mxu0 0.0
        %4388 = vmatpush1.msra.mxu0 %v3354
        %4389 = vmatprep.subr.mxu0 0.0
        %4390 = vmatpush1.msra.mxu0 %v3359
        %4391 = vmatprep.subr.mxu0 0.0
        %4392 = vmatpush1.msra.mxu0 %v3364
        %4393 = vmatprep.subr.mxu0 0.0
        %4394 = vmatpush1.msra.mxu0 %v3369
        %4395 = vmatprep.subr.mxu0 0.0
        %4396 = vmatpush1.msra.mxu0 %v3374
        %4397 = vmatprep.subr.mxu0 0.0
        %4398 = vmatpush1.msra.mxu0 %v3379
        %4399 = vmatprep.subr.mxu0 0.0
        %4400 = vmatpush1.msra.mxu0 %v3384
        %4401 = vmatprep.subr.mxu0 0.0
        %4402 = vmatpush1.msra.mxu0 %v3389
        %4403 = vmatprep.mubr.f32.mxu0 %v4165
        %4404 = vmatmul.mubr.f32.gmra.mrb[0].mxu0 %v4164
        %v4405 = vpop.f32.mrb[0].mxu0
        %v4406 = vadd.f32 %v4301, %v4405
        %v4407 = vpop.f32.mrb[0].mxu0
        %4408 = vmatprep.mubr.f32.mxu0 %v4174
        %4409 = vmatmul.mubr.f32.gmra.mrb[0].mxu0 %v4173
        %v4410 = vpop.f32.mrb[0].mxu0
        %v4411 = vadd.f32 %v4306, %v4410
        %v4412 = vpop.f32.mrb[0].mxu0
        %4413 = vmatprep.mubr.f32.mxu0 %v4183
        %4414 = vmatmul.mubr.f32.gmra.mrb[0].mxu0 %v4182
        %v4415 = vpop.f32.mrb[0].mxu0
        %v4416 = vadd.f32 %v4311, %v4415
        %v4417 = vpop.f32.mrb[0].mxu0
        %4418 = vmatprep.mubr.f32.mxu0 %v4192
        %4419 = vmatmul.mubr.f32.gmra.mrb[0].mxu0 %v4191
        %v4420 = vpop.f32.mrb[0].mxu0
        %v4421 = vadd.f32 %v4316, %v4420
        %v4422 = vpop.f32.mrb[0].mxu0
        %4423 = vmatprep.mubr.f32.mxu0 %v4201
        %4424 = vmatmul.mubr.f32.gmra.mrb[0].mxu0 %v4200
        %v4425 = vpop.f32.mrb[0].mxu0
        %v4426 = vadd.f32 %v4321, %v4425
        %v4427 = vpop.f32.mrb[0].mxu0
        %4428 = vmatprep.mubr.f32.mxu0 %v4210
        %4429 = vmatmul.mubr.f32.gmra.mrb[0].mxu0 %v4209
        %v4430 = vpop.f32.mrb[0].mxu0
        %v4431 = vadd.f32 %v4326, %v4430
        %v4432 = vpop.f32.mrb[0].mxu0
        %4433 = vmatprep.mubr.f32.mxu0 %v4219
        %4434 = vmatmul.mubr.f32.gmra.mrb[0].mxu0 %v4218
        %v4435 = vpop.f32.mrb[0].mxu0
        %v4436 = vadd.f32 %v4331, %v4435
        %v4437 = vpop.f32.mrb[0].mxu0
        %4438 = vmatprep.mubr.f32.mxu0 %v4228
        %4439 = vmatmul.mubr.f32.gmra.mrb[0].mxu0 %v4227
        %v4440 = vpop.f32.mrb[0].mxu0
        %v4441 = vadd.f32 %v4336, %v4440
        %v4442 = vpop.f32.mrb[0].mxu0
        %4443 = vdwg.mxu0
        %4444 = vmatprep.subr.mxu0 0.0
        %4445 = vmatpush1.msra.mxu0 %v3468
        %4446 = vmatprep.subr.mxu0 0.0
        %4447 = vmatpush1.msra.mxu0 %v3473
        %4448 = vmatprep.subr.mxu0 0.0
        %4449 = vmatpush1.msra.mxu0 %v3478
        %4450 = vmatprep.subr.mxu0 0.0
        %4451 = vmatpush1.msra.mxu0 %v3483
        %4452 = vmatprep.subr.mxu0 0.0
        %4453 = vmatpush1.msra.mxu0 %v3488
        %4454 = vmatprep.subr.mxu0 0.0
        %4455 = vmatpush1.msra.mxu0 %v3493
        %4456 = vmatprep.subr.mxu0 0.0
        %4457 = vmatpush1.msra.mxu0 %v3498
        %4458 = vmatprep.subr.mxu0 0.0
        %4459 = vmatpush1.msra.mxu0 %v3503
        %4460 = vmatprep.subr.mxu0 0.0
        %4461 = vmatpush1.msra.mxu0 %v3508
        %4462 = vmatprep.subr.mxu0 0.0
        %4463 = vmatpush1.msra.mxu0 %v3513
        %4464 = vmatprep.subr.mxu0 0.0
        %4465 = vmatpush1.msra.mxu0 %v3518
        %4466 = vmatprep.subr.mxu0 0.0
        %4467 = vmatpush1.msra.mxu0 %v3523
        %4468 = vmatprep.subr.mxu0 0.0
        %4469 = vmatpush1.msra.mxu0 %v3528
        %4470 = vmatprep.subr.mxu0 0.0
        %4471 = vmatpush1.msra.mxu0 %v3533
        %4472 = vmatprep.subr.mxu0 0.0
        %4473 = vmatpush1.msra.mxu0 %v3538
        %4474 = vmatprep.subr.mxu0 0.0
        %4475 = vmatpush1.msra.mxu0 %v3543
        %4476 = vmatprep.subr.mxu0 0.0
        %4477 = vmatpush1.msra.mxu0 %v3622
        %4478 = vmatprep.subr.mxu0 0.0
        %4479 = vmatpush1.msra.mxu0 %v3627
        %4480 = vmatprep.subr.mxu0 0.0
        %4481 = vmatpush1.msra.mxu0 %v3632
        %4482 = vmatprep.subr.mxu0 0.0
        %4483 = vmatpush1.msra.mxu0 %v3637
        %4484 = vmatprep.subr.mxu0 0.0
        %4485 = vmatpush1.msra.mxu0 %v3642
        %4486 = vmatprep.subr.mxu0 0.0
        %4487 = vmatpush1.msra.mxu0 %v3647
        %4488 = vmatprep.subr.mxu0 0.0
        %4489 = vmatpush1.msra.mxu0 %v3652
        %4490 = vmatprep.subr.mxu0 0.0
        %4491 = vmatpush1.msra.mxu0 %v3657
        %4492 = vmatprep.subr.mxu0 0.0
        %4493 = vmatpush1.msra.mxu0 %v3662
        %4494 = vmatprep.subr.mxu0 0.0
        %4495 = vmatpush1.msra.mxu0 %v3667
        %4496 = vmatprep.subr.mxu0 0.0
        %4497 = vmatpush1.msra.mxu0 %v3672
        %4498 = vmatprep.subr.mxu0 0.0
        %4499 = vmatpush1.msra.mxu0 %v3677
        %4500 = vmatprep.subr.mxu0 0.0
        %4501 = vmatpush1.msra.mxu0 %v3682
        %4502 = vmatprep.subr.mxu0 0.0
        %4503 = vmatpush1.msra.mxu0 %v3687
        %4504 = vmatprep.subr.mxu0 0.0
        %4505 = vmatpush1.msra.mxu0 %v3692
        %4506 = vmatprep.subr.mxu0 0.0
        %4507 = vmatpush1.msra.mxu0 %v3697
        %4508 = vmatprep.mubr.f32.mxu0 %v4167
        %4509 = vmatmul.mubr.f32.gmra.mrb[0].mxu0 %v4166
        %v4510 = vpop.f32.mrb[0].mxu0
        %v4511 = vadd.f32 %v4406, %v4510
        %v4512 = vpop.f32.mrb[0].mxu0
        %4513 = vmatprep.mubr.f32.mxu0 %v4176
        %4514 = vmatmul.mubr.f32.gmra.mrb[0].mxu0 %v4175
        %v4515 = vpop.f32.mrb[0].mxu0
        %v4516 = vadd.f32 %v4411, %v4515
        %v4517 = vpop.f32.mrb[0].mxu0
        %4518 = vmatprep.mubr.f32.mxu0 %v4185
        %4519 = vmatmul.mubr.f32.gmra.mrb[0].mxu0 %v4184
        %v4520 = vpop.f32.mrb[0].mxu0
        %v4521 = vadd.f32 %v4416, %v4520
        %v4522 = vpop.f32.mrb[0].mxu0
        %4523 = vmatprep.mubr.f32.mxu0 %v4194
        %4524 = vmatmul.mubr.f32.gmra.mrb[0].mxu0 %v4193
        %v4525 = vpop.f32.mrb[0].mxu0
        %v4526 = vadd.f32 %v4421, %v4525
        %v4527 = vpop.f32.mrb[0].mxu0
        %4528 = vmatprep.mubr.f32.mxu0 %v4203
        %4529 = vmatmul.mubr.f32.gmra.mrb[0].mxu0 %v4202
        %v4530 = vpop.f32.mrb[0].mxu0
        %v4531 = vadd.f32 %v4426, %v4530
        %v4532 = vpop.f32.mrb[0].mxu0
        %4533 = vmatprep.mubr.f32.mxu0 %v4212
        %4534 = vmatmul.mubr.f32.gmra.mrb[0].mxu0 %v4211
        %v4535 = vpop.f32.mrb[0].mxu0
        %v4536 = vadd.f32 %v4431, %v4535
        %v4537 = vpop.f32.mrb[0].mxu0
        %4538 = vmatprep.mubr.f32.mxu0 %v4221
        %4539 = vmatmul.mubr.f32.gmra.mrb[0].mxu0 %v4220
        %v4540 = vpop.f32.mrb[0].mxu0
        %v4541 = vadd.f32 %v4436, %v4540
        %v4542 = vpop.f32.mrb[0].mxu0
        %4543 = vmatprep.mubr.f32.mxu0 %v4230
        %4544 = vmatmul.mubr.f32.gmra.mrb[0].mxu0 %v4229
        %v4545 = vpop.f32.mrb[0].mxu0
        %v4546 = vadd.f32 %v4441, %v4545
        %v4547 = vpop.f32.mrb[0].mxu0
        %4548 = vdwg.mxu0
        %4549 = vmatprep.subr.mxu0 0.0
        %4550 = vmatpush1.msra.mxu0 %v3776
        %4551 = vmatprep.subr.mxu0 0.0
        %4552 = vmatpush1.msra.mxu0 %v3781
        %4553 = vmatprep.subr.mxu0 0.0
        %4554 = vmatpush1.msra.mxu0 %v3786
        %4555 = vmatprep.subr.mxu0 0.0
        %4556 = vmatpush1.msra.mxu0 %v3791
        %4557 = vmatprep.subr.mxu0 0.0
        %4558 = vmatpush1.msra.mxu0 %v3796
        %4559 = vmatprep.subr.mxu0 0.0
        %4560 = vmatpush1.msra.mxu0 %v3801
        %4561 = vmatprep.subr.mxu0 0.0
        %4562 = vmatpush1.msra.mxu0 %v3806
        %4563 = vmatprep.subr.mxu0 0.0
        %4564 = vmatpush1.msra.mxu0 %v3811
        %4565 = vmatprep.subr.mxu0 0.0
        %4566 = vmatpush1.msra.mxu0 %v3816
        %4567 = vmatprep.subr.mxu0 0.0
        %4568 = vmatpush1.msra.mxu0 %v3821
        %4569 = vmatprep.subr.mxu0 0.0
        %4570 = vmatpush1.msra.mxu0 %v3826
        %4571 = vmatprep.subr.mxu0 0.0
        %4572 = vmatpush1.msra.mxu0 %v3831
        %4573 = vmatprep.subr.mxu0 0.0
        %4574 = vmatpush1.msra.mxu0 %v3836
        %4575 = vmatprep.subr.mxu0 0.0
        %4576 = vmatpush1.msra.mxu0 %v3841
        %4577 = vmatprep.subr.mxu0 0.0
        %4578 = vmatpush1.msra.mxu0 %v3846
        %4579 = vmatprep.subr.mxu0 0.0
        %4580 = vmatpush1.msra.mxu0 %v3851
        %4581 = vmatprep.subr.mxu0 0.0
        %4582 = vmatpush1.msra.mxu0 %v3930
        %4583 = vmatprep.subr.mxu0 0.0
        %4584 = vmatpush1.msra.mxu0 %v3935
        %4585 = vmatprep.subr.mxu0 0.0
        %4586 = vmatpush1.msra.mxu0 %v3940
        %4587 = vmatprep.subr.mxu0 0.0
        %4588 = vmatpush1.msra.mxu0 %v3945
        %4589 = vmatprep.subr.mxu0 0.0
        %4590 = vmatpush1.msra.mxu0 %v3950
        %4591 = vmatprep.subr.mxu0 0.0
        %4592 = vmatpush1.msra.mxu0 %v3955
        %4593 = vmatprep.subr.mxu0 0.0
        %4594 = vmatpush1.msra.mxu0 %v3960
        %4595 = vmatprep.subr.mxu0 0.0
        %4596 = vmatpush1.msra.mxu0 %v3965
        %4597 = vmatprep.subr.mxu0 0.0
        %4598 = vmatpush1.msra.mxu0 %v3970
        %4599 = vmatprep.subr.mxu0 0.0
        %4600 = vmatpush1.msra.mxu0 %v3975
        %4601 = vmatprep.subr.mxu0 0.0
        %4602 = vmatpush1.msra.mxu0 %v3980
        %4603 = vmatprep.subr.mxu0 0.0
        %4604 = vmatpush1.msra.mxu0 %v3985
        %4605 = vmatprep.subr.mxu0 0.0
        %4606 = vmatpush1.msra.mxu0 %v3990
        %4607 = vmatprep.subr.mxu0 0.0
        %4608 = vmatpush1.msra.mxu0 %v3995
        %4609 = vmatprep.subr.mxu0 0.0
        %4610 = vmatpush1.msra.mxu0 %v4000
        %4611 = vmatprep.subr.mxu0 0.0
        %4612 = vmatpush1.msra.mxu0 %v4005
        %4613 = vmatprep.mubr.f32.mxu0 %v4169
        %4614 = vmatmul.mubr.f32.gmra.mrb[0].mxu0 %v4168
        %v4615 = vpop.f32.mrb[0].mxu0
        %v4616 = vadd.f32 %v4511, %v4615
        %v4617 = vpop.f32.mrb[0].mxu0
        %4618 = vmatprep.mubr.f32.mxu0 %v4178
        %4619 = vmatmul.mubr.f32.gmra.mrb[0].mxu0 %v4177
        %v4620 = vpop.f32.mrb[0].mxu0
        %v4621 = vadd.f32 %v4516, %v4620
        %v4622 = vpop.f32.mrb[0].mxu0
        %4623 = vmatprep.mubr.f32.mxu0 %v4187
        %4624 = vmatmul.mubr.f32.gmra.mrb[0].mxu0 %v4186
        %v4625 = vpop.f32.mrb[0].mxu0
        %v4626 = vadd.f32 %v4521, %v4625
        %v4627 = vpop.f32.mrb[0].mxu0
        %4628 = vmatprep.mubr.f32.mxu0 %v4196
        %4629 = vmatmul.mubr.f32.gmra.mrb[0].mxu0 %v4195
        %v4630 = vpop.f32.mrb[0].mxu0
        %v4631 = vadd.f32 %v4526, %v4630
        %v4632 = vpop.f32.mrb[0].mxu0
        %4633 = vmatprep.mubr.f32.mxu0 %v4205
        %4634 = vmatmul.mubr.f32.gmra.mrb[0].mxu0 %v4204
        %v4635 = vpop.f32.mrb[0].mxu0
        %v4636 = vadd.f32 %v4531, %v4635
        %v4637 = vpop.f32.mrb[0].mxu0
        %4638 = vmatprep.mubr.f32.mxu0 %v4214
        %4639 = vmatmul.mubr.f32.gmra.mrb[0].mxu0 %v4213
        %v4640 = vpop.f32.mrb[0].mxu0
        %v4641 = vadd.f32 %v4536, %v4640
        %v4642 = vpop.f32.mrb[0].mxu0
        %4643 = vmatprep.mubr.f32.mxu0 %v4223
        %4644 = vmatmul.mubr.f32.gmra.mrb[0].mxu0 %v4222
        %v4645 = vpop.f32.mrb[0].mxu0
        %v4646 = vadd.f32 %v4541, %v4645
        %v4647 = vpop.f32.mrb[0].mxu0
        %4648 = vmatprep.mubr.f32.mxu0 %v4232
        %4649 = vmatmul.mubr.f32.gmra.mrb[0].mxu0 %v4231
        %v4650 = vpop.f32.mrb[0].mxu0
        %v4651 = vadd.f32 %v4546, %v4650
        %v4652 = vpop.f32.mrb[0].mxu0
        %4653 = vdwg.mxu0
        %4654 = vmatprep.subr.mxu0 0.0
        %4655 = vmatpush1.msra.mxu0 %v4084
        %4656 = vmatprep.subr.mxu0 0.0
        %4657 = vmatpush1.msra.mxu0 %v4089
        %4658 = vmatprep.subr.mxu0 0.0
        %4659 = vmatpush1.msra.mxu0 %v4094
        %4660 = vmatprep.subr.mxu0 0.0
        %4661 = vmatpush1.msra.mxu0 %v4099
        %4662 = vmatprep.subr.mxu0 0.0
        %4663 = vmatpush1.msra.mxu0 %v4104
        %4664 = vmatprep.subr.mxu0 0.0
        %4665 = vmatpush1.msra.mxu0 %v4109
        %4666 = vmatprep.subr.mxu0 0.0
        %4667 = vmatpush1.msra.mxu0 %v4114
        %4668 = vmatprep.subr.mxu0 0.0
        %4669 = vmatpush1.msra.mxu0 %v4119
        %4670 = vmatprep.subr.mxu0 0.0
        %4671 = vmatpush1.msra.mxu0 %v4124
        %4672 = vmatprep.subr.mxu0 0.0
        %4673 = vmatpush1.msra.mxu0 %v4129
        %4674 = vmatprep.subr.mxu0 0.0
        %4675 = vmatpush1.msra.mxu0 %v4134
        %4676 = vmatprep.subr.mxu0 0.0
        %4677 = vmatpush1.msra.mxu0 %v4139
        %4678 = vmatprep.subr.mxu0 0.0
        %4679 = vmatpush1.msra.mxu0 %v4144
        %4680 = vmatprep.subr.mxu0 0.0
        %4681 = vmatpush1.msra.mxu0 %v4149
        %4682 = vmatprep.subr.mxu0 0.0
        %4683 = vmatpush1.msra.mxu0 %v4154
        %4684 = vmatprep.subr.mxu0 0.0
        %4685 = vmatpush1.msra.mxu0 %v4159
        %4686 = vmatprep.subr.mxu0 0.0
        %4687 = vmatpush1.msra.mxu0 0.0
        %4688 = vmatprep.subr.mxu0 0.0
        %4689 = vmatpush1.msra.mxu0 0.0
        %4690 = vmatprep.subr.mxu0 0.0
        %4691 = vmatpush1.msra.mxu0 0.0
        %4692 = vmatprep.subr.mxu0 0.0
        %4693 = vmatpush1.msra.mxu0 0.0
        %4694 = vmatprep.subr.mxu0 0.0
        %4695 = vmatpush1.msra.mxu0 0.0
        %4696 = vmatprep.subr.mxu0 0.0
        %4697 = vmatpush1.msra.mxu0 0.0
        %4698 = vmatprep.subr.mxu0 0.0
        %4699 = vmatpush1.msra.mxu0 0.0
        %4700 = vmatprep.subr.mxu0 0.0
        %4701 = vmatpush1.msra.mxu0 0.0
        %4702 = vmatprep.subr.mxu0 0.0
        %4703 = vmatpush1.msra.mxu0 0.0
        %4704 = vmatprep.subr.mxu0 0.0
        %4705 = vmatpush1.msra.mxu0 0.0
        %4706 = vmatprep.subr.mxu0 0.0
        %4707 = vmatpush1.msra.mxu0 0.0
        %4708 = vmatprep.subr.mxu0 0.0
        %4709 = vmatpush1.msra.mxu0 0.0
        %4710 = vmatprep.subr.mxu0 0.0
        %4711 = vmatpush1.msra.mxu0 0.0
        %4712 = vmatprep.subr.mxu0 0.0
        %4713 = vmatpush1.msra.mxu0 0.0
        %4714 = vmatprep.subr.mxu0 0.0
        %4715 = vmatpush1.msra.mxu0 0.0
        %4716 = vmatprep.subr.mxu0 0.0
        %4717 = vmatpush1.msra.mxu0 0.0
        %4718 = vmatprep.mubr.f32.mxu0 0.0
        %4719 = vmatmul.mubr.f32.gmra.mrb[0].mxu0 %v4170
        %v4720 = vpop.f32.mrb[0].mxu0
        %v4721 = vadd.f32 %v4616, %v4720
        %v4722 = vpop.f32.mrb[0].mxu0
        %4723 = vmatprep.mubr.f32.mxu0 0.0
        %4724 = vmatmul.mubr.f32.gmra.mrb[0].mxu0 %v4179
        %v4725 = vpop.f32.mrb[0].mxu0
        %v4726 = vadd.f32 %v4621, %v4725
        %v4727 = vpop.f32.mrb[0].mxu0
        %4728 = vmatprep.mubr.f32.mxu0 0.0
        %4729 = vmatmul.mubr.f32.gmra.mrb[0].mxu0 %v4188
        %v4730 = vpop.f32.mrb[0].mxu0
        %v4731 = vadd.f32 %v4626, %v4730
        %v4732 = vpop.f32.mrb[0].mxu0
        %4733 = vmatprep.mubr.f32.mxu0 0.0
        %4734 = vmatmul.mubr.f32.gmra.mrb[0].mxu0 %v4197
        %v4735 = vpop.f32.mrb[0].mxu0
        %v4736 = vadd.f32 %v4631, %v4735
        %v4737 = vpop.f32.mrb[0].mxu0
        %4738 = vmatprep.mubr.f32.mxu0 0.0
        %4739 = vmatmul.mubr.f32.gmra.mrb[0].mxu0 %v4206
        %v4740 = vpop.f32.mrb[0].mxu0
        %v4741 = vadd.f32 %v4636, %v4740
        %v4742 = vpop.f32.mrb[0].mxu0
        %4743 = vmatprep.mubr.f32.mxu0 0.0
        %4744 = vmatmul.mubr.f32.gmra.mrb[0].mxu0 %v4215
        %v4745 = vpop.f32.mrb[0].mxu0
        %v4746 = vadd.f32 %v4641, %v4745
        %v4747 = vpop.f32.mrb[0].mxu0
        %4748 = vmatprep.mubr.f32.mxu0 0.0
        %4749 = vmatmul.mubr.f32.gmra.mrb[0].mxu0 %v4224
        %v4750 = vpop.f32.mrb[0].mxu0
        %v4751 = vadd.f32 %v4646, %v4750
        %v4752 = vpop.f32.mrb[0].mxu0
        %4753 = vmatprep.mubr.f32.mxu0 0.0
        %4754 = vmatmul.mubr.f32.gmra.mrb[0].mxu0 %v4233
        %v4755 = vpop.f32.mrb[0].mxu0
        %v4756 = vadd.f32 %v4651, %v4755
        %v4757 = vpop.f32.mrb[0].mxu0
        %4758 = vdwg.mxu0
        %v4759 = vld [vmem:[%s7] sm:$0xff]
        %v4760 = vld [vmem:[%s7 + $0x8] sm:$0xff]
        %v4761 = vld [vmem:[%s7 + $0x10] sm:$0xff]
        %v4762 = vld [vmem:[%s7 + $0x18] sm:$0xff]
        %v4763 = vld [vmem:[%s7 + $0x20] sm:$0xff]
        %v4764 = vld [vmem:[%s7 + $0x28] sm:$0xff]
        %v4765 = vld [vmem:[%s7 + $0x30] sm:$0xff]
        %v4766 = vld [vmem:[%s7 + $0x38] sm:$0xff]
        %4768 = vset.pattern.permute.xlu0 0
        %4769 = vperm.xlu0 %4768, %v4759
        %v4770 = vpop.permute.xlu0 %4769
        %4773 = vset.pattern.permute.xlu0 0
        %4774 = vperm.xlu0 %4773, %v4760
        %v4775 = vpop.permute.xlu0 %4774
        %4778 = vset.pattern.permute.xlu0 0
        %4779 = vperm.xlu0 %4778, %v4761
        %v4780 = vpop.permute.xlu0 %4779
        %4783 = vset.pattern.permute.xlu0 0
        %4784 = vperm.xlu0 %4783, %v4762
        %v4785 = vpop.permute.xlu0 %4784
        %4788 = vset.pattern.permute.xlu0 0
        %4789 = vperm.xlu0 %4788, %v4763
        %v4790 = vpop.permute.xlu0 %4789
        %4793 = vset.pattern.permute.xlu0 0
        %4794 = vperm.xlu0 %4793, %v4764
        %v4795 = vpop.permute.xlu0 %4794
        %4798 = vset.pattern.permute.xlu0 0
        %4799 = vperm.xlu0 %4798, %v4765
        %v4800 = vpop.permute.xlu0 %4799
        %4803 = vset.pattern.permute.xlu0 0
        %4804 = vperm.xlu0 %4803, %v4766
        %v4805 = vpop.permute.xlu0 %4804
        %v4807 = vmul.f32 %v4721, %v4770
        %v4808 = vmul.f32 %v4726, %v4775
        %v4809 = vmul.f32 %v4731, %v4780
        %v4810 = vmul.f32 %v4736, %v4785
        %v4811 = vmul.f32 %v4741, %v4790
        %v4812 = vmul.f32 %v4746, %v4795
        %v4813 = vmul.f32 %v4751, %v4800
        %v4814 = vmul.f32 %v4756, %v4805
        %s4815 = scalar_lea.vmem %s7, 64
        %v4816 = vld [vmem:[%s4815] sm:$0xff]
        %v4817 = vld [vmem:[%s4815 + $0x8] sm:$0xff]
        %v4818 = vld [vmem:[%s4815 + $0x10] sm:$0xff]
        %v4819 = vld [vmem:[%s4815 + $0x18] sm:$0xff]
        %v4820 = vld [vmem:[%s4815 + $0x20] sm:$0xff]
        %v4821 = vld [vmem:[%s4815 + $0x28] sm:$0xff]
        %v4822 = vld [vmem:[%s4815 + $0x30] sm:$0xff]
        %v4823 = vld [vmem:[%s4815 + $0x38] sm:$0xff]
        %4825 = vset.pattern.permute.xlu0 0
        %4826 = vperm.xlu0 %4825, %v4816
        %v4827 = vpop.permute.xlu0 %4826
        %4830 = vset.pattern.permute.xlu0 0
        %4831 = vperm.xlu0 %4830, %v4817
        %v4832 = vpop.permute.xlu0 %4831
        %4835 = vset.pattern.permute.xlu0 0
        %4836 = vperm.xlu0 %4835, %v4818
        %v4837 = vpop.permute.xlu0 %4836
        %4840 = vset.pattern.permute.xlu0 0
        %4841 = vperm.xlu0 %4840, %v4819
        %v4842 = vpop.permute.xlu0 %4841
        %4845 = vset.pattern.permute.xlu0 0
        %4846 = vperm.xlu0 %4845, %v4820
        %v4847 = vpop.permute.xlu0 %4846
        %4850 = vset.pattern.permute.xlu0 0
        %4851 = vperm.xlu0 %4850, %v4821
        %v4852 = vpop.permute.xlu0 %4851
        %4855 = vset.pattern.permute.xlu0 0
        %4856 = vperm.xlu0 %4855, %v4822
        %v4857 = vpop.permute.xlu0 %4856
        %4860 = vset.pattern.permute.xlu0 0
        %4861 = vperm.xlu0 %4860, %v4823
        %v4862 = vpop.permute.xlu0 %4861
        %v4864 = vadd.f32 %v4807, %v4827
        %v4865 = vadd.f32 %v4808, %v4832
        %v4866 = vadd.f32 %v4809, %v4837
        %v4867 = vadd.f32 %v4810, %v4842
        %v4868 = vadd.f32 %v4811, %v4847
        %v4869 = vadd.f32 %v4812, %v4852
        %v4870 = vadd.f32 %v4813, %v4857
        %v4871 = vadd.f32 %v4814, %v4862
        %v4872 = vmax.f32 %v4864, 0.0
        %v4873 = vmax.f32 %v4865, 0.0
        %v4874 = vmax.f32 %v4866, 0.0
        %v4875 = vmax.f32 %v4867, 0.0
        %v4876 = vmax.f32 %v4868, 0.0
        %v4877 = vmax.f32 %v4869, 0.0
        %v4878 = vmax.f32 %v4870, 0.0
        %v4879 = vmax.f32 %v4871, 0.0
        %v4880 = vld [vmem:[#allocation9] sm:$0xff]
        %v4881 = vld [vmem:[#allocation9 + $0x8] sm:$0xff]
        %v4882 = vld [vmem:[#allocation9 + $0x10] sm:$0xff]
        %v4883 = vld [vmem:[#allocation9 + $0x18] sm:$0xff]
        %v4884 = vld [vmem:[#allocation9 + $0x20] sm:$0xff]
        %v4885 = vld [vmem:[#allocation9 + $0x28] sm:$0xff]
        %v4886 = vld [vmem:[#allocation9 + $0x30] sm:$0xff]
        %v4887 = vld [vmem:[#allocation9 + $0x38] sm:$0xff]
        %v4888 = vld [vmem:[#allocation9 + $0x40] sm:$0xff]
        %v4889 = vld [vmem:[#allocation9 + $0x48] sm:$0xff]
        %v4890 = vld [vmem:[#allocation9 + $0x50] sm:$0xff]
        %v4891 = vld [vmem:[#allocation9 + $0x58] sm:$0xff]
        %v4892 = vld [vmem:[#allocation9 + $0x60] sm:$0xff]
        %v4893 = vld [vmem:[#allocation9 + $0x68] sm:$0xff]
        %v4894 = vld [vmem:[#allocation9 + $0x70] sm:$0xff]
        %v4895 = vld [vmem:[#allocation9 + $0x78] sm:$0xff]
        %v4897 = vsel %vm2220, %v4872, 0
        %v4900 = vsel %vm2220, %v4873, 0
        %v4903 = vsel %vm2220, %v4874, 0
        %v4906 = vsel %vm2220, %v4875, 0
        %v4909 = vsel %vm2220, %v4876, 0
        %v4912 = vsel %vm2220, %v4877, 0
        %v4915 = vsel %vm2220, %v4878, 0
        %v4918 = vsel %vm2220, %v4879, 0
        %4920 = vmatprep.subr.mxu0 %v4881
        %4921 = vmatpush1.msra.mxu0 %v4880
        %4922 = vmatprep.subr.mxu0 %v4883
        %4923 = vmatpush1.msra.mxu0 %v4882
        %4924 = vmatprep.subr.mxu0 %v4885
        %4925 = vmatpush1.msra.mxu0 %v4884
        %4926 = vmatprep.subr.mxu0 %v4887
        %4927 = vmatpush1.msra.mxu0 %v4886
        %4928 = vmatprep.subr.mxu0 %v4889
        %4929 = vmatpush1.msra.mxu0 %v4888
        %4930 = vmatprep.subr.mxu0 %v4891
        %4931 = vmatpush1.msra.mxu0 %v4890
        %4932 = vmatprep.subr.mxu0 %v4893
        %4933 = vmatpush1.msra.mxu0 %v4892
        %4934 = vmatprep.subr.mxu0 %v4895
        %4935 = vmatpush1.msra.mxu0 %v4894
        %4936 = vmatprep.subr.mxu0 0.0
        %4937 = vmatpush1.msra.mxu0 0.0
        %4938 = vmatprep.subr.mxu0 0.0
        %4939 = vmatpush1.msra.mxu0 0.0
        %4940 = vmatprep.subr.mxu0 0.0
        %4941 = vmatpush1.msra.mxu0 0.0
        %4942 = vmatprep.subr.mxu0 0.0
        %4943 = vmatpush1.msra.mxu0 0.0
        %4944 = vmatprep.subr.mxu0 0.0
        %4945 = vmatpush1.msra.mxu0 0.0
        %4946 = vmatprep.subr.mxu0 0.0
        %4947 = vmatpush1.msra.mxu0 0.0
        %4948 = vmatprep.subr.mxu0 0.0
        %4949 = vmatpush1.msra.mxu0 0.0
        %4950 = vmatprep.subr.mxu0 0.0
        %4951 = vmatpush1.msra.mxu0 0.0
        %4952 = vmatprep.subr.mxu0 0.0
        %4953 = vmatpush1.msra.mxu0 0.0
        %4954 = vmatprep.subr.mxu0 0.0
        %4955 = vmatpush1.msra.mxu0 0.0
        %4956 = vmatprep.subr.mxu0 0.0
        %4957 = vmatpush1.msra.mxu0 0.0
        %4958 = vmatprep.subr.mxu0 0.0
        %4959 = vmatpush1.msra.mxu0 0.0
        %4960 = vmatprep.subr.mxu0 0.0
        %4961 = vmatpush1.msra.mxu0 0.0
        %4962 = vmatprep.subr.mxu0 0.0
        %4963 = vmatpush1.msra.mxu0 0.0
        %4964 = vmatprep.subr.mxu0 0.0
        %4965 = vmatpush1.msra.mxu0 0.0
        %4966 = vmatprep.subr.mxu0 0.0
        %4967 = vmatpush1.msra.mxu0 0.0
        %4968 = vmatprep.subr.mxu0 0.0
        %4969 = vmatpush1.msra.mxu0 0.0
        %4970 = vmatprep.subr.mxu0 0.0
        %4971 = vmatpush1.msra.mxu0 0.0
        %4972 = vmatprep.subr.mxu0 0.0
        %4973 = vmatpush1.msra.mxu0 0.0
        %4974 = vmatprep.subr.mxu0 0.0
        %4975 = vmatpush1.msra.mxu0 0.0
        %4976 = vmatprep.subr.mxu0 0.0
        %4977 = vmatpush1.msra.mxu0 0.0
        %4978 = vmatprep.subr.mxu0 0.0
        %4979 = vmatpush1.msra.mxu0 0.0
        %4980 = vmatprep.subr.mxu0 0.0
        %4981 = vmatpush1.msra.mxu0 0.0
        %4982 = vmatprep.subr.mxu0 0.0
        %4983 = vmatpush1.msra.mxu0 0.0
        %4984 = vmatprep.mubr.f32.mxu0 0.0
        %4985 = vmatmul.mubr.f32.gmra.mrb[0].mxu0 %v4897
        %v4986 = vpop.f32.mrb[0].mxu0
        %v4987 = vadd.f32 0.0, %v4986
        %v4988 = vpop.f32.mrb[0].mxu0
        %v4989 = vadd.f32 0.0, %v4988
        %4990 = vmatprep.mubr.f32.mxu0 0.0
        %4991 = vmatmul.mubr.f32.gmra.mrb[0].mxu0 %v4900
        %v4992 = vpop.f32.mrb[0].mxu0
        %v4993 = vadd.f32 0.0, %v4992
        %v4994 = vpop.f32.mrb[0].mxu0
        %v4995 = vadd.f32 0.0, %v4994
        %4996 = vmatprep.mubr.f32.mxu0 0.0
        %4997 = vmatmul.mubr.f32.gmra.mrb[0].mxu0 %v4903
        %v4998 = vpop.f32.mrb[0].mxu0
        %v4999 = vadd.f32 0.0, %v4998
        %v5000 = vpop.f32.mrb[0].mxu0
        %v5001 = vadd.f32 0.0, %v5000
        %5002 = vmatprep.mubr.f32.mxu0 0.0
        %5003 = vmatmul.mubr.f32.gmra.mrb[0].mxu0 %v4906
        %v5004 = vpop.f32.mrb[0].mxu0
        %v5005 = vadd.f32 0.0, %v5004
        %v5006 = vpop.f32.mrb[0].mxu0
        %v5007 = vadd.f32 0.0, %v5006
        %5008 = vmatprep.mubr.f32.mxu0 0.0
        %5009 = vmatmul.mubr.f32.gmra.mrb[0].mxu0 %v4909
        %v5010 = vpop.f32.mrb[0].mxu0
        %v5011 = vadd.f32 0.0, %v5010
        %v5012 = vpop.f32.mrb[0].mxu0
        %v5013 = vadd.f32 0.0, %v5012
        %5014 = vmatprep.mubr.f32.mxu0 0.0
        %5015 = vmatmul.mubr.f32.gmra.mrb[0].mxu0 %v4912
        %v5016 = vpop.f32.mrb[0].mxu0
        %v5017 = vadd.f32 0.0, %v5016
        %v5018 = vpop.f32.mrb[0].mxu0
        %v5019 = vadd.f32 0.0, %v5018
        %5020 = vmatprep.mubr.f32.mxu0 0.0
        %5021 = vmatmul.mubr.f32.gmra.mrb[0].mxu0 %v4915
        %v5022 = vpop.f32.mrb[0].mxu0
        %v5023 = vadd.f32 0.0, %v5022
        %v5024 = vpop.f32.mrb[0].mxu0
        %v5025 = vadd.f32 0.0, %v5024
        %5026 = vmatprep.mubr.f32.mxu0 0.0
        %5027 = vmatmul.mubr.f32.gmra.mrb[0].mxu0 %v4918
        %v5028 = vpop.f32.mrb[0].mxu0
        %v5029 = vadd.f32 0.0, %v5028
        %v5030 = vpop.f32.mrb[0].mxu0
        %v5031 = vadd.f32 0.0, %v5030
        %5032 = vdwg.mxu0
        %v5033 = vadd.f32 %v2713, %v4987
        %v5034 = vadd.f32 %v2714, %v4989
        %v5035 = vadd.f32 %v2715, %v4993
        %v5036 = vadd.f32 %v2716, %v4995
        %v5037 = vadd.f32 %v2717, %v4999
        %v5038 = vadd.f32 %v2718, %v5001
        %v5039 = vadd.f32 %v2719, %v5005
        %v5040 = vadd.f32 %v2720, %v5007
        %v5041 = vadd.f32 %v2721, %v5011
        %v5042 = vadd.f32 %v2722, %v5013
        %v5043 = vadd.f32 %v2723, %v5017
        %v5044 = vadd.f32 %v2724, %v5019
        %v5045 = vadd.f32 %v2725, %v5023
        %v5046 = vadd.f32 %v2726, %v5025
        %v5047 = vadd.f32 %v2727, %v5029
        %v5048 = vadd.f32 %v2728, %v5031
        %v5049 = vld [vmem:[%s9] sm:$0xff]
        %v5050 = vld [vmem:[%s9 + $0x8] sm:$0xff]
        %v5051 = vld [vmem:[%s9 + $0x10] sm:$0xff]
        %v5052 = vld [vmem:[%s9 + $0x18] sm:$0xff]
        %v5053 = vld [vmem:[%s9 + $0x20] sm:$0xff]
        %v5054 = vld [vmem:[%s9 + $0x28] sm:$0xff]
        %v5055 = vld [vmem:[%s9 + $0x30] sm:$0xff]
        %v5056 = vld [vmem:[%s9 + $0x38] sm:$0xff]
        %5057 = vmatprep.subr.mxu0 %v580
        %5058 = vmatpush1.msra.mxu0 %v579
        %5059 = vmatprep.subr.mxu0 %v582
        %5060 = vmatpush1.msra.mxu0 %v581
        %5061 = vmatprep.subr.mxu0 %v584
        %5062 = vmatpush1.msra.mxu0 %v583
        %5063 = vmatprep.subr.mxu0 %v586
        %5064 = vmatpush1.msra.mxu0 %v585
        %5065 = vmatprep.subr.mxu0 %v588
        %5066 = vmatpush1.msra.mxu0 %v587
        %5067 = vmatprep.subr.mxu0 %v590
        %5068 = vmatpush1.msra.mxu0 %v589
        %5069 = vmatprep.subr.mxu0 %v592
        %5070 = vmatpush1.msra.mxu0 %v591
        %5071 = vmatprep.subr.mxu0 %v594
        %5072 = vmatpush1.msra.mxu0 %v593
        %5073 = vmatprep.subr.mxu0 %v596
        %5074 = vmatpush1.msra.mxu0 %v595
        %5075 = vmatprep.subr.mxu0 %v598
        %5076 = vmatpush1.msra.mxu0 %v597
        %5077 = vmatprep.subr.mxu0 %v600
        %5078 = vmatpush1.msra.mxu0 %v599
        %5079 = vmatprep.subr.mxu0 %v602
        %5080 = vmatpush1.msra.mxu0 %v601
        %5081 = vmatprep.subr.mxu0 %v604
        %5082 = vmatpush1.msra.mxu0 %v603
        %5083 = vmatprep.subr.mxu0 %v606
        %5084 = vmatpush1.msra.mxu0 %v605
        %5085 = vmatprep.subr.mxu0 %v608
        %5086 = vmatpush1.msra.mxu0 %v607
        %5087 = vmatprep.subr.mxu0 %v610
        %5088 = vmatpush1.msra.mxu0 %v609
        %5089 = vmatprep.subr.mxu0 %v612
        %5090 = vmatpush1.msra.mxu0 %v611
        %5091 = vmatprep.subr.mxu0 %v614
        %5092 = vmatpush1.msra.mxu0 %v613
        %5093 = vmatprep.subr.mxu0 %v616
        %5094 = vmatpush1.msra.mxu0 %v615
        %5095 = vmatprep.subr.mxu0 %v618
        %5096 = vmatpush1.msra.mxu0 %v617
        %5097 = vmatprep.subr.mxu0 %v620
        %5098 = vmatpush1.msra.mxu0 %v619
        %5099 = vmatprep.subr.mxu0 %v622
        %5100 = vmatpush1.msra.mxu0 %v621
        %5101 = vmatprep.subr.mxu0 %v624
        %5102 = vmatpush1.msra.mxu0 %v623
        %5103 = vmatprep.subr.mxu0 %v626
        %5104 = vmatpush1.msra.mxu0 %v625
        %5105 = vmatprep.subr.mxu0 %v628
        %5106 = vmatpush1.msra.mxu0 %v627
        %5107 = vmatprep.subr.mxu0 %v630
        %5108 = vmatpush1.msra.mxu0 %v629
        %5109 = vmatprep.subr.mxu0 %v632
        %5110 = vmatpush1.msra.mxu0 %v631
        %5111 = vmatprep.subr.mxu0 %v634
        %5112 = vmatpush1.msra.mxu0 %v633
        %5113 = vmatprep.subr.mxu0 %v636
        %5114 = vmatpush1.msra.mxu0 %v635
        %5115 = vmatprep.subr.mxu0 %v638
        %5116 = vmatpush1.msra.mxu0 %v637
        %5117 = vmatprep.subr.mxu0 %v640
        %5118 = vmatpush1.msra.mxu0 %v639
        %5119 = vmatprep.subr.mxu0 %v642
        %5120 = vmatpush1.msra.mxu0 %v641
        %5121 = vmatprep.mubr.f32.mxu0 %v5034
        %5122 = vmatmul.mubr.f32.gmra.mrb[0].mxu0 %v5033
        %v5123 = vpop.f32.mrb[0].mxu0
        %v5124 = vadd.f32 0.0, %v5123
        %v5125 = vpop.f32.mrb[0].mxu0
        %v5126 = vadd.f32 0.0, %v5125
        %5127 = vmatprep.mubr.f32.mxu0 %v5036
        %5128 = vmatmul.mubr.f32.gmra.mrb[0].mxu0 %v5035
        %v5129 = vpop.f32.mrb[0].mxu0
        %v5130 = vadd.f32 0.0, %v5129
        %v5131 = vpop.f32.mrb[0].mxu0
        %v5132 = vadd.f32 0.0, %v5131
        %5133 = vmatprep.mubr.f32.mxu0 %v5038
        %5134 = vmatmul.mubr.f32.gmra.mrb[0].mxu0 %v5037
        %v5135 = vpop.f32.mrb[0].mxu0
        %v5136 = vadd.f32 0.0, %v5135
        %v5137 = vpop.f32.mrb[0].mxu0
        %v5138 = vadd.f32 0.0, %v5137
        %5139 = vmatprep.mubr.f32.mxu0 %v5040
        %5140 = vmatmul.mubr.f32.gmra.mrb[0].mxu0 %v5039
        %v5141 = vpop.f32.mrb[0].mxu0
        %v5142 = vadd.f32 0.0, %v5141
        %v5143 = vpop.f32.mrb[0].mxu0
        %v5144 = vadd.f32 0.0, %v5143
        %5145 = vmatprep.mubr.f32.mxu0 %v5042
        %5146 = vmatmul.mubr.f32.gmra.mrb[0].mxu0 %v5041
        %v5147 = vpop.f32.mrb[0].mxu0
        %v5148 = vadd.f32 0.0, %v5147
        %v5149 = vpop.f32.mrb[0].mxu0
        %v5150 = vadd.f32 0.0, %v5149
        %5151 = vmatprep.mubr.f32.mxu0 %v5044
        %5152 = vmatmul.mubr.f32.gmra.mrb[0].mxu0 %v5043
        %v5153 = vpop.f32.mrb[0].mxu0
        %v5154 = vadd.f32 0.0, %v5153
        %v5155 = vpop.f32.mrb[0].mxu0
        %v5156 = vadd.f32 0.0, %v5155
        %5157 = vmatprep.mubr.f32.mxu0 %v5046
        %5158 = vmatmul.mubr.f32.gmra.mrb[0].mxu0 %v5045
        %v5159 = vpop.f32.mrb[0].mxu0
        %v5160 = vadd.f32 0.0, %v5159
        %v5161 = vpop.f32.mrb[0].mxu0
        %v5162 = vadd.f32 0.0, %v5161
        %5163 = vmatprep.mubr.f32.mxu0 %v5048
        %5164 = vmatmul.mubr.f32.gmra.mrb[0].mxu0 %v5047
        %v5165 = vpop.f32.mrb[0].mxu0
        %v5166 = vadd.f32 0.0, %v5165
        %v5167 = vpop.f32.mrb[0].mxu0
        %v5168 = vadd.f32 0.0, %v5167
        %5169 = vdwg.mxu0
        %5171 = vset.pattern.permute.xlu0 0
        %5172 = vperm.xlu0 %5171, %v5049
        %v5173 = vpop.permute.xlu0 %5172
        %5176 = vset.pattern.permute.xlu0 0
        %5177 = vperm.xlu0 %5176, %v5050
        %v5178 = vpop.permute.xlu0 %5177
        %5181 = vset.pattern.permute.xlu0 0
        %5182 = vperm.xlu0 %5181, %v5051
        %v5183 = vpop.permute.xlu0 %5182
        %5186 = vset.pattern.permute.xlu0 0
        %5187 = vperm.xlu0 %5186, %v5052
        %v5188 = vpop.permute.xlu0 %5187
        %5191 = vset.pattern.permute.xlu0 0
        %5192 = vperm.xlu0 %5191, %v5053
        %v5193 = vpop.permute.xlu0 %5192
        %5196 = vset.pattern.permute.xlu0 0
        %5197 = vperm.xlu0 %5196, %v5054
        %v5198 = vpop.permute.xlu0 %5197
        %5201 = vset.pattern.permute.xlu0 0
        %5202 = vperm.xlu0 %5201, %v5055
        %v5203 = vpop.permute.xlu0 %5202
        %5206 = vset.pattern.permute.xlu0 0
        %5207 = vperm.xlu0 %5206, %v5056
        %v5208 = vpop.permute.xlu0 %5207
        %v5210 = vmul.f32 %v5173, %v5124
        %v5211 = vmul.f32 %v5173, %v5126
        %v5212 = vmul.f32 %v5178, %v5130
        %v5213 = vmul.f32 %v5178, %v5132
        %v5214 = vmul.f32 %v5183, %v5136
        %v5215 = vmul.f32 %v5183, %v5138
        %v5216 = vmul.f32 %v5188, %v5142
        %v5217 = vmul.f32 %v5188, %v5144
        %v5218 = vmul.f32 %v5193, %v5148
        %v5219 = vmul.f32 %v5193, %v5150
        %v5220 = vmul.f32 %v5198, %v5154
        %v5221 = vmul.f32 %v5198, %v5156
        %v5222 = vmul.f32 %v5203, %v5160
        %v5223 = vmul.f32 %v5203, %v5162
        %v5224 = vmul.f32 %v5208, %v5166
        %v5225 = vmul.f32 %v5208, %v5168
        %v5226 = vadd.f32 %v5210, 0.0
        %v5227 = vadd.f32 %v5211, 0.0
        %v5228 = vadd.f32 %v5212, 0.0
        %v5229 = vadd.f32 %v5213, 0.0
        %v5230 = vadd.f32 %v5214, 0.0
        %v5231 = vadd.f32 %v5215, 0.0
        %v5232 = vadd.f32 %v5216, 0.0
        %v5233 = vadd.f32 %v5217, 0.0
        %v5234 = vadd.f32 %v5218, 0.0
        %v5235 = vadd.f32 %v5219, 0.0
        %v5236 = vadd.f32 %v5220, 0.0
        %v5237 = vadd.f32 %v5221, 0.0
        %v5238 = vadd.f32 %v5222, 0.0
        %v5239 = vadd.f32 %v5223, 0.0
        %v5240 = vadd.f32 %v5224, 0.0
        %v5241 = vadd.f32 %v5225, 0.0
        %s5242 = scalar_lea.vmem %s9, 64
        %v5243 = vld [vmem:[%s5242] sm:$0xff]
        %v5244 = vld [vmem:[%s5242 + $0x8] sm:$0xff]
        %v5245 = vld [vmem:[%s5242 + $0x10] sm:$0xff]
        %v5246 = vld [vmem:[%s5242 + $0x18] sm:$0xff]
        %v5247 = vld [vmem:[%s5242 + $0x20] sm:$0xff]
        %v5248 = vld [vmem:[%s5242 + $0x28] sm:$0xff]
        %v5249 = vld [vmem:[%s5242 + $0x30] sm:$0xff]
        %v5250 = vld [vmem:[%s5242 + $0x38] sm:$0xff]
        %5251 = vmatprep.subr.mxu0 %v758
        %5252 = vmatpush1.msra.mxu0 %v757
        %5253 = vmatprep.subr.mxu0 %v760
        %5254 = vmatpush1.msra.mxu0 %v759
        %5255 = vmatprep.subr.mxu0 %v762
        %5256 = vmatpush1.msra.mxu0 %v761
        %5257 = vmatprep.subr.mxu0 %v764
        %5258 = vmatpush1.msra.mxu0 %v763
        %5259 = vmatprep.subr.mxu0 %v766
        %5260 = vmatpush1.msra.mxu0 %v765
        %5261 = vmatprep.subr.mxu0 %v768
        %5262 = vmatpush1.msra.mxu0 %v767
        %5263 = vmatprep.subr.mxu0 %v770
        %5264 = vmatpush1.msra.mxu0 %v769
        %5265 = vmatprep.subr.mxu0 %v772
        %5266 = vmatpush1.msra.mxu0 %v771
        %5267 = vmatprep.subr.mxu0 %v774
        %5268 = vmatpush1.msra.mxu0 %v773
        %5269 = vmatprep.subr.mxu0 %v776
        %5270 = vmatpush1.msra.mxu0 %v775
        %5271 = vmatprep.subr.mxu0 %v778
        %5272 = vmatpush1.msra.mxu0 %v777
        %5273 = vmatprep.subr.mxu0 %v780
        %5274 = vmatpush1.msra.mxu0 %v779
        %5275 = vmatprep.subr.mxu0 %v782
        %5276 = vmatpush1.msra.mxu0 %v781
        %5277 = vmatprep.subr.mxu0 %v784
        %5278 = vmatpush1.msra.mxu0 %v783
        %5279 = vmatprep.subr.mxu0 %v786
        %5280 = vmatpush1.msra.mxu0 %v785
        %5281 = vmatprep.subr.mxu0 %v788
        %5282 = vmatpush1.msra.mxu0 %v787
        %5283 = vmatprep.subr.mxu0 %v790
        %5284 = vmatpush1.msra.mxu0 %v789
        %5285 = vmatprep.subr.mxu0 %v792
        %5286 = vmatpush1.msra.mxu0 %v791
        %5287 = vmatprep.subr.mxu0 %v794
        %5288 = vmatpush1.msra.mxu0 %v793
        %5289 = vmatprep.subr.mxu0 %v796
        %5290 = vmatpush1.msra.mxu0 %v795
        %5291 = vmatprep.subr.mxu0 %v798
        %5292 = vmatpush1.msra.mxu0 %v797
        %5293 = vmatprep.subr.mxu0 %v800
        %5294 = vmatpush1.msra.mxu0 %v799
        %5295 = vmatprep.subr.mxu0 %v802
        %5296 = vmatpush1.msra.mxu0 %v801
        %5297 = vmatprep.subr.mxu0 %v804
        %5298 = vmatpush1.msra.mxu0 %v803
        %5299 = vmatprep.subr.mxu0 %v806
        %5300 = vmatpush1.msra.mxu0 %v805
        %5301 = vmatprep.subr.mxu0 %v808
        %5302 = vmatpush1.msra.mxu0 %v807
        %5303 = vmatprep.subr.mxu0 %v810
        %5304 = vmatpush1.msra.mxu0 %v809
        %5305 = vmatprep.subr.mxu0 %v812
        %5306 = vmatpush1.msra.mxu0 %v811
        %5307 = vmatprep.subr.mxu0 %v814
        %5308 = vmatpush1.msra.mxu0 %v813
        %5309 = vmatprep.subr.mxu0 %v816
        %5310 = vmatpush1.msra.mxu0 %v815
        %5311 = vmatprep.subr.mxu0 %v818
        %5312 = vmatpush1.msra.mxu0 %v817
        %5313 = vmatprep.subr.mxu0 %v820
        %5314 = vmatpush1.msra.mxu0 %v819
        %5315 = vmatprep.mubr.f32.mxu0 %v5034
        %5316 = vmatmul.mubr.f32.gmra.mrb[0].mxu0 %v5033
        %v5317 = vpop.f32.mrb[0].mxu0
        %v5318 = vadd.f32 0.0, %v5317
        %v5319 = vpop.f32.mrb[0].mxu0
        %v5320 = vadd.f32 0.0, %v5319
        %5321 = vmatprep.mubr.f32.mxu0 %v5036
        %5322 = vmatmul.mubr.f32.gmra.mrb[0].mxu0 %v5035
        %v5323 = vpop.f32.mrb[0].mxu0
        %v5324 = vadd.f32 0.0, %v5323
        %v5325 = vpop.f32.mrb[0].mxu0
        %v5326 = vadd.f32 0.0, %v5325
        %5327 = vmatprep.mubr.f32.mxu0 %v5038
        %5328 = vmatmul.mubr.f32.gmra.mrb[0].mxu0 %v5037
        %v5329 = vpop.f32.mrb[0].mxu0
        %v5330 = vadd.f32 0.0, %v5329
        %v5331 = vpop.f32.mrb[0].mxu0
        %v5332 = vadd.f32 0.0, %v5331
        %5333 = vmatprep.mubr.f32.mxu0 %v5040
        %5334 = vmatmul.mubr.f32.gmra.mrb[0].mxu0 %v5039
        %v5335 = vpop.f32.mrb[0].mxu0
        %v5336 = vadd.f32 0.0, %v5335
        %v5337 = vpop.f32.mrb[0].mxu0
        %v5338 = vadd.f32 0.0, %v5337
        %5339 = vmatprep.mubr.f32.mxu0 %v5042
        %5340 = vmatmul.mubr.f32.gmra.mrb[0].mxu0 %v5041
        %v5341 = vpop.f32.mrb[0].mxu0
        %v5342 = vadd.f32 0.0, %v5341
        %v5343 = vpop.f32.mrb[0].mxu0
        %v5344 = vadd.f32 0.0, %v5343
        %5345 = vmatprep.mubr.f32.mxu0 %v5044
        %5346 = vmatmul.mubr.f32.gmra.mrb[0].mxu0 %v5043
        %v5347 = vpop.f32.mrb[0].mxu0
        %v5348 = vadd.f32 0.0, %v5347
        %v5349 = vpop.f32.mrb[0].mxu0
        %v5350 = vadd.f32 0.0, %v5349
        %5351 = vmatprep.mubr.f32.mxu0 %v5046
        %5352 = vmatmul.mubr.f32.gmra.mrb[0].mxu0 %v5045
        %v5353 = vpop.f32.mrb[0].mxu0
        %v5354 = vadd.f32 0.0, %v5353
        %v5355 = vpop.f32.mrb[0].mxu0
        %v5356 = vadd.f32 0.0, %v5355
        %5357 = vmatprep.mubr.f32.mxu0 %v5048
        %5358 = vmatmul.mubr.f32.gmra.mrb[0].mxu0 %v5047
        %v5359 = vpop.f32.mrb[0].mxu0
        %v5360 = vadd.f32 0.0, %v5359
        %v5361 = vpop.f32.mrb[0].mxu0
        %v5362 = vadd.f32 0.0, %v5361
        %5363 = vdwg.mxu0
        %5365 = vset.pattern.permute.xlu0 0
        %5366 = vperm.xlu0 %5365, %v5243
        %v5367 = vpop.permute.xlu0 %5366
        %5370 = vset.pattern.permute.xlu0 0
        %5371 = vperm.xlu0 %5370, %v5244
        %v5372 = vpop.permute.xlu0 %5371
        %5375 = vset.pattern.permute.xlu0 0
        %5376 = vperm.xlu0 %5375, %v5245
        %v5377 = vpop.permute.xlu0 %5376
        %5380 = vset.pattern.permute.xlu0 0
        %5381 = vperm.xlu0 %5380, %v5246
        %v5382 = vpop.permute.xlu0 %5381
        %5385 = vset.pattern.permute.xlu0 0
        %5386 = vperm.xlu0 %5385, %v5247
        %v5387 = vpop.permute.xlu0 %5386
        %5390 = vset.pattern.permute.xlu0 0
        %5391 = vperm.xlu0 %5390, %v5248
        %v5392 = vpop.permute.xlu0 %5391
        %5395 = vset.pattern.permute.xlu0 0
        %5396 = vperm.xlu0 %5395, %v5249
        %v5397 = vpop.permute.xlu0 %5396
        %5400 = vset.pattern.permute.xlu0 0
        %5401 = vperm.xlu0 %5400, %v5250
        %v5402 = vpop.permute.xlu0 %5401
        %v5404 = vmul.f32 %v5367, %v5318
        %v5405 = vmul.f32 %v5367, %v5320
        %v5406 = vmul.f32 %v5372, %v5324
        %v5407 = vmul.f32 %v5372, %v5326
        %v5408 = vmul.f32 %v5377, %v5330
        %v5409 = vmul.f32 %v5377, %v5332
        %v5410 = vmul.f32 %v5382, %v5336
        %v5411 = vmul.f32 %v5382, %v5338
        %v5412 = vmul.f32 %v5387, %v5342
        %v5413 = vmul.f32 %v5387, %v5344
        %v5414 = vmul.f32 %v5392, %v5348
        %v5415 = vmul.f32 %v5392, %v5350
        %v5416 = vmul.f32 %v5397, %v5354
        %v5417 = vmul.f32 %v5397, %v5356
        %v5418 = vmul.f32 %v5402, %v5360
        %v5419 = vmul.f32 %v5402, %v5362
        %v5420 = vadd.f32 %v5226, %v5404
        %v5421 = vadd.f32 %v5227, %v5405
        %v5422 = vadd.f32 %v5228, %v5406
        %v5423 = vadd.f32 %v5229, %v5407
        %v5424 = vadd.f32 %v5230, %v5408
        %v5425 = vadd.f32 %v5231, %v5409
        %v5426 = vadd.f32 %v5232, %v5410
        %v5427 = vadd.f32 %v5233, %v5411
        %v5428 = vadd.f32 %v5234, %v5412
        %v5429 = vadd.f32 %v5235, %v5413
        %v5430 = vadd.f32 %v5236, %v5414
        %v5431 = vadd.f32 %v5237, %v5415
        %v5432 = vadd.f32 %v5238, %v5416
        %v5433 = vadd.f32 %v5239, %v5417
        %v5434 = vadd.f32 %v5240, %v5418
        %v5435 = vadd.f32 %v5241, %v5419
        %s5436 = scalar_lea.vmem %s9, 128
        %v5437 = vld [vmem:[%s5436] sm:$0xff]
        %v5438 = vld [vmem:[%s5436 + $0x8] sm:$0xff]
        %v5439 = vld [vmem:[%s5436 + $0x10] sm:$0xff]
        %v5440 = vld [vmem:[%s5436 + $0x18] sm:$0xff]
        %v5441 = vld [vmem:[%s5436 + $0x20] sm:$0xff]
        %v5442 = vld [vmem:[%s5436 + $0x28] sm:$0xff]
        %v5443 = vld [vmem:[%s5436 + $0x30] sm:$0xff]
        %v5444 = vld [vmem:[%s5436 + $0x38] sm:$0xff]
        %5445 = vmatprep.subr.mxu0 %v936
        %5446 = vmatpush1.msra.mxu0 %v935
        %5447 = vmatprep.subr.mxu0 %v938
        %5448 = vmatpush1.msra.mxu0 %v937
        %5449 = vmatprep.subr.mxu0 %v940
        %5450 = vmatpush1.msra.mxu0 %v939
        %5451 = vmatprep.subr.mxu0 %v942
        %5452 = vmatpush1.msra.mxu0 %v941
        %5453 = vmatprep.subr.mxu0 %v944
        %5454 = vmatpush1.msra.mxu0 %v943
        %5455 = vmatprep.subr.mxu0 %v946
        %5456 = vmatpush1.msra.mxu0 %v945
        %5457 = vmatprep.subr.mxu0 %v948
        %5458 = vmatpush1.msra.mxu0 %v947
        %5459 = vmatprep.subr.mxu0 %v950
        %5460 = vmatpush1.msra.mxu0 %v949
        %5461 = vmatprep.subr.mxu0 %v952
        %5462 = vmatpush1.msra.mxu0 %v951
        %5463 = vmatprep.subr.mxu0 %v954
        %5464 = vmatpush1.msra.mxu0 %v953
        %5465 = vmatprep.subr.mxu0 %v956
        %5466 = vmatpush1.msra.mxu0 %v955
        %5467 = vmatprep.subr.mxu0 %v958
        %5468 = vmatpush1.msra.mxu0 %v957
        %5469 = vmatprep.subr.mxu0 %v960
        %5470 = vmatpush1.msra.mxu0 %v959
        %5471 = vmatprep.subr.mxu0 %v962
        %5472 = vmatpush1.msra.mxu0 %v961
        %5473 = vmatprep.subr.mxu0 %v964
        %5474 = vmatpush1.msra.mxu0 %v963
        %5475 = vmatprep.subr.mxu0 %v966
        %5476 = vmatpush1.msra.mxu0 %v965
        %5477 = vmatprep.subr.mxu0 %v968
        %5478 = vmatpush1.msra.mxu0 %v967
        %5479 = vmatprep.subr.mxu0 %v970
        %5480 = vmatpush1.msra.mxu0 %v969
        %5481 = vmatprep.subr.mxu0 %v972
        %5482 = vmatpush1.msra.mxu0 %v971
        %5483 = vmatprep.subr.mxu0 %v974
        %5484 = vmatpush1.msra.mxu0 %v973
        %5485 = vmatprep.subr.mxu0 %v976
        %5486 = vmatpush1.msra.mxu0 %v975
        %5487 = vmatprep.subr.mxu0 %v978
        %5488 = vmatpush1.msra.mxu0 %v977
        %5489 = vmatprep.subr.mxu0 %v980
        %5490 = vmatpush1.msra.mxu0 %v979
        %5491 = vmatprep.subr.mxu0 %v982
        %5492 = vmatpush1.msra.mxu0 %v981
        %5493 = vmatprep.subr.mxu0 %v984
        %5494 = vmatpush1.msra.mxu0 %v983
        %5495 = vmatprep.subr.mxu0 %v986
        %5496 = vmatpush1.msra.mxu0 %v985
        %5497 = vmatprep.subr.mxu0 %v988
        %5498 = vmatpush1.msra.mxu0 %v987
        %5499 = vmatprep.subr.mxu0 %v990
        %5500 = vmatpush1.msra.mxu0 %v989
        %5501 = vmatprep.subr.mxu0 %v992
        %5502 = vmatpush1.msra.mxu0 %v991
        %5503 = vmatprep.subr.mxu0 %v994
        %5504 = vmatpush1.msra.mxu0 %v993
        %5505 = vmatprep.subr.mxu0 %v996
        %5506 = vmatpush1.msra.mxu0 %v995
        %5507 = vmatprep.subr.mxu0 %v998
        %5508 = vmatpush1.msra.mxu0 %v997
        %5509 = vmatprep.mubr.f32.mxu0 %v5034
        %5510 = vmatmul.mubr.f32.gmra.mrb[0].mxu0 %v5033
        %v5511 = vpop.f32.mrb[0].mxu0
        %v5512 = vadd.f32 0.0, %v5511
        %v5513 = vpop.f32.mrb[0].mxu0
        %v5514 = vadd.f32 0.0, %v5513
        %5515 = vmatprep.mubr.f32.mxu0 %v5036
        %5516 = vmatmul.mubr.f32.gmra.mrb[0].mxu0 %v5035
        %v5517 = vpop.f32.mrb[0].mxu0
        %v5518 = vadd.f32 0.0, %v5517
        %v5519 = vpop.f32.mrb[0].mxu0
        %v5520 = vadd.f32 0.0, %v5519
        %5521 = vmatprep.mubr.f32.mxu0 %v5038
        %5522 = vmatmul.mubr.f32.gmra.mrb[0].mxu0 %v5037
        %v5523 = vpop.f32.mrb[0].mxu0
        %v5524 = vadd.f32 0.0, %v5523
        %v5525 = vpop.f32.mrb[0].mxu0
        %v5526 = vadd.f32 0.0, %v5525
        %5527 = vmatprep.mubr.f32.mxu0 %v5040
        %5528 = vmatmul.mubr.f32.gmra.mrb[0].mxu0 %v5039
        %v5529 = vpop.f32.mrb[0].mxu0
        %v5530 = vadd.f32 0.0, %v5529
        %v5531 = vpop.f32.mrb[0].mxu0
        %v5532 = vadd.f32 0.0, %v5531
        %5533 = vmatprep.mubr.f32.mxu0 %v5042
        %5534 = vmatmul.mubr.f32.gmra.mrb[0].mxu0 %v5041
        %v5535 = vpop.f32.mrb[0].mxu0
        %v5536 = vadd.f32 0.0, %v5535
        %v5537 = vpop.f32.mrb[0].mxu0
        %v5538 = vadd.f32 0.0, %v5537
        %5539 = vmatprep.mubr.f32.mxu0 %v5044
        %5540 = vmatmul.mubr.f32.gmra.mrb[0].mxu0 %v5043
        %v5541 = vpop.f32.mrb[0].mxu0
        %v5542 = vadd.f32 0.0, %v5541
        %v5543 = vpop.f32.mrb[0].mxu0
        %v5544 = vadd.f32 0.0, %v5543
        %5545 = vmatprep.mubr.f32.mxu0 %v5046
        %5546 = vmatmul.mubr.f32.gmra.mrb[0].mxu0 %v5045
        %v5547 = vpop.f32.mrb[0].mxu0
        %v5548 = vadd.f32 0.0, %v5547
        %v5549 = vpop.f32.mrb[0].mxu0
        %v5550 = vadd.f32 0.0, %v5549
        %5551 = vmatprep.mubr.f32.mxu0 %v5048
        %5552 = vmatmul.mubr.f32.gmra.mrb[0].mxu0 %v5047
        %v5553 = vpop.f32.mrb[0].mxu0
        %v5554 = vadd.f32 0.0, %v5553
        %v5555 = vpop.f32.mrb[0].mxu0
        %v5556 = vadd.f32 0.0, %v5555
        %5557 = vdwg.mxu0
        %5559 = vset.pattern.permute.xlu0 0
        %5560 = vperm.xlu0 %5559, %v5437
        %v5561 = vpop.permute.xlu0 %5560
        %5564 = vset.pattern.permute.xlu0 0
        %5565 = vperm.xlu0 %5564, %v5438
        %v5566 = vpop.permute.xlu0 %5565
        %5569 = vset.pattern.permute.xlu0 0
        %5570 = vperm.xlu0 %5569, %v5439
        %v5571 = vpop.permute.xlu0 %5570
        %5574 = vset.pattern.permute.xlu0 0
        %5575 = vperm.xlu0 %5574, %v5440
        %v5576 = vpop.permute.xlu0 %5575
        %5579 = vset.pattern.permute.xlu0 0
        %5580 = vperm.xlu0 %5579, %v5441
        %v5581 = vpop.permute.xlu0 %5580
        %5584 = vset.pattern.permute.xlu0 0
        %5585 = vperm.xlu0 %5584, %v5442
        %v5586 = vpop.permute.xlu0 %5585
        %5589 = vset.pattern.permute.xlu0 0
        %5590 = vperm.xlu0 %5589, %v5443
        %v5591 = vpop.permute.xlu0 %5590
        %5594 = vset.pattern.permute.xlu0 0
        %5595 = vperm.xlu0 %5594, %v5444
        %v5596 = vpop.permute.xlu0 %5595
        %v5598 = vmul.f32 %v5561, %v5512
        %v5599 = vmul.f32 %v5561, %v5514
        %v5600 = vmul.f32 %v5566, %v5518
        %v5601 = vmul.f32 %v5566, %v5520
        %v5602 = vmul.f32 %v5571, %v5524
        %v5603 = vmul.f32 %v5571, %v5526
        %v5604 = vmul.f32 %v5576, %v5530
        %v5605 = vmul.f32 %v5576, %v5532
        %v5606 = vmul.f32 %v5581, %v5536
        %v5607 = vmul.f32 %v5581, %v5538
        %v5608 = vmul.f32 %v5586, %v5542
        %v5609 = vmul.f32 %v5586, %v5544
        %v5610 = vmul.f32 %v5591, %v5548
        %v5611 = vmul.f32 %v5591, %v5550
        %v5612 = vmul.f32 %v5596, %v5554
        %v5613 = vmul.f32 %v5596, %v5556
        %v5614 = vadd.f32 %v5420, %v5598
        %v5615 = vadd.f32 %v5421, %v5599
        %v5616 = vadd.f32 %v5422, %v5600
        %v5617 = vadd.f32 %v5423, %v5601
        %v5618 = vadd.f32 %v5424, %v5602
        %v5619 = vadd.f32 %v5425, %v5603
        %v5620 = vadd.f32 %v5426, %v5604
        %v5621 = vadd.f32 %v5427, %v5605
        %v5622 = vadd.f32 %v5428, %v5606
        %v5623 = vadd.f32 %v5429, %v5607
        %v5624 = vadd.f32 %v5430, %v5608
        %v5625 = vadd.f32 %v5431, %v5609
        %v5626 = vadd.f32 %v5432, %v5610
        %v5627 = vadd.f32 %v5433, %v5611
        %v5628 = vadd.f32 %v5434, %v5612
        %v5629 = vadd.f32 %v5435, %v5613
        %s5630 = scalar_lea.vmem %s9, 192
        %v5631 = vld [vmem:[%s5630] sm:$0xff]
        %v5632 = vld [vmem:[%s5630 + $0x8] sm:$0xff]
        %v5633 = vld [vmem:[%s5630 + $0x10] sm:$0xff]
        %v5634 = vld [vmem:[%s5630 + $0x18] sm:$0xff]
        %v5635 = vld [vmem:[%s5630 + $0x20] sm:$0xff]
        %v5636 = vld [vmem:[%s5630 + $0x28] sm:$0xff]
        %v5637 = vld [vmem:[%s5630 + $0x30] sm:$0xff]
        %v5638 = vld [vmem:[%s5630 + $0x38] sm:$0xff]
        %5639 = vmatprep.subr.mxu0 %v1114
        %5640 = vmatpush1.msra.mxu0 %v1113
        %5641 = vmatprep.subr.mxu0 %v1116
        %5642 = vmatpush1.msra.mxu0 %v1115
        %5643 = vmatprep.subr.mxu0 %v1118
        %5644 = vmatpush1.msra.mxu0 %v1117
        %5645 = vmatprep.subr.mxu0 %v1120
        %5646 = vmatpush1.msra.mxu0 %v1119
        %5647 = vmatprep.subr.mxu0 %v1122
        %5648 = vmatpush1.msra.mxu0 %v1121
        %5649 = vmatprep.subr.mxu0 %v1124
        %5650 = vmatpush1.msra.mxu0 %v1123
        %5651 = vmatprep.subr.mxu0 %v1126
        %5652 = vmatpush1.msra.mxu0 %v1125
        %5653 = vmatprep.subr.mxu0 %v1128
        %5654 = vmatpush1.msra.mxu0 %v1127
        %5655 = vmatprep.subr.mxu0 %v1130
        %5656 = vmatpush1.msra.mxu0 %v1129
        %5657 = vmatprep.subr.mxu0 %v1132
        %5658 = vmatpush1.msra.mxu0 %v1131
        %5659 = vmatprep.subr.mxu0 %v1134
        %5660 = vmatpush1.msra.mxu0 %v1133
        %5661 = vmatprep.subr.mxu0 %v1136
        %5662 = vmatpush1.msra.mxu0 %v1135
        %5663 = vmatprep.subr.mxu0 %v1138
        %5664 = vmatpush1.msra.mxu0 %v1137
        %5665 = vmatprep.subr.mxu0 %v1140
        %5666 = vmatpush1.msra.mxu0 %v1139
        %5667 = vmatprep.subr.mxu0 %v1142
        %5668 = vmatpush1.msra.mxu0 %v1141
        %5669 = vmatprep.subr.mxu0 %v1144
        %5670 = vmatpush1.msra.mxu0 %v1143
        %5671 = vmatprep.subr.mxu0 %v1146
        %5672 = vmatpush1.msra.mxu0 %v1145
        %5673 = vmatprep.subr.mxu0 %v1148
        %5674 = vmatpush1.msra.mxu0 %v1147
        %5675 = vmatprep.subr.mxu0 %v1150
        %5676 = vmatpush1.msra.mxu0 %v1149
        %5677 = vmatprep.subr.mxu0 %v1152
        %5678 = vmatpush1.msra.mxu0 %v1151
        %5679 = vmatprep.subr.mxu0 %v1154
        %5680 = vmatpush1.msra.mxu0 %v1153
        %5681 = vmatprep.subr.mxu0 %v1156
        %5682 = vmatpush1.msra.mxu0 %v1155
        %5683 = vmatprep.subr.mxu0 %v1158
        %5684 = vmatpush1.msra.mxu0 %v1157
        %5685 = vmatprep.subr.mxu0 %v1160
        %5686 = vmatpush1.msra.mxu0 %v1159
        %5687 = vmatprep.subr.mxu0 %v1162
        %5688 = vmatpush1.msra.mxu0 %v1161
        %5689 = vmatprep.subr.mxu0 %v1164
        %5690 = vmatpush1.msra.mxu0 %v1163
        %5691 = vmatprep.subr.mxu0 %v1166
        %5692 = vmatpush1.msra.mxu0 %v1165
        %5693 = vmatprep.subr.mxu0 %v1168
        %5694 = vmatpush1.msra.mxu0 %v1167
        %5695 = vmatprep.subr.mxu0 %v1170
        %5696 = vmatpush1.msra.mxu0 %v1169
        %5697 = vmatprep.subr.mxu0 %v1172
        %5698 = vmatpush1.msra.mxu0 %v1171
        %5699 = vmatprep.subr.mxu0 %v1174
        %5700 = vmatpush1.msra.mxu0 %v1173
        %5701 = vmatprep.subr.mxu0 %v1176
        %5702 = vmatpush1.msra.mxu0 %v1175
        %5703 = vmatprep.mubr.f32.mxu0 %v5034
        %5704 = vmatmul.mubr.f32.gmra.mrb[0].mxu0 %v5033
        %v5705 = vpop.f32.mrb[0].mxu0
        %v5706 = vadd.f32 0.0, %v5705
        %v5707 = vpop.f32.mrb[0].mxu0
        %v5708 = vadd.f32 0.0, %v5707
        %5709 = vmatprep.mubr.f32.mxu0 %v5036
        %5710 = vmatmul.mubr.f32.gmra.mrb[0].mxu0 %v5035
        %v5711 = vpop.f32.mrb[0].mxu0
        %v5712 = vadd.f32 0.0, %v5711
        %v5713 = vpop.f32.mrb[0].mxu0
        %v5714 = vadd.f32 0.0, %v5713
        %5715 = vmatprep.mubr.f32.mxu0 %v5038
        %5716 = vmatmul.mubr.f32.gmra.mrb[0].mxu0 %v5037
        %v5717 = vpop.f32.mrb[0].mxu0
        %v5718 = vadd.f32 0.0, %v5717
        %v5719 = vpop.f32.mrb[0].mxu0
        %v5720 = vadd.f32 0.0, %v5719
        %5721 = vmatprep.mubr.f32.mxu0 %v5040
        %5722 = vmatmul.mubr.f32.gmra.mrb[0].mxu0 %v5039
        %v5723 = vpop.f32.mrb[0].mxu0
        %v5724 = vadd.f32 0.0, %v5723
        %v5725 = vpop.f32.mrb[0].mxu0
        %v5726 = vadd.f32 0.0, %v5725
        %5727 = vmatprep.mubr.f32.mxu0 %v5042
        %5728 = vmatmul.mubr.f32.gmra.mrb[0].mxu0 %v5041
        %v5729 = vpop.f32.mrb[0].mxu0
        %v5730 = vadd.f32 0.0, %v5729
        %v5731 = vpop.f32.mrb[0].mxu0
        %v5732 = vadd.f32 0.0, %v5731
        %5733 = vmatprep.mubr.f32.mxu0 %v5044
        %5734 = vmatmul.mubr.f32.gmra.mrb[0].mxu0 %v5043
        %v5735 = vpop.f32.mrb[0].mxu0
        %v5736 = vadd.f32 0.0, %v5735
        %v5737 = vpop.f32.mrb[0].mxu0
        %v5738 = vadd.f32 0.0, %v5737
        %5739 = vmatprep.mubr.f32.mxu0 %v5046
        %5740 = vmatmul.mubr.f32.gmra.mrb[0].mxu0 %v5045
        %v5741 = vpop.f32.mrb[0].mxu0
        %v5742 = vadd.f32 0.0, %v5741
        %v5743 = vpop.f32.mrb[0].mxu0
        %v5744 = vadd.f32 0.0, %v5743
        %5745 = vmatprep.mubr.f32.mxu0 %v5048
        %5746 = vmatmul.mubr.f32.gmra.mrb[0].mxu0 %v5047
        %v5747 = vpop.f32.mrb[0].mxu0
        %v5748 = vadd.f32 0.0, %v5747
        %v5749 = vpop.f32.mrb[0].mxu0
        %v5750 = vadd.f32 0.0, %v5749
        %5751 = vdwg.mxu0
        %5753 = vset.pattern.permute.xlu0 0
        %5754 = vperm.xlu0 %5753, %v5631
        %v5755 = vpop.permute.xlu0 %5754
        %5758 = vset.pattern.permute.xlu0 0
        %5759 = vperm.xlu0 %5758, %v5632
        %v5760 = vpop.permute.xlu0 %5759
        %5763 = vset.pattern.permute.xlu0 0
        %5764 = vperm.xlu0 %5763, %v5633
        %v5765 = vpop.permute.xlu0 %5764
        %5768 = vset.pattern.permute.xlu0 0
        %5769 = vperm.xlu0 %5768, %v5634
        %v5770 = vpop.permute.xlu0 %5769
        %5773 = vset.pattern.permute.xlu0 0
        %5774 = vperm.xlu0 %5773, %v5635
        %v5775 = vpop.permute.xlu0 %5774
        %5778 = vset.pattern.permute.xlu0 0
        %5779 = vperm.xlu0 %5778, %v5636
        %v5780 = vpop.permute.xlu0 %5779
        %5783 = vset.pattern.permute.xlu0 0
        %5784 = vperm.xlu0 %5783, %v5637
        %v5785 = vpop.permute.xlu0 %5784
        %5788 = vset.pattern.permute.xlu0 0
        %5789 = vperm.xlu0 %5788, %v5638
        %v5790 = vpop.permute.xlu0 %5789
        %v5792 = vmul.f32 %v5755, %v5706
        %v5793 = vmul.f32 %v5755, %v5708
        %v5794 = vmul.f32 %v5760, %v5712
        %v5795 = vmul.f32 %v5760, %v5714
        %v5796 = vmul.f32 %v5765, %v5718
        %v5797 = vmul.f32 %v5765, %v5720
        %v5798 = vmul.f32 %v5770, %v5724
        %v5799 = vmul.f32 %v5770, %v5726
        %v5800 = vmul.f32 %v5775, %v5730
        %v5801 = vmul.f32 %v5775, %v5732
        %v5802 = vmul.f32 %v5780, %v5736
        %v5803 = vmul.f32 %v5780, %v5738
        %v5804 = vmul.f32 %v5785, %v5742
        %v5805 = vmul.f32 %v5785, %v5744
        %v5806 = vmul.f32 %v5790, %v5748
        %v5807 = vmul.f32 %v5790, %v5750
        %v5808 = vadd.f32 %v5614, %v5792
        %v5809 = vadd.f32 %v5615, %v5793
        %v5810 = vadd.f32 %v5616, %v5794
        %v5811 = vadd.f32 %v5617, %v5795
        %v5812 = vadd.f32 %v5618, %v5796
        %v5813 = vadd.f32 %v5619, %v5797
        %v5814 = vadd.f32 %v5620, %v5798
        %v5815 = vadd.f32 %v5621, %v5799
        %v5816 = vadd.f32 %v5622, %v5800
        %v5817 = vadd.f32 %v5623, %v5801
        %v5818 = vadd.f32 %v5624, %v5802
        %v5819 = vadd.f32 %v5625, %v5803
        %v5820 = vadd.f32 %v5626, %v5804
        %v5821 = vadd.f32 %v5627, %v5805
        %v5822 = vadd.f32 %v5628, %v5806
        %v5823 = vadd.f32 %v5629, %v5807
        %s5824 = scalar_lea.vmem %s9, 256
        %v5825 = vld [vmem:[%s5824] sm:$0xff]
        %v5826 = vld [vmem:[%s5824 + $0x8] sm:$0xff]
        %v5827 = vld [vmem:[%s5824 + $0x10] sm:$0xff]
        %v5828 = vld [vmem:[%s5824 + $0x18] sm:$0xff]
        %v5829 = vld [vmem:[%s5824 + $0x20] sm:$0xff]
        %v5830 = vld [vmem:[%s5824 + $0x28] sm:$0xff]
        %v5831 = vld [vmem:[%s5824 + $0x30] sm:$0xff]
        %v5832 = vld [vmem:[%s5824 + $0x38] sm:$0xff]
        %5833 = vmatprep.subr.mxu0 %v1292
        %5834 = vmatpush1.msra.mxu0 %v1291
        %5835 = vmatprep.subr.mxu0 %v1294
        %5836 = vmatpush1.msra.mxu0 %v1293
        %5837 = vmatprep.subr.mxu0 %v1296
        %5838 = vmatpush1.msra.mxu0 %v1295
        %5839 = vmatprep.subr.mxu0 %v1298
        %5840 = vmatpush1.msra.mxu0 %v1297
        %5841 = vmatprep.subr.mxu0 %v1300
        %5842 = vmatpush1.msra.mxu0 %v1299
        %5843 = vmatprep.subr.mxu0 %v1302
        %5844 = vmatpush1.msra.mxu0 %v1301
        %5845 = vmatprep.subr.mxu0 %v1304
        %5846 = vmatpush1.msra.mxu0 %v1303
        %5847 = vmatprep.subr.mxu0 %v1306
        %5848 = vmatpush1.msra.mxu0 %v1305
        %5849 = vmatprep.subr.mxu0 %v1308
        %5850 = vmatpush1.msra.mxu0 %v1307
        %5851 = vmatprep.subr.mxu0 %v1310
        %5852 = vmatpush1.msra.mxu0 %v1309
        %5853 = vmatprep.subr.mxu0 %v1312
        %5854 = vmatpush1.msra.mxu0 %v1311
        %5855 = vmatprep.subr.mxu0 %v1314
        %5856 = vmatpush1.msra.mxu0 %v1313
        %5857 = vmatprep.subr.mxu0 %v1316
        %5858 = vmatpush1.msra.mxu0 %v1315
        %5859 = vmatprep.subr.mxu0 %v1318
        %5860 = vmatpush1.msra.mxu0 %v1317
        %5861 = vmatprep.subr.mxu0 %v1320
        %5862 = vmatpush1.msra.mxu0 %v1319
        %5863 = vmatprep.subr.mxu0 %v1322
        %5864 = vmatpush1.msra.mxu0 %v1321
        %5865 = vmatprep.subr.mxu0 %v1324
        %5866 = vmatpush1.msra.mxu0 %v1323
        %5867 = vmatprep.subr.mxu0 %v1326
        %5868 = vmatpush1.msra.mxu0 %v1325
        %5869 = vmatprep.subr.mxu0 %v1328
        %5870 = vmatpush1.msra.mxu0 %v1327
        %5871 = vmatprep.subr.mxu0 %v1330
        %5872 = vmatpush1.msra.mxu0 %v1329
        %5873 = vmatprep.subr.mxu0 %v1332
        %5874 = vmatpush1.msra.mxu0 %v1331
        %5875 = vmatprep.subr.mxu0 %v1334
        %5876 = vmatpush1.msra.mxu0 %v1333
        %5877 = vmatprep.subr.mxu0 %v1336
        %5878 = vmatpush1.msra.mxu0 %v1335
        %5879 = vmatprep.subr.mxu0 %v1338
        %5880 = vmatpush1.msra.mxu0 %v1337
        %5881 = vmatprep.subr.mxu0 %v1340
        %5882 = vmatpush1.msra.mxu0 %v1339
        %5883 = vmatprep.subr.mxu0 %v1342
        %5884 = vmatpush1.msra.mxu0 %v1341
        %5885 = vmatprep.subr.mxu0 %v1344
        %5886 = vmatpush1.msra.mxu0 %v1343
        %5887 = vmatprep.subr.mxu0 %v1346
        %5888 = vmatpush1.msra.mxu0 %v1345
        %5889 = vmatprep.subr.mxu0 %v1348
        %5890 = vmatpush1.msra.mxu0 %v1347
        %5891 = vmatprep.subr.mxu0 %v1350
        %5892 = vmatpush1.msra.mxu0 %v1349
        %5893 = vmatprep.subr.mxu0 %v1352
        %5894 = vmatpush1.msra.mxu0 %v1351
        %5895 = vmatprep.subr.mxu0 %v1354
        %5896 = vmatpush1.msra.mxu0 %v1353
        %5897 = vmatprep.mubr.f32.mxu0 %v5034
        %5898 = vmatmul.mubr.f32.gmra.mrb[0].mxu0 %v5033
        %v5899 = vpop.f32.mrb[0].mxu0
        %v5900 = vadd.f32 0.0, %v5899
        %v5901 = vpop.f32.mrb[0].mxu0
        %v5902 = vadd.f32 0.0, %v5901
        %5903 = vmatprep.mubr.f32.mxu0 %v5036
        %5904 = vmatmul.mubr.f32.gmra.mrb[0].mxu0 %v5035
        %v5905 = vpop.f32.mrb[0].mxu0
        %v5906 = vadd.f32 0.0, %v5905
        %v5907 = vpop.f32.mrb[0].mxu0
        %v5908 = vadd.f32 0.0, %v5907
        %5909 = vmatprep.mubr.f32.mxu0 %v5038
        %5910 = vmatmul.mubr.f32.gmra.mrb[0].mxu0 %v5037
        %v5911 = vpop.f32.mrb[0].mxu0
        %v5912 = vadd.f32 0.0, %v5911
        %v5913 = vpop.f32.mrb[0].mxu0
        %v5914 = vadd.f32 0.0, %v5913
        %5915 = vmatprep.mubr.f32.mxu0 %v5040
        %5916 = vmatmul.mubr.f32.gmra.mrb[0].mxu0 %v5039
        %v5917 = vpop.f32.mrb[0].mxu0
        %v5918 = vadd.f32 0.0, %v5917
        %v5919 = vpop.f32.mrb[0].mxu0
        %v5920 = vadd.f32 0.0, %v5919
        %5921 = vmatprep.mubr.f32.mxu0 %v5042
        %5922 = vmatmul.mubr.f32.gmra.mrb[0].mxu0 %v5041
        %v5923 = vpop.f32.mrb[0].mxu0
        %v5924 = vadd.f32 0.0, %v5923
        %v5925 = vpop.f32.mrb[0].mxu0
        %v5926 = vadd.f32 0.0, %v5925
        %5927 = vmatprep.mubr.f32.mxu0 %v5044
        %5928 = vmatmul.mubr.f32.gmra.mrb[0].mxu0 %v5043
        %v5929 = vpop.f32.mrb[0].mxu0
        %v5930 = vadd.f32 0.0, %v5929
        %v5931 = vpop.f32.mrb[0].mxu0
        %v5932 = vadd.f32 0.0, %v5931
        %5933 = vmatprep.mubr.f32.mxu0 %v5046
        %5934 = vmatmul.mubr.f32.gmra.mrb[0].mxu0 %v5045
        %v5935 = vpop.f32.mrb[0].mxu0
        %v5936 = vadd.f32 0.0, %v5935
        %v5937 = vpop.f32.mrb[0].mxu0
        %v5938 = vadd.f32 0.0, %v5937
        %5939 = vmatprep.mubr.f32.mxu0 %v5048
        %5940 = vmatmul.mubr.f32.gmra.mrb[0].mxu0 %v5047
        %v5941 = vpop.f32.mrb[0].mxu0
        %v5942 = vadd.f32 0.0, %v5941
        %v5943 = vpop.f32.mrb[0].mxu0
        %v5944 = vadd.f32 0.0, %v5943
        %5945 = vdwg.mxu0
        %5947 = vset.pattern.permute.xlu0 0
        %5948 = vperm.xlu0 %5947, %v5825
        %v5949 = vpop.permute.xlu0 %5948
        %5952 = vset.pattern.permute.xlu0 0
        %5953 = vperm.xlu0 %5952, %v5826
        %v5954 = vpop.permute.xlu0 %5953
        %5957 = vset.pattern.permute.xlu0 0
        %5958 = vperm.xlu0 %5957, %v5827
        %v5959 = vpop.permute.xlu0 %5958
        %5962 = vset.pattern.permute.xlu0 0
        %5963 = vperm.xlu0 %5962, %v5828
        %v5964 = vpop.permute.xlu0 %5963
        %5967 = vset.pattern.permute.xlu0 0
        %5968 = vperm.xlu0 %5967, %v5829
        %v5969 = vpop.permute.xlu0 %5968
        %5972 = vset.pattern.permute.xlu0 0
        %5973 = vperm.xlu0 %5972, %v5830
        %v5974 = vpop.permute.xlu0 %5973
        %5977 = vset.pattern.permute.xlu0 0
        %5978 = vperm.xlu0 %5977, %v5831
        %v5979 = vpop.permute.xlu0 %5978
        %5982 = vset.pattern.permute.xlu0 0
        %5983 = vperm.xlu0 %5982, %v5832
        %v5984 = vpop.permute.xlu0 %5983
        %v5986 = vmul.f32 %v5949, %v5900
        %v5987 = vmul.f32 %v5949, %v5902
        %v5988 = vmul.f32 %v5954, %v5906
        %v5989 = vmul.f32 %v5954, %v5908
        %v5990 = vmul.f32 %v5959, %v5912
        %v5991 = vmul.f32 %v5959, %v5914
        %v5992 = vmul.f32 %v5964, %v5918
        %v5993 = vmul.f32 %v5964, %v5920
        %v5994 = vmul.f32 %v5969, %v5924
        %v5995 = vmul.f32 %v5969, %v5926
        %v5996 = vmul.f32 %v5974, %v5930
        %v5997 = vmul.f32 %v5974, %v5932
        %v5998 = vmul.f32 %v5979, %v5936
        %v5999 = vmul.f32 %v5979, %v5938
        %v6000 = vmul.f32 %v5984, %v5942
        %v6001 = vmul.f32 %v5984, %v5944
        %v6002 = vadd.f32 %v5808, %v5986
        %v6003 = vadd.f32 %v5809, %v5987
        %v6004 = vadd.f32 %v5810, %v5988
        %v6005 = vadd.f32 %v5811, %v5989
        %v6006 = vadd.f32 %v5812, %v5990
        %v6007 = vadd.f32 %v5813, %v5991
        %v6008 = vadd.f32 %v5814, %v5992
        %v6009 = vadd.f32 %v5815, %v5993
        %v6010 = vadd.f32 %v5816, %v5994
        %v6011 = vadd.f32 %v5817, %v5995
        %v6012 = vadd.f32 %v5818, %v5996
        %v6013 = vadd.f32 %v5819, %v5997
        %v6014 = vadd.f32 %v5820, %v5998
        %v6015 = vadd.f32 %v5821, %v5999
        %v6016 = vadd.f32 %v5822, %v6000
        %v6017 = vadd.f32 %v5823, %v6001
        %s6018 = scalar_lea.vmem %s9, 320
        %v6019 = vld [vmem:[%s6018] sm:$0xff]
        %v6020 = vld [vmem:[%s6018 + $0x8] sm:$0xff]
        %v6021 = vld [vmem:[%s6018 + $0x10] sm:$0xff]
        %v6022 = vld [vmem:[%s6018 + $0x18] sm:$0xff]
        %v6023 = vld [vmem:[%s6018 + $0x20] sm:$0xff]
        %v6024 = vld [vmem:[%s6018 + $0x28] sm:$0xff]
        %v6025 = vld [vmem:[%s6018 + $0x30] sm:$0xff]
        %v6026 = vld [vmem:[%s6018 + $0x38] sm:$0xff]
        %6027 = vmatprep.subr.mxu0 %v1470
        %6028 = vmatpush1.msra.mxu0 %v1469
        %6029 = vmatprep.subr.mxu0 %v1472
        %6030 = vmatpush1.msra.mxu0 %v1471
        %6031 = vmatprep.subr.mxu0 %v1474
        %6032 = vmatpush1.msra.mxu0 %v1473
        %6033 = vmatprep.subr.mxu0 %v1476
        %6034 = vmatpush1.msra.mxu0 %v1475
        %6035 = vmatprep.subr.mxu0 %v1478
        %6036 = vmatpush1.msra.mxu0 %v1477
        %6037 = vmatprep.subr.mxu0 %v1480
        %6038 = vmatpush1.msra.mxu0 %v1479
        %6039 = vmatprep.subr.mxu0 %v1482
        %6040 = vmatpush1.msra.mxu0 %v1481
        %6041 = vmatprep.subr.mxu0 %v1484
        %6042 = vmatpush1.msra.mxu0 %v1483
        %6043 = vmatprep.subr.mxu0 %v1486
        %6044 = vmatpush1.msra.mxu0 %v1485
        %6045 = vmatprep.subr.mxu0 %v1488
        %6046 = vmatpush1.msra.mxu0 %v1487
        %6047 = vmatprep.subr.mxu0 %v1490
        %6048 = vmatpush1.msra.mxu0 %v1489
        %6049 = vmatprep.subr.mxu0 %v1492
        %6050 = vmatpush1.msra.mxu0 %v1491
        %6051 = vmatprep.subr.mxu0 %v1494
        %6052 = vmatpush1.msra.mxu0 %v1493
        %6053 = vmatprep.subr.mxu0 %v1496
        %6054 = vmatpush1.msra.mxu0 %v1495
        %6055 = vmatprep.subr.mxu0 %v1498
        %6056 = vmatpush1.msra.mxu0 %v1497
        %6057 = vmatprep.subr.mxu0 %v1500
        %6058 = vmatpush1.msra.mxu0 %v1499
        %6059 = vmatprep.subr.mxu0 %v1502
        %6060 = vmatpush1.msra.mxu0 %v1501
        %6061 = vmatprep.subr.mxu0 %v1504
        %6062 = vmatpush1.msra.mxu0 %v1503
        %6063 = vmatprep.subr.mxu0 %v1506
        %6064 = vmatpush1.msra.mxu0 %v1505
        %6065 = vmatprep.subr.mxu0 %v1508
        %6066 = vmatpush1.msra.mxu0 %v1507
        %6067 = vmatprep.subr.mxu0 %v1510
        %6068 = vmatpush1.msra.mxu0 %v1509
        %6069 = vmatprep.subr.mxu0 %v1512
        %6070 = vmatpush1.msra.mxu0 %v1511
        %6071 = vmatprep.subr.mxu0 %v1514
        %6072 = vmatpush1.msra.mxu0 %v1513
        %6073 = vmatprep.subr.mxu0 %v1516
        %6074 = vmatpush1.msra.mxu0 %v1515
        %6075 = vmatprep.subr.mxu0 %v1518
        %6076 = vmatpush1.msra.mxu0 %v1517
        %6077 = vmatprep.subr.mxu0 %v1520
        %6078 = vmatpush1.msra.mxu0 %v1519
        %6079 = vmatprep.subr.mxu0 %v1522
        %6080 = vmatpush1.msra.mxu0 %v1521
        %6081 = vmatprep.subr.mxu0 %v1524
        %6082 = vmatpush1.msra.mxu0 %v1523
        %6083 = vmatprep.subr.mxu0 %v1526
        %6084 = vmatpush1.msra.mxu0 %v1525
        %6085 = vmatprep.subr.mxu0 %v1528
        %6086 = vmatpush1.msra.mxu0 %v1527
        %6087 = vmatprep.subr.mxu0 %v1530
        %6088 = vmatpush1.msra.mxu0 %v1529
        %6089 = vmatprep.subr.mxu0 %v1532
        %6090 = vmatpush1.msra.mxu0 %v1531
        %6091 = vmatprep.mubr.f32.mxu0 %v5034
        %6092 = vmatmul.mubr.f32.gmra.mrb[0].mxu0 %v5033
        %v6093 = vpop.f32.mrb[0].mxu0
        %v6094 = vadd.f32 0.0, %v6093
        %v6095 = vpop.f32.mrb[0].mxu0
        %v6096 = vadd.f32 0.0, %v6095
        %6097 = vmatprep.mubr.f32.mxu0 %v5036
        %6098 = vmatmul.mubr.f32.gmra.mrb[0].mxu0 %v5035
        %v6099 = vpop.f32.mrb[0].mxu0
        %v6100 = vadd.f32 0.0, %v6099
        %v6101 = vpop.f32.mrb[0].mxu0
        %v6102 = vadd.f32 0.0, %v6101
        %6103 = vmatprep.mubr.f32.mxu0 %v5038
        %6104 = vmatmul.mubr.f32.gmra.mrb[0].mxu0 %v5037
        %v6105 = vpop.f32.mrb[0].mxu0
        %v6106 = vadd.f32 0.0, %v6105
        %v6107 = vpop.f32.mrb[0].mxu0
        %v6108 = vadd.f32 0.0, %v6107
        %6109 = vmatprep.mubr.f32.mxu0 %v5040
        %6110 = vmatmul.mubr.f32.gmra.mrb[0].mxu0 %v5039
        %v6111 = vpop.f32.mrb[0].mxu0
        %v6112 = vadd.f32 0.0, %v6111
        %v6113 = vpop.f32.mrb[0].mxu0
        %v6114 = vadd.f32 0.0, %v6113
        %6115 = vmatprep.mubr.f32.mxu0 %v5042
        %6116 = vmatmul.mubr.f32.gmra.mrb[0].mxu0 %v5041
        %v6117 = vpop.f32.mrb[0].mxu0
        %v6118 = vadd.f32 0.0, %v6117
        %v6119 = vpop.f32.mrb[0].mxu0
        %v6120 = vadd.f32 0.0, %v6119
        %6121 = vmatprep.mubr.f32.mxu0 %v5044
        %6122 = vmatmul.mubr.f32.gmra.mrb[0].mxu0 %v5043
        %v6123 = vpop.f32.mrb[0].mxu0
        %v6124 = vadd.f32 0.0, %v6123
        %v6125 = vpop.f32.mrb[0].mxu0
        %v6126 = vadd.f32 0.0, %v6125
        %6127 = vmatprep.mubr.f32.mxu0 %v5046
        %6128 = vmatmul.mubr.f32.gmra.mrb[0].mxu0 %v5045
        %v6129 = vpop.f32.mrb[0].mxu0
        %v6130 = vadd.f32 0.0, %v6129
        %v6131 = vpop.f32.mrb[0].mxu0
        %v6132 = vadd.f32 0.0, %v6131
        %6133 = vmatprep.mubr.f32.mxu0 %v5048
        %6134 = vmatmul.mubr.f32.gmra.mrb[0].mxu0 %v5047
        %v6135 = vpop.f32.mrb[0].mxu0
        %v6136 = vadd.f32 0.0, %v6135
        %v6137 = vpop.f32.mrb[0].mxu0
        %v6138 = vadd.f32 0.0, %v6137
        %6139 = vdwg.mxu0
        %6141 = vset.pattern.permute.xlu0 0
        %6142 = vperm.xlu0 %6141, %v6019
        %v6143 = vpop.permute.xlu0 %6142
        %6146 = vset.pattern.permute.xlu0 0
        %6147 = vperm.xlu0 %6146, %v6020
        %v6148 = vpop.permute.xlu0 %6147
        %6151 = vset.pattern.permute.xlu0 0
        %6152 = vperm.xlu0 %6151, %v6021
        %v6153 = vpop.permute.xlu0 %6152
        %6156 = vset.pattern.permute.xlu0 0
        %6157 = vperm.xlu0 %6156, %v6022
        %v6158 = vpop.permute.xlu0 %6157
        %6161 = vset.pattern.permute.xlu0 0
        %6162 = vperm.xlu0 %6161, %v6023
        %v6163 = vpop.permute.xlu0 %6162
        %6166 = vset.pattern.permute.xlu0 0
        %6167 = vperm.xlu0 %6166, %v6024
        %v6168 = vpop.permute.xlu0 %6167
        %6171 = vset.pattern.permute.xlu0 0
        %6172 = vperm.xlu0 %6171, %v6025
        %v6173 = vpop.permute.xlu0 %6172
        %6176 = vset.pattern.permute.xlu0 0
        %6177 = vperm.xlu0 %6176, %v6026
        %v6178 = vpop.permute.xlu0 %6177
        %v6180 = vmul.f32 %v6143, %v6094
        %v6181 = vmul.f32 %v6143, %v6096
        %v6182 = vmul.f32 %v6148, %v6100
        %v6183 = vmul.f32 %v6148, %v6102
        %v6184 = vmul.f32 %v6153, %v6106
        %v6185 = vmul.f32 %v6153, %v6108
        %v6186 = vmul.f32 %v6158, %v6112
        %v6187 = vmul.f32 %v6158, %v6114
        %v6188 = vmul.f32 %v6163, %v6118
        %v6189 = vmul.f32 %v6163, %v6120
        %v6190 = vmul.f32 %v6168, %v6124
        %v6191 = vmul.f32 %v6168, %v6126
        %v6192 = vmul.f32 %v6173, %v6130
        %v6193 = vmul.f32 %v6173, %v6132
        %v6194 = vmul.f32 %v6178, %v6136
        %v6195 = vmul.f32 %v6178, %v6138
        %v6196 = vadd.f32 %v6002, %v6180
        %v6197 = vadd.f32 %v6003, %v6181
        %v6198 = vadd.f32 %v6004, %v6182
        %v6199 = vadd.f32 %v6005, %v6183
        %v6200 = vadd.f32 %v6006, %v6184
        %v6201 = vadd.f32 %v6007, %v6185
        %v6202 = vadd.f32 %v6008, %v6186
        %v6203 = vadd.f32 %v6009, %v6187
        %v6204 = vadd.f32 %v6010, %v6188
        %v6205 = vadd.f32 %v6011, %v6189
        %v6206 = vadd.f32 %v6012, %v6190
        %v6207 = vadd.f32 %v6013, %v6191
        %v6208 = vadd.f32 %v6014, %v6192
        %v6209 = vadd.f32 %v6015, %v6193
        %v6210 = vadd.f32 %v6016, %v6194
        %v6211 = vadd.f32 %v6017, %v6195
        %s6212 = scalar_lea.vmem %s9, 384
        %v6213 = vld [vmem:[%s6212] sm:$0xff]
        %v6214 = vld [vmem:[%s6212 + $0x8] sm:$0xff]
        %v6215 = vld [vmem:[%s6212 + $0x10] sm:$0xff]
        %v6216 = vld [vmem:[%s6212 + $0x18] sm:$0xff]
        %v6217 = vld [vmem:[%s6212 + $0x20] sm:$0xff]
        %v6218 = vld [vmem:[%s6212 + $0x28] sm:$0xff]
        %v6219 = vld [vmem:[%s6212 + $0x30] sm:$0xff]
        %v6220 = vld [vmem:[%s6212 + $0x38] sm:$0xff]
        %6221 = vmatprep.subr.mxu0 %v1648
        %6222 = vmatpush1.msra.mxu0 %v1647
        %6223 = vmatprep.subr.mxu0 %v1650
        %6224 = vmatpush1.msra.mxu0 %v1649
        %6225 = vmatprep.subr.mxu0 %v1652
        %6226 = vmatpush1.msra.mxu0 %v1651
        %6227 = vmatprep.subr.mxu0 %v1654
        %6228 = vmatpush1.msra.mxu0 %v1653
        %6229 = vmatprep.subr.mxu0 %v1656
        %6230 = vmatpush1.msra.mxu0 %v1655
        %6231 = vmatprep.subr.mxu0 %v1658
        %6232 = vmatpush1.msra.mxu0 %v1657
        %6233 = vmatprep.subr.mxu0 %v1660
        %6234 = vmatpush1.msra.mxu0 %v1659
        %6235 = vmatprep.subr.mxu0 %v1662
        %6236 = vmatpush1.msra.mxu0 %v1661
        %6237 = vmatprep.subr.mxu0 %v1664
        %6238 = vmatpush1.msra.mxu0 %v1663
        %6239 = vmatprep.subr.mxu0 %v1666
        %6240 = vmatpush1.msra.mxu0 %v1665
        %6241 = vmatprep.subr.mxu0 %v1668
        %6242 = vmatpush1.msra.mxu0 %v1667
        %6243 = vmatprep.subr.mxu0 %v1670
        %6244 = vmatpush1.msra.mxu0 %v1669
        %6245 = vmatprep.subr.mxu0 %v1672
        %6246 = vmatpush1.msra.mxu0 %v1671
        %6247 = vmatprep.subr.mxu0 %v1674
        %6248 = vmatpush1.msra.mxu0 %v1673
        %6249 = vmatprep.subr.mxu0 %v1676
        %6250 = vmatpush1.msra.mxu0 %v1675
        %6251 = vmatprep.subr.mxu0 %v1678
        %6252 = vmatpush1.msra.mxu0 %v1677
        %6253 = vmatprep.subr.mxu0 %v1680
        %6254 = vmatpush1.msra.mxu0 %v1679
        %6255 = vmatprep.subr.mxu0 %v1682
        %6256 = vmatpush1.msra.mxu0 %v1681
        %6257 = vmatprep.subr.mxu0 %v1684
        %6258 = vmatpush1.msra.mxu0 %v1683
        %6259 = vmatprep.subr.mxu0 %v1686
        %6260 = vmatpush1.msra.mxu0 %v1685
        %6261 = vmatprep.subr.mxu0 %v1688
        %6262 = vmatpush1.msra.mxu0 %v1687
        %6263 = vmatprep.subr.mxu0 %v1690
        %6264 = vmatpush1.msra.mxu0 %v1689
        %6265 = vmatprep.subr.mxu0 %v1692
        %6266 = vmatpush1.msra.mxu0 %v1691
        %6267 = vmatprep.subr.mxu0 %v1694
        %6268 = vmatpush1.msra.mxu0 %v1693
        %6269 = vmatprep.subr.mxu0 %v1696
        %6270 = vmatpush1.msra.mxu0 %v1695
        %6271 = vmatprep.subr.mxu0 %v1698
        %6272 = vmatpush1.msra.mxu0 %v1697
        %6273 = vmatprep.subr.mxu0 %v1700
        %6274 = vmatpush1.msra.mxu0 %v1699
        %6275 = vmatprep.subr.mxu0 %v1702
        %6276 = vmatpush1.msra.mxu0 %v1701
        %6277 = vmatprep.subr.mxu0 %v1704
        %6278 = vmatpush1.msra.mxu0 %v1703
        %6279 = vmatprep.subr.mxu0 %v1706
        %6280 = vmatpush1.msra.mxu0 %v1705
        %6281 = vmatprep.subr.mxu0 %v1708
        %6282 = vmatpush1.msra.mxu0 %v1707
        %6283 = vmatprep.subr.mxu0 %v1710
        %6284 = vmatpush1.msra.mxu0 %v1709
        %6285 = vmatprep.mubr.f32.mxu0 %v5034
        %6286 = vmatmul.mubr.f32.gmra.mrb[0].mxu0 %v5033
        %v6287 = vpop.f32.mrb[0].mxu0
        %v6288 = vadd.f32 0.0, %v6287
        %v6289 = vpop.f32.mrb[0].mxu0
        %v6290 = vadd.f32 0.0, %v6289
        %6291 = vmatprep.mubr.f32.mxu0 %v5036
        %6292 = vmatmul.mubr.f32.gmra.mrb[0].mxu0 %v5035
        %v6293 = vpop.f32.mrb[0].mxu0
        %v6294 = vadd.f32 0.0, %v6293
        %v6295 = vpop.f32.mrb[0].mxu0
        %v6296 = vadd.f32 0.0, %v6295
        %6297 = vmatprep.mubr.f32.mxu0 %v5038
        %6298 = vmatmul.mubr.f32.gmra.mrb[0].mxu0 %v5037
        %v6299 = vpop.f32.mrb[0].mxu0
        %v6300 = vadd.f32 0.0, %v6299
        %v6301 = vpop.f32.mrb[0].mxu0
        %v6302 = vadd.f32 0.0, %v6301
        %6303 = vmatprep.mubr.f32.mxu0 %v5040
        %6304 = vmatmul.mubr.f32.gmra.mrb[0].mxu0 %v5039
        %v6305 = vpop.f32.mrb[0].mxu0
        %v6306 = vadd.f32 0.0, %v6305
        %v6307 = vpop.f32.mrb[0].mxu0
        %v6308 = vadd.f32 0.0, %v6307
        %6309 = vmatprep.mubr.f32.mxu0 %v5042
        %6310 = vmatmul.mubr.f32.gmra.mrb[0].mxu0 %v5041
        %v6311 = vpop.f32.mrb[0].mxu0
        %v6312 = vadd.f32 0.0, %v6311
        %v6313 = vpop.f32.mrb[0].mxu0
        %v6314 = vadd.f32 0.0, %v6313
        %6315 = vmatprep.mubr.f32.mxu0 %v5044
        %6316 = vmatmul.mubr.f32.gmra.mrb[0].mxu0 %v5043
        %v6317 = vpop.f32.mrb[0].mxu0
        %v6318 = vadd.f32 0.0, %v6317
        %v6319 = vpop.f32.mrb[0].mxu0
        %v6320 = vadd.f32 0.0, %v6319
        %6321 = vmatprep.mubr.f32.mxu0 %v5046
        %6322 = vmatmul.mubr.f32.gmra.mrb[0].mxu0 %v5045
        %v6323 = vpop.f32.mrb[0].mxu0
        %v6324 = vadd.f32 0.0, %v6323
        %v6325 = vpop.f32.mrb[0].mxu0
        %v6326 = vadd.f32 0.0, %v6325
        %6327 = vmatprep.mubr.f32.mxu0 %v5048
        %6328 = vmatmul.mubr.f32.gmra.mrb[0].mxu0 %v5047
        %v6329 = vpop.f32.mrb[0].mxu0
        %v6330 = vadd.f32 0.0, %v6329
        %v6331 = vpop.f32.mrb[0].mxu0
        %v6332 = vadd.f32 0.0, %v6331
        %6333 = vdwg.mxu0
        %6335 = vset.pattern.permute.xlu0 0
        %6336 = vperm.xlu0 %6335, %v6213
        %v6337 = vpop.permute.xlu0 %6336
        %6340 = vset.pattern.permute.xlu0 0
        %6341 = vperm.xlu0 %6340, %v6214
        %v6342 = vpop.permute.xlu0 %6341
        %6345 = vset.pattern.permute.xlu0 0
        %6346 = vperm.xlu0 %6345, %v6215
        %v6347 = vpop.permute.xlu0 %6346
        %6350 = vset.pattern.permute.xlu0 0
        %6351 = vperm.xlu0 %6350, %v6216
        %v6352 = vpop.permute.xlu0 %6351
        %6355 = vset.pattern.permute.xlu0 0
        %6356 = vperm.xlu0 %6355, %v6217
        %v6357 = vpop.permute.xlu0 %6356
        %6360 = vset.pattern.permute.xlu0 0
        %6361 = vperm.xlu0 %6360, %v6218
        %v6362 = vpop.permute.xlu0 %6361
        %6365 = vset.pattern.permute.xlu0 0
        %6366 = vperm.xlu0 %6365, %v6219
        %v6367 = vpop.permute.xlu0 %6366
        %6370 = vset.pattern.permute.xlu0 0
        %6371 = vperm.xlu0 %6370, %v6220
        %v6372 = vpop.permute.xlu0 %6371
        %v6374 = vmul.f32 %v6337, %v6288
        %v6375 = vmul.f32 %v6337, %v6290
        %v6376 = vmul.f32 %v6342, %v6294
        %v6377 = vmul.f32 %v6342, %v6296
        %v6378 = vmul.f32 %v6347, %v6300
        %v6379 = vmul.f32 %v6347, %v6302
        %v6380 = vmul.f32 %v6352, %v6306
        %v6381 = vmul.f32 %v6352, %v6308
        %v6382 = vmul.f32 %v6357, %v6312
        %v6383 = vmul.f32 %v6357, %v6314
        %v6384 = vmul.f32 %v6362, %v6318
        %v6385 = vmul.f32 %v6362, %v6320
        %v6386 = vmul.f32 %v6367, %v6324
        %v6387 = vmul.f32 %v6367, %v6326
        %v6388 = vmul.f32 %v6372, %v6330
        %v6389 = vmul.f32 %v6372, %v6332
        %v6390 = vadd.f32 %v6196, %v6374
        %v6391 = vadd.f32 %v6197, %v6375
        %v6392 = vadd.f32 %v6198, %v6376
        %v6393 = vadd.f32 %v6199, %v6377
        %v6394 = vadd.f32 %v6200, %v6378
        %v6395 = vadd.f32 %v6201, %v6379
        %v6396 = vadd.f32 %v6202, %v6380
        %v6397 = vadd.f32 %v6203, %v6381
        %v6398 = vadd.f32 %v6204, %v6382
        %v6399 = vadd.f32 %v6205, %v6383
        %v6400 = vadd.f32 %v6206, %v6384
        %v6401 = vadd.f32 %v6207, %v6385
        %v6402 = vadd.f32 %v6208, %v6386
        %v6403 = vadd.f32 %v6209, %v6387
        %v6404 = vadd.f32 %v6210, %v6388
        %v6405 = vadd.f32 %v6211, %v6389
        %s6406 = scalar_lea.vmem %s9, 448
        %v6407 = vld [vmem:[%s6406] sm:$0xff]
        %v6408 = vld [vmem:[%s6406 + $0x8] sm:$0xff]
        %v6409 = vld [vmem:[%s6406 + $0x10] sm:$0xff]
        %v6410 = vld [vmem:[%s6406 + $0x18] sm:$0xff]
        %v6411 = vld [vmem:[%s6406 + $0x20] sm:$0xff]
        %v6412 = vld [vmem:[%s6406 + $0x28] sm:$0xff]
        %v6413 = vld [vmem:[%s6406 + $0x30] sm:$0xff]
        %v6414 = vld [vmem:[%s6406 + $0x38] sm:$0xff]
        %6415 = vmatprep.subr.mxu0 %v1826
        %6416 = vmatpush1.msra.mxu0 %v1825
        %6417 = vmatprep.subr.mxu0 %v1828
        %6418 = vmatpush1.msra.mxu0 %v1827
        %6419 = vmatprep.subr.mxu0 %v1830
        %6420 = vmatpush1.msra.mxu0 %v1829
        %6421 = vmatprep.subr.mxu0 %v1832
        %6422 = vmatpush1.msra.mxu0 %v1831
        %6423 = vmatprep.subr.mxu0 %v1834
        %6424 = vmatpush1.msra.mxu0 %v1833
        %6425 = vmatprep.subr.mxu0 %v1836
        %6426 = vmatpush1.msra.mxu0 %v1835
        %6427 = vmatprep.subr.mxu0 %v1838
        %6428 = vmatpush1.msra.mxu0 %v1837
        %6429 = vmatprep.subr.mxu0 %v1840
        %6430 = vmatpush1.msra.mxu0 %v1839
        %6431 = vmatprep.subr.mxu0 %v1842
        %6432 = vmatpush1.msra.mxu0 %v1841
        %6433 = vmatprep.subr.mxu0 %v1844
        %6434 = vmatpush1.msra.mxu0 %v1843
        %6435 = vmatprep.subr.mxu0 %v1846
        %6436 = vmatpush1.msra.mxu0 %v1845
        %6437 = vmatprep.subr.mxu0 %v1848
        %6438 = vmatpush1.msra.mxu0 %v1847
        %6439 = vmatprep.subr.mxu0 %v1850
        %6440 = vmatpush1.msra.mxu0 %v1849
        %6441 = vmatprep.subr.mxu0 %v1852
        %6442 = vmatpush1.msra.mxu0 %v1851
        %6443 = vmatprep.subr.mxu0 %v1854
        %6444 = vmatpush1.msra.mxu0 %v1853
        %6445 = vmatprep.subr.mxu0 %v1856
        %6446 = vmatpush1.msra.mxu0 %v1855
        %6447 = vmatprep.subr.mxu0 %v1858
        %6448 = vmatpush1.msra.mxu0 %v1857
        %6449 = vmatprep.subr.mxu0 %v1860
        %6450 = vmatpush1.msra.mxu0 %v1859
        %6451 = vmatprep.subr.mxu0 %v1862
        %6452 = vmatpush1.msra.mxu0 %v1861
        %6453 = vmatprep.subr.mxu0 %v1864
        %6454 = vmatpush1.msra.mxu0 %v1863
        %6455 = vmatprep.subr.mxu0 %v1866
        %6456 = vmatpush1.msra.mxu0 %v1865
        %6457 = vmatprep.subr.mxu0 %v1868
        %6458 = vmatpush1.msra.mxu0 %v1867
        %6459 = vmatprep.subr.mxu0 %v1870
        %6460 = vmatpush1.msra.mxu0 %v1869
        %6461 = vmatprep.subr.mxu0 %v1872
        %6462 = vmatpush1.msra.mxu0 %v1871
        %6463 = vmatprep.subr.mxu0 %v1874
        %6464 = vmatpush1.msra.mxu0 %v1873
        %6465 = vmatprep.subr.mxu0 %v1876
        %6466 = vmatpush1.msra.mxu0 %v1875
        %6467 = vmatprep.subr.mxu0 %v1878
        %6468 = vmatpush1.msra.mxu0 %v1877
        %6469 = vmatprep.subr.mxu0 %v1880
        %6470 = vmatpush1.msra.mxu0 %v1879
        %6471 = vmatprep.subr.mxu0 %v1882
        %6472 = vmatpush1.msra.mxu0 %v1881
        %6473 = vmatprep.subr.mxu0 %v1884
        %6474 = vmatpush1.msra.mxu0 %v1883
        %6475 = vmatprep.subr.mxu0 %v1886
        %6476 = vmatpush1.msra.mxu0 %v1885
        %6477 = vmatprep.subr.mxu0 %v1888
        %6478 = vmatpush1.msra.mxu0 %v1887
        %6479 = vmatprep.mubr.f32.mxu0 %v5034
        %6480 = vmatmul.mubr.f32.gmra.mrb[0].mxu0 %v5033
        %v6481 = vpop.f32.mrb[0].mxu0
        %v6482 = vadd.f32 0.0, %v6481
        %v6483 = vpop.f32.mrb[0].mxu0
        %v6484 = vadd.f32 0.0, %v6483
        %6485 = vmatprep.mubr.f32.mxu0 %v5036
        %6486 = vmatmul.mubr.f32.gmra.mrb[0].mxu0 %v5035
        %v6487 = vpop.f32.mrb[0].mxu0
        %v6488 = vadd.f32 0.0, %v6487
        %v6489 = vpop.f32.mrb[0].mxu0
        %v6490 = vadd.f32 0.0, %v6489
        %6491 = vmatprep.mubr.f32.mxu0 %v5038
        %6492 = vmatmul.mubr.f32.gmra.mrb[0].mxu0 %v5037
        %v6493 = vpop.f32.mrb[0].mxu0
        %v6494 = vadd.f32 0.0, %v6493
        %v6495 = vpop.f32.mrb[0].mxu0
        %v6496 = vadd.f32 0.0, %v6495
        %6497 = vmatprep.mubr.f32.mxu0 %v5040
        %6498 = vmatmul.mubr.f32.gmra.mrb[0].mxu0 %v5039
        %v6499 = vpop.f32.mrb[0].mxu0
        %v6500 = vadd.f32 0.0, %v6499
        %v6501 = vpop.f32.mrb[0].mxu0
        %v6502 = vadd.f32 0.0, %v6501
        %6503 = vmatprep.mubr.f32.mxu0 %v5042
        %6504 = vmatmul.mubr.f32.gmra.mrb[0].mxu0 %v5041
        %v6505 = vpop.f32.mrb[0].mxu0
        %v6506 = vadd.f32 0.0, %v6505
        %v6507 = vpop.f32.mrb[0].mxu0
        %v6508 = vadd.f32 0.0, %v6507
        %6509 = vmatprep.mubr.f32.mxu0 %v5044
        %6510 = vmatmul.mubr.f32.gmra.mrb[0].mxu0 %v5043
        %v6511 = vpop.f32.mrb[0].mxu0
        %v6512 = vadd.f32 0.0, %v6511
        %v6513 = vpop.f32.mrb[0].mxu0
        %v6514 = vadd.f32 0.0, %v6513
        %6515 = vmatprep.mubr.f32.mxu0 %v5046
        %6516 = vmatmul.mubr.f32.gmra.mrb[0].mxu0 %v5045
        %v6517 = vpop.f32.mrb[0].mxu0
        %v6518 = vadd.f32 0.0, %v6517
        %v6519 = vpop.f32.mrb[0].mxu0
        %v6520 = vadd.f32 0.0, %v6519
        %6521 = vmatprep.mubr.f32.mxu0 %v5048
        %6522 = vmatmul.mubr.f32.gmra.mrb[0].mxu0 %v5047
        %v6523 = vpop.f32.mrb[0].mxu0
        %v6524 = vadd.f32 0.0, %v6523
        %v6525 = vpop.f32.mrb[0].mxu0
        %v6526 = vadd.f32 0.0, %v6525
        %6527 = vdwg.mxu0
        %6529 = vset.pattern.permute.xlu0 0
        %6530 = vperm.xlu0 %6529, %v6407
        %v6531 = vpop.permute.xlu0 %6530
        %6534 = vset.pattern.permute.xlu0 0
        %6535 = vperm.xlu0 %6534, %v6408
        %v6536 = vpop.permute.xlu0 %6535
        %6539 = vset.pattern.permute.xlu0 0
        %6540 = vperm.xlu0 %6539, %v6409
        %v6541 = vpop.permute.xlu0 %6540
        %6544 = vset.pattern.permute.xlu0 0
        %6545 = vperm.xlu0 %6544, %v6410
        %v6546 = vpop.permute.xlu0 %6545
        %6549 = vset.pattern.permute.xlu0 0
        %6550 = vperm.xlu0 %6549, %v6411
        %v6551 = vpop.permute.xlu0 %6550
        %6554 = vset.pattern.permute.xlu0 0
        %6555 = vperm.xlu0 %6554, %v6412
        %v6556 = vpop.permute.xlu0 %6555
        %6559 = vset.pattern.permute.xlu0 0
        %6560 = vperm.xlu0 %6559, %v6413
        %v6561 = vpop.permute.xlu0 %6560
        %6564 = vset.pattern.permute.xlu0 0
        %6565 = vperm.xlu0 %6564, %v6414
        %v6566 = vpop.permute.xlu0 %6565
        %v6568 = vmul.f32 %v6531, %v6482
        %v6569 = vmul.f32 %v6531, %v6484
        %v6570 = vmul.f32 %v6536, %v6488
        %v6571 = vmul.f32 %v6536, %v6490
        %v6572 = vmul.f32 %v6541, %v6494
        %v6573 = vmul.f32 %v6541, %v6496
        %v6574 = vmul.f32 %v6546, %v6500
        %v6575 = vmul.f32 %v6546, %v6502
        %v6576 = vmul.f32 %v6551, %v6506
        %v6577 = vmul.f32 %v6551, %v6508
        %v6578 = vmul.f32 %v6556, %v6512
        %v6579 = vmul.f32 %v6556, %v6514
        %v6580 = vmul.f32 %v6561, %v6518
        %v6581 = vmul.f32 %v6561, %v6520
        %v6582 = vmul.f32 %v6566, %v6524
        %v6583 = vmul.f32 %v6566, %v6526
        %v6584 = vadd.f32 %v6390, %v6568
        %v6585 = vadd.f32 %v6391, %v6569
        %v6586 = vadd.f32 %v6392, %v6570
        %v6587 = vadd.f32 %v6393, %v6571
        %v6588 = vadd.f32 %v6394, %v6572
        %v6589 = vadd.f32 %v6395, %v6573
        %v6590 = vadd.f32 %v6396, %v6574
        %v6591 = vadd.f32 %v6397, %v6575
        %v6592 = vadd.f32 %v6398, %v6576
        %v6593 = vadd.f32 %v6399, %v6577
        %v6594 = vadd.f32 %v6400, %v6578
        %v6595 = vadd.f32 %v6401, %v6579
        %v6596 = vadd.f32 %v6402, %v6580
        %v6597 = vadd.f32 %v6403, %v6581
        %v6598 = vadd.f32 %v6404, %v6582
        %v6599 = vadd.f32 %v6405, %v6583
        %s6600 = scalar_lea.vmem %s9, 512
        %v6601 = vld [vmem:[%s6600] sm:$0xff]
        %v6602 = vld [vmem:[%s6600 + $0x8] sm:$0xff]
        %v6603 = vld [vmem:[%s6600 + $0x10] sm:$0xff]
        %v6604 = vld [vmem:[%s6600 + $0x18] sm:$0xff]
        %v6605 = vld [vmem:[%s6600 + $0x20] sm:$0xff]
        %v6606 = vld [vmem:[%s6600 + $0x28] sm:$0xff]
        %v6607 = vld [vmem:[%s6600 + $0x30] sm:$0xff]
        %v6608 = vld [vmem:[%s6600 + $0x38] sm:$0xff]
        %6609 = vmatprep.subr.mxu0 %v2004
        %6610 = vmatpush1.msra.mxu0 %v2003
        %6611 = vmatprep.subr.mxu0 %v2006
        %6612 = vmatpush1.msra.mxu0 %v2005
        %6613 = vmatprep.subr.mxu0 %v2008
        %6614 = vmatpush1.msra.mxu0 %v2007
        %6615 = vmatprep.subr.mxu0 %v2010
        %6616 = vmatpush1.msra.mxu0 %v2009
        %6617 = vmatprep.subr.mxu0 %v2012
        %6618 = vmatpush1.msra.mxu0 %v2011
        %6619 = vmatprep.subr.mxu0 %v2014
        %6620 = vmatpush1.msra.mxu0 %v2013
        %6621 = vmatprep.subr.mxu0 %v2016
        %6622 = vmatpush1.msra.mxu0 %v2015
        %6623 = vmatprep.subr.mxu0 %v2018
        %6624 = vmatpush1.msra.mxu0 %v2017
        %6625 = vmatprep.subr.mxu0 %v2020
        %6626 = vmatpush1.msra.mxu0 %v2019
        %6627 = vmatprep.subr.mxu0 %v2022
        %6628 = vmatpush1.msra.mxu0 %v2021
        %6629 = vmatprep.subr.mxu0 %v2024
        %6630 = vmatpush1.msra.mxu0 %v2023
        %6631 = vmatprep.subr.mxu0 %v2026
        %6632 = vmatpush1.msra.mxu0 %v2025
        %6633 = vmatprep.subr.mxu0 %v2028
        %6634 = vmatpush1.msra.mxu0 %v2027
        %6635 = vmatprep.subr.mxu0 %v2030
        %6636 = vmatpush1.msra.mxu0 %v2029
        %6637 = vmatprep.subr.mxu0 %v2032
        %6638 = vmatpush1.msra.mxu0 %v2031
        %6639 = vmatprep.subr.mxu0 %v2034
        %6640 = vmatpush1.msra.mxu0 %v2033
        %6641 = vmatprep.subr.mxu0 %v2036
        %6642 = vmatpush1.msra.mxu0 %v2035
        %6643 = vmatprep.subr.mxu0 %v2038
        %6644 = vmatpush1.msra.mxu0 %v2037
        %6645 = vmatprep.subr.mxu0 %v2040
        %6646 = vmatpush1.msra.mxu0 %v2039
        %6647 = vmatprep.subr.mxu0 %v2042
        %6648 = vmatpush1.msra.mxu0 %v2041
        %6649 = vmatprep.subr.mxu0 %v2044
        %6650 = vmatpush1.msra.mxu0 %v2043
        %6651 = vmatprep.subr.mxu0 %v2046
        %6652 = vmatpush1.msra.mxu0 %v2045
        %6653 = vmatprep.subr.mxu0 %v2048
        %6654 = vmatpush1.msra.mxu0 %v2047
        %6655 = vmatprep.subr.mxu0 %v2050
        %6656 = vmatpush1.msra.mxu0 %v2049
        %6657 = vmatprep.subr.mxu0 %v2052
        %6658 = vmatpush1.msra.mxu0 %v2051
        %6659 = vmatprep.subr.mxu0 %v2054
        %6660 = vmatpush1.msra.mxu0 %v2053
        %6661 = vmatprep.subr.mxu0 %v2056
        %6662 = vmatpush1.msra.mxu0 %v2055
        %6663 = vmatprep.subr.mxu0 %v2058
        %6664 = vmatpush1.msra.mxu0 %v2057
        %6665 = vmatprep.subr.mxu0 %v2060
        %6666 = vmatpush1.msra.mxu0 %v2059
        %6667 = vmatprep.subr.mxu0 %v2062
        %6668 = vmatpush1.msra.mxu0 %v2061
        %6669 = vmatprep.subr.mxu0 %v2064
        %6670 = vmatpush1.msra.mxu0 %v2063
        %6671 = vmatprep.subr.mxu0 %v2066
        %6672 = vmatpush1.msra.mxu0 %v2065
        %6673 = vmatprep.mubr.f32.mxu0 %v5034
        %6674 = vmatmul.mubr.f32.gmra.mrb[0].mxu0 %v5033
        %v6675 = vpop.f32.mrb[0].mxu0
        %v6676 = vadd.f32 0.0, %v6675
        %v6677 = vpop.f32.mrb[0].mxu0
        %v6678 = vadd.f32 0.0, %v6677
        %6679 = vmatprep.mubr.f32.mxu0 %v5036
        %6680 = vmatmul.mubr.f32.gmra.mrb[0].mxu0 %v5035
        %v6681 = vpop.f32.mrb[0].mxu0
        %v6682 = vadd.f32 0.0, %v6681
        %v6683 = vpop.f32.mrb[0].mxu0
        %v6684 = vadd.f32 0.0, %v6683
        %6685 = vmatprep.mubr.f32.mxu0 %v5038
        %6686 = vmatmul.mubr.f32.gmra.mrb[0].mxu0 %v5037
        %v6687 = vpop.f32.mrb[0].mxu0
        %v6688 = vadd.f32 0.0, %v6687
        %v6689 = vpop.f32.mrb[0].mxu0
        %v6690 = vadd.f32 0.0, %v6689
        %6691 = vmatprep.mubr.f32.mxu0 %v5040
        %6692 = vmatmul.mubr.f32.gmra.mrb[0].mxu0 %v5039
        %v6693 = vpop.f32.mrb[0].mxu0
        %v6694 = vadd.f32 0.0, %v6693
        %v6695 = vpop.f32.mrb[0].mxu0
        %v6696 = vadd.f32 0.0, %v6695
        %6697 = vmatprep.mubr.f32.mxu0 %v5042
        %6698 = vmatmul.mubr.f32.gmra.mrb[0].mxu0 %v5041
        %v6699 = vpop.f32.mrb[0].mxu0
        %v6700 = vadd.f32 0.0, %v6699
        %v6701 = vpop.f32.mrb[0].mxu0
        %v6702 = vadd.f32 0.0, %v6701
        %6703 = vmatprep.mubr.f32.mxu0 %v5044
        %6704 = vmatmul.mubr.f32.gmra.mrb[0].mxu0 %v5043
        %v6705 = vpop.f32.mrb[0].mxu0
        %v6706 = vadd.f32 0.0, %v6705
        %v6707 = vpop.f32.mrb[0].mxu0
        %v6708 = vadd.f32 0.0, %v6707
        %6709 = vmatprep.mubr.f32.mxu0 %v5046
        %6710 = vmatmul.mubr.f32.gmra.mrb[0].mxu0 %v5045
        %v6711 = vpop.f32.mrb[0].mxu0
        %v6712 = vadd.f32 0.0, %v6711
        %v6713 = vpop.f32.mrb[0].mxu0
        %v6714 = vadd.f32 0.0, %v6713
        %6715 = vmatprep.mubr.f32.mxu0 %v5048
        %6716 = vmatmul.mubr.f32.gmra.mrb[0].mxu0 %v5047
        %v6717 = vpop.f32.mrb[0].mxu0
        %v6718 = vadd.f32 0.0, %v6717
        %v6719 = vpop.f32.mrb[0].mxu0
        %v6720 = vadd.f32 0.0, %v6719
        %6721 = vdwg.mxu0
        %6723 = vset.pattern.permute.xlu0 0
        %6724 = vperm.xlu0 %6723, %v6601
        %v6725 = vpop.permute.xlu0 %6724
        %6728 = vset.pattern.permute.xlu0 0
        %6729 = vperm.xlu0 %6728, %v6602
        %v6730 = vpop.permute.xlu0 %6729
        %6733 = vset.pattern.permute.xlu0 0
        %6734 = vperm.xlu0 %6733, %v6603
        %v6735 = vpop.permute.xlu0 %6734
        %6738 = vset.pattern.permute.xlu0 0
        %6739 = vperm.xlu0 %6738, %v6604
        %v6740 = vpop.permute.xlu0 %6739
        %6743 = vset.pattern.permute.xlu0 0
        %6744 = vperm.xlu0 %6743, %v6605
        %v6745 = vpop.permute.xlu0 %6744
        %6748 = vset.pattern.permute.xlu0 0
        %6749 = vperm.xlu0 %6748, %v6606
        %v6750 = vpop.permute.xlu0 %6749
        %6753 = vset.pattern.permute.xlu0 0
        %6754 = vperm.xlu0 %6753, %v6607
        %v6755 = vpop.permute.xlu0 %6754
        %6758 = vset.pattern.permute.xlu0 0
        %6759 = vperm.xlu0 %6758, %v6608
        %v6760 = vpop.permute.xlu0 %6759
        %v6762 = vmul.f32 %v6725, %v6676
        %v6763 = vmul.f32 %v6725, %v6678
        %v6764 = vmul.f32 %v6730, %v6682
        %v6765 = vmul.f32 %v6730, %v6684
        %v6766 = vmul.f32 %v6735, %v6688
        %v6767 = vmul.f32 %v6735, %v6690
        %v6768 = vmul.f32 %v6740, %v6694
        %v6769 = vmul.f32 %v6740, %v6696
        %v6770 = vmul.f32 %v6745, %v6700
        %v6771 = vmul.f32 %v6745, %v6702
        %v6772 = vmul.f32 %v6750, %v6706
        %v6773 = vmul.f32 %v6750, %v6708
        %v6774 = vmul.f32 %v6755, %v6712
        %v6775 = vmul.f32 %v6755, %v6714
        %v6776 = vmul.f32 %v6760, %v6718
        %v6777 = vmul.f32 %v6760, %v6720
        %v6778 = vadd.f32 %v6584, %v6762
        %v6779 = vadd.f32 %v6585, %v6763
        %v6780 = vadd.f32 %v6586, %v6764
        %v6781 = vadd.f32 %v6587, %v6765
        %v6782 = vadd.f32 %v6588, %v6766
        %v6783 = vadd.f32 %v6589, %v6767
        %v6784 = vadd.f32 %v6590, %v6768
        %v6785 = vadd.f32 %v6591, %v6769
        %v6786 = vadd.f32 %v6592, %v6770
        %v6787 = vadd.f32 %v6593, %v6771
        %v6788 = vadd.f32 %v6594, %v6772
        %v6789 = vadd.f32 %v6595, %v6773
        %v6790 = vadd.f32 %v6596, %v6774
        %v6791 = vadd.f32 %v6597, %v6775
        %v6792 = vadd.f32 %v6598, %v6776
        %v6793 = vadd.f32 %v6599, %v6777
        %v6794 = vld [vmem:[%s10] sm:$0xff]
        %v6795 = vld [vmem:[%s10 + $0x8] sm:$0xff]
        %v6796 = vld [vmem:[%s10 + $0x10] sm:$0xff]
        %v6797 = vld [vmem:[%s10 + $0x18] sm:$0xff]
        %v6798 = vld [vmem:[%s10 + $0x20] sm:$0xff]
        %v6799 = vld [vmem:[%s10 + $0x28] sm:$0xff]
        %v6800 = vld [vmem:[%s10 + $0x30] sm:$0xff]
        %v6801 = vld [vmem:[%s10 + $0x38] sm:$0xff]
        %6803 = vset.pattern.permute.xlu0 0
        %6804 = vperm.xlu0 %6803, %v6794
        %v6805 = vpop.permute.xlu0 %6804
        %6808 = vset.pattern.permute.xlu0 0
        %6809 = vperm.xlu0 %6808, %v6795
        %v6810 = vpop.permute.xlu0 %6809
        %6813 = vset.pattern.permute.xlu0 0
        %6814 = vperm.xlu0 %6813, %v6796
        %v6815 = vpop.permute.xlu0 %6814
        %6818 = vset.pattern.permute.xlu0 0
        %6819 = vperm.xlu0 %6818, %v6797
        %v6820 = vpop.permute.xlu0 %6819
        %6823 = vset.pattern.permute.xlu0 0
        %6824 = vperm.xlu0 %6823, %v6798
        %v6825 = vpop.permute.xlu0 %6824
        %6828 = vset.pattern.permute.xlu0 0
        %6829 = vperm.xlu0 %6828, %v6799
        %v6830 = vpop.permute.xlu0 %6829
        %6833 = vset.pattern.permute.xlu0 0
        %6834 = vperm.xlu0 %6833, %v6800
        %v6835 = vpop.permute.xlu0 %6834
        %6838 = vset.pattern.permute.xlu0 0
        %6839 = vperm.xlu0 %6838, %v6801
        %v6840 = vpop.permute.xlu0 %6839
        %v6842 = vmul.f32 %v6778, %v6805
        %v6843 = vmul.f32 %v6779, %v6805
        %v6844 = vmul.f32 %v6780, %v6810
        %v6845 = vmul.f32 %v6781, %v6810
        %v6846 = vmul.f32 %v6782, %v6815
        %v6847 = vmul.f32 %v6783, %v6815
        %v6848 = vmul.f32 %v6784, %v6820
        %v6849 = vmul.f32 %v6785, %v6820
        %v6850 = vmul.f32 %v6786, %v6825
        %v6851 = vmul.f32 %v6787, %v6825
        %v6852 = vmul.f32 %v6788, %v6830
        %v6853 = vmul.f32 %v6789, %v6830
        %v6854 = vmul.f32 %v6790, %v6835
        %v6855 = vmul.f32 %v6791, %v6835
        %v6856 = vmul.f32 %v6792, %v6840
        %v6857 = vmul.f32 %v6793, %v6840
        %s6858 = scalar_lea.vmem %s10, 64
        %v6859 = vld [vmem:[%s6858] sm:$0xff]
        %v6860 = vld [vmem:[%s6858 + $0x8] sm:$0xff]
        %v6861 = vld [vmem:[%s6858 + $0x10] sm:$0xff]
        %v6862 = vld [vmem:[%s6858 + $0x18] sm:$0xff]
        %v6863 = vld [vmem:[%s6858 + $0x20] sm:$0xff]
        %v6864 = vld [vmem:[%s6858 + $0x28] sm:$0xff]
        %v6865 = vld [vmem:[%s6858 + $0x30] sm:$0xff]
        %v6866 = vld [vmem:[%s6858 + $0x38] sm:$0xff]
        %6868 = vset.pattern.permute.xlu0 0
        %6869 = vperm.xlu0 %6868, %v6859
        %v6870 = vpop.permute.xlu0 %6869
        %6873 = vset.pattern.permute.xlu0 0
        %6874 = vperm.xlu0 %6873, %v6860
        %v6875 = vpop.permute.xlu0 %6874
        %6878 = vset.pattern.permute.xlu0 0
        %6879 = vperm.xlu0 %6878, %v6861
        %v6880 = vpop.permute.xlu0 %6879
        %6883 = vset.pattern.permute.xlu0 0
        %6884 = vperm.xlu0 %6883, %v6862
        %v6885 = vpop.permute.xlu0 %6884
        %6888 = vset.pattern.permute.xlu0 0
        %6889 = vperm.xlu0 %6888, %v6863
        %v6890 = vpop.permute.xlu0 %6889
        %6893 = vset.pattern.permute.xlu0 0
        %6894 = vperm.xlu0 %6893, %v6864
        %v6895 = vpop.permute.xlu0 %6894
        %6898 = vset.pattern.permute.xlu0 0
        %6899 = vperm.xlu0 %6898, %v6865
        %v6900 = vpop.permute.xlu0 %6899
        %6903 = vset.pattern.permute.xlu0 0
        %6904 = vperm.xlu0 %6903, %v6866
        %v6905 = vpop.permute.xlu0 %6904
        %v6907 = vadd.f32 %v6842, %v6870
        %v6908 = vadd.f32 %v6843, %v6870
        %v6909 = vadd.f32 %v6844, %v6875
        %v6910 = vadd.f32 %v6845, %v6875
        %v6911 = vadd.f32 %v6846, %v6880
        %v6912 = vadd.f32 %v6847, %v6880
        %v6913 = vadd.f32 %v6848, %v6885
        %v6914 = vadd.f32 %v6849, %v6885
        %v6915 = vadd.f32 %v6850, %v6890
        %v6916 = vadd.f32 %v6851, %v6890
        %v6917 = vadd.f32 %v6852, %v6895
        %v6918 = vadd.f32 %v6853, %v6895
        %v6919 = vadd.f32 %v6854, %v6900
        %v6920 = vadd.f32 %v6855, %v6900
        %v6921 = vadd.f32 %v6856, %v6905
        %v6922 = vadd.f32 %v6857, %v6905
        %v6923 = vld [vmem:[#allocation10] sm:$0xff]
        %v6924 = vld [vmem:[%s12] sm:$0xff]
        %6926 = vset.pattern.permute.xlu0 0
        %6927 = vperm.xlu0 %6926, %v6924
        %v6928 = vpop.permute.xlu0 %6927
        %v6931 = vsel %vm2220, %v6923, 0
        %6933 = vmatprep.subr.mxu0 %v6908
        %6934 = vmatpush1.msra.mxu0 %v6907
        %6935 = vmatprep.subr.mxu0 %v6910
        %6936 = vmatpush1.msra.mxu0 %v6909
        %6937 = vmatprep.subr.mxu0 %v6912
        %6938 = vmatpush1.msra.mxu0 %v6911
        %6939 = vmatprep.subr.mxu0 %v6914
        %6940 = vmatpush1.msra.mxu0 %v6913
        %6941 = vmatprep.subr.mxu0 %v6916
        %6942 = vmatpush1.msra.mxu0 %v6915
        %6943 = vmatprep.subr.mxu0 %v6918
        %6944 = vmatpush1.msra.mxu0 %v6917
        %6945 = vmatprep.subr.mxu0 %v6920
        %6946 = vmatpush1.msra.mxu0 %v6919
        %6947 = vmatprep.subr.mxu0 %v6922
        %6948 = vmatpush1.msra.mxu0 %v6921
        %6949 = vmatprep.subr.mxu0 0.0
        %6950 = vmatpush1.msra.mxu0 0.0
        %6951 = vmatprep.subr.mxu0 0.0
        %6952 = vmatpush1.msra.mxu0 0.0
        %6953 = vmatprep.subr.mxu0 0.0
        %6954 = vmatpush1.msra.mxu0 0.0
        %6955 = vmatprep.subr.mxu0 0.0
        %6956 = vmatpush1.msra.mxu0 0.0
        %6957 = vmatprep.subr.mxu0 0.0
        %6958 = vmatpush1.msra.mxu0 0.0
        %6959 = vmatprep.subr.mxu0 0.0
        %6960 = vmatpush1.msra.mxu0 0.0
        %6961 = vmatprep.subr.mxu0 0.0
        %6962 = vmatpush1.msra.mxu0 0.0
        %6963 = vmatprep.subr.mxu0 0.0
        %6964 = vmatpush1.msra.mxu0 0.0
        %6965 = vmatprep.subr.mxu0 0.0
        %6966 = vmatpush1.msra.mxu0 0.0
        %6967 = vmatprep.subr.mxu0 0.0
        %6968 = vmatpush1.msra.mxu0 0.0
        %6969 = vmatprep.subr.mxu0 0.0
        %6970 = vmatpush1.msra.mxu0 0.0
        %6971 = vmatprep.subr.mxu0 0.0
        %6972 = vmatpush1.msra.mxu0 0.0
        %6973 = vmatprep.subr.mxu0 0.0
        %6974 = vmatpush1.msra.mxu0 0.0
        %6975 = vmatprep.subr.mxu0 0.0
        %6976 = vmatpush1.msra.mxu0 0.0
        %6977 = vmatprep.subr.mxu0 0.0
        %6978 = vmatpush1.msra.mxu0 0.0
        %6979 = vmatprep.subr.mxu0 0.0
        %6980 = vmatpush1.msra.mxu0 0.0
        %6981 = vmatprep.subr.mxu0 0.0
        %6982 = vmatpush1.msra.mxu0 0.0
        %6983 = vmatprep.subr.mxu0 0.0
        %6984 = vmatpush1.msra.mxu0 0.0
        %6985 = vmatprep.subr.mxu0 0.0
        %6986 = vmatpush1.msra.mxu0 0.0
        %6987 = vmatprep.subr.mxu0 0.0
        %6988 = vmatpush1.msra.mxu0 0.0
        %6989 = vmatprep.subr.mxu0 0.0
        %6990 = vmatpush1.msra.mxu0 0.0
        %6991 = vmatprep.subr.mxu0 0.0
        %6992 = vmatpush1.msra.mxu0 0.0
        %6993 = vmatprep.subr.mxu0 0.0
        %6994 = vmatpush1.msra.mxu0 0.0
        %6995 = vmatprep.subr.mxu0 0.0
        %6996 = vmatpush1.msra.mxu0 0.0
        %6997 = vmatprep.mubr.f32.mxu0 0.0
        %6998 = vmatmul.mubr.f32.gmra.mrb[0].mxu0 %v6931
        %v6999 = vpop.f32.mrb[0].mxu0
        %v7000 = vadd.f32 %v6928, %v6999
        %v7001 = vpop.f32.mrb[0].mxu0
        %v7002 = vadd.f32 %v6928, %v7001
        %7003 = vdwg.mxu0
        %7004 = vst [vmem:[%s546] sm:$0xff] %v7000
        %7005 = vst [vmem:[%s546 + $0x8] sm:$0xff] %v7002
        %p7006 = scmp.lt.s32.totalorder %s28, 1
        %s7007 = scalar_select %p7006, %s28, 1
        %s7008 = smul.addr %s7007, 2
        %s7009 = smul.addr %s7008, 8
        %s7010 = scalar_lea.vmem %s13, %s7009
        // Predicated region
        $region97: #{rt_classifier_forward.1} parent=71 // pred_check
          %p7011 = pneg %p329
        $region98: #{rt_classifier_forward.1} parent=71 // pred_check_branch
          %7013 = sbr.rel (%p7011) target = $region100
        $region99: #{rt_classifier_forward.1} parent=71 // pred_region
          _
        $region100: #{rt_classifier_forward.1} parent=71 // pred_fallthru
          _
      $region72: #{rt_classifier_forward.1} parent=5 // pred_fallthru
        _
      %p7014 = scmp.le.s32.totalorder 2, %s23
      // Predicated region
      $region101: #{rt_classifier_forward.1} parent=5 // pred_check
        %p7015 = pneg %p7014
      $region102: #{rt_classifier_forward.1} parent=5 // pred_check_branch
        %7017 = sbr.rel (%p7015) target = $region104
      $region103: #{rt_classifier_forward.1} parent=5 // pred_region
        %s7018 = ssub.s32 %s23, 2
        // Predicated region
        $region105: #{rt_classifier_forward.1} parent=103 // pred_check
          %p7019 = pneg %p335
        $region106: #{rt_classifier_forward.1} parent=103 // pred_check_branch
          %7021 = sbr.rel (%p7019) target = $region108
        $region107: #{rt_classifier_forward.1} parent=103 // pred_region
          %p7022 = scmp.lt.s32.totalorder %s29, 1
          %s7023 = scalar_select %p7022, %s29, 1
          %s7024 = smul.addr %s7023, 2
          %s7025 = smul.addr %s7024, 8
          %s7026 = scalar_lea.vmem %s13, %s7025
        $region108: #{rt_classifier_forward.1} parent=103 // pred_fallthru
          _
      $region104: #{rt_classifier_forward.1} parent=5 // pred_fallthru
        _
    $region6: #{rt_classifier_forward.1} parent=1 // loop_footer
      %s27 = sadd.s32 1, %s23
    $region7: #{rt_classifier_forward.1} parent=1 // loop_footer_branch
      %22 = sbr.rel target = $region3
    $region8: #{rt_classifier_forward.1} parent=1 // loop_exit
      _
    %7027 = vsyncpa [#allocation3], 1
    %s7028 = scalar_lea.sflag [#allocation3], 1
    %7029 = vsyncpa %s7028, 1
    %7030 = vsyncpa [#allocation5], 1
    %7031 = vsyncpa [#allocation8], 1
    %7032 = vsyncpa [#allocation11], 1

</llo_original>
